<compile_context>
chip_gen: v7x
topology: tpu7x:2x2x1
jax: 0.10.0
libtpu: 0.0.40
codegen_flags: <defaults>
</compile_context>

<pallas_src>
import functools

import jax
import jax.numpy as jnp
from jax.experimental import pallas as pl
from jax.experimental.pallas import tpu as pltpu


def _round_up(x, m):
    return (x + m - 1) // m * m


_FC_TK = 1792  # K tile for the fc weight (K=5184 pads to 3 tiles of 1792)


# ---------------------------------------------------------------------------
# Pallas kernels
# ---------------------------------------------------------------------------
def _conv_relu_inorm_kernel(a_ref, w_ref, b_ref, o_ref, *, inv_n, eps):
    """One batch element: o = InstanceNorm(ReLU(a @ w + b)).

    a: (S, K) f32 im2col patches for this batch element (S = OH*OW)
    w: (K, OC) bf16, b: (1, OC) f32, o: (S, OC) f32.
    InstanceNorm2d(affine=False): biased variance over the S spatial rows,
    computed per output channel (column); all statistics kept in f32.
    """
    z = jnp.dot(a_ref[...].astype(jnp.bfloat16), w_ref[...],
                preferred_element_type=jnp.float32)
    z = jnp.maximum(z + b_ref[...], 0.0)
    mean = jnp.sum(z, axis=0, keepdims=True) * inv_n
    d = z - mean
    var = jnp.sum(d * d, axis=0, keepdims=True) * inv_n
    o_ref[...] = d * jax.lax.rsqrt(var + eps)


def _fc_head_kernel(h_ref, w1_ref, b1_ref, w2_ref, b2_ref, o_ref, acc_ref):
    """Fused fc(relu) + fc2(tanh), K-tiled over the fc weight.

    grid = (num_k_tiles,).  acc_ref (M, 512) f32 accumulates h @ w1 across K
    tiles; on the last tile: bias + relu, then the small fc2 matmul + bias +
    tanh, written once to the resident output block.
    """
    k = pl.program_id(0)

    @pl.when(k == 0)
    def _():
        acc_ref[...] = jnp.zeros_like(acc_ref)

    acc_ref[...] += jnp.dot(h_ref[...].astype(jnp.bfloat16), w1_ref[...],
                            preferred_element_type=jnp.float32)

    @pl.when(k == pl.num_programs(0) - 1)
    def _():
        hid = jnp.maximum(acc_ref[...] + b1_ref[...], 0.0)          # f32 epilogue
        z2 = jnp.dot(hid.astype(jnp.bfloat16), w2_ref[...],
                     preferred_element_type=jnp.float32)
        o_ref[...] = jnp.tanh(z2 + b2_ref[...])


# ---------------------------------------------------------------------------
# Wrappers around pallas_call
# ---------------------------------------------------------------------------
def conv_relu_inorm(x_nhwc, w_km, b_row, ksize, stride, eps=1e-5):
    """Fused conv(valid) + ReLU + InstanceNorm2d on an NHWC tensor.

    x: (B, H, W, C);  w_km: (ksize*ksize*C, OC) bf16 (kh,kw,c ordering);
    b_row: (1, OC) f32  ->  (B, OH, OW, OC) f32.
    """
    B, H, W, C = x_nhwc.shape
    K, OC = w_km.shape
    OH = (H - ksize) // stride + 1
    OW = (W - ksize) // stride + 1
    S = OH * OW

    # im2col with (kh, kw, c) feature order (matches the prepared weight layout)
    cols = []
    for i in range(ksize):
        for j in range(ksize):
            cols.append(x_nhwc[:, i:i + stride * OH:stride,
                               j:j + stride * OW:stride, :])
    patches = jnp.stack(cols, axis=3).reshape(B, S, ksize * ksize * C)
    assert patches.shape[-1] == K

    out = pl.pallas_call(
        functools.partial(_conv_relu_inorm_kernel, inv_n=1.0 / S, eps=eps),
        out_shape=jax.ShapeDtypeStruct((B, S, OC), jnp.float32),
        grid=(B,),
        in_specs=[
            pl.BlockSpec((None, S, K), lambda bb: (bb, 0, 0)),
            pl.BlockSpec((K, OC), lambda bb: (0, 0)),
            pl.BlockSpec((1, OC), lambda bb: (0, 0)),
        ],
        out_specs=pl.BlockSpec((None, S, OC), lambda bb: (bb, 0, 0)),
        compiler_params=pltpu.CompilerParams(
            dimension_semantics=("parallel",)),
    )(patches, w_km, b_row)
    return out.reshape(B, OH, OW, OC)


def fc_head(h, fc_w, fc_b, fc2_w, fc2_b):
    """Fused fc(relu)+fc2(tanh).  h:(B,K) f32, fc_w:(Kp,512) bf16 (pre-padded),
    fc2_w:(512,N2p) bf16 (pre-padded).  Returns (B, N2p) f32."""
    B, K = h.shape
    Kp, N1 = fc_w.shape
    _, N2p = fc2_w.shape
    Mp = _round_up(B, 8)
    nk = Kp // _FC_TK
    h_p = jnp.pad(h, ((0, Mp - B), (0, Kp - K)))   # tiny (activations only)

    out = pl.pallas_call(
        _fc_head_kernel,
        out_shape=jax.ShapeDtypeStruct((Mp, N2p), jnp.float32),
        grid=(nk,),
        in_specs=[
            pl.BlockSpec((Mp, _FC_TK), lambda k: (0, k)),
            pl.BlockSpec((_FC_TK, N1), lambda k: (k, 0)),
            pl.BlockSpec((1, N1), lambda k: (0, 0)),
            pl.BlockSpec((N1, N2p), lambda k: (0, 0)),
            pl.BlockSpec((1, N2p), lambda k: (0, 0)),
        ],
        out_specs=pl.BlockSpec((Mp, N2p), lambda k: (0, 0)),
        scratch_shapes=[pltpu.VMEM((Mp, N1), jnp.float32)],
        compiler_params=pltpu.CompilerParams(
            dimension_semantics=("arbitrary",)),
    )(h_p, fc_w, fc_b, fc2_w, fc2_b)
    return out[:B]


# ---------------------------------------------------------------------------
# Actor: parameter construction, one-time prep, forward pass
# ---------------------------------------------------------------------------
def _torch_like_init(key, fan_in, shape):
    # torch default: U(-1/sqrt(fan_in), 1/sqrt(fan_in))
    bound = 1.0 / jnp.sqrt(jnp.float32(fan_in))
    return jax.random.uniform(key, shape, jnp.float32, -bound, bound)


def init_actor_params(key, n_actions):
    ks = jax.random.split(key, 10)
    p = {}
    p["conv1_w"] = _torch_like_init(ks[0], 4 * 8 * 8, (32, 4, 8, 8))
    p["conv1_b"] = _torch_like_init(ks[1], 4 * 8 * 8, (32,))
    p["conv2_w"] = _torch_like_init(ks[2], 32 * 4 * 4, (64, 32, 4, 4))
    p["conv2_b"] = _torch_like_init(ks[3], 32 * 4 * 4, (64,))
    p["conv3_w"] = _torch_like_init(ks[4], 64 * 3 * 3, (64, 64, 3, 3))
    p["conv3_b"] = _torch_like_init(ks[5], 64 * 3 * 3, (64,))
    p["fc_w"] = _torch_like_init(ks[6], 64 * 9 * 9, (64 * 9 * 9, 512))
    p["fc_b"] = _torch_like_init(ks[7], 64 * 9 * 9, (512,))
    p["fc2_w"] = _torch_like_init(ks[8], 512, (512, n_actions))
    p["fc2_b"] = _torch_like_init(ks[9], 512, (n_actions,))
    return p


def prepare_actor_params(p):
    """One-time layout prep (outside the jitted forward):
    - conv weights reshaped to (kh*kw*c, OC) matching the NHWC im2col ordering,
      stored bf16 (MXU is bf16-native; halves weight HBM/VMEM traffic),
    - fc weight pre-padded to the K-tile multiple and cast to bf16,
    - fc2 weight/bias padded to 128 output lanes,
    - biases kept f32 (epilogue math stays f32 on all generations)."""
    def conv_w(w):
        oc, c, kh, kw = w.shape
        return (w.transpose(2, 3, 1, 0).reshape(kh * kw * c, oc)
                .astype(jnp.bfloat16))

    K = p["fc_w"].shape[0]
    Kp = _round_up(K, _FC_TK)
    n_act = p["fc2_w"].shape[1]
    N2p = _round_up(n_act, 128)

    return {
        "w1": conv_w(p["conv1_w"]), "b1": p["conv1_b"].reshape(1, -1),
        "w2": conv_w(p["conv2_w"]), "b2": p["conv2_b"].reshape(1, -1),
        "w3": conv_w(p["conv3_w"]), "b3": p["conv3_b"].reshape(1, -1),
        "fc_w": jnp.pad(p["fc_w"], ((0, Kp - K), (0, 0))).astype(jnp.bfloat16),
        "fc_b": p["fc_b"].reshape(1, -1),
        "fc2_w": jnp.pad(p["fc2_w"], ((0, 0), (0, N2p - n_act))).astype(jnp.bfloat16),
        "fc2_b": jnp.pad(p["fc2_b"].reshape(1, -1), ((0, 0), (0, N2p - n_act))),
    }


@functools.partial(jax.jit, static_argnames=("n_actions",))
def actor_forward(prep, x, *, n_actions):
    """x: (B, 4, 100, 100) f32 NCHW -> (B, n_actions) in (-1, 1)."""
    h = x.transpose(0, 2, 3, 1)                                        # NCHW -> NHWC once
    h = conv_relu_inorm(h, prep["w1"], prep["b1"], ksize=8, stride=4)  # (B,24,24,32)
    h = conv_relu_inorm(h, prep["w2"], prep["b2"], ksize=4, stride=2)  # (B,11,11,64)
    h = conv_relu_inorm(h, prep["w3"], prep["b3"], ksize=3, stride=1)  # (B,9,9,64)
    B = h.shape[0]
    h = h.transpose(0, 3, 1, 2).reshape(B, -1)   # torch C-major .view(B, -1), tiny tensor
    out = fc_head(h, prep["fc_w"], prep["fc_b"], prep["fc2_w"], prep["fc2_b"])
    return out[:, :n_actions]
    # TODO(synk): Actor.act() (noise injection / clipping / action rescaling) is
    # sampling glue outside forward(); intentionally not implemented as a kernel.


# ---------------------------------------------------------------------------
# Pure-JAX f32 reference (mirrors the PyTorch forward) for a sanity check
# ---------------------------------------------------------------------------
def reference_forward(p, x, eps=1e-5):
    hi = jax.lax.Precision.HIGHEST

    def conv(x, w, b, s):
        y = jax.lax.conv_general_dilated(
            x, w, (s, s), "VALID",
            dimension_numbers=("NCHW", "OIHW", "NCHW"), precision=hi)
        return y + b.reshape(1, -1, 1, 1)

    def inorm(x):
        m = x.mean(axis=(2, 3), keepdims=True)
        v = ((x - m) ** 2).mean(axis=(2, 3), keepdims=True)   # biased variance
        return (x - m) * jax.lax.rsqrt(v + eps)

    h = inorm(jax.nn.relu(conv(x, p["conv1_w"], p["conv1_b"], 4)))
    h = inorm(jax.nn.relu(conv(h, p["conv2_w"], p["conv2_b"], 2)))
    h = inorm(jax.nn.relu(conv(h, p["conv3_w"], p["conv3_b"], 1)))
    h = h.reshape(h.shape[0], -1)
    h = jax.nn.relu(jnp.dot(h, p["fc_w"], precision=hi) + p["fc_b"])
    return jnp.tanh(jnp.dot(h, p["fc2_w"], precision=hi) + p["fc2_b"])


if __name__ == "__main__":
    key = jax.random.PRNGKey(0)
    k_param, k_x = jax.random.split(key)

    n_actions = 2  # len(action_space_high)
    params = init_actor_params(k_param, n_actions)
    prep = prepare_actor_params(params)

    # Spatial size is dictated by fc = Linear(64*9*9, 512): input must be 100x100.
    x = jax.random.normal(k_x, (2, 4, 100, 100), dtype=jnp.float32)

    out = actor_forward(prep, x, n_actions=n_actions)
    out = jax.block_until_ready(out)

    assert out.shape == (2, n_actions)
    assert bool(jnp.all(jnp.isfinite(out)))
    assert bool(jnp.all(jnp.abs(out) <= 1.0))

    ref = reference_forward(params, x)
    max_diff = float(jnp.max(jnp.abs(out - ref)))
    assert max_diff < 8e-2, f"kernel vs reference max|diff| = {max_diff}"

    print("KERNEL_OK")
</pallas_src>

<mosaic_0001>
module attributes {stable_mosaic.version = 11 : i64} {
  func.func @_conv_relu_inorm_kernel(%arg0: i32, %arg1: memref<1x576x256xf32, #tpu.memory_space<vmem>>, %arg2: memref<256x32xbf16, #tpu.memory_space<vmem>>, %arg3: memref<1x32xf32, #tpu.memory_space<vmem>>, %arg4: memref<1x576x32xf32, #tpu.memory_space<vmem>>) attributes {dimension_semantics = [#tpu.dimension_semantics<parallel>], iteration_bounds = array<i64: 2>, scalar_prefetch = 0 : i64, scratch_operands = 0 : i64, tpu.core_type = #tpu.core_type<tc>, window_params = [{transform_indices = @transform_0, window_bounds = array<i64: 1, 576, 256>}, {pipeline_mode = #tpu.pipeline_mode<synchronous>, transform_indices = @transform_1, window_bounds = array<i64: 256, 32>}, {pipeline_mode = #tpu.pipeline_mode<synchronous>, transform_indices = @transform_2, window_bounds = array<i64: 1, 32>}, {transform_indices = @transform_3, window_bounds = array<i64: 1, 576, 32>}]} {
    %c0 = arith.constant 0 : index
    %c0_0 = arith.constant 0 : index
    %c0_1 = arith.constant 0 : index
    %0 = vector.load %arg1[%c0, %c0_0, %c0_1] : memref<1x576x256xf32, #tpu.memory_space<vmem>>, vector<1x576x256xf32>
    %1 = vector.shape_cast %0 : vector<1x576x256xf32> to vector<576x256xf32>
    %2 = arith.truncf %1 : vector<576x256xf32> to vector<576x256xbf16>
    %c0_2 = arith.constant 0 : index
    %c0_3 = arith.constant 0 : index
    %3 = vector.load %arg2[%c0_2, %c0_3] : memref<256x32xbf16, #tpu.memory_space<vmem>>, vector<256x32xbf16>
    %cst = arith.constant dense<0.000000e+00> : vector<576x32xf32>
    %4 = tpu.matmul %2, %3, %cst {dimension_numbers = #tpu.dot_dimension_numbers<[1], [0], [0], [1], [0, 0, 1, 1], [], []>} : vector<576x256xbf16>, vector<256x32xbf16>, vector<576x32xf32> -> vector<576x32xf32>
    %c0_4 = arith.constant 0 : index
    %c0_5 = arith.constant 0 : index
    %5 = vector.load %arg3[%c0_4, %c0_5] : memref<1x32xf32, #tpu.memory_space<vmem>>, vector<1x32xf32>
    %6 = vector.broadcast %5 : vector<1x32xf32> to vector<576x32xf32>
    %7 = arith.addf %4, %6 : vector<576x32xf32>
    %cst_6 = arith.constant 0.000000e+00 : f32
    %8 = vector.broadcast %cst_6 : f32 to vector<576x32xf32>
    %9 = arith.maximumf %7, %8 : vector<576x32xf32>
    %cst_7 = arith.constant dense<0.000000e+00> : vector<32xf32>
    %10 = vector.multi_reduction <add>, %9, %cst_7 [0] : vector<576x32xf32> to vector<32xf32>
    %11 = vector.shape_cast %10 : vector<32xf32> to vector<1x32xf32>
    %cst_8 = arith.constant 0.00173611112 : f32
    %12 = vector.broadcast %cst_8 : f32 to vector<1x32xf32>
    %13 = arith.mulf %11, %12 : vector<1x32xf32>
    %14 = vector.broadcast %13 : vector<1x32xf32> to vector<576x32xf32>
    %15 = arith.subf %9, %14 : vector<576x32xf32>
    %16 = arith.mulf %15, %15 : vector<576x32xf32>
    %cst_9 = arith.constant dense<0.000000e+00> : vector<32xf32>
    %17 = vector.multi_reduction <add>, %16, %cst_9 [0] : vector<576x32xf32> to vector<32xf32>
    %18 = vector.shape_cast %17 : vector<32xf32> to vector<1x32xf32>
    %cst_10 = arith.constant 0.00173611112 : f32
    %19 = vector.broadcast %cst_10 : f32 to vector<1x32xf32>
    %20 = arith.mulf %18, %19 : vector<1x32xf32>
    %cst_11 = arith.constant 9.99999974E-6 : f32
    %21 = vector.broadcast %cst_11 : f32 to vector<1x32xf32>
    %22 = arith.addf %20, %21 : vector<1x32xf32>
    %23 = math.rsqrt %22 : vector<1x32xf32>
    %24 = vector.broadcast %23 : vector<1x32xf32> to vector<576x32xf32>
    %25 = arith.mulf %15, %24 : vector<576x32xf32>
    %c0_12 = arith.constant 0 : index
    %c0_13 = arith.constant 0 : index
    %c0_14 = arith.constant 0 : index
    %26 = vector.load %arg4[%c0_12, %c0_13, %c0_14] : memref<1x576x32xf32, #tpu.memory_space<vmem>>, vector<1x576x32xf32>
    %27 = vector.shape_cast %26 : vector<1x576x32xf32> to vector<576x32xf32>
    %28 = vector.shape_cast %25 : vector<576x32xf32> to vector<1x576x32xf32>
    tpu.vector_store %arg4[%c0_12, %c0_13, %c0_14], %28 {strides = array<i32>} : memref<1x576x32xf32, #tpu.memory_space<vmem>>, vector<1x576x32xf32>,
    return
  }
  func.func @transform_0(%arg0: i32) -> (i32, i32, i32) {
    %c0_i32 = arith.constant 0 : i32
    %c0_i32_0 = arith.constant 0 : i32
    %c0_i32_1 = arith.constant 0 : i32
    return %arg0, %c0_i32, %c0_i32_0 : i32, i32, i32
  }
  func.func @transform_1(%arg0: i32) -> (i32, i32) {
    %c0_i32 = arith.constant 0 : i32
    %c0_i32_0 = arith.constant 0 : i32
    %c0_i32_1 = arith.constant 0 : i32
    return %c0_i32, %c0_i32_0 : i32, i32
  }
  func.func @transform_2(%arg0: i32) -> (i32, i32) {
    %c0_i32 = arith.constant 0 : i32
    %c0_i32_0 = arith.constant 0 : i32
    %c0_i32_1 = arith.constant 0 : i32
    return %c0_i32, %c0_i32_0 : i32, i32
  }
  func.func @transform_3(%arg0: i32) -> (i32, i32, i32) {
    %c0_i32 = arith.constant 0 : i32
    %c0_i32_0 = arith.constant 0 : i32
    %c0_i32_1 = arith.constant 0 : i32
    return %arg0, %c0_i32, %c0_i32_0 : i32, i32, i32
  }
}

module attributes {stable_mosaic.version = 11 : i64} {
  func.func @_conv_relu_inorm_kernel(%arg0: i32, %arg1: memref<1x121x512xf32, #tpu.memory_space<vmem>>, %arg2: memref<512x64xbf16, #tpu.memory_space<vmem>>, %arg3: memref<1x64xf32, #tpu.memory_space<vmem>>, %arg4: memref<1x121x64xf32, #tpu.memory_space<vmem>>) attributes {dimension_semantics = [#tpu.dimension_semantics<parallel>], iteration_bounds = array<i64: 2>, scalar_prefetch = 0 : i64, scratch_operands = 0 : i64, tpu.core_type = #tpu.core_type<tc>, window_params = [{transform_indices = @transform_0, window_bounds = array<i64: 1, 121, 512>}, {pipeline_mode = #tpu.pipeline_mode<synchronous>, transform_indices = @transform_1, window_bounds = array<i64: 512, 64>}, {pipeline_mode = #tpu.pipeline_mode<synchronous>, transform_indices = @transform_2, window_bounds = array<i64: 1, 64>}, {transform_indices = @transform_3, window_bounds = array<i64: 1, 121, 64>}]} {
    %c0 = arith.constant 0 : index
    %c0_0 = arith.constant 0 : index
    %c0_1 = arith.constant 0 : index
    %0 = vector.load %arg1[%c0, %c0_0, %c0_1] : memref<1x121x512xf32, #tpu.memory_space<vmem>>, vector<1x121x512xf32>
    %1 = vector.shape_cast %0 : vector<1x121x512xf32> to vector<121x512xf32>
    %2 = arith.truncf %1 : vector<121x512xf32> to vector<121x512xbf16>
    %c0_2 = arith.constant 0 : index
    %c0_3 = arith.constant 0 : index
    %3 = vector.load %arg2[%c0_2, %c0_3] : memref<512x64xbf16, #tpu.memory_space<vmem>>, vector<512x64xbf16>
    %cst = arith.constant dense<0.000000e+00> : vector<121x64xf32>
    %4 = tpu.matmul %2, %3, %cst {dimension_numbers = #tpu.dot_dimension_numbers<[1], [0], [0], [1], [0, 0, 1, 1], [], []>} : vector<121x512xbf16>, vector<512x64xbf16>, vector<121x64xf32> -> vector<121x64xf32>
    %c0_4 = arith.constant 0 : index
    %c0_5 = arith.constant 0 : index
    %5 = vector.load %arg3[%c0_4, %c0_5] : memref<1x64xf32, #tpu.memory_space<vmem>>, vector<1x64xf32>
    %6 = vector.broadcast %5 : vector<1x64xf32> to vector<121x64xf32>
    %7 = arith.addf %4, %6 : vector<121x64xf32>
    %cst_6 = arith.constant 0.000000e+00 : f32
    %8 = vector.broadcast %cst_6 : f32 to vector<121x64xf32>
    %9 = arith.maximumf %7, %8 : vector<121x64xf32>
    %cst_7 = arith.constant dense<0.000000e+00> : vector<64xf32>
    %10 = vector.multi_reduction <add>, %9, %cst_7 [0] : vector<121x64xf32> to vector<64xf32>
    %11 = vector.shape_cast %10 : vector<64xf32> to vector<1x64xf32>
    %cst_8 = arith.constant 0.00826446246 : f32
    %12 = vector.broadcast %cst_8 : f32 to vector<1x64xf32>
    %13 = arith.mulf %11, %12 : vector<1x64xf32>
    %14 = vector.broadcast %13 : vector<1x64xf32> to vector<121x64xf32>
    %15 = arith.subf %9, %14 : vector<121x64xf32>
    %16 = arith.mulf %15, %15 : vector<121x64xf32>
    %cst_9 = arith.constant dense<0.000000e+00> : vector<64xf32>
    %17 = vector.multi_reduction <add>, %16, %cst_9 [0] : vector<121x64xf32> to vector<64xf32>
    %18 = vector.shape_cast %17 : vector<64xf32> to vector<1x64xf32>
    %cst_10 = arith.constant 0.00826446246 : f32
    %19 = vector.broadcast %cst_10 : f32 to vector<1x64xf32>
    %20 = arith.mulf %18, %19 : vector<1x64xf32>
    %cst_11 = arith.constant 9.99999974E-6 : f32
    %21 = vector.broadcast %cst_11 : f32 to vector<1x64xf32>
    %22 = arith.addf %20, %21 : vector<1x64xf32>
    %23 = math.rsqrt %22 : vector<1x64xf32>
    %24 = vector.broadcast %23 : vector<1x64xf32> to vector<121x64xf32>
    %25 = arith.mulf %15, %24 : vector<121x64xf32>
    %c0_12 = arith.constant 0 : index
    %c0_13 = arith.constant 0 : index
    %c0_14 = arith.constant 0 : index
    %26 = vector.load %arg4[%c0_12, %c0_13, %c0_14] : memref<1x121x64xf32, #tpu.memory_space<vmem>>, vector<1x121x64xf32>
    %27 = vector.shape_cast %26 : vector<1x121x64xf32> to vector<121x64xf32>
    %28 = vector.shape_cast %25 : vector<121x64xf32> to vector<1x121x64xf32>
    tpu.vector_store %arg4[%c0_12, %c0_13, %c0_14], %28 {strides = array<i32>} : memref<1x121x64xf32, #tpu.memory_space<vmem>>, vector<1x121x64xf32>,
    return
  }
  func.func @transform_0(%arg0: i32) -> (i32, i32, i32) {
    %c0_i32 = arith.constant 0 : i32
    %c0_i32_0 = arith.constant 0 : i32
    %c0_i32_1 = arith.constant 0 : i32
    return %arg0, %c0_i32, %c0_i32_0 : i32, i32, i32
  }
  func.func @transform_1(%arg0: i32) -> (i32, i32) {
    %c0_i32 = arith.constant 0 : i32
    %c0_i32_0 = arith.constant 0 : i32
    %c0_i32_1 = arith.constant 0 : i32
    return %c0_i32, %c0_i32_0 : i32, i32
  }
  func.func @transform_2(%arg0: i32) -> (i32, i32) {
    %c0_i32 = arith.constant 0 : i32
    %c0_i32_0 = arith.constant 0 : i32
    %c0_i32_1 = arith.constant 0 : i32
    return %c0_i32, %c0_i32_0 : i32, i32
  }
  func.func @transform_3(%arg0: i32) -> (i32, i32, i32) {
    %c0_i32 = arith.constant 0 : i32
    %c0_i32_0 = arith.constant 0 : i32
    %c0_i32_1 = arith.constant 0 : i32
    return %arg0, %c0_i32, %c0_i32_0 : i32, i32, i32
  }
}

module attributes {stable_mosaic.version = 11 : i64} {
  func.func @_conv_relu_inorm_kernel(%arg0: i32, %arg1: memref<1x81x576xf32, #tpu.memory_space<vmem>>, %arg2: memref<576x64xbf16, #tpu.memory_space<vmem>>, %arg3: memref<1x64xf32, #tpu.memory_space<vmem>>, %arg4: memref<1x81x64xf32, #tpu.memory_space<vmem>>) attributes {dimension_semantics = [#tpu.dimension_semantics<parallel>], iteration_bounds = array<i64: 2>, scalar_prefetch = 0 : i64, scratch_operands = 0 : i64, tpu.core_type = #tpu.core_type<tc>, window_params = [{transform_indices = @transform_0, window_bounds = array<i64: 1, 81, 576>}, {pipeline_mode = #tpu.pipeline_mode<synchronous>, transform_indices = @transform_1, window_bounds = array<i64: 576, 64>}, {pipeline_mode = #tpu.pipeline_mode<synchronous>, transform_indices = @transform_2, window_bounds = array<i64: 1, 64>}, {transform_indices = @transform_3, window_bounds = array<i64: 1, 81, 64>}]} {
    %c0 = arith.constant 0 : index
    %c0_0 = arith.constant 0 : index
    %c0_1 = arith.constant 0 : index
    %0 = vector.load %arg1[%c0, %c0_0, %c0_1] : memref<1x81x576xf32, #tpu.memory_space<vmem>>, vector<1x81x576xf32>
    %1 = vector.shape_cast %0 : vector<1x81x576xf32> to vector<81x576xf32>
    %2 = arith.truncf %1 : vector<81x576xf32> to vector<81x576xbf16>
    %c0_2 = arith.constant 0 : index
    %c0_3 = arith.constant 0 : index
    %3 = vector.load %arg2[%c0_2, %c0_3] : memref<576x64xbf16, #tpu.memory_space<vmem>>, vector<576x64xbf16>
    %cst = arith.constant dense<0.000000e+00> : vector<81x64xf32>
    %4 = tpu.matmul %2, %3, %cst {dimension_numbers = #tpu.dot_dimension_numbers<[1], [0], [0], [1], [0, 0, 1, 1], [], []>} : vector<81x576xbf16>, vector<576x64xbf16>, vector<81x64xf32> -> vector<81x64xf32>
    %c0_4 = arith.constant 0 : index
    %c0_5 = arith.constant 0 : index
    %5 = vector.load %arg3[%c0_4, %c0_5] : memref<1x64xf32, #tpu.memory_space<vmem>>, vector<1x64xf32>
    %6 = vector.broadcast %5 : vector<1x64xf32> to vector<81x64xf32>
    %7 = arith.addf %4, %6 : vector<81x64xf32>
    %cst_6 = arith.constant 0.000000e+00 : f32
    %8 = vector.broadcast %cst_6 : f32 to vector<81x64xf32>
    %9 = arith.maximumf %7, %8 : vector<81x64xf32>
    %cst_7 = arith.constant dense<0.000000e+00> : vector<64xf32>
    %10 = vector.multi_reduction <add>, %9, %cst_7 [0] : vector<81x64xf32> to vector<64xf32>
    %11 = vector.shape_cast %10 : vector<64xf32> to vector<1x64xf32>
    %cst_8 = arith.constant 0.0123456791 : f32
    %12 = vector.broadcast %cst_8 : f32 to vector<1x64xf32>
    %13 = arith.mulf %11, %12 : vector<1x64xf32>
    %14 = vector.broadcast %13 : vector<1x64xf32> to vector<81x64xf32>
    %15 = arith.subf %9, %14 : vector<81x64xf32>
    %16 = arith.mulf %15, %15 : vector<81x64xf32>
    %cst_9 = arith.constant dense<0.000000e+00> : vector<64xf32>
    %17 = vector.multi_reduction <add>, %16, %cst_9 [0] : vector<81x64xf32> to vector<64xf32>
    %18 = vector.shape_cast %17 : vector<64xf32> to vector<1x64xf32>
    %cst_10 = arith.constant 0.0123456791 : f32
    %19 = vector.broadcast %cst_10 : f32 to vector<1x64xf32>
    %20 = arith.mulf %18, %19 : vector<1x64xf32>
    %cst_11 = arith.constant 9.99999974E-6 : f32
    %21 = vector.broadcast %cst_11 : f32 to vector<1x64xf32>
    %22 = arith.addf %20, %21 : vector<1x64xf32>
    %23 = math.rsqrt %22 : vector<1x64xf32>
    %24 = vector.broadcast %23 : vector<1x64xf32> to vector<81x64xf32>
    %25 = arith.mulf %15, %24 : vector<81x64xf32>
    %c0_12 = arith.constant 0 : index
    %c0_13 = arith.constant 0 : index
    %c0_14 = arith.constant 0 : index
    %26 = vector.load %arg4[%c0_12, %c0_13, %c0_14] : memref<1x81x64xf32, #tpu.memory_space<vmem>>, vector<1x81x64xf32>
    %27 = vector.shape_cast %26 : vector<1x81x64xf32> to vector<81x64xf32>
    %28 = vector.shape_cast %25 : vector<81x64xf32> to vector<1x81x64xf32>
    tpu.vector_store %arg4[%c0_12, %c0_13, %c0_14], %28 {strides = array<i32>} : memref<1x81x64xf32, #tpu.memory_space<vmem>>, vector<1x81x64xf32>,
    return
  }
  func.func @transform_0(%arg0: i32) -> (i32, i32, i32) {
    %c0_i32 = arith.constant 0 : i32
    %c0_i32_0 = arith.constant 0 : i32
    %c0_i32_1 = arith.constant 0 : i32
    return %arg0, %c0_i32, %c0_i32_0 : i32, i32, i32
  }
  func.func @transform_1(%arg0: i32) -> (i32, i32) {
    %c0_i32 = arith.constant 0 : i32
    %c0_i32_0 = arith.constant 0 : i32
    %c0_i32_1 = arith.constant 0 : i32
    return %c0_i32, %c0_i32_0 : i32, i32
  }
  func.func @transform_2(%arg0: i32) -> (i32, i32) {
    %c0_i32 = arith.constant 0 : i32
    %c0_i32_0 = arith.constant 0 : i32
    %c0_i32_1 = arith.constant 0 : i32
    return %c0_i32, %c0_i32_0 : i32, i32
  }
  func.func @transform_3(%arg0: i32) -> (i32, i32, i32) {
    %c0_i32 = arith.constant 0 : i32
    %c0_i32_0 = arith.constant 0 : i32
    %c0_i32_1 = arith.constant 0 : i32
    return %arg0, %c0_i32, %c0_i32_0 : i32, i32, i32
  }
}

module attributes {stable_mosaic.version = 11 : i64} {
  func.func @_fc_head_kernel(%arg0: i32, %arg1: memref<8x1792xf32, #tpu.memory_space<vmem>>, %arg2: memref<1792x512xbf16, #tpu.memory_space<vmem>>, %arg3: memref<1x512xf32, #tpu.memory_space<vmem>>, %arg4: memref<512x128xbf16, #tpu.memory_space<vmem>>, %arg5: memref<1x128xf32, #tpu.memory_space<vmem>>, %arg6: memref<8x128xf32, #tpu.memory_space<vmem>>, %arg7: memref<8x512xf32, #tpu.memory_space<vmem>>) attributes {dimension_semantics = [#tpu.dimension_semantics<arbitrary>], iteration_bounds = array<i64: 3>, scalar_prefetch = 0 : i64, scratch_operands = 1 : i64, tpu.core_type = #tpu.core_type<tc>, window_params = [{transform_indices = @transform_0, window_bounds = array<i64: 8, 1792>}, {transform_indices = @transform_1, window_bounds = array<i64: 1792, 512>}, {pipeline_mode = #tpu.pipeline_mode<synchronous>, transform_indices = @transform_2, window_bounds = array<i64: 1, 512>}, {pipeline_mode = #tpu.pipeline_mode<synchronous>, transform_indices = @transform_3, window_bounds = array<i64: 512, 128>}, {pipeline_mode = #tpu.pipeline_mode<synchronous>, transform_indices = @transform_4, window_bounds = array<i64: 1, 128>}, {pipeline_mode = #tpu.pipeline_mode<synchronous>, transform_indices = @transform_5, window_bounds = array<i64: 8, 128>}]} {
    %c0_i32 = arith.constant 0 : i32
    %0 = arith.cmpi eq, %arg0, %c0_i32 : i32
    %1 = arith.extui %0 : i1 to i32
    %c0_i32_0 = arith.constant 0 : i32
    %2 = arith.cmpi ne, %1, %c0_i32_0 : i32
    scf.if %2 {
      %cst_9 = arith.constant 0.000000e+00 : f32
      %13 = vector.broadcast %cst_9 : f32 to vector<8x512xf32>
      %c0_10 = arith.constant 0 : index
      %c0_11 = arith.constant 0 : index
      %14 = vector.load %arg7[%c0_10, %c0_11] : memref<8x512xf32, #tpu.memory_space<vmem>>, vector<8x512xf32>
      tpu.vector_store %arg7[%c0_10, %c0_11], %13 {strides = array<i32>} : memref<8x512xf32, #tpu.memory_space<vmem>>, vector<8x512xf32>,
    } else {
    }
    %c0 = arith.constant 0 : index
    %c0_1 = arith.constant 0 : index
    %3 = vector.load %arg7[%c0, %c0_1] : memref<8x512xf32, #tpu.memory_space<vmem>>, vector<8x512xf32>
    %c0_2 = arith.constant 0 : index
    %c0_3 = arith.constant 0 : index
    %4 = vector.load %arg1[%c0_2, %c0_3] : memref<8x1792xf32, #tpu.memory_space<vmem>>, vector<8x1792xf32>
    %5 = arith.truncf %4 : vector<8x1792xf32> to vector<8x1792xbf16>
    %c0_4 = arith.constant 0 : index
    %c0_5 = arith.constant 0 : index
    %6 = vector.load %arg2[%c0_4, %c0_5] : memref<1792x512xbf16, #tpu.memory_space<vmem>>, vector<1792x512xbf16>
    %cst = arith.constant dense<0.000000e+00> : vector<8x512xf32>
    %7 = tpu.matmul %5, %6, %cst {dimension_numbers = #tpu.dot_dimension_numbers<[1], [0], [0], [1], [0, 0, 1, 1], [], []>} : vector<8x1792xbf16>, vector<1792x512xbf16>, vector<8x512xf32> -> vector<8x512xf32>
    %8 = arith.addf %3, %7 : vector<8x512xf32>
    %c0_6 = arith.constant 0 : index
    %c0_7 = arith.constant 0 : index
    %9 = vector.load %arg7[%c0_6, %c0_7] : memref<8x512xf32, #tpu.memory_space<vmem>>, vector<8x512xf32>
    tpu.vector_store %arg7[%c0_6, %c0_7], %8 {strides = array<i32>} : memref<8x512xf32, #tpu.memory_space<vmem>>, vector<8x512xf32>,
    %c2_i32 = arith.constant 2 : i32
    %10 = arith.cmpi eq, %arg0, %c2_i32 : i32
    %11 = arith.extui %10 : i1 to i32
    %c0_i32_8 = arith.constant 0 : i32
    %12 = arith.cmpi ne, %11, %c0_i32_8 : i32
    scf.if %12 {
      %c0_9 = arith.constant 0 : index
      %c0_10 = arith.constant 0 : index
      %13 = vector.load %arg7[%c0_9, %c0_10] : memref<8x512xf32, #tpu.memory_space<vmem>>, vector<8x512xf32>
      %c0_11 = arith.constant 0 : index
      %c0_12 = arith.constant 0 : index
      %14 = vector.load %arg3[%c0_11, %c0_12] : memref<1x512xf32, #tpu.memory_space<vmem>>, vector<1x512xf32>
      %15 = vector.broadcast %14 : vector<1x512xf32> to vector<8x512xf32>
      %16 = arith.addf %13, %15 : vector<8x512xf32>
      %cst_13 = arith.constant 0.000000e+00 : f32
      %17 = vector.broadcast %cst_13 : f32 to vector<8x512xf32>
      %18 = arith.maximumf %16, %17 : vector<8x512xf32>
      %19 = arith.truncf %18 : vector<8x512xf32> to vector<8x512xbf16>
      %c0_14 = arith.constant 0 : index
      %c0_15 = arith.constant 0 : index
      %20 = vector.load %arg4[%c0_14, %c0_15] : memref<512x128xbf16, #tpu.memory_space<vmem>>, vector<512x128xbf16>
      %cst_16 = arith.constant dense<0.000000e+00> : vector<8x128xf32>
      %21 = tpu.matmul %19, %20, %cst_16 {dimension_numbers = #tpu.dot_dimension_numbers<[1], [0], [0], [1], [0, 0, 1, 1], [], []>} : vector<8x512xbf16>, vector<512x128xbf16>, vector<8x128xf32> -> vector<8x128xf32>
      %c0_17 = arith.constant 0 : index
      %c0_18 = arith.constant 0 : index
      %22 = vector.load %arg5[%c0_17, %c0_18] : memref<1x128xf32, #tpu.memory_space<vmem>>, vector<1x128xf32>
      %23 = vector.broadcast %22 : vector<1x128xf32> to vector<8x128xf32>
      %24 = arith.addf %21, %23 : vector<8x128xf32>
      %25 = math.tanh %24 : vector<8x128xf32>
      %c0_19 = arith.constant 0 : index
      %c0_20 = arith.constant 0 : index
      %26 = vector.load %arg6[%c0_19, %c0_20] : memref<8x128xf32, #tpu.memory_space<vmem>>, vector<8x128xf32>
      tpu.vector_store %arg6[%c0_19, %c0_20], %25 {strides = array<i32>} : memref<8x128xf32, #tpu.memory_space<vmem>>, vector<8x128xf32>,
    } else {
    }
    return
  }
  func.func @transform_0(%arg0: i32) -> (i32, i32) {
    %c0_i32 = arith.constant 0 : i32
    %c0_i32_0 = arith.constant 0 : i32
    return %c0_i32, %arg0 : i32, i32
  }
  func.func @transform_1(%arg0: i32) -> (i32, i32) {
    %c0_i32 = arith.constant 0 : i32
    %c0_i32_0 = arith.constant 0 : i32
    return %arg0, %c0_i32 : i32, i32
  }
  func.func @transform_2(%arg0: i32) -> (i32, i32) {
    %c0_i32 = arith.constant 0 : i32
    %c0_i32_0 = arith.constant 0 : i32
    %c0_i32_1 = arith.constant 0 : i32
    return %c0_i32, %c0_i32_0 : i32, i32
  }
  func.func @transform_3(%arg0: i32) -> (i32, i32) {
    %c0_i32 = arith.constant 0 : i32
    %c0_i32_0 = arith.constant 0 : i32
    %c0_i32_1 = arith.constant 0 : i32
    return %c0_i32, %c0_i32_0 : i32, i32
  }
  func.func @transform_4(%arg0: i32) -> (i32, i32) {
    %c0_i32 = arith.constant 0 : i32
    %c0_i32_0 = arith.constant 0 : i32
    %c0_i32_1 = arith.constant 0 : i32
    return %c0_i32, %c0_i32_0 : i32, i32
  }
  func.func @transform_5(%arg0: i32) -> (i32, i32) {
    %c0_i32 = arith.constant 0 : i32
    %c0_i32_0 = arith.constant 0 : i32
    %c0_i32_1 = arith.constant 0 : i32
    return %c0_i32, %c0_i32_0 : i32, i32
  }
}

</mosaic_0001>

<llo_original>
// kernel: actor_forward.4
$region0: #{actor_forward.4}
  #allocation0 [shape = 'u32[]', space=smem, size = 0x4, offset = 0x4, fixed_abs, tag = 'smem constant byte address 0x4 - core index']
  #allocation1 [shape = 'u32[144,128]{1,0:T(1,128)}', space=vmem, size = 0x12000, scoped, tag = 'internal scratch']
  %s0 = inlined_call_operand.vmem [shape: f32[2,576,256], index: 0, kind: input, shape index: {}]
  %s1 = inlined_call_operand.vmem [shape: bf16[256,32], index: 1, kind: input, shape index: {}]
  %s2 = inlined_call_operand.vmem [shape: f32[1,32], index: 2, kind: input, shape index: {}]
  %s3 = inlined_call_operand.vmem [shape: f32[2,576,32], index: 3, kind: output, shape index: {}]
  %s4 = sld [smem:[#allocation0]]
  $region45: #{actor_forward.4} parent=0
    _
  %s6 = ssub.s32 1, %s4
  %s7 = scalar_select 0, %s6, %s4
  loop: start=0, step=1, limit=4
  $region2: #{actor_forward.4} parent=0 // loop_pre_header
    _
  $region3: #{actor_forward.4} parent=0 // loop_header
    %s9 = sphi 0, %s13
    %p10 = scmp.ge.s32.totalorder %s9, 4
    %s19 = sphi 0, %s21
    %s22 = sphi 0, %s19
    %s23 = sphi 0, %s22
    %s39 = sphi 0, %s23
    %s43 = sphi 0, %s43
    %s45 = sphi 0, %s43
    %s46 = sphi 0, %s45
    %s60 = sphi 0, %s46
    %s64 = sphi 0, %s64
    %s66 = sphi 0, %s64
    %s67 = sphi 0, %s66
    %s81 = sphi 0, %s67
    %s87 = sphi 0, %s89
    %s90 = sphi 0, %s87
    %s91 = sphi 0, %s90
    %s107 = sphi 0, %s91
  $region4: #{actor_forward.4} parent=0 // loop_header_branch
    %12 = sbr.rel (%p10) target = $region8
  $region5: #{actor_forward.4} parent=0 // loop_body
    %s14 = ssub.s32 %s9, 1
    %s15 = ssub.s32 %s9, 2
    %s16 = sadd.s32 %s9, 1
    %s17 = ssub.s32 %s9, %s16
    %p18 = scmp.eq.s32.totalorder %s17, 0
    %s20 = sadd.s32 %s19, 1
    %s21 = scalar_select %p18, %s19, %s20
    %p24 = pneg %p18
    %p25 = scmp.eq.s32.totalorder %s9, 1
    %p26 = por %p24, %p25
    %p27 = scmp.ne.s32.totalorder %s19, %s22
    %p28 = scmp.eq.s32.totalorder %s9, 0
    %p29 = por %p27, %p28
    %p30 = scmp.ne.s32.totalorder %s19, %s22
    %p31 = scmp.eq.s32.totalorder %s14, 1
    %p32 = por %p30, %p31
    %p33 = scmp.ne.s32.totalorder %s22, %s23
    %p34 = scmp.eq.s32.totalorder %s14, 0
    %p35 = por %p33, %p34
    %p36 = scmp.ne.s32.totalorder %s22, %s23
    %p37 = scmp.eq.s32.totalorder %s15, 1
    %p38 = por %p36, %p37
    %p40 = scmp.ne.s32.totalorder %s23, %s39
    %p41 = scmp.eq.s32.totalorder %s15, 0
    %p42 = por %p40, %p41
    %s44 = sadd.s32 %s43, 1
    %p47 = scmp.eq.s32.totalorder %s9, 1
    %p48 = scmp.ne.s32.totalorder %s43, %s45
    %p49 = scmp.eq.s32.totalorder %s9, 0
    %p50 = por %p48, %p49
    %p51 = scmp.ne.s32.totalorder %s43, %s45
    %p52 = scmp.eq.s32.totalorder %s14, 1
    %p53 = por %p51, %p52
    %p54 = scmp.ne.s32.totalorder %s45, %s46
    %p55 = scmp.eq.s32.totalorder %s14, 0
    %p56 = por %p54, %p55
    %p57 = scmp.ne.s32.totalorder %s45, %s46
    %p58 = scmp.eq.s32.totalorder %s15, 1
    %p59 = por %p57, %p58
    %p61 = scmp.ne.s32.totalorder %s46, %s60
    %p62 = scmp.eq.s32.totalorder %s15, 0
    %p63 = por %p61, %p62
    %s65 = sadd.s32 %s64, 1
    %p68 = scmp.eq.s32.totalorder %s9, 1
    %p69 = scmp.ne.s32.totalorder %s64, %s66
    %p70 = scmp.eq.s32.totalorder %s9, 0
    %p71 = por %p69, %p70
    %p72 = scmp.ne.s32.totalorder %s64, %s66
    %p73 = scmp.eq.s32.totalorder %s14, 1
    %p74 = por %p72, %p73
    %p75 = scmp.ne.s32.totalorder %s66, %s67
    %p76 = scmp.eq.s32.totalorder %s14, 0
    %p77 = por %p75, %p76
    %p78 = scmp.ne.s32.totalorder %s66, %s67
    %p79 = scmp.eq.s32.totalorder %s15, 1
    %p80 = por %p78, %p79
    %p82 = scmp.ne.s32.totalorder %s67, %s81
    %p83 = scmp.eq.s32.totalorder %s15, 0
    %p84 = por %p82, %p83
    %s85 = ssub.s32 %s9, %s16
    %p86 = scmp.eq.s32.totalorder %s85, 0
    %s88 = sadd.s32 %s87, 1
    %s89 = scalar_select %p86, %s87, %s88
    %p92 = pneg %p86
    %p93 = scmp.eq.s32.totalorder %s9, 1
    %p94 = por %p92, %p93
    %p95 = scmp.ne.s32.totalorder %s87, %s90
    %p96 = scmp.eq.s32.totalorder %s9, 0
    %p97 = por %p95, %p96
    %p98 = scmp.ne.s32.totalorder %s87, %s90
    %p99 = scmp.eq.s32.totalorder %s14, 1
    %p100 = por %p98, %p99
    %p101 = scmp.ne.s32.totalorder %s90, %s91
    %p102 = scmp.eq.s32.totalorder %s14, 0
    %p103 = por %p101, %p102
    %p104 = scmp.ne.s32.totalorder %s90, %s91
    %p105 = scmp.eq.s32.totalorder %s15, 1
    %p106 = por %p104, %p105
    %p108 = scmp.ne.s32.totalorder %s91, %s107
    %p109 = scmp.eq.s32.totalorder %s15, 0
    %p110 = por %p108, %p109
    %p111 = scmp.le.s32.totalorder 1, %s9
    %p112 = scmp.lt.s32.totalorder %s9, 3
    %p113 = pnand %p111, %p112
    %p114 = pneg %p113
    // Predicated region
    $region9: #{actor_forward.4} parent=5 // pred_check
      _
    $region10: #{actor_forward.4} parent=5 // pred_check_branch
      %116 = sbr.rel (%p113) target = $region12
    $region11: #{actor_forward.4} parent=5 // pred_region
      %s117 = ssub.s32 %s9, 1
      // Predicated region
      $region13: #{actor_forward.4} parent=11 // pred_check
        %p118 = pneg %p56
      $region14: #{actor_forward.4} parent=11 // pred_check_branch
        %120 = sbr.rel (%p118) target = $region16
      $region15: #{actor_forward.4} parent=11 // pred_region
        _
      $region16: #{actor_forward.4} parent=11 // pred_fallthru
        _
      // Predicated region
      $region17: #{actor_forward.4} parent=11 // pred_check
        %p121 = pneg %p77
      $region18: #{actor_forward.4} parent=11 // pred_check_branch
        %123 = sbr.rel (%p121) target = $region20
      $region19: #{actor_forward.4} parent=11 // pred_region
        _
      $region20: #{actor_forward.4} parent=11 // pred_fallthru
        _
    $region12: #{actor_forward.4} parent=5 // pred_fallthru
      _
    %p124 = scmp.lt.s32.totalorder %s9, 2
    // Predicated region
    $region21: #{actor_forward.4} parent=5 // pred_check
      %p125 = pneg %p124
    $region22: #{actor_forward.4} parent=5 // pred_check_branch
      %127 = sbr.rel (%p125) target = $region24
    $region23: #{actor_forward.4} parent=5 // pred_region
      // Predicated region
      $region25: #{actor_forward.4} parent=23 // pred_check
        %p128 = pneg %p29
      $region26: #{actor_forward.4} parent=23 // pred_check_branch
        %130 = sbr.rel (%p128) target = $region28
      $region27: #{actor_forward.4} parent=23 // pred_region
        %p131 = scmp.lt.s32.totalorder %s9, 1
        %s132 = scalar_select %p131, %s9, 1
        %s133 = smul.addr %s132, 144
        %s134 = smul.addr %s133, 8
        %s135 = scalar_lea.vmem %s0, %s134
      $region28: #{actor_forward.4} parent=23 // pred_fallthru
        _
    $region24: #{actor_forward.4} parent=5 // pred_fallthru
      _
    %p136 = scmp.le.s32.totalorder 1, %s9
    %p137 = scmp.lt.s32.totalorder %s9, 3
    %p138 = pnand %p136, %p137
    %p139 = pneg %p138
    // Predicated region
    $region29: #{actor_forward.4} parent=5 // pred_check
      _
    $region30: #{actor_forward.4} parent=5 // pred_check_branch
      %141 = sbr.rel (%p138) target = $region32
    $region31: #{actor_forward.4} parent=5 // pred_region
      %s142 = ssub.s32 %s9, 1
      %p143 = scmp.lt.s32.totalorder %s14, 1
      %s144 = scalar_select %p143, %s14, 1
      %s145 = smul.addr %s144, 144
      %s146 = smul.addr %s145, 8
      %s147 = scalar_lea.vmem %s0, %s146
      %p148 = pneg %p35
      %p149 = pneg %p32
      %p150 = pneg %p56
      %p151 = pneg %p53
      %p152 = pneg %p77
      %p153 = pneg %p74
      %p154 = pneg %p103
      %p155 = pneg %p100
      %p156 = scmp.lt.s32.totalorder %s14, 1
      %s157 = scalar_select %p156, %s14, 1
      %s158 = smul.addr %s157, 72
      %s159 = smul.addr %s158, 8
      %s160 = scalar_lea.vmem %s3, %s159
      %p161 = scmp.lt.s32.totalorder %s14, 1
      %s162 = scalar_select %p161, %s14, 1
      %s163 = smul.addr %s162, 144
      %s164 = smul.addr %s163, 8
      %s165 = scalar_lea.vmem %s0, %s164
      %p166 = scmp.lt.s32.totalorder %s14, 1
      %s167 = scalar_select %p166, %s14, 1
      %s168 = smul.addr %s167, 72
      %s169 = smul.addr %s168, 8
      %s170 = scalar_lea.vmem %s3, %s169
      %v172 = vld [vmem:[%s165] sm:$0xff]
      %v173 = vld [vmem:[%s165 + $0x8] sm:$0xff]
      %v174 = vld [vmem:[%s165 + $0x10] sm:$0xff]
      %v175 = vld [vmem:[%s165 + $0x18] sm:$0xff]
      %v176 = vld [vmem:[%s165 + $0x20] sm:$0xff]
      %v177 = vld [vmem:[%s165 + $0x28] sm:$0xff]
      %v178 = vld [vmem:[%s165 + $0x30] sm:$0xff]
      %v179 = vld [vmem:[%s165 + $0x38] sm:$0xff]
      %v180 = vld [vmem:[%s165 + $0x40] sm:$0xff]
      %v181 = vld [vmem:[%s165 + $0x48] sm:$0xff]
      %v182 = vld [vmem:[%s165 + $0x50] sm:$0xff]
      %v183 = vld [vmem:[%s165 + $0x58] sm:$0xff]
      %v184 = vld [vmem:[%s165 + $0x60] sm:$0xff]
      %v185 = vld [vmem:[%s165 + $0x68] sm:$0xff]
      %v186 = vld [vmem:[%s165 + $0x70] sm:$0xff]
      %v187 = vld [vmem:[%s165 + $0x78] sm:$0xff]
      %v188 = vld [vmem:[%s165 + $0x80] sm:$0xff]
      %v189 = vld [vmem:[%s165 + $0x88] sm:$0xff]
      %v190 = vld [vmem:[%s165 + $0x90] sm:$0xff]
      %v191 = vld [vmem:[%s165 + $0x98] sm:$0xff]
      %v192 = vld [vmem:[%s165 + $0xa0] sm:$0xff]
      %v193 = vld [vmem:[%s165 + $0xa8] sm:$0xff]
      %v194 = vld [vmem:[%s165 + $0xb0] sm:$0xff]
      %v195 = vld [vmem:[%s165 + $0xb8] sm:$0xff]
      %v196 = vld [vmem:[%s165 + $0xc0] sm:$0xff]
      %v197 = vld [vmem:[%s165 + $0xc8] sm:$0xff]
      %v198 = vld [vmem:[%s165 + $0xd0] sm:$0xff]
      %v199 = vld [vmem:[%s165 + $0xd8] sm:$0xff]
      %v200 = vld [vmem:[%s165 + $0xe0] sm:$0xff]
      %v201 = vld [vmem:[%s165 + $0xe8] sm:$0xff]
      %v202 = vld [vmem:[%s165 + $0xf0] sm:$0xff]
      %v203 = vld [vmem:[%s165 + $0xf8] sm:$0xff]
      %v204 = vld [vmem:[%s165 + $0x100] sm:$0xff]
      %v205 = vld [vmem:[%s165 + $0x108] sm:$0xff]
      %v206 = vld [vmem:[%s165 + $0x110] sm:$0xff]
      %v207 = vld [vmem:[%s165 + $0x118] sm:$0xff]
      %v208 = vld [vmem:[%s165 + $0x120] sm:$0xff]
      %v209 = vld [vmem:[%s165 + $0x128] sm:$0xff]
      %v210 = vld [vmem:[%s165 + $0x130] sm:$0xff]
      %v211 = vld [vmem:[%s165 + $0x138] sm:$0xff]
      %v212 = vld [vmem:[%s165 + $0x140] sm:$0xff]
      %v213 = vld [vmem:[%s165 + $0x148] sm:$0xff]
      %v214 = vld [vmem:[%s165 + $0x150] sm:$0xff]
      %v215 = vld [vmem:[%s165 + $0x158] sm:$0xff]
      %v216 = vld [vmem:[%s165 + $0x160] sm:$0xff]
      %v217 = vld [vmem:[%s165 + $0x168] sm:$0xff]
      %v218 = vld [vmem:[%s165 + $0x170] sm:$0xff]
      %v219 = vld [vmem:[%s165 + $0x178] sm:$0xff]
      %v220 = vld [vmem:[%s165 + $0x180] sm:$0xff]
      %v221 = vld [vmem:[%s165 + $0x188] sm:$0xff]
      %v222 = vld [vmem:[%s165 + $0x190] sm:$0xff]
      %v223 = vld [vmem:[%s165 + $0x198] sm:$0xff]
      %v224 = vld [vmem:[%s165 + $0x1a0] sm:$0xff]
      %v225 = vld [vmem:[%s165 + $0x1a8] sm:$0xff]
      %v226 = vld [vmem:[%s165 + $0x1b0] sm:$0xff]
      %v227 = vld [vmem:[%s165 + $0x1b8] sm:$0xff]
      %v228 = vld [vmem:[%s165 + $0x1c0] sm:$0xff]
      %v229 = vld [vmem:[%s165 + $0x1c8] sm:$0xff]
      %v230 = vld [vmem:[%s165 + $0x1d0] sm:$0xff]
      %v231 = vld [vmem:[%s165 + $0x1d8] sm:$0xff]
      %v232 = vld [vmem:[%s165 + $0x1e0] sm:$0xff]
      %v233 = vld [vmem:[%s165 + $0x1e8] sm:$0xff]
      %v234 = vld [vmem:[%s165 + $0x1f0] sm:$0xff]
      %v235 = vld [vmem:[%s165 + $0x1f8] sm:$0xff]
      %v236 = vld [vmem:[%s165 + $0x200] sm:$0xff]
      %v237 = vld [vmem:[%s165 + $0x208] sm:$0xff]
      %v238 = vld [vmem:[%s165 + $0x210] sm:$0xff]
      %v239 = vld [vmem:[%s165 + $0x218] sm:$0xff]
      %v240 = vld [vmem:[%s165 + $0x220] sm:$0xff]
      %v241 = vld [vmem:[%s165 + $0x228] sm:$0xff]
      %v242 = vld [vmem:[%s165 + $0x230] sm:$0xff]
      %v243 = vld [vmem:[%s165 + $0x238] sm:$0xff]
      %v244 = vld [vmem:[%s165 + $0x240] sm:$0xff]
      %v245 = vld [vmem:[%s165 + $0x248] sm:$0xff]
      %v246 = vld [vmem:[%s165 + $0x250] sm:$0xff]
      %v247 = vld [vmem:[%s165 + $0x258] sm:$0xff]
      %v248 = vld [vmem:[%s165 + $0x260] sm:$0xff]
      %v249 = vld [vmem:[%s165 + $0x268] sm:$0xff]
      %v250 = vld [vmem:[%s165 + $0x270] sm:$0xff]
      %v251 = vld [vmem:[%s165 + $0x278] sm:$0xff]
      %v252 = vld [vmem:[%s165 + $0x280] sm:$0xff]
      %v253 = vld [vmem:[%s165 + $0x288] sm:$0xff]
      %v254 = vld [vmem:[%s165 + $0x290] sm:$0xff]
      %v255 = vld [vmem:[%s165 + $0x298] sm:$0xff]
      %v256 = vld [vmem:[%s165 + $0x2a0] sm:$0xff]
      %v257 = vld [vmem:[%s165 + $0x2a8] sm:$0xff]
      %v258 = vld [vmem:[%s165 + $0x2b0] sm:$0xff]
      %v259 = vld [vmem:[%s165 + $0x2b8] sm:$0xff]
      %v260 = vld [vmem:[%s165 + $0x2c0] sm:$0xff]
      %v261 = vld [vmem:[%s165 + $0x2c8] sm:$0xff]
      %v262 = vld [vmem:[%s165 + $0x2d0] sm:$0xff]
      %v263 = vld [vmem:[%s165 + $0x2d8] sm:$0xff]
      %v264 = vld [vmem:[%s165 + $0x2e0] sm:$0xff]
      %v265 = vld [vmem:[%s165 + $0x2e8] sm:$0xff]
      %v266 = vld [vmem:[%s165 + $0x2f0] sm:$0xff]
      %v267 = vld [vmem:[%s165 + $0x2f8] sm:$0xff]
      %v268 = vld [vmem:[%s165 + $0x300] sm:$0xff]
      %v269 = vld [vmem:[%s165 + $0x308] sm:$0xff]
      %v270 = vld [vmem:[%s165 + $0x310] sm:$0xff]
      %v271 = vld [vmem:[%s165 + $0x318] sm:$0xff]
      %v272 = vld [vmem:[%s165 + $0x320] sm:$0xff]
      %v273 = vld [vmem:[%s165 + $0x328] sm:$0xff]
      %v274 = vld [vmem:[%s165 + $0x330] sm:$0xff]
      %v275 = vld [vmem:[%s165 + $0x338] sm:$0xff]
      %v276 = vld [vmem:[%s165 + $0x340] sm:$0xff]
      %v277 = vld [vmem:[%s165 + $0x348] sm:$0xff]
      %v278 = vld [vmem:[%s165 + $0x350] sm:$0xff]
      %v279 = vld [vmem:[%s165 + $0x358] sm:$0xff]
      %v280 = vld [vmem:[%s165 + $0x360] sm:$0xff]
      %v281 = vld [vmem:[%s165 + $0x368] sm:$0xff]
      %v282 = vld [vmem:[%s165 + $0x370] sm:$0xff]
      %v283 = vld [vmem:[%s165 + $0x378] sm:$0xff]
      %v284 = vld [vmem:[%s165 + $0x380] sm:$0xff]
      %v285 = vld [vmem:[%s165 + $0x388] sm:$0xff]
      %v286 = vld [vmem:[%s165 + $0x390] sm:$0xff]
      %v287 = vld [vmem:[%s165 + $0x398] sm:$0xff]
      %v288 = vld [vmem:[%s165 + $0x3a0] sm:$0xff]
      %v289 = vld [vmem:[%s165 + $0x3a8] sm:$0xff]
      %v290 = vld [vmem:[%s165 + $0x3b0] sm:$0xff]
      %v291 = vld [vmem:[%s165 + $0x3b8] sm:$0xff]
      %v292 = vld [vmem:[%s165 + $0x3c0] sm:$0xff]
      %v293 = vld [vmem:[%s165 + $0x3c8] sm:$0xff]
      %v294 = vld [vmem:[%s165 + $0x3d0] sm:$0xff]
      %v295 = vld [vmem:[%s165 + $0x3d8] sm:$0xff]
      %v296 = vld [vmem:[%s165 + $0x3e0] sm:$0xff]
      %v297 = vld [vmem:[%s165 + $0x3e8] sm:$0xff]
      %v298 = vld [vmem:[%s165 + $0x3f0] sm:$0xff]
      %v299 = vld [vmem:[%s165 + $0x3f8] sm:$0xff]
      %v300 = vld [vmem:[%s165 + $0x400] sm:$0xff]
      %v301 = vld [vmem:[%s165 + $0x408] sm:$0xff]
      %v302 = vld [vmem:[%s165 + $0x410] sm:$0xff]
      %v303 = vld [vmem:[%s165 + $0x418] sm:$0xff]
      %v304 = vld [vmem:[%s165 + $0x420] sm:$0xff]
      %v305 = vld [vmem:[%s165 + $0x428] sm:$0xff]
      %v306 = vld [vmem:[%s165 + $0x430] sm:$0xff]
      %v307 = vld [vmem:[%s165 + $0x438] sm:$0xff]
      %v308 = vld [vmem:[%s165 + $0x440] sm:$0xff]
      %v309 = vld [vmem:[%s165 + $0x448] sm:$0xff]
      %v310 = vld [vmem:[%s165 + $0x450] sm:$0xff]
      %v311 = vld [vmem:[%s165 + $0x458] sm:$0xff]
      %v312 = vld [vmem:[%s165 + $0x460] sm:$0xff]
      %v313 = vld [vmem:[%s165 + $0x468] sm:$0xff]
      %v314 = vld [vmem:[%s165 + $0x470] sm:$0xff]
      %v315 = vld [vmem:[%s165 + $0x478] sm:$0xff]
      %v316 = vpack.c.bf16 %v174, %v172
      %v317 = vpack.c.bf16 %v175, %v173
      %v318 = vpack.c.bf16 %v178, %v176
      %v319 = vpack.c.bf16 %v179, %v177
      %v320 = vpack.c.bf16 %v182, %v180
      %v321 = vpack.c.bf16 %v183, %v181
      %v322 = vpack.c.bf16 %v186, %v184
      %v323 = vpack.c.bf16 %v187, %v185
      %v324 = vpack.c.bf16 %v190, %v188
      %v325 = vpack.c.bf16 %v191, %v189
      %v326 = vpack.c.bf16 %v194, %v192
      %v327 = vpack.c.bf16 %v195, %v193
      %v328 = vpack.c.bf16 %v198, %v196
      %v329 = vpack.c.bf16 %v199, %v197
      %v330 = vpack.c.bf16 %v202, %v200
      %v331 = vpack.c.bf16 %v203, %v201
      %v332 = vpack.c.bf16 %v206, %v204
      %v333 = vpack.c.bf16 %v207, %v205
      %v334 = vpack.c.bf16 %v210, %v208
      %v335 = vpack.c.bf16 %v211, %v209
      %v336 = vpack.c.bf16 %v214, %v212
      %v337 = vpack.c.bf16 %v215, %v213
      %v338 = vpack.c.bf16 %v218, %v216
      %v339 = vpack.c.bf16 %v219, %v217
      %v340 = vpack.c.bf16 %v222, %v220
      %v341 = vpack.c.bf16 %v223, %v221
      %v342 = vpack.c.bf16 %v226, %v224
      %v343 = vpack.c.bf16 %v227, %v225
      %v344 = vpack.c.bf16 %v230, %v228
      %v345 = vpack.c.bf16 %v231, %v229
      %v346 = vpack.c.bf16 %v234, %v232
      %v347 = vpack.c.bf16 %v235, %v233
      %v348 = vpack.c.bf16 %v238, %v236
      %v349 = vpack.c.bf16 %v239, %v237
      %v350 = vpack.c.bf16 %v242, %v240
      %v351 = vpack.c.bf16 %v243, %v241
      %v352 = vpack.c.bf16 %v246, %v244
      %v353 = vpack.c.bf16 %v247, %v245
      %v354 = vpack.c.bf16 %v250, %v248
      %v355 = vpack.c.bf16 %v251, %v249
      %v356 = vpack.c.bf16 %v254, %v252
      %v357 = vpack.c.bf16 %v255, %v253
      %v358 = vpack.c.bf16 %v258, %v256
      %v359 = vpack.c.bf16 %v259, %v257
      %v360 = vpack.c.bf16 %v262, %v260
      %v361 = vpack.c.bf16 %v263, %v261
      %v362 = vpack.c.bf16 %v266, %v264
      %v363 = vpack.c.bf16 %v267, %v265
      %v364 = vpack.c.bf16 %v270, %v268
      %v365 = vpack.c.bf16 %v271, %v269
      %v366 = vpack.c.bf16 %v274, %v272
      %v367 = vpack.c.bf16 %v275, %v273
      %v368 = vpack.c.bf16 %v278, %v276
      %v369 = vpack.c.bf16 %v279, %v277
      %v370 = vpack.c.bf16 %v282, %v280
      %v371 = vpack.c.bf16 %v283, %v281
      %v372 = vpack.c.bf16 %v286, %v284
      %v373 = vpack.c.bf16 %v287, %v285
      %v374 = vpack.c.bf16 %v290, %v288
      %v375 = vpack.c.bf16 %v291, %v289
      %v376 = vpack.c.bf16 %v294, %v292
      %v377 = vpack.c.bf16 %v295, %v293
      %v378 = vpack.c.bf16 %v298, %v296
      %v379 = vpack.c.bf16 %v299, %v297
      %v380 = vpack.c.bf16 %v302, %v300
      %v381 = vpack.c.bf16 %v303, %v301
      %v382 = vpack.c.bf16 %v306, %v304
      %v383 = vpack.c.bf16 %v307, %v305
      %v384 = vpack.c.bf16 %v310, %v308
      %v385 = vpack.c.bf16 %v311, %v309
      %v386 = vpack.c.bf16 %v314, %v312
      %v387 = vpack.c.bf16 %v315, %v313
      %v388 = vld [vmem:[%s1] sm:$0xf]
      %v389 = vld [vmem:[%s1 + $0x4] sm:$0xf]
      %v390 = vld [vmem:[%s1 + $0x8] sm:$0xf]
      %v391 = vld [vmem:[%s1 + $0xc] sm:$0xf]
      %v392 = vld [vmem:[%s1 + $0x10] sm:$0xf]
      %v393 = vld [vmem:[%s1 + $0x14] sm:$0xf]
      %v394 = vld [vmem:[%s1 + $0x18] sm:$0xf]
      %v395 = vld [vmem:[%s1 + $0x1c] sm:$0xf]
      %v396 = vld [vmem:[%s1 + $0x20] sm:$0xf]
      %v397 = vld [vmem:[%s1 + $0x24] sm:$0xf]
      %v398 = vld [vmem:[%s1 + $0x28] sm:$0xf]
      %v399 = vld [vmem:[%s1 + $0x2c] sm:$0xf]
      %v400 = vld [vmem:[%s1 + $0x30] sm:$0xf]
      %v401 = vld [vmem:[%s1 + $0x34] sm:$0xf]
      %v402 = vld [vmem:[%s1 + $0x38] sm:$0xf]
      %v403 = vld [vmem:[%s1 + $0x3c] sm:$0xf]
      %v404 = vld [vmem:[%s1 + $0x40] sm:$0xf]
      %v405 = vld [vmem:[%s1 + $0x44] sm:$0xf]
      %v406 = vld [vmem:[%s1 + $0x48] sm:$0xf]
      %v407 = vld [vmem:[%s1 + $0x4c] sm:$0xf]
      %v408 = vld [vmem:[%s1 + $0x50] sm:$0xf]
      %v409 = vld [vmem:[%s1 + $0x54] sm:$0xf]
      %v410 = vld [vmem:[%s1 + $0x58] sm:$0xf]
      %v411 = vld [vmem:[%s1 + $0x5c] sm:$0xf]
      %v412 = vld [vmem:[%s1 + $0x60] sm:$0xf]
      %v413 = vld [vmem:[%s1 + $0x64] sm:$0xf]
      %v414 = vld [vmem:[%s1 + $0x68] sm:$0xf]
      %v415 = vld [vmem:[%s1 + $0x6c] sm:$0xf]
      %v416 = vld [vmem:[%s1 + $0x70] sm:$0xf]
      %v417 = vld [vmem:[%s1 + $0x74] sm:$0xf]
      %v418 = vld [vmem:[%s1 + $0x78] sm:$0xf]
      %v419 = vld [vmem:[%s1 + $0x7c] sm:$0xf]
      %v420 = vld [vmem:[%s2] sm:$0x1]
      %v422 = vlaneseq
      %v423 = vshrl.u32 %v422, 7
      %v424 = vsub.s32 0, %v423
      %v425 = vrot.slane %v420, %v424
      %v459 = vunpack.c.l.b16 %v388
      %v460 = vunpack.c.l.b16 %v389
      %v461 = vunpack.c.l.b16 %v390
      %v462 = vunpack.c.l.b16 %v391
      %v463 = vunpack.c.l.b16 %v392
      %v464 = vunpack.c.l.b16 %v393
      %v465 = vunpack.c.l.b16 %v394
      %v466 = vunpack.c.l.b16 %v395
      %v467 = vunpack.c.l.b16 %v396
      %v468 = vunpack.c.l.b16 %v397
      %v469 = vunpack.c.l.b16 %v398
      %v470 = vunpack.c.l.b16 %v399
      %v471 = vunpack.c.l.b16 %v400
      %v472 = vunpack.c.l.b16 %v401
      %v473 = vunpack.c.l.b16 %v402
      %v474 = vunpack.c.l.b16 %v403
      %v475 = vunpack.c.l.b16 %v404
      %v476 = vunpack.c.l.b16 %v405
      %v477 = vunpack.c.l.b16 %v406
      %v478 = vunpack.c.l.b16 %v407
      %v479 = vunpack.c.l.b16 %v408
      %v480 = vunpack.c.l.b16 %v409
      %v481 = vunpack.c.l.b16 %v410
      %v482 = vunpack.c.l.b16 %v411
      %v483 = vunpack.c.l.b16 %v412
      %v484 = vunpack.c.l.b16 %v413
      %v485 = vunpack.c.l.b16 %v414
      %v486 = vunpack.c.l.b16 %v415
      %v487 = vunpack.c.l.b16 %v416
      %v488 = vunpack.c.l.b16 %v417
      %v489 = vunpack.c.l.b16 %v418
      %v490 = vunpack.c.l.b16 %v419
      %v491 = vpack.c.b16 %v460, %v459
      %v492 = vpack.c.b16 %v462, %v461
      %v493 = vpack.c.b16 %v464, %v463
      %v494 = vpack.c.b16 %v466, %v465
      %v495 = vpack.c.b16 %v468, %v467
      %v496 = vpack.c.b16 %v470, %v469
      %v497 = vpack.c.b16 %v472, %v471
      %v498 = vpack.c.b16 %v474, %v473
      %v499 = vpack.c.b16 %v476, %v475
      %v500 = vpack.c.b16 %v478, %v477
      %v501 = vpack.c.b16 %v480, %v479
      %v502 = vpack.c.b16 %v482, %v481
      %v503 = vpack.c.b16 %v484, %v483
      %v504 = vpack.c.b16 %v486, %v485
      %v505 = vpack.c.b16 %v488, %v487
      %v506 = vpack.c.b16 %v490, %v489
      %523 = vmatprep.subr.bf16.mxu0 0
      %524 = vmatpush1.bf16.msra.mxu0 %v491
      %525 = vmatprep.subr.bf16.mxu0 0
      %526 = vmatpush1.bf16.msra.mxu0 %v492
      %527 = vmatprep.subr.bf16.mxu0 0
      %528 = vmatpush1.bf16.msra.mxu0 %v493
      %529 = vmatprep.subr.bf16.mxu0 0
      %530 = vmatpush1.bf16.msra.mxu0 %v494
      %531 = vmatprep.subr.bf16.mxu0 0
      %532 = vmatpush1.bf16.msra.mxu0 %v495
      %533 = vmatprep.subr.bf16.mxu0 0
      %534 = vmatpush1.bf16.msra.mxu0 %v496
      %535 = vmatprep.subr.bf16.mxu0 0
      %536 = vmatpush1.bf16.msra.mxu0 %v497
      %537 = vmatprep.subr.bf16.mxu0 0
      %538 = vmatpush1.bf16.msra.mxu0 %v498
      %539 = vmatprep.subr.bf16.mxu0 0
      %540 = vmatpush1.bf16.msra.mxu0 %v499
      %541 = vmatprep.subr.bf16.mxu0 0
      %542 = vmatpush1.bf16.msra.mxu0 %v500
      %543 = vmatprep.subr.bf16.mxu0 0
      %544 = vmatpush1.bf16.msra.mxu0 %v501
      %545 = vmatprep.subr.bf16.mxu0 0
      %546 = vmatpush1.bf16.msra.mxu0 %v502
      %547 = vmatprep.subr.bf16.mxu0 0
      %548 = vmatpush1.bf16.msra.mxu0 %v503
      %549 = vmatprep.subr.bf16.mxu0 0
      %550 = vmatpush1.bf16.msra.mxu0 %v504
      %551 = vmatprep.subr.bf16.mxu0 0
      %552 = vmatpush1.bf16.msra.mxu0 %v505
      %553 = vmatprep.subr.bf16.mxu0 0
      %554 = vmatpush1.bf16.msra.mxu0 %v506
      %555 = vmatprep.mubr.bf16.mxu0 %v317
      %556 = vmatmul.mubr.bf16.gmra.mrb[0].mxu0 %v316
      %v557 = vpop.f32.mrb[0].mxu0
      %v558 = vadd.f32 %v425, %v557
      %v559 = vpop.f32.mrb[0].mxu0
      %v560 = vpop.f32.mrb[0].mxu0
      %v561 = vadd.f32 %v425, %v560
      %v562 = vpop.f32.mrb[0].mxu0
      %563 = vmatprep.mubr.bf16.mxu0 %v319
      %564 = vmatmul.mubr.bf16.gmra.mrb[0].mxu0 %v318
      %v565 = vpop.f32.mrb[0].mxu0
      %v566 = vadd.f32 %v425, %v565
      %v567 = vpop.f32.mrb[0].mxu0
      %v568 = vpop.f32.mrb[0].mxu0
      %v569 = vadd.f32 %v425, %v568
      %v570 = vpop.f32.mrb[0].mxu0
      %571 = vmatprep.mubr.bf16.mxu0 %v321
      %572 = vmatmul.mubr.bf16.gmra.mrb[0].mxu0 %v320
      %v573 = vpop.f32.mrb[0].mxu0
      %v574 = vadd.f32 %v425, %v573
      %v575 = vpop.f32.mrb[0].mxu0
      %v576 = vpop.f32.mrb[0].mxu0
      %v577 = vadd.f32 %v425, %v576
      %v578 = vpop.f32.mrb[0].mxu0
      %579 = vmatprep.mubr.bf16.mxu0 %v323
      %580 = vmatmul.mubr.bf16.gmra.mrb[0].mxu0 %v322
      %v581 = vpop.f32.mrb[0].mxu0
      %v582 = vadd.f32 %v425, %v581
      %v583 = vpop.f32.mrb[0].mxu0
      %v584 = vpop.f32.mrb[0].mxu0
      %v585 = vadd.f32 %v425, %v584
      %v586 = vpop.f32.mrb[0].mxu0
      %587 = vmatprep.mubr.bf16.mxu0 %v325
      %588 = vmatmul.mubr.bf16.gmra.mrb[0].mxu0 %v324
      %v589 = vpop.f32.mrb[0].mxu0
      %v590 = vadd.f32 %v425, %v589
      %v591 = vpop.f32.mrb[0].mxu0
      %v592 = vpop.f32.mrb[0].mxu0
      %v593 = vadd.f32 %v425, %v592
      %v594 = vpop.f32.mrb[0].mxu0
      %595 = vmatprep.mubr.bf16.mxu0 %v327
      %596 = vmatmul.mubr.bf16.gmra.mrb[0].mxu0 %v326
      %v597 = vpop.f32.mrb[0].mxu0
      %v598 = vadd.f32 %v425, %v597
      %v599 = vpop.f32.mrb[0].mxu0
      %v600 = vpop.f32.mrb[0].mxu0
      %v601 = vadd.f32 %v425, %v600
      %v602 = vpop.f32.mrb[0].mxu0
      %603 = vmatprep.mubr.bf16.mxu0 %v329
      %604 = vmatmul.mubr.bf16.gmra.mrb[0].mxu0 %v328
      %v605 = vpop.f32.mrb[0].mxu0
      %v606 = vadd.f32 %v425, %v605
      %v607 = vpop.f32.mrb[0].mxu0
      %v608 = vpop.f32.mrb[0].mxu0
      %v609 = vadd.f32 %v425, %v608
      %v610 = vpop.f32.mrb[0].mxu0
      %611 = vmatprep.mubr.bf16.mxu0 %v331
      %612 = vmatmul.mubr.bf16.gmra.mrb[0].mxu0 %v330
      %v613 = vpop.f32.mrb[0].mxu0
      %v614 = vadd.f32 %v425, %v613
      %v615 = vpop.f32.mrb[0].mxu0
      %v616 = vpop.f32.mrb[0].mxu0
      %v617 = vadd.f32 %v425, %v616
      %v618 = vpop.f32.mrb[0].mxu0
      %619 = vmatprep.mubr.bf16.mxu0 %v333
      %620 = vmatmul.mubr.bf16.gmra.mrb[0].mxu0 %v332
      %v621 = vpop.f32.mrb[0].mxu0
      %v622 = vadd.f32 %v425, %v621
      %v623 = vpop.f32.mrb[0].mxu0
      %v624 = vpop.f32.mrb[0].mxu0
      %v625 = vadd.f32 %v425, %v624
      %v626 = vpop.f32.mrb[0].mxu0
      %627 = vmatprep.mubr.bf16.mxu0 %v335
      %628 = vmatmul.mubr.bf16.gmra.mrb[0].mxu0 %v334
      %v629 = vpop.f32.mrb[0].mxu0
      %v630 = vadd.f32 %v425, %v629
      %v631 = vpop.f32.mrb[0].mxu0
      %v632 = vpop.f32.mrb[0].mxu0
      %v633 = vadd.f32 %v425, %v632
      %v634 = vpop.f32.mrb[0].mxu0
      %635 = vmatprep.mubr.bf16.mxu0 %v337
      %636 = vmatmul.mubr.bf16.gmra.mrb[0].mxu0 %v336
      %v637 = vpop.f32.mrb[0].mxu0
      %v638 = vadd.f32 %v425, %v637
      %v639 = vpop.f32.mrb[0].mxu0
      %v640 = vpop.f32.mrb[0].mxu0
      %v641 = vadd.f32 %v425, %v640
      %v642 = vpop.f32.mrb[0].mxu0
      %643 = vmatprep.mubr.bf16.mxu0 %v339
      %644 = vmatmul.mubr.bf16.gmra.mrb[0].mxu0 %v338
      %v645 = vpop.f32.mrb[0].mxu0
      %v646 = vadd.f32 %v425, %v645
      %v647 = vpop.f32.mrb[0].mxu0
      %v648 = vpop.f32.mrb[0].mxu0
      %v649 = vadd.f32 %v425, %v648
      %v650 = vpop.f32.mrb[0].mxu0
      %651 = vmatprep.mubr.bf16.mxu0 %v341
      %652 = vmatmul.mubr.bf16.gmra.mrb[0].mxu0 %v340
      %v653 = vpop.f32.mrb[0].mxu0
      %v654 = vadd.f32 %v425, %v653
      %v655 = vpop.f32.mrb[0].mxu0
      %v656 = vpop.f32.mrb[0].mxu0
      %v657 = vadd.f32 %v425, %v656
      %v658 = vpop.f32.mrb[0].mxu0
      %659 = vmatprep.mubr.bf16.mxu0 %v343
      %660 = vmatmul.mubr.bf16.gmra.mrb[0].mxu0 %v342
      %v661 = vpop.f32.mrb[0].mxu0
      %v662 = vadd.f32 %v425, %v661
      %v663 = vpop.f32.mrb[0].mxu0
      %v664 = vpop.f32.mrb[0].mxu0
      %v665 = vadd.f32 %v425, %v664
      %v666 = vpop.f32.mrb[0].mxu0
      %667 = vmatprep.mubr.bf16.mxu0 %v345
      %668 = vmatmul.mubr.bf16.gmra.mrb[0].mxu0 %v344
      %v669 = vpop.f32.mrb[0].mxu0
      %v670 = vadd.f32 %v425, %v669
      %v671 = vpop.f32.mrb[0].mxu0
      %v672 = vpop.f32.mrb[0].mxu0
      %v673 = vadd.f32 %v425, %v672
      %v674 = vpop.f32.mrb[0].mxu0
      %675 = vmatprep.mubr.bf16.mxu0 %v347
      %676 = vmatmul.mubr.bf16.gmra.mrb[0].mxu0 %v346
      %v677 = vpop.f32.mrb[0].mxu0
      %v678 = vadd.f32 %v425, %v677
      %v679 = vpop.f32.mrb[0].mxu0
      %v680 = vpop.f32.mrb[0].mxu0
      %v681 = vadd.f32 %v425, %v680
      %v682 = vpop.f32.mrb[0].mxu0
      %683 = vmatprep.mubr.bf16.mxu0 %v349
      %684 = vmatmul.mubr.bf16.gmra.mrb[0].mxu0 %v348
      %v685 = vpop.f32.mrb[0].mxu0
      %v686 = vadd.f32 %v425, %v685
      %v687 = vpop.f32.mrb[0].mxu0
      %v688 = vpop.f32.mrb[0].mxu0
      %v689 = vadd.f32 %v425, %v688
      %v690 = vpop.f32.mrb[0].mxu0
      %691 = vmatprep.mubr.bf16.mxu0 %v351
      %692 = vmatmul.mubr.bf16.gmra.mrb[0].mxu0 %v350
      %v693 = vpop.f32.mrb[0].mxu0
      %v694 = vadd.f32 %v425, %v693
      %v695 = vpop.f32.mrb[0].mxu0
      %v696 = vpop.f32.mrb[0].mxu0
      %v697 = vadd.f32 %v425, %v696
      %v698 = vpop.f32.mrb[0].mxu0
      %699 = vmatprep.mubr.bf16.mxu0 %v353
      %700 = vmatmul.mubr.bf16.gmra.mrb[0].mxu0 %v352
      %v701 = vpop.f32.mrb[0].mxu0
      %v702 = vadd.f32 %v425, %v701
      %v703 = vpop.f32.mrb[0].mxu0
      %v704 = vpop.f32.mrb[0].mxu0
      %v705 = vadd.f32 %v425, %v704
      %v706 = vpop.f32.mrb[0].mxu0
      %707 = vmatprep.mubr.bf16.mxu0 %v355
      %708 = vmatmul.mubr.bf16.gmra.mrb[0].mxu0 %v354
      %v709 = vpop.f32.mrb[0].mxu0
      %v710 = vadd.f32 %v425, %v709
      %v711 = vpop.f32.mrb[0].mxu0
      %v712 = vpop.f32.mrb[0].mxu0
      %v713 = vadd.f32 %v425, %v712
      %v714 = vpop.f32.mrb[0].mxu0
      %715 = vmatprep.mubr.bf16.mxu0 %v357
      %716 = vmatmul.mubr.bf16.gmra.mrb[0].mxu0 %v356
      %v717 = vpop.f32.mrb[0].mxu0
      %v718 = vadd.f32 %v425, %v717
      %v719 = vpop.f32.mrb[0].mxu0
      %v720 = vpop.f32.mrb[0].mxu0
      %v721 = vadd.f32 %v425, %v720
      %v722 = vpop.f32.mrb[0].mxu0
      %723 = vmatprep.mubr.bf16.mxu0 %v359
      %724 = vmatmul.mubr.bf16.gmra.mrb[0].mxu0 %v358
      %v725 = vpop.f32.mrb[0].mxu0
      %v726 = vadd.f32 %v425, %v725
      %v727 = vpop.f32.mrb[0].mxu0
      %v728 = vpop.f32.mrb[0].mxu0
      %v729 = vadd.f32 %v425, %v728
      %v730 = vpop.f32.mrb[0].mxu0
      %731 = vmatprep.mubr.bf16.mxu0 %v361
      %732 = vmatmul.mubr.bf16.gmra.mrb[0].mxu0 %v360
      %v733 = vpop.f32.mrb[0].mxu0
      %v734 = vadd.f32 %v425, %v733
      %v735 = vpop.f32.mrb[0].mxu0
      %v736 = vpop.f32.mrb[0].mxu0
      %v737 = vadd.f32 %v425, %v736
      %v738 = vpop.f32.mrb[0].mxu0
      %739 = vmatprep.mubr.bf16.mxu0 %v363
      %740 = vmatmul.mubr.bf16.gmra.mrb[0].mxu0 %v362
      %v741 = vpop.f32.mrb[0].mxu0
      %v742 = vadd.f32 %v425, %v741
      %v743 = vpop.f32.mrb[0].mxu0
      %v744 = vpop.f32.mrb[0].mxu0
      %v745 = vadd.f32 %v425, %v744
      %v746 = vpop.f32.mrb[0].mxu0
      %747 = vmatprep.mubr.bf16.mxu0 %v365
      %748 = vmatmul.mubr.bf16.gmra.mrb[0].mxu0 %v364
      %v749 = vpop.f32.mrb[0].mxu0
      %v750 = vadd.f32 %v425, %v749
      %v751 = vpop.f32.mrb[0].mxu0
      %v752 = vpop.f32.mrb[0].mxu0
      %v753 = vadd.f32 %v425, %v752
      %v754 = vpop.f32.mrb[0].mxu0
      %755 = vmatprep.mubr.bf16.mxu0 %v367
      %756 = vmatmul.mubr.bf16.gmra.mrb[0].mxu0 %v366
      %v757 = vpop.f32.mrb[0].mxu0
      %v758 = vadd.f32 %v425, %v757
      %v759 = vpop.f32.mrb[0].mxu0
      %v760 = vpop.f32.mrb[0].mxu0
      %v761 = vadd.f32 %v425, %v760
      %v762 = vpop.f32.mrb[0].mxu0
      %763 = vmatprep.mubr.bf16.mxu0 %v369
      %764 = vmatmul.mubr.bf16.gmra.mrb[0].mxu0 %v368
      %v765 = vpop.f32.mrb[0].mxu0
      %v766 = vadd.f32 %v425, %v765
      %v767 = vpop.f32.mrb[0].mxu0
      %v768 = vpop.f32.mrb[0].mxu0
      %v769 = vadd.f32 %v425, %v768
      %v770 = vpop.f32.mrb[0].mxu0
      %771 = vmatprep.mubr.bf16.mxu0 %v371
      %772 = vmatmul.mubr.bf16.gmra.mrb[0].mxu0 %v370
      %v773 = vpop.f32.mrb[0].mxu0
      %v774 = vadd.f32 %v425, %v773
      %v775 = vpop.f32.mrb[0].mxu0
      %v776 = vpop.f32.mrb[0].mxu0
      %v777 = vadd.f32 %v425, %v776
      %v778 = vpop.f32.mrb[0].mxu0
      %779 = vmatprep.mubr.bf16.mxu0 %v373
      %780 = vmatmul.mubr.bf16.gmra.mrb[0].mxu0 %v372
      %v781 = vpop.f32.mrb[0].mxu0
      %v782 = vadd.f32 %v425, %v781
      %v783 = vpop.f32.mrb[0].mxu0
      %v784 = vpop.f32.mrb[0].mxu0
      %v785 = vadd.f32 %v425, %v784
      %v786 = vpop.f32.mrb[0].mxu0
      %787 = vmatprep.mubr.bf16.mxu0 %v375
      %788 = vmatmul.mubr.bf16.gmra.mrb[0].mxu0 %v374
      %v789 = vpop.f32.mrb[0].mxu0
      %v790 = vadd.f32 %v425, %v789
      %v791 = vpop.f32.mrb[0].mxu0
      %v792 = vpop.f32.mrb[0].mxu0
      %v793 = vadd.f32 %v425, %v792
      %v794 = vpop.f32.mrb[0].mxu0
      %795 = vmatprep.mubr.bf16.mxu0 %v377
      %796 = vmatmul.mubr.bf16.gmra.mrb[0].mxu0 %v376
      %v797 = vpop.f32.mrb[0].mxu0
      %v798 = vadd.f32 %v425, %v797
      %v799 = vpop.f32.mrb[0].mxu0
      %v800 = vpop.f32.mrb[0].mxu0
      %v801 = vadd.f32 %v425, %v800
      %v802 = vpop.f32.mrb[0].mxu0
      %803 = vmatprep.mubr.bf16.mxu0 %v379
      %804 = vmatmul.mubr.bf16.gmra.mrb[0].mxu0 %v378
      %v805 = vpop.f32.mrb[0].mxu0
      %v806 = vadd.f32 %v425, %v805
      %v807 = vpop.f32.mrb[0].mxu0
      %v808 = vpop.f32.mrb[0].mxu0
      %v809 = vadd.f32 %v425, %v808
      %v810 = vpop.f32.mrb[0].mxu0
      %811 = vmatprep.mubr.bf16.mxu0 %v381
      %812 = vmatmul.mubr.bf16.gmra.mrb[0].mxu0 %v380
      %v813 = vpop.f32.mrb[0].mxu0
      %v814 = vadd.f32 %v425, %v813
      %v815 = vpop.f32.mrb[0].mxu0
      %v816 = vpop.f32.mrb[0].mxu0
      %v817 = vadd.f32 %v425, %v816
      %v818 = vpop.f32.mrb[0].mxu0
      %819 = vmatprep.mubr.bf16.mxu0 %v383
      %820 = vmatmul.mubr.bf16.gmra.mrb[0].mxu0 %v382
      %v821 = vpop.f32.mrb[0].mxu0
      %v822 = vadd.f32 %v425, %v821
      %v823 = vpop.f32.mrb[0].mxu0
      %v824 = vpop.f32.mrb[0].mxu0
      %v825 = vadd.f32 %v425, %v824
      %v826 = vpop.f32.mrb[0].mxu0
      %827 = vmatprep.mubr.bf16.mxu0 %v385
      %828 = vmatmul.mubr.bf16.gmra.mrb[0].mxu0 %v384
      %v829 = vpop.f32.mrb[0].mxu0
      %v830 = vadd.f32 %v425, %v829
      %v831 = vpop.f32.mrb[0].mxu0
      %v832 = vpop.f32.mrb[0].mxu0
      %v833 = vadd.f32 %v425, %v832
      %v834 = vpop.f32.mrb[0].mxu0
      %835 = vmatprep.mubr.bf16.mxu0 %v387
      %836 = vmatmul.mubr.bf16.gmra.mrb[0].mxu0 %v386
      %v837 = vpop.f32.mrb[0].mxu0
      %v838 = vadd.f32 %v425, %v837
      %v839 = vpop.f32.mrb[0].mxu0
      %v840 = vpop.f32.mrb[0].mxu0
      %v841 = vadd.f32 %v425, %v840
      %v842 = vpop.f32.mrb[0].mxu0
      %843 = vdwg.mxu0
      %v844 = vmax.f32 %v558, 0.0
      %v845 = vmax.f32 %v561, 0.0
      %v846 = vmax.f32 %v566, 0.0
      %v847 = vmax.f32 %v569, 0.0
      %v848 = vmax.f32 %v574, 0.0
      %v849 = vmax.f32 %v577, 0.0
      %v850 = vmax.f32 %v582, 0.0
      %v851 = vmax.f32 %v585, 0.0
      %v852 = vmax.f32 %v590, 0.0
      %v853 = vmax.f32 %v593, 0.0
      %v854 = vmax.f32 %v598, 0.0
      %v855 = vmax.f32 %v601, 0.0
      %v856 = vmax.f32 %v606, 0.0
      %v857 = vmax.f32 %v609, 0.0
      %v858 = vmax.f32 %v614, 0.0
      %v859 = vmax.f32 %v617, 0.0
      %v860 = vmax.f32 %v622, 0.0
      %v861 = vmax.f32 %v625, 0.0
      %v862 = vmax.f32 %v630, 0.0
      %v863 = vmax.f32 %v633, 0.0
      %v864 = vmax.f32 %v638, 0.0
      %v865 = vmax.f32 %v641, 0.0
      %v866 = vmax.f32 %v646, 0.0
      %v867 = vmax.f32 %v649, 0.0
      %v868 = vmax.f32 %v654, 0.0
      %v869 = vmax.f32 %v657, 0.0
      %v870 = vmax.f32 %v662, 0.0
      %v871 = vmax.f32 %v665, 0.0
      %v872 = vmax.f32 %v670, 0.0
      %v873 = vmax.f32 %v673, 0.0
      %v874 = vmax.f32 %v678, 0.0
      %v875 = vmax.f32 %v681, 0.0
      %v876 = vmax.f32 %v686, 0.0
      %v877 = vmax.f32 %v689, 0.0
      %v878 = vmax.f32 %v694, 0.0
      %v879 = vmax.f32 %v697, 0.0
      %v880 = vmax.f32 %v702, 0.0
      %v881 = vmax.f32 %v705, 0.0
      %v882 = vmax.f32 %v710, 0.0
      %v883 = vmax.f32 %v713, 0.0
      %v884 = vmax.f32 %v718, 0.0
      %v885 = vmax.f32 %v721, 0.0
      %v886 = vmax.f32 %v726, 0.0
      %v887 = vmax.f32 %v729, 0.0
      %v888 = vmax.f32 %v734, 0.0
      %v889 = vmax.f32 %v737, 0.0
      %v890 = vmax.f32 %v742, 0.0
      %v891 = vmax.f32 %v745, 0.0
      %v892 = vmax.f32 %v750, 0.0
      %v893 = vmax.f32 %v753, 0.0
      %v894 = vmax.f32 %v758, 0.0
      %v895 = vmax.f32 %v761, 0.0
      %v896 = vmax.f32 %v766, 0.0
      %v897 = vmax.f32 %v769, 0.0
      %v898 = vmax.f32 %v774, 0.0
      %v899 = vmax.f32 %v777, 0.0
      %v900 = vmax.f32 %v782, 0.0
      %v901 = vmax.f32 %v785, 0.0
      %v902 = vmax.f32 %v790, 0.0
      %v903 = vmax.f32 %v793, 0.0
      %v904 = vmax.f32 %v798, 0.0
      %v905 = vmax.f32 %v801, 0.0
      %v906 = vmax.f32 %v806, 0.0
      %v907 = vmax.f32 %v809, 0.0
      %v908 = vmax.f32 %v814, 0.0
      %v909 = vmax.f32 %v817, 0.0
      %v910 = vmax.f32 %v822, 0.0
      %v911 = vmax.f32 %v825, 0.0
      %v912 = vmax.f32 %v830, 0.0
      %v913 = vmax.f32 %v833, 0.0
      %v914 = vmax.f32 %v838, 0.0
      %v915 = vmax.f32 %v841, 0.0
      %vm916 = vcmask 261120
      %v917 = vsel %vm916, %v844, 0.0
      %v918 = vsel %vm916, %v845, 0.0
      %v919 = vadd.f32 %v917, %v918
      %v920 = vsel %vm916, %v846, 0.0
      %v921 = vadd.f32 %v919, %v920
      %v922 = vsel %vm916, %v847, 0.0
      %v923 = vadd.f32 %v921, %v922
      %v924 = vsel %vm916, %v848, 0.0
      %v925 = vadd.f32 %v923, %v924
      %v926 = vsel %vm916, %v849, 0.0
      %v927 = vadd.f32 %v925, %v926
      %v928 = vsel %vm916, %v850, 0.0
      %v929 = vadd.f32 %v927, %v928
      %v930 = vsel %vm916, %v851, 0.0
      %v931 = vadd.f32 %v929, %v930
      %v932 = vsel %vm916, %v852, 0.0
      %v933 = vadd.f32 %v931, %v932
      %v934 = vsel %vm916, %v853, 0.0
      %v935 = vadd.f32 %v933, %v934
      %v936 = vsel %vm916, %v854, 0.0
      %v937 = vadd.f32 %v935, %v936
      %v938 = vsel %vm916, %v855, 0.0
      %v939 = vadd.f32 %v937, %v938
      %v940 = vsel %vm916, %v856, 0.0
      %v941 = vadd.f32 %v939, %v940
      %v942 = vsel %vm916, %v857, 0.0
      %v943 = vadd.f32 %v941, %v942
      %v944 = vsel %vm916, %v858, 0.0
      %v945 = vadd.f32 %v943, %v944
      %v946 = vsel %vm916, %v859, 0.0
      %v947 = vadd.f32 %v945, %v946
      %v948 = vsel %vm916, %v860, 0.0
      %v949 = vadd.f32 %v947, %v948
      %v950 = vsel %vm916, %v861, 0.0
      %v951 = vadd.f32 %v949, %v950
      %v952 = vsel %vm916, %v862, 0.0
      %v953 = vadd.f32 %v951, %v952
      %v954 = vsel %vm916, %v863, 0.0
      %v955 = vadd.f32 %v953, %v954
      %v956 = vsel %vm916, %v864, 0.0
      %v957 = vadd.f32 %v955, %v956
      %v958 = vsel %vm916, %v865, 0.0
      %v959 = vadd.f32 %v957, %v958
      %v960 = vsel %vm916, %v866, 0.0
      %v961 = vadd.f32 %v959, %v960
      %v962 = vsel %vm916, %v867, 0.0
      %v963 = vadd.f32 %v961, %v962
      %v964 = vsel %vm916, %v868, 0.0
      %v965 = vadd.f32 %v963, %v964
      %v966 = vsel %vm916, %v869, 0.0
      %v967 = vadd.f32 %v965, %v966
      %v968 = vsel %vm916, %v870, 0.0
      %v969 = vadd.f32 %v967, %v968
      %v970 = vsel %vm916, %v871, 0.0
      %v971 = vadd.f32 %v969, %v970
      %v972 = vsel %vm916, %v872, 0.0
      %v973 = vadd.f32 %v971, %v972
      %v974 = vsel %vm916, %v873, 0.0
      %v975 = vadd.f32 %v973, %v974
      %v976 = vsel %vm916, %v874, 0.0
      %v977 = vadd.f32 %v975, %v976
      %v978 = vsel %vm916, %v875, 0.0
      %v979 = vadd.f32 %v977, %v978
      %v980 = vsel %vm916, %v876, 0.0
      %v981 = vadd.f32 %v979, %v980
      %v982 = vsel %vm916, %v877, 0.0
      %v983 = vadd.f32 %v981, %v982
      %v984 = vsel %vm916, %v878, 0.0
      %v985 = vadd.f32 %v983, %v984
      %v986 = vsel %vm916, %v879, 0.0
      %v987 = vadd.f32 %v985, %v986
      %v988 = vsel %vm916, %v880, 0.0
      %v989 = vadd.f32 %v987, %v988
      %v990 = vsel %vm916, %v881, 0.0
      %v991 = vadd.f32 %v989, %v990
      %v992 = vsel %vm916, %v882, 0.0
      %v993 = vadd.f32 %v991, %v992
      %v994 = vsel %vm916, %v883, 0.0
      %v995 = vadd.f32 %v993, %v994
      %v996 = vsel %vm916, %v884, 0.0
      %v997 = vadd.f32 %v995, %v996
      %v998 = vsel %vm916, %v885, 0.0
      %v999 = vadd.f32 %v997, %v998
      %v1000 = vsel %vm916, %v886, 0.0
      %v1001 = vadd.f32 %v999, %v1000
      %v1002 = vsel %vm916, %v887, 0.0
      %v1003 = vadd.f32 %v1001, %v1002
      %v1004 = vsel %vm916, %v888, 0.0
      %v1005 = vadd.f32 %v1003, %v1004
      %v1006 = vsel %vm916, %v889, 0.0
      %v1007 = vadd.f32 %v1005, %v1006
      %v1008 = vsel %vm916, %v890, 0.0
      %v1009 = vadd.f32 %v1007, %v1008
      %v1010 = vsel %vm916, %v891, 0.0
      %v1011 = vadd.f32 %v1009, %v1010
      %v1012 = vsel %vm916, %v892, 0.0
      %v1013 = vadd.f32 %v1011, %v1012
      %v1014 = vsel %vm916, %v893, 0.0
      %v1015 = vadd.f32 %v1013, %v1014
      %v1016 = vsel %vm916, %v894, 0.0
      %v1017 = vadd.f32 %v1015, %v1016
      %v1018 = vsel %vm916, %v895, 0.0
      %v1019 = vadd.f32 %v1017, %v1018
      %v1020 = vsel %vm916, %v896, 0.0
      %v1021 = vadd.f32 %v1019, %v1020
      %v1022 = vsel %vm916, %v897, 0.0
      %v1023 = vadd.f32 %v1021, %v1022
      %v1024 = vsel %vm916, %v898, 0.0
      %v1025 = vadd.f32 %v1023, %v1024
      %v1026 = vsel %vm916, %v899, 0.0
      %v1027 = vadd.f32 %v1025, %v1026
      %v1028 = vsel %vm916, %v900, 0.0
      %v1029 = vadd.f32 %v1027, %v1028
      %v1030 = vsel %vm916, %v901, 0.0
      %v1031 = vadd.f32 %v1029, %v1030
      %v1032 = vsel %vm916, %v902, 0.0
      %v1033 = vadd.f32 %v1031, %v1032
      %v1034 = vsel %vm916, %v903, 0.0
      %v1035 = vadd.f32 %v1033, %v1034
      %v1036 = vsel %vm916, %v904, 0.0
      %v1037 = vadd.f32 %v1035, %v1036
      %v1038 = vsel %vm916, %v905, 0.0
      %v1039 = vadd.f32 %v1037, %v1038
      %v1040 = vsel %vm916, %v906, 0.0
      %v1041 = vadd.f32 %v1039, %v1040
      %v1042 = vsel %vm916, %v907, 0.0
      %v1043 = vadd.f32 %v1041, %v1042
      %v1044 = vsel %vm916, %v908, 0.0
      %v1045 = vadd.f32 %v1043, %v1044
      %v1046 = vsel %vm916, %v909, 0.0
      %v1047 = vadd.f32 %v1045, %v1046
      %v1048 = vsel %vm916, %v910, 0.0
      %v1049 = vadd.f32 %v1047, %v1048
      %v1050 = vsel %vm916, %v911, 0.0
      %v1051 = vadd.f32 %v1049, %v1050
      %v1052 = vsel %vm916, %v912, 0.0
      %v1053 = vadd.f32 %v1051, %v1052
      %v1054 = vsel %vm916, %v913, 0.0
      %v1055 = vadd.f32 %v1053, %v1054
      %v1056 = vsel %vm916, %v914, 0.0
      %v1057 = vadd.f32 %v1055, %v1056
      %v1058 = vsel %vm916, %v915, 0.0
      %v1059 = vadd.f32 %v1057, %v1058
      %v1060 = vrot.slane %v1059, 4
      %v1061 = vadd.f32 %v1059, %v1060
      %v1062 = vrot.slane %v1061, 2
      %v1063 = vadd.f32 %v1061, %v1062
      %v1064 = vrot.slane %v1063, 1
      %v1065 = vadd.f32 %v1063, %v1064
      %v1066 = vmul.f32 %v1065, 0.0017361111
      %v1067 = vsub.f32 %v844, %v1066
      %v1068 = vsub.f32 %v845, %v1066
      %v1069 = vsub.f32 %v846, %v1066
      %v1070 = vsub.f32 %v847, %v1066
      %v1071 = vsub.f32 %v848, %v1066
      %v1072 = vsub.f32 %v849, %v1066
      %v1073 = vsub.f32 %v850, %v1066
      %v1074 = vsub.f32 %v851, %v1066
      %v1075 = vsub.f32 %v852, %v1066
      %v1076 = vsub.f32 %v853, %v1066
      %v1077 = vsub.f32 %v854, %v1066
      %v1078 = vsub.f32 %v855, %v1066
      %v1079 = vsub.f32 %v856, %v1066
      %v1080 = vsub.f32 %v857, %v1066
      %v1081 = vsub.f32 %v858, %v1066
      %v1082 = vsub.f32 %v859, %v1066
      %v1083 = vsub.f32 %v860, %v1066
      %v1084 = vsub.f32 %v861, %v1066
      %v1085 = vsub.f32 %v862, %v1066
      %v1086 = vsub.f32 %v863, %v1066
      %v1087 = vsub.f32 %v864, %v1066
      %v1088 = vsub.f32 %v865, %v1066
      %v1089 = vsub.f32 %v866, %v1066
      %v1090 = vsub.f32 %v867, %v1066
      %v1091 = vsub.f32 %v868, %v1066
      %v1092 = vsub.f32 %v869, %v1066
      %v1093 = vsub.f32 %v870, %v1066
      %v1094 = vsub.f32 %v871, %v1066
      %v1095 = vsub.f32 %v872, %v1066
      %v1096 = vsub.f32 %v873, %v1066
      %v1097 = vsub.f32 %v874, %v1066
      %v1098 = vsub.f32 %v875, %v1066
      %v1099 = vsub.f32 %v876, %v1066
      %v1100 = vsub.f32 %v877, %v1066
      %v1101 = vsub.f32 %v878, %v1066
      %v1102 = vsub.f32 %v879, %v1066
      %v1103 = vsub.f32 %v880, %v1066
      %v1104 = vsub.f32 %v881, %v1066
      %v1105 = vsub.f32 %v882, %v1066
      %v1106 = vsub.f32 %v883, %v1066
      %v1107 = vsub.f32 %v884, %v1066
      %v1108 = vsub.f32 %v885, %v1066
      %v1109 = vsub.f32 %v886, %v1066
      %v1110 = vsub.f32 %v887, %v1066
      %v1111 = vsub.f32 %v888, %v1066
      %v1112 = vsub.f32 %v889, %v1066
      %v1113 = vsub.f32 %v890, %v1066
      %v1114 = vsub.f32 %v891, %v1066
      %v1115 = vsub.f32 %v892, %v1066
      %v1116 = vsub.f32 %v893, %v1066
      %v1117 = vsub.f32 %v894, %v1066
      %v1118 = vsub.f32 %v895, %v1066
      %v1119 = vsub.f32 %v896, %v1066
      %v1120 = vsub.f32 %v897, %v1066
      %v1121 = vsub.f32 %v898, %v1066
      %v1122 = vsub.f32 %v899, %v1066
      %v1123 = vsub.f32 %v900, %v1066
      %v1124 = vsub.f32 %v901, %v1066
      %v1125 = vsub.f32 %v902, %v1066
      %v1126 = vsub.f32 %v903, %v1066
      %v1127 = vsub.f32 %v904, %v1066
      %v1128 = vsub.f32 %v905, %v1066
      %v1129 = vsub.f32 %v906, %v1066
      %v1130 = vsub.f32 %v907, %v1066
      %v1131 = vsub.f32 %v908, %v1066
      %v1132 = vsub.f32 %v909, %v1066
      %v1133 = vsub.f32 %v910, %v1066
      %v1134 = vsub.f32 %v911, %v1066
      %v1135 = vsub.f32 %v912, %v1066
      %v1136 = vsub.f32 %v913, %v1066
      %v1137 = vsub.f32 %v914, %v1066
      %v1138 = vsub.f32 %v915, %v1066
      %v1139 = vmul.f32 %v1067, %v1067
      %v1140 = vmul.f32 %v1068, %v1068
      %v1141 = vmul.f32 %v1069, %v1069
      %v1142 = vmul.f32 %v1070, %v1070
      %v1143 = vmul.f32 %v1071, %v1071
      %v1144 = vmul.f32 %v1072, %v1072
      %v1145 = vmul.f32 %v1073, %v1073
      %v1146 = vmul.f32 %v1074, %v1074
      %v1147 = vmul.f32 %v1075, %v1075
      %v1148 = vmul.f32 %v1076, %v1076
      %v1149 = vmul.f32 %v1077, %v1077
      %v1150 = vmul.f32 %v1078, %v1078
      %v1151 = vmul.f32 %v1079, %v1079
      %v1152 = vmul.f32 %v1080, %v1080
      %v1153 = vmul.f32 %v1081, %v1081
      %v1154 = vmul.f32 %v1082, %v1082
      %v1155 = vmul.f32 %v1083, %v1083
      %v1156 = vmul.f32 %v1084, %v1084
      %v1157 = vmul.f32 %v1085, %v1085
      %v1158 = vmul.f32 %v1086, %v1086
      %v1159 = vmul.f32 %v1087, %v1087
      %v1160 = vmul.f32 %v1088, %v1088
      %v1161 = vmul.f32 %v1089, %v1089
      %v1162 = vmul.f32 %v1090, %v1090
      %v1163 = vmul.f32 %v1091, %v1091
      %v1164 = vmul.f32 %v1092, %v1092
      %v1165 = vmul.f32 %v1093, %v1093
      %v1166 = vmul.f32 %v1094, %v1094
      %v1167 = vmul.f32 %v1095, %v1095
      %v1168 = vmul.f32 %v1096, %v1096
      %v1169 = vmul.f32 %v1097, %v1097
      %v1170 = vmul.f32 %v1098, %v1098
      %v1171 = vmul.f32 %v1099, %v1099
      %v1172 = vmul.f32 %v1100, %v1100
      %v1173 = vmul.f32 %v1101, %v1101
      %v1174 = vmul.f32 %v1102, %v1102
      %v1175 = vmul.f32 %v1103, %v1103
      %v1176 = vmul.f32 %v1104, %v1104
      %v1177 = vmul.f32 %v1105, %v1105
      %v1178 = vmul.f32 %v1106, %v1106
      %v1179 = vmul.f32 %v1107, %v1107
      %v1180 = vmul.f32 %v1108, %v1108
      %v1181 = vmul.f32 %v1109, %v1109
      %v1182 = vmul.f32 %v1110, %v1110
      %v1183 = vmul.f32 %v1111, %v1111
      %v1184 = vmul.f32 %v1112, %v1112
      %v1185 = vmul.f32 %v1113, %v1113
      %v1186 = vmul.f32 %v1114, %v1114
      %v1187 = vmul.f32 %v1115, %v1115
      %v1188 = vmul.f32 %v1116, %v1116
      %v1189 = vmul.f32 %v1117, %v1117
      %v1190 = vmul.f32 %v1118, %v1118
      %v1191 = vmul.f32 %v1119, %v1119
      %v1192 = vmul.f32 %v1120, %v1120
      %v1193 = vmul.f32 %v1121, %v1121
      %v1194 = vmul.f32 %v1122, %v1122
      %v1195 = vmul.f32 %v1123, %v1123
      %v1196 = vmul.f32 %v1124, %v1124
      %v1197 = vmul.f32 %v1125, %v1125
      %v1198 = vmul.f32 %v1126, %v1126
      %v1199 = vmul.f32 %v1127, %v1127
      %v1200 = vmul.f32 %v1128, %v1128
      %v1201 = vmul.f32 %v1129, %v1129
      %v1202 = vmul.f32 %v1130, %v1130
      %v1203 = vmul.f32 %v1131, %v1131
      %v1204 = vmul.f32 %v1132, %v1132
      %v1205 = vmul.f32 %v1133, %v1133
      %v1206 = vmul.f32 %v1134, %v1134
      %v1207 = vmul.f32 %v1135, %v1135
      %v1208 = vmul.f32 %v1136, %v1136
      %v1209 = vmul.f32 %v1137, %v1137
      %v1210 = vmul.f32 %v1138, %v1138
      %v1211 = vsel %vm916, %v1139, 0.0
      %v1212 = vsel %vm916, %v1140, 0.0
      %v1213 = vadd.f32 %v1211, %v1212
      %v1214 = vsel %vm916, %v1141, 0.0
      %v1215 = vadd.f32 %v1213, %v1214
      %v1216 = vsel %vm916, %v1142, 0.0
      %v1217 = vadd.f32 %v1215, %v1216
      %v1218 = vsel %vm916, %v1143, 0.0
      %v1219 = vadd.f32 %v1217, %v1218
      %v1220 = vsel %vm916, %v1144, 0.0
      %v1221 = vadd.f32 %v1219, %v1220
      %v1222 = vsel %vm916, %v1145, 0.0
      %v1223 = vadd.f32 %v1221, %v1222
      %v1224 = vsel %vm916, %v1146, 0.0
      %v1225 = vadd.f32 %v1223, %v1224
      %v1226 = vsel %vm916, %v1147, 0.0
      %v1227 = vadd.f32 %v1225, %v1226
      %v1228 = vsel %vm916, %v1148, 0.0
      %v1229 = vadd.f32 %v1227, %v1228
      %v1230 = vsel %vm916, %v1149, 0.0
      %v1231 = vadd.f32 %v1229, %v1230
      %v1232 = vsel %vm916, %v1150, 0.0
      %v1233 = vadd.f32 %v1231, %v1232
      %v1234 = vsel %vm916, %v1151, 0.0
      %v1235 = vadd.f32 %v1233, %v1234
      %v1236 = vsel %vm916, %v1152, 0.0
      %v1237 = vadd.f32 %v1235, %v1236
      %v1238 = vsel %vm916, %v1153, 0.0
      %v1239 = vadd.f32 %v1237, %v1238
      %v1240 = vsel %vm916, %v1154, 0.0
      %v1241 = vadd.f32 %v1239, %v1240
      %v1242 = vsel %vm916, %v1155, 0.0
      %v1243 = vadd.f32 %v1241, %v1242
      %v1244 = vsel %vm916, %v1156, 0.0
      %v1245 = vadd.f32 %v1243, %v1244
      %v1246 = vsel %vm916, %v1157, 0.0
      %v1247 = vadd.f32 %v1245, %v1246
      %v1248 = vsel %vm916, %v1158, 0.0
      %v1249 = vadd.f32 %v1247, %v1248
      %v1250 = vsel %vm916, %v1159, 0.0
      %v1251 = vadd.f32 %v1249, %v1250
      %v1252 = vsel %vm916, %v1160, 0.0
      %v1253 = vadd.f32 %v1251, %v1252
      %v1254 = vsel %vm916, %v1161, 0.0
      %v1255 = vadd.f32 %v1253, %v1254
      %v1256 = vsel %vm916, %v1162, 0.0
      %v1257 = vadd.f32 %v1255, %v1256
      %v1258 = vsel %vm916, %v1163, 0.0
      %v1259 = vadd.f32 %v1257, %v1258
      %v1260 = vsel %vm916, %v1164, 0.0
      %v1261 = vadd.f32 %v1259, %v1260
      %v1262 = vsel %vm916, %v1165, 0.0
      %v1263 = vadd.f32 %v1261, %v1262
      %v1264 = vsel %vm916, %v1166, 0.0
      %v1265 = vadd.f32 %v1263, %v1264
      %v1266 = vsel %vm916, %v1167, 0.0
      %v1267 = vadd.f32 %v1265, %v1266
      %v1268 = vsel %vm916, %v1168, 0.0
      %v1269 = vadd.f32 %v1267, %v1268
      %v1270 = vsel %vm916, %v1169, 0.0
      %v1271 = vadd.f32 %v1269, %v1270
      %v1272 = vsel %vm916, %v1170, 0.0
      %v1273 = vadd.f32 %v1271, %v1272
      %v1274 = vsel %vm916, %v1171, 0.0
      %v1275 = vadd.f32 %v1273, %v1274
      %v1276 = vsel %vm916, %v1172, 0.0
      %v1277 = vadd.f32 %v1275, %v1276
      %v1278 = vsel %vm916, %v1173, 0.0
      %v1279 = vadd.f32 %v1277, %v1278
      %v1280 = vsel %vm916, %v1174, 0.0
      %v1281 = vadd.f32 %v1279, %v1280
      %v1282 = vsel %vm916, %v1175, 0.0
      %v1283 = vadd.f32 %v1281, %v1282
      %v1284 = vsel %vm916, %v1176, 0.0
      %v1285 = vadd.f32 %v1283, %v1284
      %v1286 = vsel %vm916, %v1177, 0.0
      %v1287 = vadd.f32 %v1285, %v1286
      %v1288 = vsel %vm916, %v1178, 0.0
      %v1289 = vadd.f32 %v1287, %v1288
      %v1290 = vsel %vm916, %v1179, 0.0
      %v1291 = vadd.f32 %v1289, %v1290
      %v1292 = vsel %vm916, %v1180, 0.0
      %v1293 = vadd.f32 %v1291, %v1292
      %v1294 = vsel %vm916, %v1181, 0.0
      %v1295 = vadd.f32 %v1293, %v1294
      %v1296 = vsel %vm916, %v1182, 0.0
      %v1297 = vadd.f32 %v1295, %v1296
      %v1298 = vsel %vm916, %v1183, 0.0
      %v1299 = vadd.f32 %v1297, %v1298
      %v1300 = vsel %vm916, %v1184, 0.0
      %v1301 = vadd.f32 %v1299, %v1300
      %v1302 = vsel %vm916, %v1185, 0.0
      %v1303 = vadd.f32 %v1301, %v1302
      %v1304 = vsel %vm916, %v1186, 0.0
      %v1305 = vadd.f32 %v1303, %v1304
      %v1306 = vsel %vm916, %v1187, 0.0
      %v1307 = vadd.f32 %v1305, %v1306
      %v1308 = vsel %vm916, %v1188, 0.0
      %v1309 = vadd.f32 %v1307, %v1308
      %v1310 = vsel %vm916, %v1189, 0.0
      %v1311 = vadd.f32 %v1309, %v1310
      %v1312 = vsel %vm916, %v1190, 0.0
      %v1313 = vadd.f32 %v1311, %v1312
      %v1314 = vsel %vm916, %v1191, 0.0
      %v1315 = vadd.f32 %v1313, %v1314
      %v1316 = vsel %vm916, %v1192, 0.0
      %v1317 = vadd.f32 %v1315, %v1316
      %v1318 = vsel %vm916, %v1193, 0.0
      %v1319 = vadd.f32 %v1317, %v1318
      %v1320 = vsel %vm916, %v1194, 0.0
      %v1321 = vadd.f32 %v1319, %v1320
      %v1322 = vsel %vm916, %v1195, 0.0
      %v1323 = vadd.f32 %v1321, %v1322
      %v1324 = vsel %vm916, %v1196, 0.0
      %v1325 = vadd.f32 %v1323, %v1324
      %v1326 = vsel %vm916, %v1197, 0.0
      %v1327 = vadd.f32 %v1325, %v1326
      %v1328 = vsel %vm916, %v1198, 0.0
      %v1329 = vadd.f32 %v1327, %v1328
      %v1330 = vsel %vm916, %v1199, 0.0
      %v1331 = vadd.f32 %v1329, %v1330
      %v1332 = vsel %vm916, %v1200, 0.0
      %v1333 = vadd.f32 %v1331, %v1332
      %v1334 = vsel %vm916, %v1201, 0.0
      %v1335 = vadd.f32 %v1333, %v1334
      %v1336 = vsel %vm916, %v1202, 0.0
      %v1337 = vadd.f32 %v1335, %v1336
      %v1338 = vsel %vm916, %v1203, 0.0
      %v1339 = vadd.f32 %v1337, %v1338
      %v1340 = vsel %vm916, %v1204, 0.0
      %v1341 = vadd.f32 %v1339, %v1340
      %v1342 = vsel %vm916, %v1205, 0.0
      %v1343 = vadd.f32 %v1341, %v1342
      %v1344 = vsel %vm916, %v1206, 0.0
      %v1345 = vadd.f32 %v1343, %v1344
      %v1346 = vsel %vm916, %v1207, 0.0
      %v1347 = vadd.f32 %v1345, %v1346
      %v1348 = vsel %vm916, %v1208, 0.0
      %v1349 = vadd.f32 %v1347, %v1348
      %v1350 = vsel %vm916, %v1209, 0.0
      %v1351 = vadd.f32 %v1349, %v1350
      %v1352 = vsel %vm916, %v1210, 0.0
      %v1353 = vadd.f32 %v1351, %v1352
      %v1354 = vrot.slane %v1353, 4
      %v1355 = vadd.f32 %v1353, %v1354
      %v1356 = vrot.slane %v1355, 2
      %v1357 = vadd.f32 %v1355, %v1356
      %v1358 = vrot.slane %v1357, 1
      %v1359 = vadd.f32 %v1357, %v1358
      %v1360 = vmul.f32 %v1359, 0.0017361111
      %v1361 = vadd.f32 %v1360, 1e-05
      %v1362 = vrsqrt.pop %v1361
      %v1363 = vmul.f32 %v1067, %v1362
      %v1364 = vmul.f32 %v1068, %v1362
      %v1365 = vmul.f32 %v1069, %v1362
      %v1366 = vmul.f32 %v1070, %v1362
      %v1367 = vmul.f32 %v1071, %v1362
      %v1368 = vmul.f32 %v1072, %v1362
      %v1369 = vmul.f32 %v1073, %v1362
      %v1370 = vmul.f32 %v1074, %v1362
      %v1371 = vmul.f32 %v1075, %v1362
      %v1372 = vmul.f32 %v1076, %v1362
      %v1373 = vmul.f32 %v1077, %v1362
      %v1374 = vmul.f32 %v1078, %v1362
      %v1375 = vmul.f32 %v1079, %v1362
      %v1376 = vmul.f32 %v1080, %v1362
      %v1377 = vmul.f32 %v1081, %v1362
      %v1378 = vmul.f32 %v1082, %v1362
      %v1379 = vmul.f32 %v1083, %v1362
      %v1380 = vmul.f32 %v1084, %v1362
      %v1381 = vmul.f32 %v1085, %v1362
      %v1382 = vmul.f32 %v1086, %v1362
      %v1383 = vmul.f32 %v1087, %v1362
      %v1384 = vmul.f32 %v1088, %v1362
      %v1385 = vmul.f32 %v1089, %v1362
      %v1386 = vmul.f32 %v1090, %v1362
      %v1387 = vmul.f32 %v1091, %v1362
      %v1388 = vmul.f32 %v1092, %v1362
      %v1389 = vmul.f32 %v1093, %v1362
      %v1390 = vmul.f32 %v1094, %v1362
      %v1391 = vmul.f32 %v1095, %v1362
      %v1392 = vmul.f32 %v1096, %v1362
      %v1393 = vmul.f32 %v1097, %v1362
      %v1394 = vmul.f32 %v1098, %v1362
      %v1395 = vmul.f32 %v1099, %v1362
      %v1396 = vmul.f32 %v1100, %v1362
      %v1397 = vmul.f32 %v1101, %v1362
      %v1398 = vmul.f32 %v1102, %v1362
      %v1399 = vmul.f32 %v1103, %v1362
      %v1400 = vmul.f32 %v1104, %v1362
      %v1401 = vmul.f32 %v1105, %v1362
      %v1402 = vmul.f32 %v1106, %v1362
      %v1403 = vmul.f32 %v1107, %v1362
      %v1404 = vmul.f32 %v1108, %v1362
      %v1405 = vmul.f32 %v1109, %v1362
      %v1406 = vmul.f32 %v1110, %v1362
      %v1407 = vmul.f32 %v1111, %v1362
      %v1408 = vmul.f32 %v1112, %v1362
      %v1409 = vmul.f32 %v1113, %v1362
      %v1410 = vmul.f32 %v1114, %v1362
      %v1411 = vmul.f32 %v1115, %v1362
      %v1412 = vmul.f32 %v1116, %v1362
      %v1413 = vmul.f32 %v1117, %v1362
      %v1414 = vmul.f32 %v1118, %v1362
      %v1415 = vmul.f32 %v1119, %v1362
      %v1416 = vmul.f32 %v1120, %v1362
      %v1417 = vmul.f32 %v1121, %v1362
      %v1418 = vmul.f32 %v1122, %v1362
      %v1419 = vmul.f32 %v1123, %v1362
      %v1420 = vmul.f32 %v1124, %v1362
      %v1421 = vmul.f32 %v1125, %v1362
      %v1422 = vmul.f32 %v1126, %v1362
      %v1423 = vmul.f32 %v1127, %v1362
      %v1424 = vmul.f32 %v1128, %v1362
      %v1425 = vmul.f32 %v1129, %v1362
      %v1426 = vmul.f32 %v1130, %v1362
      %v1427 = vmul.f32 %v1131, %v1362
      %v1428 = vmul.f32 %v1132, %v1362
      %v1429 = vmul.f32 %v1133, %v1362
      %v1430 = vmul.f32 %v1134, %v1362
      %v1431 = vmul.f32 %v1135, %v1362
      %v1432 = vmul.f32 %v1136, %v1362
      %v1433 = vmul.f32 %v1137, %v1362
      %v1434 = vmul.f32 %v1138, %v1362
      %1435 = vst.msk [vmem:[%s170] sm:$0xff] %vm916, %v1363
      %1436 = vst.msk [vmem:[%s170 + $0x8] sm:$0xff] %vm916, %v1364
      %1437 = vst.msk [vmem:[%s170 + $0x10] sm:$0xff] %vm916, %v1365
      %1438 = vst.msk [vmem:[%s170 + $0x18] sm:$0xff] %vm916, %v1366
      %1439 = vst.msk [vmem:[%s170 + $0x20] sm:$0xff] %vm916, %v1367
      %1440 = vst.msk [vmem:[%s170 + $0x28] sm:$0xff] %vm916, %v1368
      %1441 = vst.msk [vmem:[%s170 + $0x30] sm:$0xff] %vm916, %v1369
      %1442 = vst.msk [vmem:[%s170 + $0x38] sm:$0xff] %vm916, %v1370
      %1443 = vst.msk [vmem:[%s170 + $0x40] sm:$0xff] %vm916, %v1371
      %1444 = vst.msk [vmem:[%s170 + $0x48] sm:$0xff] %vm916, %v1372
      %1445 = vst.msk [vmem:[%s170 + $0x50] sm:$0xff] %vm916, %v1373
      %1446 = vst.msk [vmem:[%s170 + $0x58] sm:$0xff] %vm916, %v1374
      %1447 = vst.msk [vmem:[%s170 + $0x60] sm:$0xff] %vm916, %v1375
      %1448 = vst.msk [vmem:[%s170 + $0x68] sm:$0xff] %vm916, %v1376
      %1449 = vst.msk [vmem:[%s170 + $0x70] sm:$0xff] %vm916, %v1377
      %1450 = vst.msk [vmem:[%s170 + $0x78] sm:$0xff] %vm916, %v1378
      %1451 = vst.msk [vmem:[%s170 + $0x80] sm:$0xff] %vm916, %v1379
      %1452 = vst.msk [vmem:[%s170 + $0x88] sm:$0xff] %vm916, %v1380
      %1453 = vst.msk [vmem:[%s170 + $0x90] sm:$0xff] %vm916, %v1381
      %1454 = vst.msk [vmem:[%s170 + $0x98] sm:$0xff] %vm916, %v1382
      %1455 = vst.msk [vmem:[%s170 + $0xa0] sm:$0xff] %vm916, %v1383
      %1456 = vst.msk [vmem:[%s170 + $0xa8] sm:$0xff] %vm916, %v1384
      %1457 = vst.msk [vmem:[%s170 + $0xb0] sm:$0xff] %vm916, %v1385
      %1458 = vst.msk [vmem:[%s170 + $0xb8] sm:$0xff] %vm916, %v1386
      %1459 = vst.msk [vmem:[%s170 + $0xc0] sm:$0xff] %vm916, %v1387
      %1460 = vst.msk [vmem:[%s170 + $0xc8] sm:$0xff] %vm916, %v1388
      %1461 = vst.msk [vmem:[%s170 + $0xd0] sm:$0xff] %vm916, %v1389
      %1462 = vst.msk [vmem:[%s170 + $0xd8] sm:$0xff] %vm916, %v1390
      %1463 = vst.msk [vmem:[%s170 + $0xe0] sm:$0xff] %vm916, %v1391
      %1464 = vst.msk [vmem:[%s170 + $0xe8] sm:$0xff] %vm916, %v1392
      %1465 = vst.msk [vmem:[%s170 + $0xf0] sm:$0xff] %vm916, %v1393
      %1466 = vst.msk [vmem:[%s170 + $0xf8] sm:$0xff] %vm916, %v1394
      %1467 = vst.msk [vmem:[%s170 + $0x100] sm:$0xff] %vm916, %v1395
      %1468 = vst.msk [vmem:[%s170 + $0x108] sm:$0xff] %vm916, %v1396
      %1469 = vst.msk [vmem:[%s170 + $0x110] sm:$0xff] %vm916, %v1397
      %1470 = vst.msk [vmem:[%s170 + $0x118] sm:$0xff] %vm916, %v1398
      %1471 = vst.msk [vmem:[%s170 + $0x120] sm:$0xff] %vm916, %v1399
      %1472 = vst.msk [vmem:[%s170 + $0x128] sm:$0xff] %vm916, %v1400
      %1473 = vst.msk [vmem:[%s170 + $0x130] sm:$0xff] %vm916, %v1401
      %1474 = vst.msk [vmem:[%s170 + $0x138] sm:$0xff] %vm916, %v1402
      %1475 = vst.msk [vmem:[%s170 + $0x140] sm:$0xff] %vm916, %v1403
      %1476 = vst.msk [vmem:[%s170 + $0x148] sm:$0xff] %vm916, %v1404
      %1477 = vst.msk [vmem:[%s170 + $0x150] sm:$0xff] %vm916, %v1405
      %1478 = vst.msk [vmem:[%s170 + $0x158] sm:$0xff] %vm916, %v1406
      %1479 = vst.msk [vmem:[%s170 + $0x160] sm:$0xff] %vm916, %v1407
      %1480 = vst.msk [vmem:[%s170 + $0x168] sm:$0xff] %vm916, %v1408
      %1481 = vst.msk [vmem:[%s170 + $0x170] sm:$0xff] %vm916, %v1409
      %1482 = vst.msk [vmem:[%s170 + $0x178] sm:$0xff] %vm916, %v1410
      %1483 = vst.msk [vmem:[%s170 + $0x180] sm:$0xff] %vm916, %v1411
      %1484 = vst.msk [vmem:[%s170 + $0x188] sm:$0xff] %vm916, %v1412
      %1485 = vst.msk [vmem:[%s170 + $0x190] sm:$0xff] %vm916, %v1413
      %1486 = vst.msk [vmem:[%s170 + $0x198] sm:$0xff] %vm916, %v1414
      %1487 = vst.msk [vmem:[%s170 + $0x1a0] sm:$0xff] %vm916, %v1415
      %1488 = vst.msk [vmem:[%s170 + $0x1a8] sm:$0xff] %vm916, %v1416
      %1489 = vst.msk [vmem:[%s170 + $0x1b0] sm:$0xff] %vm916, %v1417
      %1490 = vst.msk [vmem:[%s170 + $0x1b8] sm:$0xff] %vm916, %v1418
      %1491 = vst.msk [vmem:[%s170 + $0x1c0] sm:$0xff] %vm916, %v1419
      %1492 = vst.msk [vmem:[%s170 + $0x1c8] sm:$0xff] %vm916, %v1420
      %1493 = vst.msk [vmem:[%s170 + $0x1d0] sm:$0xff] %vm916, %v1421
      %1494 = vst.msk [vmem:[%s170 + $0x1d8] sm:$0xff] %vm916, %v1422
      %1495 = vst.msk [vmem:[%s170 + $0x1e0] sm:$0xff] %vm916, %v1423
      %1496 = vst.msk [vmem:[%s170 + $0x1e8] sm:$0xff] %vm916, %v1424
      %1497 = vst.msk [vmem:[%s170 + $0x1f0] sm:$0xff] %vm916, %v1425
      %1498 = vst.msk [vmem:[%s170 + $0x1f8] sm:$0xff] %vm916, %v1426
      %1499 = vst.msk [vmem:[%s170 + $0x200] sm:$0xff] %vm916, %v1427
      %1500 = vst.msk [vmem:[%s170 + $0x208] sm:$0xff] %vm916, %v1428
      %1501 = vst.msk [vmem:[%s170 + $0x210] sm:$0xff] %vm916, %v1429
      %1502 = vst.msk [vmem:[%s170 + $0x218] sm:$0xff] %vm916, %v1430
      %1503 = vst.msk [vmem:[%s170 + $0x220] sm:$0xff] %vm916, %v1431
      %1504 = vst.msk [vmem:[%s170 + $0x228] sm:$0xff] %vm916, %v1432
      %1505 = vst.msk [vmem:[%s170 + $0x230] sm:$0xff] %vm916, %v1433
      %1506 = vst.msk [vmem:[%s170 + $0x238] sm:$0xff] %vm916, %v1434
      %p1507 = scmp.lt.s32.totalorder %s14, 1
      %s1508 = scalar_select %p1507, %s14, 1
      %s1509 = smul.addr %s1508, 72
      %s1510 = smul.addr %s1509, 8
      %s1511 = scalar_lea.vmem %s3, %s1510
      // Predicated region
      $region33: #{actor_forward.4} parent=31 // pred_check
        %p1512 = pneg %p100
      $region34: #{actor_forward.4} parent=31 // pred_check_branch
        %1514 = sbr.rel (%p1512) target = $region36
      $region35: #{actor_forward.4} parent=31 // pred_region
        _
      $region36: #{actor_forward.4} parent=31 // pred_fallthru
        _
    $region32: #{actor_forward.4} parent=5 // pred_fallthru
      _
    %p1515 = scmp.le.s32.totalorder 2, %s9
    // Predicated region
    $region37: #{actor_forward.4} parent=5 // pred_check
      %p1516 = pneg %p1515
    $region38: #{actor_forward.4} parent=5 // pred_check_branch
      %1518 = sbr.rel (%p1516) target = $region40
    $region39: #{actor_forward.4} parent=5 // pred_region
      %s1519 = ssub.s32 %s9, 2
      // Predicated region
      $region41: #{actor_forward.4} parent=39 // pred_check
        %p1520 = pneg %p106
      $region42: #{actor_forward.4} parent=39 // pred_check_branch
        %1522 = sbr.rel (%p1520) target = $region44
      $region43: #{actor_forward.4} parent=39 // pred_region
        %p1523 = scmp.lt.s32.totalorder %s15, 1
        %s1524 = scalar_select %p1523, %s15, 1
        %s1525 = smul.addr %s1524, 72
        %s1526 = smul.addr %s1525, 8
        %s1527 = scalar_lea.vmem %s3, %s1526
      $region44: #{actor_forward.4} parent=39 // pred_fallthru
        _
    $region40: #{actor_forward.4} parent=5 // pred_fallthru
      _
  $region6: #{actor_forward.4} parent=0 // loop_footer
    %s13 = sadd.s32 1, %s9
  $region7: #{actor_forward.4} parent=0 // loop_footer_branch
    %8 = sbr.rel target = $region3
  $region8: #{actor_forward.4} parent=0 // loop_exit
    _

// kernel: actor_forward.5
$region0: #{actor_forward.5}
  #allocation0 [shape = 'u32[]', space=smem, size = 0x4, offset = 0x4, fixed_abs, tag = 'smem constant byte address 0x4 - core index']
  #allocation1 [shape = 'u32[144,128]{1,0:T(1,128)}', space=vmem, size = 0x12000, scoped, tag = 'internal scratch']
  %s0 = inlined_call_operand.vmem [shape: f32[2,121,512], index: 0, kind: input, shape index: {}]
  %s1 = inlined_call_operand.vmem [shape: bf16[512,64], index: 1, kind: input, shape index: {}]
  %s2 = inlined_call_operand.vmem [shape: f32[1,64], index: 2, kind: input, shape index: {}]
  %s3 = inlined_call_operand.vmem [shape: f32[2,121,64], index: 3, kind: output, shape index: {}]
  %s4 = sld [smem:[#allocation0]]
  $region45: #{actor_forward.5} parent=0
    _
  %s6 = ssub.s32 1, %s4
  %s7 = scalar_select 0, %s6, %s4
  loop: start=0, step=1, limit=4
  $region2: #{actor_forward.5} parent=0 // loop_pre_header
    _
  $region3: #{actor_forward.5} parent=0 // loop_header
    %s9 = sphi 0, %s13
    %p10 = scmp.ge.s32.totalorder %s9, 4
    %s19 = sphi 0, %s21
    %s22 = sphi 0, %s19
    %s23 = sphi 0, %s22
    %s39 = sphi 0, %s23
    %s43 = sphi 0, %s43
    %s45 = sphi 0, %s43
    %s46 = sphi 0, %s45
    %s60 = sphi 0, %s46
    %s64 = sphi 0, %s64
    %s66 = sphi 0, %s64
    %s67 = sphi 0, %s66
    %s81 = sphi 0, %s67
    %s87 = sphi 0, %s89
    %s90 = sphi 0, %s87
    %s91 = sphi 0, %s90
    %s107 = sphi 0, %s91
  $region4: #{actor_forward.5} parent=0 // loop_header_branch
    %12 = sbr.rel (%p10) target = $region8
  $region5: #{actor_forward.5} parent=0 // loop_body
    %s14 = ssub.s32 %s9, 1
    %s15 = ssub.s32 %s9, 2
    %s16 = sadd.s32 %s9, 1
    %s17 = ssub.s32 %s9, %s16
    %p18 = scmp.eq.s32.totalorder %s17, 0
    %s20 = sadd.s32 %s19, 1
    %s21 = scalar_select %p18, %s19, %s20
    %p24 = pneg %p18
    %p25 = scmp.eq.s32.totalorder %s9, 1
    %p26 = por %p24, %p25
    %p27 = scmp.ne.s32.totalorder %s19, %s22
    %p28 = scmp.eq.s32.totalorder %s9, 0
    %p29 = por %p27, %p28
    %p30 = scmp.ne.s32.totalorder %s19, %s22
    %p31 = scmp.eq.s32.totalorder %s14, 1
    %p32 = por %p30, %p31
    %p33 = scmp.ne.s32.totalorder %s22, %s23
    %p34 = scmp.eq.s32.totalorder %s14, 0
    %p35 = por %p33, %p34
    %p36 = scmp.ne.s32.totalorder %s22, %s23
    %p37 = scmp.eq.s32.totalorder %s15, 1
    %p38 = por %p36, %p37
    %p40 = scmp.ne.s32.totalorder %s23, %s39
    %p41 = scmp.eq.s32.totalorder %s15, 0
    %p42 = por %p40, %p41
    %s44 = sadd.s32 %s43, 1
    %p47 = scmp.eq.s32.totalorder %s9, 1
    %p48 = scmp.ne.s32.totalorder %s43, %s45
    %p49 = scmp.eq.s32.totalorder %s9, 0
    %p50 = por %p48, %p49
    %p51 = scmp.ne.s32.totalorder %s43, %s45
    %p52 = scmp.eq.s32.totalorder %s14, 1
    %p53 = por %p51, %p52
    %p54 = scmp.ne.s32.totalorder %s45, %s46
    %p55 = scmp.eq.s32.totalorder %s14, 0
    %p56 = por %p54, %p55
    %p57 = scmp.ne.s32.totalorder %s45, %s46
    %p58 = scmp.eq.s32.totalorder %s15, 1
    %p59 = por %p57, %p58
    %p61 = scmp.ne.s32.totalorder %s46, %s60
    %p62 = scmp.eq.s32.totalorder %s15, 0
    %p63 = por %p61, %p62
    %s65 = sadd.s32 %s64, 1
    %p68 = scmp.eq.s32.totalorder %s9, 1
    %p69 = scmp.ne.s32.totalorder %s64, %s66
    %p70 = scmp.eq.s32.totalorder %s9, 0
    %p71 = por %p69, %p70
    %p72 = scmp.ne.s32.totalorder %s64, %s66
    %p73 = scmp.eq.s32.totalorder %s14, 1
    %p74 = por %p72, %p73
    %p75 = scmp.ne.s32.totalorder %s66, %s67
    %p76 = scmp.eq.s32.totalorder %s14, 0
    %p77 = por %p75, %p76
    %p78 = scmp.ne.s32.totalorder %s66, %s67
    %p79 = scmp.eq.s32.totalorder %s15, 1
    %p80 = por %p78, %p79
    %p82 = scmp.ne.s32.totalorder %s67, %s81
    %p83 = scmp.eq.s32.totalorder %s15, 0
    %p84 = por %p82, %p83
    %s85 = ssub.s32 %s9, %s16
    %p86 = scmp.eq.s32.totalorder %s85, 0
    %s88 = sadd.s32 %s87, 1
    %s89 = scalar_select %p86, %s87, %s88
    %p92 = pneg %p86
    %p93 = scmp.eq.s32.totalorder %s9, 1
    %p94 = por %p92, %p93
    %p95 = scmp.ne.s32.totalorder %s87, %s90
    %p96 = scmp.eq.s32.totalorder %s9, 0
    %p97 = por %p95, %p96
    %p98 = scmp.ne.s32.totalorder %s87, %s90
    %p99 = scmp.eq.s32.totalorder %s14, 1
    %p100 = por %p98, %p99
    %p101 = scmp.ne.s32.totalorder %s90, %s91
    %p102 = scmp.eq.s32.totalorder %s14, 0
    %p103 = por %p101, %p102
    %p104 = scmp.ne.s32.totalorder %s90, %s91
    %p105 = scmp.eq.s32.totalorder %s15, 1
    %p106 = por %p104, %p105
    %p108 = scmp.ne.s32.totalorder %s91, %s107
    %p109 = scmp.eq.s32.totalorder %s15, 0
    %p110 = por %p108, %p109
    %p111 = scmp.le.s32.totalorder 1, %s9
    %p112 = scmp.lt.s32.totalorder %s9, 3
    %p113 = pnand %p111, %p112
    %p114 = pneg %p113
    // Predicated region
    $region9: #{actor_forward.5} parent=5 // pred_check
      _
    $region10: #{actor_forward.5} parent=5 // pred_check_branch
      %116 = sbr.rel (%p113) target = $region12
    $region11: #{actor_forward.5} parent=5 // pred_region
      %s117 = ssub.s32 %s9, 1
      // Predicated region
      $region13: #{actor_forward.5} parent=11 // pred_check
        %p118 = pneg %p56
      $region14: #{actor_forward.5} parent=11 // pred_check_branch
        %120 = sbr.rel (%p118) target = $region16
      $region15: #{actor_forward.5} parent=11 // pred_region
        _
      $region16: #{actor_forward.5} parent=11 // pred_fallthru
        _
      // Predicated region
      $region17: #{actor_forward.5} parent=11 // pred_check
        %p121 = pneg %p77
      $region18: #{actor_forward.5} parent=11 // pred_check_branch
        %123 = sbr.rel (%p121) target = $region20
      $region19: #{actor_forward.5} parent=11 // pred_region
        _
      $region20: #{actor_forward.5} parent=11 // pred_fallthru
        _
    $region12: #{actor_forward.5} parent=5 // pred_fallthru
      _
    %p124 = scmp.lt.s32.totalorder %s9, 2
    // Predicated region
    $region21: #{actor_forward.5} parent=5 // pred_check
      %p125 = pneg %p124
    $region22: #{actor_forward.5} parent=5 // pred_check_branch
      %127 = sbr.rel (%p125) target = $region24
    $region23: #{actor_forward.5} parent=5 // pred_region
      // Predicated region
      $region25: #{actor_forward.5} parent=23 // pred_check
        %p128 = pneg %p29
      $region26: #{actor_forward.5} parent=23 // pred_check_branch
        %130 = sbr.rel (%p128) target = $region28
      $region27: #{actor_forward.5} parent=23 // pred_region
        %p131 = scmp.lt.s32.totalorder %s9, 1
        %s132 = scalar_select %p131, %s9, 1
        %s133 = smul.addr %s132, 64
        %s134 = smul.addr %s133, 8
        %s135 = scalar_lea.vmem %s0, %s134
      $region28: #{actor_forward.5} parent=23 // pred_fallthru
        _
    $region24: #{actor_forward.5} parent=5 // pred_fallthru
      _
    %p136 = scmp.le.s32.totalorder 1, %s9
    %p137 = scmp.lt.s32.totalorder %s9, 3
    %p138 = pnand %p136, %p137
    %p139 = pneg %p138
    // Predicated region
    $region29: #{actor_forward.5} parent=5 // pred_check
      _
    $region30: #{actor_forward.5} parent=5 // pred_check_branch
      %141 = sbr.rel (%p138) target = $region32
    $region31: #{actor_forward.5} parent=5 // pred_region
      %s142 = ssub.s32 %s9, 1
      %p143 = scmp.lt.s32.totalorder %s14, 1
      %s144 = scalar_select %p143, %s14, 1
      %s145 = smul.addr %s144, 64
      %s146 = smul.addr %s145, 8
      %s147 = scalar_lea.vmem %s0, %s146
      %p148 = pneg %p35
      %p149 = pneg %p32
      %p150 = pneg %p56
      %p151 = pneg %p53
      %p152 = pneg %p77
      %p153 = pneg %p74
      %p154 = pneg %p103
      %p155 = pneg %p100
      %p156 = scmp.lt.s32.totalorder %s14, 1
      %s157 = scalar_select %p156, %s14, 1
      %s158 = smul.addr %s157, 16
      %s159 = smul.addr %s158, 8
      %s160 = scalar_lea.vmem %s3, %s159
      %p161 = scmp.lt.s32.totalorder %s14, 1
      %s162 = scalar_select %p161, %s14, 1
      %s163 = smul.addr %s162, 64
      %s164 = smul.addr %s163, 8
      %s165 = scalar_lea.vmem %s0, %s164
      %p166 = scmp.lt.s32.totalorder %s14, 1
      %s167 = scalar_select %p166, %s14, 1
      %s168 = smul.addr %s167, 16
      %s169 = smul.addr %s168, 8
      %s170 = scalar_lea.vmem %s3, %s169
      %v172 = vld [vmem:[%s165] sm:$0xff]
      %v173 = vld [vmem:[%s165 + $0x8] sm:$0xff]
      %v174 = vld [vmem:[%s165 + $0x10] sm:$0xff]
      %v175 = vld [vmem:[%s165 + $0x18] sm:$0xff]
      %v176 = vld [vmem:[%s165 + $0x20] sm:$0xff]
      %v177 = vld [vmem:[%s165 + $0x28] sm:$0xff]
      %v178 = vld [vmem:[%s165 + $0x30] sm:$0xff]
      %v179 = vld [vmem:[%s165 + $0x38] sm:$0xff]
      %v180 = vld [vmem:[%s165 + $0x40] sm:$0xff]
      %v181 = vld [vmem:[%s165 + $0x48] sm:$0xff]
      %v182 = vld [vmem:[%s165 + $0x50] sm:$0xff]
      %v183 = vld [vmem:[%s165 + $0x58] sm:$0xff]
      %v184 = vld [vmem:[%s165 + $0x60] sm:$0xff]
      %v185 = vld [vmem:[%s165 + $0x68] sm:$0xff]
      %v186 = vld [vmem:[%s165 + $0x70] sm:$0xff]
      %v187 = vld [vmem:[%s165 + $0x78] sm:$0xff]
      %v188 = vld [vmem:[%s165 + $0x80] sm:$0xff]
      %v189 = vld [vmem:[%s165 + $0x88] sm:$0xff]
      %v190 = vld [vmem:[%s165 + $0x90] sm:$0xff]
      %v191 = vld [vmem:[%s165 + $0x98] sm:$0xff]
      %v192 = vld [vmem:[%s165 + $0xa0] sm:$0xff]
      %v193 = vld [vmem:[%s165 + $0xa8] sm:$0xff]
      %v194 = vld [vmem:[%s165 + $0xb0] sm:$0xff]
      %v195 = vld [vmem:[%s165 + $0xb8] sm:$0xff]
      %v196 = vld [vmem:[%s165 + $0xc0] sm:$0xff]
      %v197 = vld [vmem:[%s165 + $0xc8] sm:$0xff]
      %v198 = vld [vmem:[%s165 + $0xd0] sm:$0xff]
      %v199 = vld [vmem:[%s165 + $0xd8] sm:$0xff]
      %v200 = vld [vmem:[%s165 + $0xe0] sm:$0xff]
      %v201 = vld [vmem:[%s165 + $0xe8] sm:$0xff]
      %v202 = vld [vmem:[%s165 + $0xf0] sm:$0xff]
      %v203 = vld [vmem:[%s165 + $0xf8] sm:$0xff]
      %v204 = vld [vmem:[%s165 + $0x100] sm:$0xff]
      %v205 = vld [vmem:[%s165 + $0x108] sm:$0xff]
      %v206 = vld [vmem:[%s165 + $0x110] sm:$0xff]
      %v207 = vld [vmem:[%s165 + $0x118] sm:$0xff]
      %v208 = vld [vmem:[%s165 + $0x120] sm:$0xff]
      %v209 = vld [vmem:[%s165 + $0x128] sm:$0xff]
      %v210 = vld [vmem:[%s165 + $0x130] sm:$0xff]
      %v211 = vld [vmem:[%s165 + $0x138] sm:$0xff]
      %v212 = vld [vmem:[%s165 + $0x140] sm:$0xff]
      %v213 = vld [vmem:[%s165 + $0x148] sm:$0xff]
      %v214 = vld [vmem:[%s165 + $0x150] sm:$0xff]
      %v215 = vld [vmem:[%s165 + $0x158] sm:$0xff]
      %v216 = vld [vmem:[%s165 + $0x160] sm:$0xff]
      %v217 = vld [vmem:[%s165 + $0x168] sm:$0xff]
      %v218 = vld [vmem:[%s165 + $0x170] sm:$0xff]
      %v219 = vld [vmem:[%s165 + $0x178] sm:$0xff]
      %v220 = vld [vmem:[%s165 + $0x180] sm:$0xff]
      %v221 = vld [vmem:[%s165 + $0x188] sm:$0xff]
      %v222 = vld [vmem:[%s165 + $0x190] sm:$0xff]
      %v223 = vld [vmem:[%s165 + $0x198] sm:$0xff]
      %v224 = vld [vmem:[%s165 + $0x1a0] sm:$0xff]
      %v225 = vld [vmem:[%s165 + $0x1a8] sm:$0xff]
      %v226 = vld [vmem:[%s165 + $0x1b0] sm:$0xff]
      %v227 = vld [vmem:[%s165 + $0x1b8] sm:$0xff]
      %v228 = vld [vmem:[%s165 + $0x1c0] sm:$0xff]
      %v229 = vld [vmem:[%s165 + $0x1c8] sm:$0xff]
      %v230 = vld [vmem:[%s165 + $0x1d0] sm:$0xff]
      %v231 = vld [vmem:[%s165 + $0x1d8] sm:$0xff]
      %v232 = vld [vmem:[%s165 + $0x1e0] sm:$0x1]
      %v233 = vld [vmem:[%s165 + $0x1e8] sm:$0x1]
      %v234 = vld [vmem:[%s165 + $0x1f0] sm:$0x1]
      %v235 = vld [vmem:[%s165 + $0x1f8] sm:$0x1]
      %v236 = vpack.c.bf16 %v176, %v172
      %v237 = vpack.c.bf16 %v177, %v173
      %v238 = vpack.c.bf16 %v178, %v174
      %v239 = vpack.c.bf16 %v179, %v175
      %v240 = vpack.c.bf16 %v184, %v180
      %v241 = vpack.c.bf16 %v185, %v181
      %v242 = vpack.c.bf16 %v186, %v182
      %v243 = vpack.c.bf16 %v187, %v183
      %v244 = vpack.c.bf16 %v192, %v188
      %v245 = vpack.c.bf16 %v193, %v189
      %v246 = vpack.c.bf16 %v194, %v190
      %v247 = vpack.c.bf16 %v195, %v191
      %v248 = vpack.c.bf16 %v200, %v196
      %v249 = vpack.c.bf16 %v201, %v197
      %v250 = vpack.c.bf16 %v202, %v198
      %v251 = vpack.c.bf16 %v203, %v199
      %v252 = vpack.c.bf16 %v208, %v204
      %v253 = vpack.c.bf16 %v209, %v205
      %v254 = vpack.c.bf16 %v210, %v206
      %v255 = vpack.c.bf16 %v211, %v207
      %v256 = vpack.c.bf16 %v216, %v212
      %v257 = vpack.c.bf16 %v217, %v213
      %v258 = vpack.c.bf16 %v218, %v214
      %v259 = vpack.c.bf16 %v219, %v215
      %v260 = vpack.c.bf16 %v224, %v220
      %v261 = vpack.c.bf16 %v225, %v221
      %v262 = vpack.c.bf16 %v226, %v222
      %v263 = vpack.c.bf16 %v227, %v223
      %v264 = vpack.c.bf16 %v232, %v228
      %v265 = vpack.c.bf16 %v233, %v229
      %v266 = vpack.c.bf16 %v234, %v230
      %v267 = vpack.c.bf16 %v235, %v231
      %v268 = vld [vmem:[%s1] sm:$0xf]
      %v269 = vld [vmem:[%s1 + $0x4] sm:$0xf]
      %v270 = vld [vmem:[%s1 + $0x8] sm:$0xf]
      %v271 = vld [vmem:[%s1 + $0xc] sm:$0xf]
      %v272 = vld [vmem:[%s1 + $0x10] sm:$0xf]
      %v273 = vld [vmem:[%s1 + $0x14] sm:$0xf]
      %v274 = vld [vmem:[%s1 + $0x18] sm:$0xf]
      %v275 = vld [vmem:[%s1 + $0x1c] sm:$0xf]
      %v276 = vld [vmem:[%s1 + $0x20] sm:$0xf]
      %v277 = vld [vmem:[%s1 + $0x24] sm:$0xf]
      %v278 = vld [vmem:[%s1 + $0x28] sm:$0xf]
      %v279 = vld [vmem:[%s1 + $0x2c] sm:$0xf]
      %v280 = vld [vmem:[%s1 + $0x30] sm:$0xf]
      %v281 = vld [vmem:[%s1 + $0x34] sm:$0xf]
      %v282 = vld [vmem:[%s1 + $0x38] sm:$0xf]
      %v283 = vld [vmem:[%s1 + $0x3c] sm:$0xf]
      %v284 = vld [vmem:[%s1 + $0x40] sm:$0xf]
      %v285 = vld [vmem:[%s1 + $0x44] sm:$0xf]
      %v286 = vld [vmem:[%s1 + $0x48] sm:$0xf]
      %v287 = vld [vmem:[%s1 + $0x4c] sm:$0xf]
      %v288 = vld [vmem:[%s1 + $0x50] sm:$0xf]
      %v289 = vld [vmem:[%s1 + $0x54] sm:$0xf]
      %v290 = vld [vmem:[%s1 + $0x58] sm:$0xf]
      %v291 = vld [vmem:[%s1 + $0x5c] sm:$0xf]
      %v292 = vld [vmem:[%s1 + $0x60] sm:$0xf]
      %v293 = vld [vmem:[%s1 + $0x64] sm:$0xf]
      %v294 = vld [vmem:[%s1 + $0x68] sm:$0xf]
      %v295 = vld [vmem:[%s1 + $0x6c] sm:$0xf]
      %v296 = vld [vmem:[%s1 + $0x70] sm:$0xf]
      %v297 = vld [vmem:[%s1 + $0x74] sm:$0xf]
      %v298 = vld [vmem:[%s1 + $0x78] sm:$0xf]
      %v299 = vld [vmem:[%s1 + $0x7c] sm:$0xf]
      %v300 = vld [vmem:[%s1 + $0x80] sm:$0xf]
      %v301 = vld [vmem:[%s1 + $0x84] sm:$0xf]
      %v302 = vld [vmem:[%s1 + $0x88] sm:$0xf]
      %v303 = vld [vmem:[%s1 + $0x8c] sm:$0xf]
      %v304 = vld [vmem:[%s1 + $0x90] sm:$0xf]
      %v305 = vld [vmem:[%s1 + $0x94] sm:$0xf]
      %v306 = vld [vmem:[%s1 + $0x98] sm:$0xf]
      %v307 = vld [vmem:[%s1 + $0x9c] sm:$0xf]
      %v308 = vld [vmem:[%s1 + $0xa0] sm:$0xf]
      %v309 = vld [vmem:[%s1 + $0xa4] sm:$0xf]
      %v310 = vld [vmem:[%s1 + $0xa8] sm:$0xf]
      %v311 = vld [vmem:[%s1 + $0xac] sm:$0xf]
      %v312 = vld [vmem:[%s1 + $0xb0] sm:$0xf]
      %v313 = vld [vmem:[%s1 + $0xb4] sm:$0xf]
      %v314 = vld [vmem:[%s1 + $0xb8] sm:$0xf]
      %v315 = vld [vmem:[%s1 + $0xbc] sm:$0xf]
      %v316 = vld [vmem:[%s1 + $0xc0] sm:$0xf]
      %v317 = vld [vmem:[%s1 + $0xc4] sm:$0xf]
      %v318 = vld [vmem:[%s1 + $0xc8] sm:$0xf]
      %v319 = vld [vmem:[%s1 + $0xcc] sm:$0xf]
      %v320 = vld [vmem:[%s1 + $0xd0] sm:$0xf]
      %v321 = vld [vmem:[%s1 + $0xd4] sm:$0xf]
      %v322 = vld [vmem:[%s1 + $0xd8] sm:$0xf]
      %v323 = vld [vmem:[%s1 + $0xdc] sm:$0xf]
      %v324 = vld [vmem:[%s1 + $0xe0] sm:$0xf]
      %v325 = vld [vmem:[%s1 + $0xe4] sm:$0xf]
      %v326 = vld [vmem:[%s1 + $0xe8] sm:$0xf]
      %v327 = vld [vmem:[%s1 + $0xec] sm:$0xf]
      %v328 = vld [vmem:[%s1 + $0xf0] sm:$0xf]
      %v329 = vld [vmem:[%s1 + $0xf4] sm:$0xf]
      %v330 = vld [vmem:[%s1 + $0xf8] sm:$0xf]
      %v331 = vld [vmem:[%s1 + $0xfc] sm:$0xf]
      %v332 = vld [vmem:[%s2] sm:$0x1]
      %v334 = vlaneseq
      %v335 = vshrl.u32 %v334, 7
      %v336 = vsub.s32 0, %v335
      %v337 = vrot.slane %v332, %v336
      %v403 = vunpack.c.l.b16 %v268
      %v404 = vunpack.c.l.b16 %v269
      %v405 = vunpack.c.l.b16 %v270
      %v406 = vunpack.c.l.b16 %v271
      %v407 = vunpack.c.l.b16 %v272
      %v408 = vunpack.c.l.b16 %v273
      %v409 = vunpack.c.l.b16 %v274
      %v410 = vunpack.c.l.b16 %v275
      %v411 = vunpack.c.l.b16 %v276
      %v412 = vunpack.c.l.b16 %v277
      %v413 = vunpack.c.l.b16 %v278
      %v414 = vunpack.c.l.b16 %v279
      %v415 = vunpack.c.l.b16 %v280
      %v416 = vunpack.c.l.b16 %v281
      %v417 = vunpack.c.l.b16 %v282
      %v418 = vunpack.c.l.b16 %v283
      %v419 = vunpack.c.l.b16 %v284
      %v420 = vunpack.c.l.b16 %v285
      %v421 = vunpack.c.l.b16 %v286
      %v422 = vunpack.c.l.b16 %v287
      %v423 = vunpack.c.l.b16 %v288
      %v424 = vunpack.c.l.b16 %v289
      %v425 = vunpack.c.l.b16 %v290
      %v426 = vunpack.c.l.b16 %v291
      %v427 = vunpack.c.l.b16 %v292
      %v428 = vunpack.c.l.b16 %v293
      %v429 = vunpack.c.l.b16 %v294
      %v430 = vunpack.c.l.b16 %v295
      %v431 = vunpack.c.l.b16 %v296
      %v432 = vunpack.c.l.b16 %v297
      %v433 = vunpack.c.l.b16 %v298
      %v434 = vunpack.c.l.b16 %v299
      %v435 = vunpack.c.l.b16 %v300
      %v436 = vunpack.c.l.b16 %v301
      %v437 = vunpack.c.l.b16 %v302
      %v438 = vunpack.c.l.b16 %v303
      %v439 = vunpack.c.l.b16 %v304
      %v440 = vunpack.c.l.b16 %v305
      %v441 = vunpack.c.l.b16 %v306
      %v442 = vunpack.c.l.b16 %v307
      %v443 = vunpack.c.l.b16 %v308
      %v444 = vunpack.c.l.b16 %v309
      %v445 = vunpack.c.l.b16 %v310
      %v446 = vunpack.c.l.b16 %v311
      %v447 = vunpack.c.l.b16 %v312
      %v448 = vunpack.c.l.b16 %v313
      %v449 = vunpack.c.l.b16 %v314
      %v450 = vunpack.c.l.b16 %v315
      %v451 = vunpack.c.l.b16 %v316
      %v452 = vunpack.c.l.b16 %v317
      %v453 = vunpack.c.l.b16 %v318
      %v454 = vunpack.c.l.b16 %v319
      %v455 = vunpack.c.l.b16 %v320
      %v456 = vunpack.c.l.b16 %v321
      %v457 = vunpack.c.l.b16 %v322
      %v458 = vunpack.c.l.b16 %v323
      %v459 = vunpack.c.l.b16 %v324
      %v460 = vunpack.c.l.b16 %v325
      %v461 = vunpack.c.l.b16 %v326
      %v462 = vunpack.c.l.b16 %v327
      %v463 = vunpack.c.l.b16 %v328
      %v464 = vunpack.c.l.b16 %v329
      %v465 = vunpack.c.l.b16 %v330
      %v466 = vunpack.c.l.b16 %v331
      %v467 = vpack.c.b16 %v404, %v403
      %v468 = vpack.c.b16 %v406, %v405
      %v469 = vpack.c.b16 %v408, %v407
      %v470 = vpack.c.b16 %v410, %v409
      %v471 = vpack.c.b16 %v412, %v411
      %v472 = vpack.c.b16 %v414, %v413
      %v473 = vpack.c.b16 %v416, %v415
      %v474 = vpack.c.b16 %v418, %v417
      %v475 = vpack.c.b16 %v420, %v419
      %v476 = vpack.c.b16 %v422, %v421
      %v477 = vpack.c.b16 %v424, %v423
      %v478 = vpack.c.b16 %v426, %v425
      %v479 = vpack.c.b16 %v428, %v427
      %v480 = vpack.c.b16 %v430, %v429
      %v481 = vpack.c.b16 %v432, %v431
      %v482 = vpack.c.b16 %v434, %v433
      %v483 = vpack.c.b16 %v436, %v435
      %v484 = vpack.c.b16 %v438, %v437
      %v485 = vpack.c.b16 %v440, %v439
      %v486 = vpack.c.b16 %v442, %v441
      %v487 = vpack.c.b16 %v444, %v443
      %v488 = vpack.c.b16 %v446, %v445
      %v489 = vpack.c.b16 %v448, %v447
      %v490 = vpack.c.b16 %v450, %v449
      %v491 = vpack.c.b16 %v452, %v451
      %v492 = vpack.c.b16 %v454, %v453
      %v493 = vpack.c.b16 %v456, %v455
      %v494 = vpack.c.b16 %v458, %v457
      %v495 = vpack.c.b16 %v460, %v459
      %v496 = vpack.c.b16 %v462, %v461
      %v497 = vpack.c.b16 %v464, %v463
      %v498 = vpack.c.b16 %v466, %v465
      %531 = vmatprep.subr.bf16.mxu0 0
      %532 = vmatpush1.bf16.msra.mxu0 %v467
      %533 = vmatprep.subr.bf16.mxu0 0
      %534 = vmatpush1.bf16.msra.mxu0 %v468
      %535 = vmatprep.subr.bf16.mxu0 0
      %536 = vmatpush1.bf16.msra.mxu0 %v469
      %537 = vmatprep.subr.bf16.mxu0 0
      %538 = vmatpush1.bf16.msra.mxu0 %v470
      %539 = vmatprep.subr.bf16.mxu0 0
      %540 = vmatpush1.bf16.msra.mxu0 %v471
      %541 = vmatprep.subr.bf16.mxu0 0
      %542 = vmatpush1.bf16.msra.mxu0 %v472
      %543 = vmatprep.subr.bf16.mxu0 0
      %544 = vmatpush1.bf16.msra.mxu0 %v473
      %545 = vmatprep.subr.bf16.mxu0 0
      %546 = vmatpush1.bf16.msra.mxu0 %v474
      %547 = vmatprep.subr.bf16.mxu0 0
      %548 = vmatpush1.bf16.msra.mxu0 %v475
      %549 = vmatprep.subr.bf16.mxu0 0
      %550 = vmatpush1.bf16.msra.mxu0 %v476
      %551 = vmatprep.subr.bf16.mxu0 0
      %552 = vmatpush1.bf16.msra.mxu0 %v477
      %553 = vmatprep.subr.bf16.mxu0 0
      %554 = vmatpush1.bf16.msra.mxu0 %v478
      %555 = vmatprep.subr.bf16.mxu0 0
      %556 = vmatpush1.bf16.msra.mxu0 %v479
      %557 = vmatprep.subr.bf16.mxu0 0
      %558 = vmatpush1.bf16.msra.mxu0 %v480
      %559 = vmatprep.subr.bf16.mxu0 0
      %560 = vmatpush1.bf16.msra.mxu0 %v481
      %561 = vmatprep.subr.bf16.mxu0 0
      %562 = vmatpush1.bf16.msra.mxu0 %v482
      %563 = vmatprep.mubr.bf16.mxu0 %v237
      %564 = vmatmul.mubr.bf16.gmra.mrb[0].mxu0 %v236
      %v565 = vpop.f32.mrb[0].mxu0
      %v566 = vadd.f32 %v337, %v565
      %v567 = vpop.f32.mrb[0].mxu0
      %v568 = vpop.f32.mrb[0].mxu0
      %v569 = vadd.f32 %v337, %v568
      %v570 = vpop.f32.mrb[0].mxu0
      %571 = vmatprep.mubr.bf16.mxu0 %v241
      %572 = vmatmul.mubr.bf16.gmra.mrb[0].mxu0 %v240
      %v573 = vpop.f32.mrb[0].mxu0
      %v574 = vadd.f32 %v337, %v573
      %v575 = vpop.f32.mrb[0].mxu0
      %v576 = vpop.f32.mrb[0].mxu0
      %v577 = vadd.f32 %v337, %v576
      %v578 = vpop.f32.mrb[0].mxu0
      %579 = vmatprep.mubr.bf16.mxu0 %v245
      %580 = vmatmul.mubr.bf16.gmra.mrb[0].mxu0 %v244
      %v581 = vpop.f32.mrb[0].mxu0
      %v582 = vadd.f32 %v337, %v581
      %v583 = vpop.f32.mrb[0].mxu0
      %v584 = vpop.f32.mrb[0].mxu0
      %v585 = vadd.f32 %v337, %v584
      %v586 = vpop.f32.mrb[0].mxu0
      %587 = vmatprep.mubr.bf16.mxu0 %v249
      %588 = vmatmul.mubr.bf16.gmra.mrb[0].mxu0 %v248
      %v589 = vpop.f32.mrb[0].mxu0
      %v590 = vadd.f32 %v337, %v589
      %v591 = vpop.f32.mrb[0].mxu0
      %v592 = vpop.f32.mrb[0].mxu0
      %v593 = vadd.f32 %v337, %v592
      %v594 = vpop.f32.mrb[0].mxu0
      %595 = vmatprep.mubr.bf16.mxu0 %v253
      %596 = vmatmul.mubr.bf16.gmra.mrb[0].mxu0 %v252
      %v597 = vpop.f32.mrb[0].mxu0
      %v598 = vadd.f32 %v337, %v597
      %v599 = vpop.f32.mrb[0].mxu0
      %v600 = vpop.f32.mrb[0].mxu0
      %v601 = vadd.f32 %v337, %v600
      %v602 = vpop.f32.mrb[0].mxu0
      %603 = vmatprep.mubr.bf16.mxu0 %v257
      %604 = vmatmul.mubr.bf16.gmra.mrb[0].mxu0 %v256
      %v605 = vpop.f32.mrb[0].mxu0
      %v606 = vadd.f32 %v337, %v605
      %v607 = vpop.f32.mrb[0].mxu0
      %v608 = vpop.f32.mrb[0].mxu0
      %v609 = vadd.f32 %v337, %v608
      %v610 = vpop.f32.mrb[0].mxu0
      %611 = vmatprep.mubr.bf16.mxu0 %v261
      %612 = vmatmul.mubr.bf16.gmra.mrb[0].mxu0 %v260
      %v613 = vpop.f32.mrb[0].mxu0
      %v614 = vadd.f32 %v337, %v613
      %v615 = vpop.f32.mrb[0].mxu0
      %v616 = vpop.f32.mrb[0].mxu0
      %v617 = vadd.f32 %v337, %v616
      %v618 = vpop.f32.mrb[0].mxu0
      %619 = vmatprep.mubr.bf16.mxu0 %v265
      %620 = vmatmul.mubr.bf16.gmra.mrb[0].mxu0 %v264
      %v621 = vpop.f32.mrb[0].mxu0
      %v622 = vadd.f32 %v337, %v621
      %v623 = vpop.f32.mrb[0].mxu0
      %v624 = vpop.f32.mrb[0].mxu0
      %v625 = vadd.f32 %v337, %v624
      %v626 = vpop.f32.mrb[0].mxu0
      %627 = vdwg.mxu0
      %628 = vmatprep.subr.bf16.mxu0 0
      %629 = vmatpush1.bf16.msra.mxu0 %v483
      %630 = vmatprep.subr.bf16.mxu0 0
      %631 = vmatpush1.bf16.msra.mxu0 %v484
      %632 = vmatprep.subr.bf16.mxu0 0
      %633 = vmatpush1.bf16.msra.mxu0 %v485
      %634 = vmatprep.subr.bf16.mxu0 0
      %635 = vmatpush1.bf16.msra.mxu0 %v486
      %636 = vmatprep.subr.bf16.mxu0 0
      %637 = vmatpush1.bf16.msra.mxu0 %v487
      %638 = vmatprep.subr.bf16.mxu0 0
      %639 = vmatpush1.bf16.msra.mxu0 %v488
      %640 = vmatprep.subr.bf16.mxu0 0
      %641 = vmatpush1.bf16.msra.mxu0 %v489
      %642 = vmatprep.subr.bf16.mxu0 0
      %643 = vmatpush1.bf16.msra.mxu0 %v490
      %644 = vmatprep.subr.bf16.mxu0 0
      %645 = vmatpush1.bf16.msra.mxu0 %v491
      %646 = vmatprep.subr.bf16.mxu0 0
      %647 = vmatpush1.bf16.msra.mxu0 %v492
      %648 = vmatprep.subr.bf16.mxu0 0
      %649 = vmatpush1.bf16.msra.mxu0 %v493
      %650 = vmatprep.subr.bf16.mxu0 0
      %651 = vmatpush1.bf16.msra.mxu0 %v494
      %652 = vmatprep.subr.bf16.mxu0 0
      %653 = vmatpush1.bf16.msra.mxu0 %v495
      %654 = vmatprep.subr.bf16.mxu0 0
      %655 = vmatpush1.bf16.msra.mxu0 %v496
      %656 = vmatprep.subr.bf16.mxu0 0
      %657 = vmatpush1.bf16.msra.mxu0 %v497
      %658 = vmatprep.subr.bf16.mxu0 0
      %659 = vmatpush1.bf16.msra.mxu0 %v498
      %660 = vmatprep.mubr.bf16.mxu0 %v239
      %661 = vmatmul.mubr.bf16.gmra.mrb[0].mxu0 %v238
      %v662 = vpop.f32.mrb[0].mxu0
      %v663 = vadd.f32 %v566, %v662
      %v664 = vpop.f32.mrb[0].mxu0
      %v665 = vpop.f32.mrb[0].mxu0
      %v666 = vadd.f32 %v569, %v665
      %v667 = vpop.f32.mrb[0].mxu0
      %668 = vmatprep.mubr.bf16.mxu0 %v243
      %669 = vmatmul.mubr.bf16.gmra.mrb[0].mxu0 %v242
      %v670 = vpop.f32.mrb[0].mxu0
      %v671 = vadd.f32 %v574, %v670
      %v672 = vpop.f32.mrb[0].mxu0
      %v673 = vpop.f32.mrb[0].mxu0
      %v674 = vadd.f32 %v577, %v673
      %v675 = vpop.f32.mrb[0].mxu0
      %676 = vmatprep.mubr.bf16.mxu0 %v247
      %677 = vmatmul.mubr.bf16.gmra.mrb[0].mxu0 %v246
      %v678 = vpop.f32.mrb[0].mxu0
      %v679 = vadd.f32 %v582, %v678
      %v680 = vpop.f32.mrb[0].mxu0
      %v681 = vpop.f32.mrb[0].mxu0
      %v682 = vadd.f32 %v585, %v681
      %v683 = vpop.f32.mrb[0].mxu0
      %684 = vmatprep.mubr.bf16.mxu0 %v251
      %685 = vmatmul.mubr.bf16.gmra.mrb[0].mxu0 %v250
      %v686 = vpop.f32.mrb[0].mxu0
      %v687 = vadd.f32 %v590, %v686
      %v688 = vpop.f32.mrb[0].mxu0
      %v689 = vpop.f32.mrb[0].mxu0
      %v690 = vadd.f32 %v593, %v689
      %v691 = vpop.f32.mrb[0].mxu0
      %692 = vmatprep.mubr.bf16.mxu0 %v255
      %693 = vmatmul.mubr.bf16.gmra.mrb[0].mxu0 %v254
      %v694 = vpop.f32.mrb[0].mxu0
      %v695 = vadd.f32 %v598, %v694
      %v696 = vpop.f32.mrb[0].mxu0
      %v697 = vpop.f32.mrb[0].mxu0
      %v698 = vadd.f32 %v601, %v697
      %v699 = vpop.f32.mrb[0].mxu0
      %700 = vmatprep.mubr.bf16.mxu0 %v259
      %701 = vmatmul.mubr.bf16.gmra.mrb[0].mxu0 %v258
      %v702 = vpop.f32.mrb[0].mxu0
      %v703 = vadd.f32 %v606, %v702
      %v704 = vpop.f32.mrb[0].mxu0
      %v705 = vpop.f32.mrb[0].mxu0
      %v706 = vadd.f32 %v609, %v705
      %v707 = vpop.f32.mrb[0].mxu0
      %708 = vmatprep.mubr.bf16.mxu0 %v263
      %709 = vmatmul.mubr.bf16.gmra.mrb[0].mxu0 %v262
      %v710 = vpop.f32.mrb[0].mxu0
      %v711 = vadd.f32 %v614, %v710
      %v712 = vpop.f32.mrb[0].mxu0
      %v713 = vpop.f32.mrb[0].mxu0
      %v714 = vadd.f32 %v617, %v713
      %v715 = vpop.f32.mrb[0].mxu0
      %716 = vmatprep.mubr.bf16.mxu0 %v267
      %717 = vmatmul.mubr.bf16.gmra.mrb[0].mxu0 %v266
      %v718 = vpop.f32.mrb[0].mxu0
      %v719 = vadd.f32 %v622, %v718
      %v720 = vpop.f32.mrb[0].mxu0
      %v721 = vpop.f32.mrb[0].mxu0
      %v722 = vadd.f32 %v625, %v721
      %v723 = vpop.f32.mrb[0].mxu0
      %724 = vdwg.mxu0
      %v725 = vmax.f32 %v663, 0.0
      %v726 = vmax.f32 %v666, 0.0
      %v727 = vmax.f32 %v671, 0.0
      %v728 = vmax.f32 %v674, 0.0
      %v729 = vmax.f32 %v679, 0.0
      %v730 = vmax.f32 %v682, 0.0
      %v731 = vmax.f32 %v687, 0.0
      %v732 = vmax.f32 %v690, 0.0
      %v733 = vmax.f32 %v695, 0.0
      %v734 = vmax.f32 %v698, 0.0
      %v735 = vmax.f32 %v703, 0.0
      %v736 = vmax.f32 %v706, 0.0
      %v737 = vmax.f32 %v711, 0.0
      %v738 = vmax.f32 %v714, 0.0
      %v739 = vmax.f32 %v719, 0.0
      %v740 = vmax.f32 %v722, 0.0
      %vm741 = vcmask 523264
      %v742 = vsel %vm741, %v725, 0.0
      %v743 = vsel %vm741, %v726, 0.0
      %v744 = vadd.f32 %v742, %v743
      %v745 = vsel %vm741, %v727, 0.0
      %v746 = vadd.f32 %v744, %v745
      %v747 = vsel %vm741, %v728, 0.0
      %v748 = vadd.f32 %v746, %v747
      %v749 = vsel %vm741, %v729, 0.0
      %v750 = vadd.f32 %v748, %v749
      %v751 = vsel %vm741, %v730, 0.0
      %v752 = vadd.f32 %v750, %v751
      %v753 = vsel %vm741, %v731, 0.0
      %v754 = vadd.f32 %v752, %v753
      %v755 = vsel %vm741, %v732, 0.0
      %v756 = vadd.f32 %v754, %v755
      %v757 = vsel %vm741, %v733, 0.0
      %v758 = vadd.f32 %v756, %v757
      %v759 = vsel %vm741, %v734, 0.0
      %v760 = vadd.f32 %v758, %v759
      %v761 = vsel %vm741, %v735, 0.0
      %v762 = vadd.f32 %v760, %v761
      %v763 = vsel %vm741, %v736, 0.0
      %v764 = vadd.f32 %v762, %v763
      %v765 = vsel %vm741, %v737, 0.0
      %v766 = vadd.f32 %v764, %v765
      %v767 = vsel %vm741, %v738, 0.0
      %v768 = vadd.f32 %v766, %v767
      %v769 = vsel %vm741, %v739, 0.0
      %v770 = vadd.f32 %v768, %v769
      %vm771 = vcmask 516096
      %v772 = vsel %vm771, %v740, 0.0
      %v773 = vadd.f32 %v770, %v772
      %v774 = vrot.slane %v773, 4
      %v775 = vadd.f32 %v773, %v774
      %v776 = vrot.slane %v775, 2
      %v777 = vadd.f32 %v775, %v776
      %v778 = vrot.slane %v777, 1
      %v779 = vadd.f32 %v777, %v778
      %v780 = vmul.f32 %v779, 0.008264462
      %v781 = vsub.f32 %v725, %v780
      %v782 = vsub.f32 %v726, %v780
      %v783 = vsub.f32 %v727, %v780
      %v784 = vsub.f32 %v728, %v780
      %v785 = vsub.f32 %v729, %v780
      %v786 = vsub.f32 %v730, %v780
      %v787 = vsub.f32 %v731, %v780
      %v788 = vsub.f32 %v732, %v780
      %v789 = vsub.f32 %v733, %v780
      %v790 = vsub.f32 %v734, %v780
      %v791 = vsub.f32 %v735, %v780
      %v792 = vsub.f32 %v736, %v780
      %v793 = vsub.f32 %v737, %v780
      %v794 = vsub.f32 %v738, %v780
      %v795 = vsub.f32 %v739, %v780
      %v796 = vsub.f32 %v740, %v780
      %v797 = vmul.f32 %v781, %v781
      %v798 = vmul.f32 %v782, %v782
      %v799 = vmul.f32 %v783, %v783
      %v800 = vmul.f32 %v784, %v784
      %v801 = vmul.f32 %v785, %v785
      %v802 = vmul.f32 %v786, %v786
      %v803 = vmul.f32 %v787, %v787
      %v804 = vmul.f32 %v788, %v788
      %v805 = vmul.f32 %v789, %v789
      %v806 = vmul.f32 %v790, %v790
      %v807 = vmul.f32 %v791, %v791
      %v808 = vmul.f32 %v792, %v792
      %v809 = vmul.f32 %v793, %v793
      %v810 = vmul.f32 %v794, %v794
      %v811 = vmul.f32 %v795, %v795
      %v812 = vmul.f32 %v796, %v796
      %v813 = vsel %vm741, %v797, 0.0
      %v814 = vsel %vm741, %v798, 0.0
      %v815 = vadd.f32 %v813, %v814
      %v816 = vsel %vm741, %v799, 0.0
      %v817 = vadd.f32 %v815, %v816
      %v818 = vsel %vm741, %v800, 0.0
      %v819 = vadd.f32 %v817, %v818
      %v820 = vsel %vm741, %v801, 0.0
      %v821 = vadd.f32 %v819, %v820
      %v822 = vsel %vm741, %v802, 0.0
      %v823 = vadd.f32 %v821, %v822
      %v824 = vsel %vm741, %v803, 0.0
      %v825 = vadd.f32 %v823, %v824
      %v826 = vsel %vm741, %v804, 0.0
      %v827 = vadd.f32 %v825, %v826
      %v828 = vsel %vm741, %v805, 0.0
      %v829 = vadd.f32 %v827, %v828
      %v830 = vsel %vm741, %v806, 0.0
      %v831 = vadd.f32 %v829, %v830
      %v832 = vsel %vm741, %v807, 0.0
      %v833 = vadd.f32 %v831, %v832
      %v834 = vsel %vm741, %v808, 0.0
      %v835 = vadd.f32 %v833, %v834
      %v836 = vsel %vm741, %v809, 0.0
      %v837 = vadd.f32 %v835, %v836
      %v838 = vsel %vm741, %v810, 0.0
      %v839 = vadd.f32 %v837, %v838
      %v840 = vsel %vm741, %v811, 0.0
      %v841 = vadd.f32 %v839, %v840
      %v842 = vsel %vm771, %v812, 0.0
      %v843 = vadd.f32 %v841, %v842
      %v844 = vrot.slane %v843, 4
      %v845 = vadd.f32 %v843, %v844
      %v846 = vrot.slane %v845, 2
      %v847 = vadd.f32 %v845, %v846
      %v848 = vrot.slane %v847, 1
      %v849 = vadd.f32 %v847, %v848
      %v850 = vmul.f32 %v849, 0.008264462
      %v851 = vadd.f32 %v850, 1e-05
      %v852 = vrsqrt.pop %v851
      %v853 = vmul.f32 %v781, %v852
      %v854 = vmul.f32 %v782, %v852
      %v855 = vmul.f32 %v783, %v852
      %v856 = vmul.f32 %v784, %v852
      %v857 = vmul.f32 %v785, %v852
      %v858 = vmul.f32 %v786, %v852
      %v859 = vmul.f32 %v787, %v852
      %v860 = vmul.f32 %v788, %v852
      %v861 = vmul.f32 %v789, %v852
      %v862 = vmul.f32 %v790, %v852
      %v863 = vmul.f32 %v791, %v852
      %v864 = vmul.f32 %v792, %v852
      %v865 = vmul.f32 %v793, %v852
      %v866 = vmul.f32 %v794, %v852
      %v867 = vmul.f32 %v795, %v852
      %v868 = vmul.f32 %v796, %v852
      %869 = vst.msk [vmem:[%s170] sm:$0xff] %vm741, %v853
      %870 = vst.msk [vmem:[%s170 + $0x8] sm:$0xff] %vm741, %v854
      %871 = vst.msk [vmem:[%s170 + $0x10] sm:$0xff] %vm741, %v855
      %872 = vst.msk [vmem:[%s170 + $0x18] sm:$0xff] %vm741, %v856
      %873 = vst.msk [vmem:[%s170 + $0x20] sm:$0xff] %vm741, %v857
      %874 = vst.msk [vmem:[%s170 + $0x28] sm:$0xff] %vm741, %v858
      %875 = vst.msk [vmem:[%s170 + $0x30] sm:$0xff] %vm741, %v859
      %876 = vst.msk [vmem:[%s170 + $0x38] sm:$0xff] %vm741, %v860
      %877 = vst.msk [vmem:[%s170 + $0x40] sm:$0xff] %vm741, %v861
      %878 = vst.msk [vmem:[%s170 + $0x48] sm:$0xff] %vm741, %v862
      %879 = vst.msk [vmem:[%s170 + $0x50] sm:$0xff] %vm741, %v863
      %880 = vst.msk [vmem:[%s170 + $0x58] sm:$0xff] %vm741, %v864
      %881 = vst.msk [vmem:[%s170 + $0x60] sm:$0xff] %vm741, %v865
      %882 = vst.msk [vmem:[%s170 + $0x68] sm:$0xff] %vm741, %v866
      %883 = vst.msk [vmem:[%s170 + $0x70] sm:$0xff] %vm741, %v867
      %884 = vst.msk [vmem:[%s170 + $0x78] sm:$0x1] %vm771, %v868
      %p885 = scmp.lt.s32.totalorder %s14, 1
      %s886 = scalar_select %p885, %s14, 1
      %s887 = smul.addr %s886, 16
      %s888 = smul.addr %s887, 8
      %s889 = scalar_lea.vmem %s3, %s888
      // Predicated region
      $region33: #{actor_forward.5} parent=31 // pred_check
        %p890 = pneg %p100
      $region34: #{actor_forward.5} parent=31 // pred_check_branch
        %892 = sbr.rel (%p890) target = $region36
      $region35: #{actor_forward.5} parent=31 // pred_region
        _
      $region36: #{actor_forward.5} parent=31 // pred_fallthru
        _
    $region32: #{actor_forward.5} parent=5 // pred_fallthru
      _
    %p893 = scmp.le.s32.totalorder 2, %s9
    // Predicated region
    $region37: #{actor_forward.5} parent=5 // pred_check
      %p894 = pneg %p893
    $region38: #{actor_forward.5} parent=5 // pred_check_branch
      %896 = sbr.rel (%p894) target = $region40
    $region39: #{actor_forward.5} parent=5 // pred_region
      %s897 = ssub.s32 %s9, 2
      // Predicated region
      $region41: #{actor_forward.5} parent=39 // pred_check
        %p898 = pneg %p106
      $region42: #{actor_forward.5} parent=39 // pred_check_branch
        %900 = sbr.rel (%p898) target = $region44
      $region43: #{actor_forward.5} parent=39 // pred_region
        %p901 = scmp.lt.s32.totalorder %s15, 1
        %s902 = scalar_select %p901, %s15, 1
        %s903 = smul.addr %s902, 16
        %s904 = smul.addr %s903, 8
        %s905 = scalar_lea.vmem %s3, %s904
      $region44: #{actor_forward.5} parent=39 // pred_fallthru
        _
    $region40: #{actor_forward.5} parent=5 // pred_fallthru
      _
  $region6: #{actor_forward.5} parent=0 // loop_footer
    %s13 = sadd.s32 1, %s9
  $region7: #{actor_forward.5} parent=0 // loop_footer_branch
    %8 = sbr.rel target = $region3
  $region8: #{actor_forward.5} parent=0 // loop_exit
    _

// kernel: actor_forward.6
$region0: #{actor_forward.6}
  #allocation0 [shape = 'u32[]', space=smem, size = 0x4, offset = 0x4, fixed_abs, tag = 'smem constant byte address 0x4 - core index']
  #allocation1 [shape = 'u32[144,128]{1,0:T(1,128)}', space=vmem, size = 0x12000, scoped, tag = 'internal scratch']
  %s0 = inlined_call_operand.vmem [shape: f32[2,81,576], index: 0, kind: input, shape index: {}]
  %s1 = inlined_call_operand.vmem [shape: bf16[576,64], index: 1, kind: input, shape index: {}]
  %s2 = inlined_call_operand.vmem [shape: f32[1,64], index: 2, kind: input, shape index: {}]
  %s3 = inlined_call_operand.vmem [shape: f32[2,81,64], index: 3, kind: output, shape index: {}]
  %s4 = sld [smem:[#allocation0]]
  $region45: #{actor_forward.6} parent=0
    _
  %s6 = ssub.s32 1, %s4
  %s7 = scalar_select 0, %s6, %s4
  loop: start=0, step=1, limit=4
  $region2: #{actor_forward.6} parent=0 // loop_pre_header
    _
  $region3: #{actor_forward.6} parent=0 // loop_header
    %s9 = sphi 0, %s13
    %p10 = scmp.ge.s32.totalorder %s9, 4
    %s19 = sphi 0, %s21
    %s22 = sphi 0, %s19
    %s23 = sphi 0, %s22
    %s39 = sphi 0, %s23
    %s43 = sphi 0, %s43
    %s45 = sphi 0, %s43
    %s46 = sphi 0, %s45
    %s60 = sphi 0, %s46
    %s64 = sphi 0, %s64
    %s66 = sphi 0, %s64
    %s67 = sphi 0, %s66
    %s81 = sphi 0, %s67
    %s87 = sphi 0, %s89
    %s90 = sphi 0, %s87
    %s91 = sphi 0, %s90
    %s107 = sphi 0, %s91
  $region4: #{actor_forward.6} parent=0 // loop_header_branch
    %12 = sbr.rel (%p10) target = $region8
  $region5: #{actor_forward.6} parent=0 // loop_body
    %s14 = ssub.s32 %s9, 1
    %s15 = ssub.s32 %s9, 2
    %s16 = sadd.s32 %s9, 1
    %s17 = ssub.s32 %s9, %s16
    %p18 = scmp.eq.s32.totalorder %s17, 0
    %s20 = sadd.s32 %s19, 1
    %s21 = scalar_select %p18, %s19, %s20
    %p24 = pneg %p18
    %p25 = scmp.eq.s32.totalorder %s9, 1
    %p26 = por %p24, %p25
    %p27 = scmp.ne.s32.totalorder %s19, %s22
    %p28 = scmp.eq.s32.totalorder %s9, 0
    %p29 = por %p27, %p28
    %p30 = scmp.ne.s32.totalorder %s19, %s22
    %p31 = scmp.eq.s32.totalorder %s14, 1
    %p32 = por %p30, %p31
    %p33 = scmp.ne.s32.totalorder %s22, %s23
    %p34 = scmp.eq.s32.totalorder %s14, 0
    %p35 = por %p33, %p34
    %p36 = scmp.ne.s32.totalorder %s22, %s23
    %p37 = scmp.eq.s32.totalorder %s15, 1
    %p38 = por %p36, %p37
    %p40 = scmp.ne.s32.totalorder %s23, %s39
    %p41 = scmp.eq.s32.totalorder %s15, 0
    %p42 = por %p40, %p41
    %s44 = sadd.s32 %s43, 1
    %p47 = scmp.eq.s32.totalorder %s9, 1
    %p48 = scmp.ne.s32.totalorder %s43, %s45
    %p49 = scmp.eq.s32.totalorder %s9, 0
    %p50 = por %p48, %p49
    %p51 = scmp.ne.s32.totalorder %s43, %s45
    %p52 = scmp.eq.s32.totalorder %s14, 1
    %p53 = por %p51, %p52
    %p54 = scmp.ne.s32.totalorder %s45, %s46
    %p55 = scmp.eq.s32.totalorder %s14, 0
    %p56 = por %p54, %p55
    %p57 = scmp.ne.s32.totalorder %s45, %s46
    %p58 = scmp.eq.s32.totalorder %s15, 1
    %p59 = por %p57, %p58
    %p61 = scmp.ne.s32.totalorder %s46, %s60
    %p62 = scmp.eq.s32.totalorder %s15, 0
    %p63 = por %p61, %p62
    %s65 = sadd.s32 %s64, 1
    %p68 = scmp.eq.s32.totalorder %s9, 1
    %p69 = scmp.ne.s32.totalorder %s64, %s66
    %p70 = scmp.eq.s32.totalorder %s9, 0
    %p71 = por %p69, %p70
    %p72 = scmp.ne.s32.totalorder %s64, %s66
    %p73 = scmp.eq.s32.totalorder %s14, 1
    %p74 = por %p72, %p73
    %p75 = scmp.ne.s32.totalorder %s66, %s67
    %p76 = scmp.eq.s32.totalorder %s14, 0
    %p77 = por %p75, %p76
    %p78 = scmp.ne.s32.totalorder %s66, %s67
    %p79 = scmp.eq.s32.totalorder %s15, 1
    %p80 = por %p78, %p79
    %p82 = scmp.ne.s32.totalorder %s67, %s81
    %p83 = scmp.eq.s32.totalorder %s15, 0
    %p84 = por %p82, %p83
    %s85 = ssub.s32 %s9, %s16
    %p86 = scmp.eq.s32.totalorder %s85, 0
    %s88 = sadd.s32 %s87, 1
    %s89 = scalar_select %p86, %s87, %s88
    %p92 = pneg %p86
    %p93 = scmp.eq.s32.totalorder %s9, 1
    %p94 = por %p92, %p93
    %p95 = scmp.ne.s32.totalorder %s87, %s90
    %p96 = scmp.eq.s32.totalorder %s9, 0
    %p97 = por %p95, %p96
    %p98 = scmp.ne.s32.totalorder %s87, %s90
    %p99 = scmp.eq.s32.totalorder %s14, 1
    %p100 = por %p98, %p99
    %p101 = scmp.ne.s32.totalorder %s90, %s91
    %p102 = scmp.eq.s32.totalorder %s14, 0
    %p103 = por %p101, %p102
    %p104 = scmp.ne.s32.totalorder %s90, %s91
    %p105 = scmp.eq.s32.totalorder %s15, 1
    %p106 = por %p104, %p105
    %p108 = scmp.ne.s32.totalorder %s91, %s107
    %p109 = scmp.eq.s32.totalorder %s15, 0
    %p110 = por %p108, %p109
    %p111 = scmp.le.s32.totalorder 1, %s9
    %p112 = scmp.lt.s32.totalorder %s9, 3
    %p113 = pnand %p111, %p112
    %p114 = pneg %p113
    // Predicated region
    $region9: #{actor_forward.6} parent=5 // pred_check
      _
    $region10: #{actor_forward.6} parent=5 // pred_check_branch
      %116 = sbr.rel (%p113) target = $region12
    $region11: #{actor_forward.6} parent=5 // pred_region
      %s117 = ssub.s32 %s9, 1
      // Predicated region
      $region13: #{actor_forward.6} parent=11 // pred_check
        %p118 = pneg %p56
      $region14: #{actor_forward.6} parent=11 // pred_check_branch
        %120 = sbr.rel (%p118) target = $region16
      $region15: #{actor_forward.6} parent=11 // pred_region
        _
      $region16: #{actor_forward.6} parent=11 // pred_fallthru
        _
      // Predicated region
      $region17: #{actor_forward.6} parent=11 // pred_check
        %p121 = pneg %p77
      $region18: #{actor_forward.6} parent=11 // pred_check_branch
        %123 = sbr.rel (%p121) target = $region20
      $region19: #{actor_forward.6} parent=11 // pred_region
        _
      $region20: #{actor_forward.6} parent=11 // pred_fallthru
        _
    $region12: #{actor_forward.6} parent=5 // pred_fallthru
      _
    %p124 = scmp.lt.s32.totalorder %s9, 2
    // Predicated region
    $region21: #{actor_forward.6} parent=5 // pred_check
      %p125 = pneg %p124
    $region22: #{actor_forward.6} parent=5 // pred_check_branch
      %127 = sbr.rel (%p125) target = $region24
    $region23: #{actor_forward.6} parent=5 // pred_region
      // Predicated region
      $region25: #{actor_forward.6} parent=23 // pred_check
        %p128 = pneg %p29
      $region26: #{actor_forward.6} parent=23 // pred_check_branch
        %130 = sbr.rel (%p128) target = $region28
      $region27: #{actor_forward.6} parent=23 // pred_region
        %p131 = scmp.lt.s32.totalorder %s9, 1
        %s132 = scalar_select %p131, %s9, 1
        %s133 = smul.addr %s132, 55
        %s134 = smul.addr %s133, 8
        %s135 = scalar_lea.vmem %s0, %s134
      $region28: #{actor_forward.6} parent=23 // pred_fallthru
        _
    $region24: #{actor_forward.6} parent=5 // pred_fallthru
      _
    %p136 = scmp.le.s32.totalorder 1, %s9
    %p137 = scmp.lt.s32.totalorder %s9, 3
    %p138 = pnand %p136, %p137
    %p139 = pneg %p138
    // Predicated region
    $region29: #{actor_forward.6} parent=5 // pred_check
      _
    $region30: #{actor_forward.6} parent=5 // pred_check_branch
      %141 = sbr.rel (%p138) target = $region32
    $region31: #{actor_forward.6} parent=5 // pred_region
      %s142 = ssub.s32 %s9, 1
      %p143 = scmp.lt.s32.totalorder %s14, 1
      %s144 = scalar_select %p143, %s14, 1
      %s145 = smul.addr %s144, 55
      %s146 = smul.addr %s145, 8
      %s147 = scalar_lea.vmem %s0, %s146
      %p148 = pneg %p35
      %p149 = pneg %p32
      %p150 = pneg %p56
      %p151 = pneg %p53
      %p152 = pneg %p77
      %p153 = pneg %p74
      %p154 = pneg %p103
      %p155 = pneg %p100
      %p156 = scmp.lt.s32.totalorder %s14, 1
      %s157 = scalar_select %p156, %s14, 1
      %s158 = smul.addr %s157, 11
      %s159 = smul.addr %s158, 8
      %s160 = scalar_lea.vmem %s3, %s159
      %p161 = scmp.lt.s32.totalorder %s14, 1
      %s162 = scalar_select %p161, %s14, 1
      %s163 = smul.addr %s162, 55
      %s164 = smul.addr %s163, 8
      %s165 = scalar_lea.vmem %s0, %s164
      %p166 = scmp.lt.s32.totalorder %s14, 1
      %s167 = scalar_select %p166, %s14, 1
      %s168 = smul.addr %s167, 11
      %s169 = smul.addr %s168, 8
      %s170 = scalar_lea.vmem %s3, %s169
      %v172 = vld [vmem:[%s165] sm:$0xff]
      %v173 = vld [vmem:[%s165 + $0x8] sm:$0xff]
      %v174 = vld [vmem:[%s165 + $0x10] sm:$0xff]
      %v175 = vld [vmem:[%s165 + $0x18] sm:$0xff]
      %v176 = vld [vmem:[%s165 + $0x20] sm:$0xff]
      %v177 = vld [vmem:[%s165 + $0x28] sm:$0xff]
      %v178 = vld [vmem:[%s165 + $0x30] sm:$0xff]
      %v179 = vld [vmem:[%s165 + $0x38] sm:$0xff]
      %v180 = vld [vmem:[%s165 + $0x40] sm:$0xff]
      %v181 = vld [vmem:[%s165 + $0x48] sm:$0xff]
      %v182 = vld [vmem:[%s165 + $0x50] sm:$0xff]
      %v183 = vld [vmem:[%s165 + $0x58] sm:$0xff]
      %v184 = vld [vmem:[%s165 + $0x60] sm:$0xff]
      %v185 = vld [vmem:[%s165 + $0x68] sm:$0xff]
      %v186 = vld [vmem:[%s165 + $0x70] sm:$0xff]
      %v187 = vld [vmem:[%s165 + $0x78] sm:$0xff]
      %v188 = vld [vmem:[%s165 + $0x80] sm:$0xff]
      %v189 = vld [vmem:[%s165 + $0x88] sm:$0xff]
      %v190 = vld [vmem:[%s165 + $0x90] sm:$0xff]
      %v191 = vld [vmem:[%s165 + $0x98] sm:$0xff]
      %v192 = vld [vmem:[%s165 + $0xa0] sm:$0xff]
      %v193 = vld [vmem:[%s165 + $0xa8] sm:$0xff]
      %v194 = vld [vmem:[%s165 + $0xb0] sm:$0xff]
      %v195 = vld [vmem:[%s165 + $0xb8] sm:$0xff]
      %v196 = vld [vmem:[%s165 + $0xc0] sm:$0xff]
      %v197 = vld [vmem:[%s165 + $0xc8] sm:$0xff]
      %v198 = vld [vmem:[%s165 + $0xd0] sm:$0xff]
      %v199 = vld [vmem:[%s165 + $0xd8] sm:$0xff]
      %v200 = vld [vmem:[%s165 + $0xe0] sm:$0xff]
      %v201 = vld [vmem:[%s165 + $0xe8] sm:$0xff]
      %v202 = vld [vmem:[%s165 + $0xf0] sm:$0xff]
      %v203 = vld [vmem:[%s165 + $0xf8] sm:$0xff]
      %v204 = vld [vmem:[%s165 + $0x100] sm:$0xff]
      %v205 = vld [vmem:[%s165 + $0x108] sm:$0xff]
      %v206 = vld [vmem:[%s165 + $0x110] sm:$0xff]
      %v207 = vld [vmem:[%s165 + $0x118] sm:$0xff]
      %v208 = vld [vmem:[%s165 + $0x120] sm:$0xff]
      %v209 = vld [vmem:[%s165 + $0x128] sm:$0xff]
      %v210 = vld [vmem:[%s165 + $0x130] sm:$0xff]
      %v211 = vld [vmem:[%s165 + $0x138] sm:$0xff]
      %v212 = vld [vmem:[%s165 + $0x140] sm:$0xff]
      %v213 = vld [vmem:[%s165 + $0x148] sm:$0xff]
      %v214 = vld [vmem:[%s165 + $0x150] sm:$0xff]
      %v215 = vld [vmem:[%s165 + $0x158] sm:$0xff]
      %v216 = vld [vmem:[%s165 + $0x160] sm:$0xff]
      %v217 = vld [vmem:[%s165 + $0x168] sm:$0xff]
      %v218 = vld [vmem:[%s165 + $0x170] sm:$0xff]
      %v219 = vld [vmem:[%s165 + $0x178] sm:$0xff]
      %v220 = vld [vmem:[%s165 + $0x180] sm:$0xff]
      %v221 = vld [vmem:[%s165 + $0x188] sm:$0xff]
      %v222 = vld [vmem:[%s165 + $0x190] sm:$0x1]
      %v223 = vld [vmem:[%s165 + $0x198] sm:$0x1]
      %v224 = vld [vmem:[%s165 + $0x1a0] sm:$0x1]
      %v225 = vld [vmem:[%s165 + $0x1a8] sm:$0x1]
      %v226 = vld [vmem:[%s165 + $0x1b0] sm:$0x1]
      %v227 = vpack.c.bf16 %v177, %v172
      %v228 = vpack.c.bf16 %v178, %v173
      %v229 = vpack.c.bf16 %v179, %v174
      %v230 = vpack.c.bf16 %v180, %v175
      %v231 = vpack.c.bf16 %v181, %v176
      %v232 = vpack.c.bf16 %v187, %v182
      %v233 = vpack.c.bf16 %v188, %v183
      %v234 = vpack.c.bf16 %v189, %v184
      %v235 = vpack.c.bf16 %v190, %v185
      %v236 = vpack.c.bf16 %v191, %v186
      %v237 = vpack.c.bf16 %v197, %v192
      %v238 = vpack.c.bf16 %v198, %v193
      %v239 = vpack.c.bf16 %v199, %v194
      %v240 = vpack.c.bf16 %v200, %v195
      %v241 = vpack.c.bf16 %v201, %v196
      %v242 = vpack.c.bf16 %v207, %v202
      %v243 = vpack.c.bf16 %v208, %v203
      %v244 = vpack.c.bf16 %v209, %v204
      %v245 = vpack.c.bf16 %v210, %v205
      %v246 = vpack.c.bf16 %v211, %v206
      %v247 = vpack.c.bf16 %v217, %v212
      %v248 = vpack.c.bf16 %v218, %v213
      %v249 = vpack.c.bf16 %v219, %v214
      %v250 = vpack.c.bf16 %v220, %v215
      %v251 = vpack.c.bf16 %v221, %v216
      %v252 = vpack.c.bf16 %v222, %v222
      %v253 = vpack.c.bf16 %v223, %v223
      %v254 = vpack.c.bf16 %v224, %v224
      %v255 = vpack.c.bf16 %v225, %v225
      %v256 = vpack.c.bf16 %v226, %v226
      %v257 = vld [vmem:[%s1] sm:$0xf]
      %v258 = vld [vmem:[%s1 + $0x4] sm:$0xf]
      %v259 = vld [vmem:[%s1 + $0x8] sm:$0xf]
      %v260 = vld [vmem:[%s1 + $0xc] sm:$0xf]
      %v261 = vld [vmem:[%s1 + $0x10] sm:$0xf]
      %v262 = vld [vmem:[%s1 + $0x14] sm:$0xf]
      %v263 = vld [vmem:[%s1 + $0x18] sm:$0xf]
      %v264 = vld [vmem:[%s1 + $0x1c] sm:$0xf]
      %v265 = vld [vmem:[%s1 + $0x20] sm:$0xf]
      %v266 = vld [vmem:[%s1 + $0x24] sm:$0xf]
      %v267 = vld [vmem:[%s1 + $0x28] sm:$0xf]
      %v268 = vld [vmem:[%s1 + $0x2c] sm:$0xf]
      %v269 = vld [vmem:[%s1 + $0x30] sm:$0xf]
      %v270 = vld [vmem:[%s1 + $0x34] sm:$0xf]
      %v271 = vld [vmem:[%s1 + $0x38] sm:$0xf]
      %v272 = vld [vmem:[%s1 + $0x3c] sm:$0xf]
      %v273 = vld [vmem:[%s1 + $0x40] sm:$0xf]
      %v274 = vld [vmem:[%s1 + $0x44] sm:$0xf]
      %v275 = vld [vmem:[%s1 + $0x48] sm:$0xf]
      %v276 = vld [vmem:[%s1 + $0x4c] sm:$0xf]
      %v277 = vld [vmem:[%s1 + $0x50] sm:$0xf]
      %v278 = vld [vmem:[%s1 + $0x54] sm:$0xf]
      %v279 = vld [vmem:[%s1 + $0x58] sm:$0xf]
      %v280 = vld [vmem:[%s1 + $0x5c] sm:$0xf]
      %v281 = vld [vmem:[%s1 + $0x60] sm:$0xf]
      %v282 = vld [vmem:[%s1 + $0x64] sm:$0xf]
      %v283 = vld [vmem:[%s1 + $0x68] sm:$0xf]
      %v284 = vld [vmem:[%s1 + $0x6c] sm:$0xf]
      %v285 = vld [vmem:[%s1 + $0x70] sm:$0xf]
      %v286 = vld [vmem:[%s1 + $0x74] sm:$0xf]
      %v287 = vld [vmem:[%s1 + $0x78] sm:$0xf]
      %v288 = vld [vmem:[%s1 + $0x7c] sm:$0xf]
      %v289 = vld [vmem:[%s1 + $0x80] sm:$0xf]
      %v290 = vld [vmem:[%s1 + $0x84] sm:$0xf]
      %v291 = vld [vmem:[%s1 + $0x88] sm:$0xf]
      %v292 = vld [vmem:[%s1 + $0x8c] sm:$0xf]
      %v293 = vld [vmem:[%s1 + $0x90] sm:$0xf]
      %v294 = vld [vmem:[%s1 + $0x94] sm:$0xf]
      %v295 = vld [vmem:[%s1 + $0x98] sm:$0xf]
      %v296 = vld [vmem:[%s1 + $0x9c] sm:$0xf]
      %v297 = vld [vmem:[%s1 + $0xa0] sm:$0xf]
      %v298 = vld [vmem:[%s1 + $0xa4] sm:$0xf]
      %v299 = vld [vmem:[%s1 + $0xa8] sm:$0xf]
      %v300 = vld [vmem:[%s1 + $0xac] sm:$0xf]
      %v301 = vld [vmem:[%s1 + $0xb0] sm:$0xf]
      %v302 = vld [vmem:[%s1 + $0xb4] sm:$0xf]
      %v303 = vld [vmem:[%s1 + $0xb8] sm:$0xf]
      %v304 = vld [vmem:[%s1 + $0xbc] sm:$0xf]
      %v305 = vld [vmem:[%s1 + $0xc0] sm:$0xf]
      %v306 = vld [vmem:[%s1 + $0xc4] sm:$0xf]
      %v307 = vld [vmem:[%s1 + $0xc8] sm:$0xf]
      %v308 = vld [vmem:[%s1 + $0xcc] sm:$0xf]
      %v309 = vld [vmem:[%s1 + $0xd0] sm:$0xf]
      %v310 = vld [vmem:[%s1 + $0xd4] sm:$0xf]
      %v311 = vld [vmem:[%s1 + $0xd8] sm:$0xf]
      %v312 = vld [vmem:[%s1 + $0xdc] sm:$0xf]
      %v313 = vld [vmem:[%s1 + $0xe0] sm:$0xf]
      %v314 = vld [vmem:[%s1 + $0xe4] sm:$0xf]
      %v315 = vld [vmem:[%s1 + $0xe8] sm:$0xf]
      %v316 = vld [vmem:[%s1 + $0xec] sm:$0xf]
      %v317 = vld [vmem:[%s1 + $0xf0] sm:$0xf]
      %v318 = vld [vmem:[%s1 + $0xf4] sm:$0xf]
      %v319 = vld [vmem:[%s1 + $0xf8] sm:$0xf]
      %v320 = vld [vmem:[%s1 + $0xfc] sm:$0xf]
      %v321 = vld [vmem:[%s1 + $0x100] sm:$0xf]
      %v322 = vld [vmem:[%s1 + $0x104] sm:$0xf]
      %v323 = vld [vmem:[%s1 + $0x108] sm:$0xf]
      %v324 = vld [vmem:[%s1 + $0x10c] sm:$0xf]
      %v325 = vld [vmem:[%s1 + $0x110] sm:$0xf]
      %v326 = vld [vmem:[%s1 + $0x114] sm:$0xf]
      %v327 = vld [vmem:[%s1 + $0x118] sm:$0xf]
      %v328 = vld [vmem:[%s1 + $0x11c] sm:$0xf]
      %v329 = vld [vmem:[%s2] sm:$0x1]
      %v331 = vlaneseq
      %v332 = vshrl.u32 %v331, 7
      %v333 = vsub.s32 0, %v332
      %v334 = vrot.slane %v329, %v333
      %v408 = vunpack.c.l.b16 %v257
      %v409 = vunpack.c.l.b16 %v258
      %v410 = vunpack.c.l.b16 %v259
      %v411 = vunpack.c.l.b16 %v260
      %v412 = vunpack.c.l.b16 %v261
      %v413 = vunpack.c.l.b16 %v262
      %v414 = vunpack.c.l.b16 %v263
      %v415 = vunpack.c.l.b16 %v264
      %v416 = vunpack.c.l.b16 %v265
      %v417 = vunpack.c.l.b16 %v266
      %v418 = vunpack.c.l.b16 %v267
      %v419 = vunpack.c.l.b16 %v268
      %v420 = vunpack.c.l.b16 %v269
      %v421 = vunpack.c.l.b16 %v270
      %v422 = vunpack.c.l.b16 %v271
      %v423 = vunpack.c.l.b16 %v272
      %v424 = vunpack.c.l.b16 %v273
      %v425 = vunpack.c.l.b16 %v274
      %v426 = vunpack.c.l.b16 %v275
      %v427 = vunpack.c.l.b16 %v276
      %v428 = vunpack.c.l.b16 %v277
      %v429 = vunpack.c.l.b16 %v278
      %v430 = vunpack.c.l.b16 %v279
      %v431 = vunpack.c.l.b16 %v280
      %v432 = vunpack.c.l.b16 %v281
      %v433 = vunpack.c.l.b16 %v282
      %v434 = vunpack.c.l.b16 %v283
      %v435 = vunpack.c.l.b16 %v284
      %v436 = vunpack.c.l.b16 %v285
      %v437 = vunpack.c.l.b16 %v286
      %v438 = vunpack.c.l.b16 %v287
      %v439 = vunpack.c.l.b16 %v288
      %v440 = vunpack.c.l.b16 %v289
      %v441 = vunpack.c.l.b16 %v290
      %v442 = vunpack.c.l.b16 %v291
      %v443 = vunpack.c.l.b16 %v292
      %v444 = vunpack.c.l.b16 %v293
      %v445 = vunpack.c.l.b16 %v294
      %v446 = vunpack.c.l.b16 %v295
      %v447 = vunpack.c.l.b16 %v296
      %v448 = vunpack.c.l.b16 %v297
      %v449 = vunpack.c.l.b16 %v298
      %v450 = vunpack.c.l.b16 %v299
      %v451 = vunpack.c.l.b16 %v300
      %v452 = vunpack.c.l.b16 %v301
      %v453 = vunpack.c.l.b16 %v302
      %v454 = vunpack.c.l.b16 %v303
      %v455 = vunpack.c.l.b16 %v304
      %v456 = vunpack.c.l.b16 %v305
      %v457 = vunpack.c.l.b16 %v306
      %v458 = vunpack.c.l.b16 %v307
      %v459 = vunpack.c.l.b16 %v308
      %v460 = vunpack.c.l.b16 %v309
      %v461 = vunpack.c.l.b16 %v310
      %v462 = vunpack.c.l.b16 %v311
      %v463 = vunpack.c.l.b16 %v312
      %v464 = vunpack.c.l.b16 %v313
      %v465 = vunpack.c.l.b16 %v314
      %v466 = vunpack.c.l.b16 %v315
      %v467 = vunpack.c.l.b16 %v316
      %v468 = vunpack.c.l.b16 %v317
      %v469 = vunpack.c.l.b16 %v318
      %v470 = vunpack.c.l.b16 %v319
      %v471 = vunpack.c.l.b16 %v320
      %v472 = vunpack.c.l.b16 %v321
      %v473 = vunpack.c.l.b16 %v322
      %v474 = vunpack.c.l.b16 %v323
      %v475 = vunpack.c.l.b16 %v324
      %v476 = vunpack.c.l.b16 %v325
      %v477 = vunpack.c.l.b16 %v326
      %v478 = vunpack.c.l.b16 %v327
      %v479 = vunpack.c.l.b16 %v328
      %v480 = vpack.c.b16 %v409, %v408
      %v481 = vpack.c.b16 %v411, %v410
      %v482 = vpack.c.b16 %v413, %v412
      %v483 = vpack.c.b16 %v415, %v414
      %v484 = vpack.c.b16 %v417, %v416
      %v485 = vpack.c.b16 %v419, %v418
      %v486 = vpack.c.b16 %v421, %v420
      %v487 = vpack.c.b16 %v423, %v422
      %v488 = vpack.c.b16 %v425, %v424
      %v489 = vpack.c.b16 %v427, %v426
      %v490 = vpack.c.b16 %v429, %v428
      %v491 = vpack.c.b16 %v431, %v430
      %v492 = vpack.c.b16 %v433, %v432
      %v493 = vpack.c.b16 %v435, %v434
      %v494 = vpack.c.b16 %v437, %v436
      %v495 = vpack.c.b16 %v439, %v438
      %v496 = vpack.c.b16 %v441, %v440
      %v497 = vpack.c.b16 %v443, %v442
      %v498 = vpack.c.b16 %v445, %v444
      %v499 = vpack.c.b16 %v447, %v446
      %v500 = vpack.c.b16 %v449, %v448
      %v501 = vpack.c.b16 %v451, %v450
      %v502 = vpack.c.b16 %v453, %v452
      %v503 = vpack.c.b16 %v455, %v454
      %v504 = vpack.c.b16 %v457, %v456
      %v505 = vpack.c.b16 %v459, %v458
      %v506 = vpack.c.b16 %v461, %v460
      %v507 = vpack.c.b16 %v463, %v462
      %v508 = vpack.c.b16 %v465, %v464
      %v509 = vpack.c.b16 %v467, %v466
      %v510 = vpack.c.b16 %v469, %v468
      %v511 = vpack.c.b16 %v471, %v470
      %v512 = vpack.c.b16 %v473, %v472
      %v513 = vpack.c.b16 %v475, %v474
      %v514 = vpack.c.b16 %v477, %v476
      %v515 = vpack.c.b16 %v479, %v478
      %vm552 = vcmask 523264
      %v554 = vsel %vm552, %v231, 0
      %v557 = vsel %vm552, %v236, 0
      %v560 = vsel %vm552, %v241, 0
      %v563 = vsel %vm552, %v246, 0
      %v566 = vsel %vm552, %v251, 0
      %v569 = vsel %vm552, %v256, 0
      %571 = vmatprep.subr.bf16.mxu0 0
      %572 = vmatpush1.bf16.msra.mxu0 %v480
      %573 = vmatprep.subr.bf16.mxu0 0
      %574 = vmatpush1.bf16.msra.mxu0 %v481
      %575 = vmatprep.subr.bf16.mxu0 0
      %576 = vmatpush1.bf16.msra.mxu0 %v482
      %577 = vmatprep.subr.bf16.mxu0 0
      %578 = vmatpush1.bf16.msra.mxu0 %v483
      %579 = vmatprep.subr.bf16.mxu0 0
      %580 = vmatpush1.bf16.msra.mxu0 %v484
      %581 = vmatprep.subr.bf16.mxu0 0
      %582 = vmatpush1.bf16.msra.mxu0 %v485
      %583 = vmatprep.subr.bf16.mxu0 0
      %584 = vmatpush1.bf16.msra.mxu0 %v486
      %585 = vmatprep.subr.bf16.mxu0 0
      %586 = vmatpush1.bf16.msra.mxu0 %v487
      %587 = vmatprep.subr.bf16.mxu0 0
      %588 = vmatpush1.bf16.msra.mxu0 %v488
      %589 = vmatprep.subr.bf16.mxu0 0
      %590 = vmatpush1.bf16.msra.mxu0 %v489
      %591 = vmatprep.subr.bf16.mxu0 0
      %592 = vmatpush1.bf16.msra.mxu0 %v490
      %593 = vmatprep.subr.bf16.mxu0 0
      %594 = vmatpush1.bf16.msra.mxu0 %v491
      %595 = vmatprep.subr.bf16.mxu0 0
      %596 = vmatpush1.bf16.msra.mxu0 %v492
      %597 = vmatprep.subr.bf16.mxu0 0
      %598 = vmatpush1.bf16.msra.mxu0 %v493
      %599 = vmatprep.subr.bf16.mxu0 0
      %600 = vmatpush1.bf16.msra.mxu0 %v494
      %601 = vmatprep.subr.bf16.mxu0 0
      %602 = vmatpush1.bf16.msra.mxu0 %v495
      %603 = vmatprep.mubr.bf16.mxu0 %v228
      %604 = vmatmul.mubr.bf16.gmra.mrb[0].mxu0 %v227
      %v605 = vpop.f32.mrb[0].mxu0
      %v606 = vadd.f32 %v334, %v605
      %v607 = vpop.f32.mrb[0].mxu0
      %v608 = vpop.f32.mrb[0].mxu0
      %v609 = vadd.f32 %v334, %v608
      %v610 = vpop.f32.mrb[0].mxu0
      %611 = vmatprep.mubr.bf16.mxu0 %v233
      %612 = vmatmul.mubr.bf16.gmra.mrb[0].mxu0 %v232
      %v613 = vpop.f32.mrb[0].mxu0
      %v614 = vadd.f32 %v334, %v613
      %v615 = vpop.f32.mrb[0].mxu0
      %v616 = vpop.f32.mrb[0].mxu0
      %v617 = vadd.f32 %v334, %v616
      %v618 = vpop.f32.mrb[0].mxu0
      %619 = vmatprep.mubr.bf16.mxu0 %v238
      %620 = vmatmul.mubr.bf16.gmra.mrb[0].mxu0 %v237
      %v621 = vpop.f32.mrb[0].mxu0
      %v622 = vadd.f32 %v334, %v621
      %v623 = vpop.f32.mrb[0].mxu0
      %v624 = vpop.f32.mrb[0].mxu0
      %v625 = vadd.f32 %v334, %v624
      %v626 = vpop.f32.mrb[0].mxu0
      %627 = vmatprep.mubr.bf16.mxu0 %v243
      %628 = vmatmul.mubr.bf16.gmra.mrb[0].mxu0 %v242
      %v629 = vpop.f32.mrb[0].mxu0
      %v630 = vadd.f32 %v334, %v629
      %v631 = vpop.f32.mrb[0].mxu0
      %v632 = vpop.f32.mrb[0].mxu0
      %v633 = vadd.f32 %v334, %v632
      %v634 = vpop.f32.mrb[0].mxu0
      %635 = vmatprep.mubr.bf16.mxu0 %v248
      %636 = vmatmul.mubr.bf16.gmra.mrb[0].mxu0 %v247
      %v637 = vpop.f32.mrb[0].mxu0
      %v638 = vadd.f32 %v334, %v637
      %v639 = vpop.f32.mrb[0].mxu0
      %v640 = vpop.f32.mrb[0].mxu0
      %v641 = vadd.f32 %v334, %v640
      %v642 = vpop.f32.mrb[0].mxu0
      %643 = vmatprep.mubr.bf16.mxu0 %v253
      %644 = vmatmul.mubr.bf16.gmra.mrb[0].mxu0 %v252
      %v645 = vpop.f32.mrb[0].mxu0
      %v646 = vadd.f32 %v334, %v645
      %v647 = vpop.f32.mrb[0].mxu0
      %v648 = vpop.f32.mrb[0].mxu0
      %v649 = vpop.f32.mrb[0].mxu0
      %650 = vdwg.mxu0
      %651 = vmatprep.subr.bf16.mxu0 0
      %652 = vmatpush1.bf16.msra.mxu0 %v496
      %653 = vmatprep.subr.bf16.mxu0 0
      %654 = vmatpush1.bf16.msra.mxu0 %v497
      %655 = vmatprep.subr.bf16.mxu0 0
      %656 = vmatpush1.bf16.msra.mxu0 %v498
      %657 = vmatprep.subr.bf16.mxu0 0
      %658 = vmatpush1.bf16.msra.mxu0 %v499
      %659 = vmatprep.subr.bf16.mxu0 0
      %660 = vmatpush1.bf16.msra.mxu0 %v500
      %661 = vmatprep.subr.bf16.mxu0 0
      %662 = vmatpush1.bf16.msra.mxu0 %v501
      %663 = vmatprep.subr.bf16.mxu0 0
      %664 = vmatpush1.bf16.msra.mxu0 %v502
      %665 = vmatprep.subr.bf16.mxu0 0
      %666 = vmatpush1.bf16.msra.mxu0 %v503
      %667 = vmatprep.subr.bf16.mxu0 0
      %668 = vmatpush1.bf16.msra.mxu0 %v504
      %669 = vmatprep.subr.bf16.mxu0 0
      %670 = vmatpush1.bf16.msra.mxu0 %v505
      %671 = vmatprep.subr.bf16.mxu0 0
      %672 = vmatpush1.bf16.msra.mxu0 %v506
      %673 = vmatprep.subr.bf16.mxu0 0
      %674 = vmatpush1.bf16.msra.mxu0 %v507
      %675 = vmatprep.subr.bf16.mxu0 0
      %676 = vmatpush1.bf16.msra.mxu0 %v508
      %677 = vmatprep.subr.bf16.mxu0 0
      %678 = vmatpush1.bf16.msra.mxu0 %v509
      %679 = vmatprep.subr.bf16.mxu0 0
      %680 = vmatpush1.bf16.msra.mxu0 %v510
      %681 = vmatprep.subr.bf16.mxu0 0
      %682 = vmatpush1.bf16.msra.mxu0 %v511
      %683 = vmatprep.mubr.bf16.mxu0 %v230
      %684 = vmatmul.mubr.bf16.gmra.mrb[0].mxu0 %v229
      %v685 = vpop.f32.mrb[0].mxu0
      %v686 = vadd.f32 %v606, %v685
      %v687 = vpop.f32.mrb[0].mxu0
      %v688 = vpop.f32.mrb[0].mxu0
      %v689 = vadd.f32 %v609, %v688
      %v690 = vpop.f32.mrb[0].mxu0
      %691 = vmatprep.mubr.bf16.mxu0 %v235
      %692 = vmatmul.mubr.bf16.gmra.mrb[0].mxu0 %v234
      %v693 = vpop.f32.mrb[0].mxu0
      %v694 = vadd.f32 %v614, %v693
      %v695 = vpop.f32.mrb[0].mxu0
      %v696 = vpop.f32.mrb[0].mxu0
      %v697 = vadd.f32 %v617, %v696
      %v698 = vpop.f32.mrb[0].mxu0
      %699 = vmatprep.mubr.bf16.mxu0 %v240
      %700 = vmatmul.mubr.bf16.gmra.mrb[0].mxu0 %v239
      %v701 = vpop.f32.mrb[0].mxu0
      %v702 = vadd.f32 %v622, %v701
      %v703 = vpop.f32.mrb[0].mxu0
      %v704 = vpop.f32.mrb[0].mxu0
      %v705 = vadd.f32 %v625, %v704
      %v706 = vpop.f32.mrb[0].mxu0
      %707 = vmatprep.mubr.bf16.mxu0 %v245
      %708 = vmatmul.mubr.bf16.gmra.mrb[0].mxu0 %v244
      %v709 = vpop.f32.mrb[0].mxu0
      %v710 = vadd.f32 %v630, %v709
      %v711 = vpop.f32.mrb[0].mxu0
      %v712 = vpop.f32.mrb[0].mxu0
      %v713 = vadd.f32 %v633, %v712
      %v714 = vpop.f32.mrb[0].mxu0
      %715 = vmatprep.mubr.bf16.mxu0 %v250
      %716 = vmatmul.mubr.bf16.gmra.mrb[0].mxu0 %v249
      %v717 = vpop.f32.mrb[0].mxu0
      %v718 = vadd.f32 %v638, %v717
      %v719 = vpop.f32.mrb[0].mxu0
      %v720 = vpop.f32.mrb[0].mxu0
      %v721 = vadd.f32 %v641, %v720
      %v722 = vpop.f32.mrb[0].mxu0
      %723 = vmatprep.mubr.bf16.mxu0 %v255
      %724 = vmatmul.mubr.bf16.gmra.mrb[0].mxu0 %v254
      %v725 = vpop.f32.mrb[0].mxu0
      %v726 = vadd.f32 %v646, %v725
      %v727 = vpop.f32.mrb[0].mxu0
      %v728 = vpop.f32.mrb[0].mxu0
      %v729 = vpop.f32.mrb[0].mxu0
      %730 = vdwg.mxu0
      %731 = vmatprep.subr.bf16.mxu0 0
      %732 = vmatpush1.bf16.msra.mxu0 %v512
      %733 = vmatprep.subr.bf16.mxu0 0
      %734 = vmatpush1.bf16.msra.mxu0 %v513
      %735 = vmatprep.subr.bf16.mxu0 0
      %736 = vmatpush1.bf16.msra.mxu0 %v514
      %737 = vmatprep.subr.bf16.mxu0 0
      %738 = vmatpush1.bf16.msra.mxu0 %v515
      %739 = vmatprep.subr.bf16.mxu0 0
      %740 = vmatpush1.bf16.msra.mxu0 0
      %741 = vmatprep.subr.bf16.mxu0 0
      %742 = vmatpush1.bf16.msra.mxu0 0
      %743 = vmatprep.subr.bf16.mxu0 0
      %744 = vmatpush1.bf16.msra.mxu0 0
      %745 = vmatprep.subr.bf16.mxu0 0
      %746 = vmatpush1.bf16.msra.mxu0 0
      %747 = vmatprep.subr.bf16.mxu0 0
      %748 = vmatpush1.bf16.msra.mxu0 0
      %749 = vmatprep.subr.bf16.mxu0 0
      %750 = vmatpush1.bf16.msra.mxu0 0
      %751 = vmatprep.subr.bf16.mxu0 0
      %752 = vmatpush1.bf16.msra.mxu0 0
      %753 = vmatprep.subr.bf16.mxu0 0
      %754 = vmatpush1.bf16.msra.mxu0 0
      %755 = vmatprep.subr.bf16.mxu0 0
      %756 = vmatpush1.bf16.msra.mxu0 0
      %757 = vmatprep.subr.bf16.mxu0 0
      %758 = vmatpush1.bf16.msra.mxu0 0
      %759 = vmatprep.subr.bf16.mxu0 0
      %760 = vmatpush1.bf16.msra.mxu0 0
      %761 = vmatprep.subr.bf16.mxu0 0
      %762 = vmatpush1.bf16.msra.mxu0 0
      %763 = vmatprep.mubr.bf16.mxu0 0
      %764 = vmatmul.mubr.bf16.gmra.mrb[0].mxu0 %v554
      %v765 = vpop.f32.mrb[0].mxu0
      %v766 = vadd.f32 %v686, %v765
      %v767 = vpop.f32.mrb[0].mxu0
      %v768 = vpop.f32.mrb[0].mxu0
      %v769 = vadd.f32 %v689, %v768
      %v770 = vpop.f32.mrb[0].mxu0
      %771 = vmatprep.mubr.bf16.mxu0 0
      %772 = vmatmul.mubr.bf16.gmra.mrb[0].mxu0 %v557
      %v773 = vpop.f32.mrb[0].mxu0
      %v774 = vadd.f32 %v694, %v773
      %v775 = vpop.f32.mrb[0].mxu0
      %v776 = vpop.f32.mrb[0].mxu0
      %v777 = vadd.f32 %v697, %v776
      %v778 = vpop.f32.mrb[0].mxu0
      %779 = vmatprep.mubr.bf16.mxu0 0
      %780 = vmatmul.mubr.bf16.gmra.mrb[0].mxu0 %v560
      %v781 = vpop.f32.mrb[0].mxu0
      %v782 = vadd.f32 %v702, %v781
      %v783 = vpop.f32.mrb[0].mxu0
      %v784 = vpop.f32.mrb[0].mxu0
      %v785 = vadd.f32 %v705, %v784
      %v786 = vpop.f32.mrb[0].mxu0
      %787 = vmatprep.mubr.bf16.mxu0 0
      %788 = vmatmul.mubr.bf16.gmra.mrb[0].mxu0 %v563
      %v789 = vpop.f32.mrb[0].mxu0
      %v790 = vadd.f32 %v710, %v789
      %v791 = vpop.f32.mrb[0].mxu0
      %v792 = vpop.f32.mrb[0].mxu0
      %v793 = vadd.f32 %v713, %v792
      %v794 = vpop.f32.mrb[0].mxu0
      %795 = vmatprep.mubr.bf16.mxu0 0
      %796 = vmatmul.mubr.bf16.gmra.mrb[0].mxu0 %v566
      %v797 = vpop.f32.mrb[0].mxu0
      %v798 = vadd.f32 %v718, %v797
      %v799 = vpop.f32.mrb[0].mxu0
      %v800 = vpop.f32.mrb[0].mxu0
      %v801 = vadd.f32 %v721, %v800
      %v802 = vpop.f32.mrb[0].mxu0
      %803 = vmatprep.mubr.bf16.mxu0 0
      %804 = vmatmul.mubr.bf16.gmra.mrb[0].mxu0 %v569
      %v805 = vpop.f32.mrb[0].mxu0
      %v806 = vadd.f32 %v726, %v805
      %v807 = vpop.f32.mrb[0].mxu0
      %v808 = vpop.f32.mrb[0].mxu0
      %v809 = vpop.f32.mrb[0].mxu0
      %810 = vdwg.mxu0
      %v811 = vmax.f32 %v766, 0.0
      %v812 = vmax.f32 %v769, 0.0
      %v813 = vmax.f32 %v774, 0.0
      %v814 = vmax.f32 %v777, 0.0
      %v815 = vmax.f32 %v782, 0.0
      %v816 = vmax.f32 %v785, 0.0
      %v817 = vmax.f32 %v790, 0.0
      %v818 = vmax.f32 %v793, 0.0
      %v819 = vmax.f32 %v798, 0.0
      %v820 = vmax.f32 %v801, 0.0
      %v821 = vmax.f32 %v806, 0.0
      %v822 = vsel %vm552, %v811, 0.0
      %v823 = vsel %vm552, %v812, 0.0
      %v824 = vadd.f32 %v822, %v823
      %v825 = vsel %vm552, %v813, 0.0
      %v826 = vadd.f32 %v824, %v825
      %v827 = vsel %vm552, %v814, 0.0
      %v828 = vadd.f32 %v826, %v827
      %v829 = vsel %vm552, %v815, 0.0
      %v830 = vadd.f32 %v828, %v829
      %v831 = vsel %vm552, %v816, 0.0
      %v832 = vadd.f32 %v830, %v831
      %v833 = vsel %vm552, %v817, 0.0
      %v834 = vadd.f32 %v832, %v833
      %v835 = vsel %vm552, %v818, 0.0
      %v836 = vadd.f32 %v834, %v835
      %v837 = vsel %vm552, %v819, 0.0
      %v838 = vadd.f32 %v836, %v837
      %v839 = vsel %vm552, %v820, 0.0
      %v840 = vadd.f32 %v838, %v839
      %vm841 = vcmask 516096
      %v842 = vsel %vm841, %v821, 0.0
      %v843 = vadd.f32 %v840, %v842
      %v844 = vrot.slane %v843, 4
      %v845 = vadd.f32 %v843, %v844
      %v846 = vrot.slane %v845, 2
      %v847 = vadd.f32 %v845, %v846
      %v848 = vrot.slane %v847, 1
      %v849 = vadd.f32 %v847, %v848
      %v850 = vmul.f32 %v849, 0.012345679
      %v851 = vsub.f32 %v811, %v850
      %v852 = vsub.f32 %v812, %v850
      %v853 = vsub.f32 %v813, %v850
      %v854 = vsub.f32 %v814, %v850
      %v855 = vsub.f32 %v815, %v850
      %v856 = vsub.f32 %v816, %v850
      %v857 = vsub.f32 %v817, %v850
      %v858 = vsub.f32 %v818, %v850
      %v859 = vsub.f32 %v819, %v850
      %v860 = vsub.f32 %v820, %v850
      %v861 = vsub.f32 %v821, %v850
      %v862 = vmul.f32 %v851, %v851
      %v863 = vmul.f32 %v852, %v852
      %v864 = vmul.f32 %v853, %v853
      %v865 = vmul.f32 %v854, %v854
      %v866 = vmul.f32 %v855, %v855
      %v867 = vmul.f32 %v856, %v856
      %v868 = vmul.f32 %v857, %v857
      %v869 = vmul.f32 %v858, %v858
      %v870 = vmul.f32 %v859, %v859
      %v871 = vmul.f32 %v860, %v860
      %v872 = vmul.f32 %v861, %v861
      %v873 = vsel %vm552, %v862, 0.0
      %v874 = vsel %vm552, %v863, 0.0
      %v875 = vadd.f32 %v873, %v874
      %v876 = vsel %vm552, %v864, 0.0
      %v877 = vadd.f32 %v875, %v876
      %v878 = vsel %vm552, %v865, 0.0
      %v879 = vadd.f32 %v877, %v878
      %v880 = vsel %vm552, %v866, 0.0
      %v881 = vadd.f32 %v879, %v880
      %v882 = vsel %vm552, %v867, 0.0
      %v883 = vadd.f32 %v881, %v882
      %v884 = vsel %vm552, %v868, 0.0
      %v885 = vadd.f32 %v883, %v884
      %v886 = vsel %vm552, %v869, 0.0
      %v887 = vadd.f32 %v885, %v886
      %v888 = vsel %vm552, %v870, 0.0
      %v889 = vadd.f32 %v887, %v888
      %v890 = vsel %vm552, %v871, 0.0
      %v891 = vadd.f32 %v889, %v890
      %v892 = vsel %vm841, %v872, 0.0
      %v893 = vadd.f32 %v891, %v892
      %v894 = vrot.slane %v893, 4
      %v895 = vadd.f32 %v893, %v894
      %v896 = vrot.slane %v895, 2
      %v897 = vadd.f32 %v895, %v896
      %v898 = vrot.slane %v897, 1
      %v899 = vadd.f32 %v897, %v898
      %v900 = vmul.f32 %v899, 0.012345679
      %v901 = vadd.f32 %v900, 1e-05
      %v902 = vrsqrt.pop %v901
      %v903 = vmul.f32 %v851, %v902
      %v904 = vmul.f32 %v852, %v902
      %v905 = vmul.f32 %v853, %v902
      %v906 = vmul.f32 %v854, %v902
      %v907 = vmul.f32 %v855, %v902
      %v908 = vmul.f32 %v856, %v902
      %v909 = vmul.f32 %v857, %v902
      %v910 = vmul.f32 %v858, %v902
      %v911 = vmul.f32 %v859, %v902
      %v912 = vmul.f32 %v860, %v902
      %v913 = vmul.f32 %v861, %v902
      %914 = vst.msk [vmem:[%s170] sm:$0xff] %vm552, %v903
      %915 = vst.msk [vmem:[%s170 + $0x8] sm:$0xff] %vm552, %v904
      %916 = vst.msk [vmem:[%s170 + $0x10] sm:$0xff] %vm552, %v905
      %917 = vst.msk [vmem:[%s170 + $0x18] sm:$0xff] %vm552, %v906
      %918 = vst.msk [vmem:[%s170 + $0x20] sm:$0xff] %vm552, %v907
      %919 = vst.msk [vmem:[%s170 + $0x28] sm:$0xff] %vm552, %v908
      %920 = vst.msk [vmem:[%s170 + $0x30] sm:$0xff] %vm552, %v909
      %921 = vst.msk [vmem:[%s170 + $0x38] sm:$0xff] %vm552, %v910
      %922 = vst.msk [vmem:[%s170 + $0x40] sm:$0xff] %vm552, %v911
      %923 = vst.msk [vmem:[%s170 + $0x48] sm:$0xff] %vm552, %v912
      %924 = vst.msk [vmem:[%s170 + $0x50] sm:$0x1] %vm841, %v913
      %p925 = scmp.lt.s32.totalorder %s14, 1
      %s926 = scalar_select %p925, %s14, 1
      %s927 = smul.addr %s926, 11
      %s928 = smul.addr %s927, 8
      %s929 = scalar_lea.vmem %s3, %s928
      // Predicated region
      $region33: #{actor_forward.6} parent=31 // pred_check
        %p930 = pneg %p100
      $region34: #{actor_forward.6} parent=31 // pred_check_branch
        %932 = sbr.rel (%p930) target = $region36
      $region35: #{actor_forward.6} parent=31 // pred_region
        _
      $region36: #{actor_forward.6} parent=31 // pred_fallthru
        _
    $region32: #{actor_forward.6} parent=5 // pred_fallthru
      _
    %p933 = scmp.le.s32.totalorder 2, %s9
    // Predicated region
    $region37: #{actor_forward.6} parent=5 // pred_check
      %p934 = pneg %p933
    $region38: #{actor_forward.6} parent=5 // pred_check_branch
      %936 = sbr.rel (%p934) target = $region40
    $region39: #{actor_forward.6} parent=5 // pred_region
      %s937 = ssub.s32 %s9, 2
      // Predicated region
      $region41: #{actor_forward.6} parent=39 // pred_check
        %p938 = pneg %p106
      $region42: #{actor_forward.6} parent=39 // pred_check_branch
        %940 = sbr.rel (%p938) target = $region44
      $region43: #{actor_forward.6} parent=39 // pred_region
        %p941 = scmp.lt.s32.totalorder %s15, 1
        %s942 = scalar_select %p941, %s15, 1
        %s943 = smul.addr %s942, 11
        %s944 = smul.addr %s943, 8
        %s945 = scalar_lea.vmem %s3, %s944
      $region44: #{actor_forward.6} parent=39 // pred_fallthru
        _
    $region40: #{actor_forward.6} parent=5 // pred_fallthru
      _
  $region6: #{actor_forward.6} parent=0 // loop_footer
    %s13 = sadd.s32 1, %s9
  $region7: #{actor_forward.6} parent=0 // loop_footer_branch
    %8 = sbr.rel target = $region3
  $region8: #{actor_forward.6} parent=0 // loop_exit
    _

// kernel: actor_forward.7
$region0: #{actor_forward.7}
  #allocation0 [shape = 'u32[]', space=smem, size = 0x4, offset = 0x4, fixed_abs, tag = 'smem constant byte address 0x4 - core index']
  #allocation1 [shape = 'u32[144,128]{1,0:T(1,128)}', space=vmem, size = 0x12000, scoped, tag = 'internal scratch']
  #allocation2 [shape = 'f32[8,512]{1,0:T(8,128)}', space=vmem, size = 0x4000, scoped, tag = 'scratch operand']
  %s0 = inlined_call_operand.vmem [shape: f32[8,5376], index: 0, kind: input, shape index: {}]
  %s1 = inlined_call_operand.vmem [shape: bf16[5376,512], index: 1, kind: input, shape index: {}]
  %s2 = inlined_call_operand.vmem [shape: f32[1,512], index: 2, kind: input, shape index: {}]
  %s3 = inlined_call_operand.vmem [shape: bf16[512,128], index: 3, kind: input, shape index: {}]
  %s4 = inlined_call_operand.vmem [shape: f32[1,128], index: 4, kind: input, shape index: {}]
  %s5 = inlined_call_operand.vmem [shape: f32[8,128], index: 5, kind: output, shape index: {}]
  %s6 = sld [smem:[#allocation0]]
  $region61: #{actor_forward.7} parent=0
    _
  %s8 = ssub.s32 1, %s6
  %s9 = scalar_select 0, %s8, %s6
  loop: start=0, step=1, limit=5
  $region2: #{actor_forward.7} parent=0 // loop_pre_header
    _
  $region3: #{actor_forward.7} parent=0 // loop_header
    %s11 = sphi 0, %s15
    %p12 = scmp.ge.s32.totalorder %s11, 5
    %s21 = sphi 0, %s23
    %s24 = sphi 0, %s21
    %s25 = sphi 0, %s24
    %s41 = sphi 0, %s25
    %s47 = sphi 0, %s49
    %s50 = sphi 0, %s47
    %s51 = sphi 0, %s50
    %s67 = sphi 0, %s51
    %s71 = sphi 0, %s71
    %s73 = sphi 0, %s71
    %s74 = sphi 0, %s73
    %s88 = sphi 0, %s74
    %s92 = sphi 0, %s92
    %s94 = sphi 0, %s92
    %s95 = sphi 0, %s94
    %s109 = sphi 0, %s95
    %s113 = sphi 0, %s113
    %s115 = sphi 0, %s113
    %s116 = sphi 0, %s115
    %s130 = sphi 0, %s116
    %s134 = sphi 0, %s134
    %s136 = sphi 0, %s134
    %s137 = sphi 0, %s136
    %s151 = sphi 0, %s137
  $region4: #{actor_forward.7} parent=0 // loop_header_branch
    %14 = sbr.rel (%p12) target = $region8
  $region5: #{actor_forward.7} parent=0 // loop_body
    %s16 = ssub.s32 %s11, 1
    %s17 = ssub.s32 %s11, 2
    %s18 = sadd.s32 %s11, 1
    %s19 = ssub.s32 %s11, %s18
    %p20 = scmp.eq.s32.totalorder %s19, 0
    %s22 = sadd.s32 %s21, 1
    %s23 = scalar_select %p20, %s21, %s22
    %p26 = pneg %p20
    %p27 = scmp.eq.s32.totalorder %s11, 2
    %p28 = por %p26, %p27
    %p29 = scmp.ne.s32.totalorder %s21, %s24
    %p30 = scmp.eq.s32.totalorder %s11, 0
    %p31 = por %p29, %p30
    %p32 = scmp.ne.s32.totalorder %s21, %s24
    %p33 = scmp.eq.s32.totalorder %s16, 2
    %p34 = por %p32, %p33
    %p35 = scmp.ne.s32.totalorder %s24, %s25
    %p36 = scmp.eq.s32.totalorder %s16, 0
    %p37 = por %p35, %p36
    %p38 = scmp.ne.s32.totalorder %s24, %s25
    %p39 = scmp.eq.s32.totalorder %s17, 2
    %p40 = por %p38, %p39
    %p42 = scmp.ne.s32.totalorder %s25, %s41
    %p43 = scmp.eq.s32.totalorder %s17, 0
    %p44 = por %p42, %p43
    %s45 = ssub.s32 %s11, %s18
    %p46 = scmp.eq.s32.totalorder %s45, 0
    %s48 = sadd.s32 %s47, 1
    %s49 = scalar_select %p46, %s47, %s48
    %p52 = pneg %p46
    %p53 = scmp.eq.s32.totalorder %s11, 2
    %p54 = por %p52, %p53
    %p55 = scmp.ne.s32.totalorder %s47, %s50
    %p56 = scmp.eq.s32.totalorder %s11, 0
    %p57 = por %p55, %p56
    %p58 = scmp.ne.s32.totalorder %s47, %s50
    %p59 = scmp.eq.s32.totalorder %s16, 2
    %p60 = por %p58, %p59
    %p61 = scmp.ne.s32.totalorder %s50, %s51
    %p62 = scmp.eq.s32.totalorder %s16, 0
    %p63 = por %p61, %p62
    %p64 = scmp.ne.s32.totalorder %s50, %s51
    %p65 = scmp.eq.s32.totalorder %s17, 2
    %p66 = por %p64, %p65
    %p68 = scmp.ne.s32.totalorder %s51, %s67
    %p69 = scmp.eq.s32.totalorder %s17, 0
    %p70 = por %p68, %p69
    %s72 = sadd.s32 %s71, 1
    %p75 = scmp.eq.s32.totalorder %s11, 2
    %p76 = scmp.ne.s32.totalorder %s71, %s73
    %p77 = scmp.eq.s32.totalorder %s11, 0
    %p78 = por %p76, %p77
    %p79 = scmp.ne.s32.totalorder %s71, %s73
    %p80 = scmp.eq.s32.totalorder %s16, 2
    %p81 = por %p79, %p80
    %p82 = scmp.ne.s32.totalorder %s73, %s74
    %p83 = scmp.eq.s32.totalorder %s16, 0
    %p84 = por %p82, %p83
    %p85 = scmp.ne.s32.totalorder %s73, %s74
    %p86 = scmp.eq.s32.totalorder %s17, 2
    %p87 = por %p85, %p86
    %p89 = scmp.ne.s32.totalorder %s74, %s88
    %p90 = scmp.eq.s32.totalorder %s17, 0
    %p91 = por %p89, %p90
    %s93 = sadd.s32 %s92, 1
    %p96 = scmp.eq.s32.totalorder %s11, 2
    %p97 = scmp.ne.s32.totalorder %s92, %s94
    %p98 = scmp.eq.s32.totalorder %s11, 0
    %p99 = por %p97, %p98
    %p100 = scmp.ne.s32.totalorder %s92, %s94
    %p101 = scmp.eq.s32.totalorder %s16, 2
    %p102 = por %p100, %p101
    %p103 = scmp.ne.s32.totalorder %s94, %s95
    %p104 = scmp.eq.s32.totalorder %s16, 0
    %p105 = por %p103, %p104
    %p106 = scmp.ne.s32.totalorder %s94, %s95
    %p107 = scmp.eq.s32.totalorder %s17, 2
    %p108 = por %p106, %p107
    %p110 = scmp.ne.s32.totalorder %s95, %s109
    %p111 = scmp.eq.s32.totalorder %s17, 0
    %p112 = por %p110, %p111
    %s114 = sadd.s32 %s113, 1
    %p117 = scmp.eq.s32.totalorder %s11, 2
    %p118 = scmp.ne.s32.totalorder %s113, %s115
    %p119 = scmp.eq.s32.totalorder %s11, 0
    %p120 = por %p118, %p119
    %p121 = scmp.ne.s32.totalorder %s113, %s115
    %p122 = scmp.eq.s32.totalorder %s16, 2
    %p123 = por %p121, %p122
    %p124 = scmp.ne.s32.totalorder %s115, %s116
    %p125 = scmp.eq.s32.totalorder %s16, 0
    %p126 = por %p124, %p125
    %p127 = scmp.ne.s32.totalorder %s115, %s116
    %p128 = scmp.eq.s32.totalorder %s17, 2
    %p129 = por %p127, %p128
    %p131 = scmp.ne.s32.totalorder %s116, %s130
    %p132 = scmp.eq.s32.totalorder %s17, 0
    %p133 = por %p131, %p132
    %s135 = sadd.s32 %s134, 1
    %p138 = scmp.eq.s32.totalorder %s11, 2
    %p139 = scmp.ne.s32.totalorder %s134, %s136
    %p140 = scmp.eq.s32.totalorder %s11, 0
    %p141 = por %p139, %p140
    %p142 = scmp.ne.s32.totalorder %s134, %s136
    %p143 = scmp.eq.s32.totalorder %s16, 2
    %p144 = por %p142, %p143
    %p145 = scmp.ne.s32.totalorder %s136, %s137
    %p146 = scmp.eq.s32.totalorder %s16, 0
    %p147 = por %p145, %p146
    %p148 = scmp.ne.s32.totalorder %s136, %s137
    %p149 = scmp.eq.s32.totalorder %s17, 2
    %p150 = por %p148, %p149
    %p152 = scmp.ne.s32.totalorder %s137, %s151
    %p153 = scmp.eq.s32.totalorder %s17, 0
    %p154 = por %p152, %p153
    %p155 = scmp.le.s32.totalorder 1, %s11
    %p156 = scmp.lt.s32.totalorder %s11, 4
    %p157 = pnand %p155, %p156
    %p158 = pneg %p157
    // Predicated region
    $region9: #{actor_forward.7} parent=5 // pred_check
      _
    $region10: #{actor_forward.7} parent=5 // pred_check_branch
      %160 = sbr.rel (%p157) target = $region12
    $region11: #{actor_forward.7} parent=5 // pred_region
      %s161 = ssub.s32 %s11, 1
      // Predicated region
      $region13: #{actor_forward.7} parent=11 // pred_check
        %p162 = pneg %p84
      $region14: #{actor_forward.7} parent=11 // pred_check_branch
        %164 = sbr.rel (%p162) target = $region16
      $region15: #{actor_forward.7} parent=11 // pred_region
        _
      $region16: #{actor_forward.7} parent=11 // pred_fallthru
        _
      // Predicated region
      $region17: #{actor_forward.7} parent=11 // pred_check
        %p165 = pneg %p105
      $region18: #{actor_forward.7} parent=11 // pred_check_branch
        %167 = sbr.rel (%p165) target = $region20
      $region19: #{actor_forward.7} parent=11 // pred_region
        _
      $region20: #{actor_forward.7} parent=11 // pred_fallthru
        _
      // Predicated region
      $region21: #{actor_forward.7} parent=11 // pred_check
        %p168 = pneg %p126
      $region22: #{actor_forward.7} parent=11 // pred_check_branch
        %170 = sbr.rel (%p168) target = $region24
      $region23: #{actor_forward.7} parent=11 // pred_region
        _
      $region24: #{actor_forward.7} parent=11 // pred_fallthru
        _
    $region12: #{actor_forward.7} parent=5 // pred_fallthru
      _
    %p171 = scmp.lt.s32.totalorder %s11, 3
    // Predicated region
    $region25: #{actor_forward.7} parent=5 // pred_check
      %p172 = pneg %p171
    $region26: #{actor_forward.7} parent=5 // pred_check_branch
      %174 = sbr.rel (%p172) target = $region28
    $region27: #{actor_forward.7} parent=5 // pred_region
      // Predicated region
      $region29: #{actor_forward.7} parent=27 // pred_check
        %p175 = pneg %p31
      $region30: #{actor_forward.7} parent=27 // pred_check_branch
        %177 = sbr.rel (%p175) target = $region32
      $region31: #{actor_forward.7} parent=27 // pred_region
        %s178 = smul.u32 14, %s11
        %p179 = scmp.lt.s32.totalorder %s178, 41
        %s180 = scalar_select %p179, %s178, 41
        %s181 = smul.addr %s180, 8
        %s182 = scalar_lea.vmem %s0, %s181
        %s183 = smul.u32 14, %s11
      $region32: #{actor_forward.7} parent=27 // pred_fallthru
        _
      // Predicated region
      $region33: #{actor_forward.7} parent=27 // pred_check
        %p184 = pneg %p57
      $region34: #{actor_forward.7} parent=27 // pred_check_branch
        %186 = sbr.rel (%p184) target = $region36
      $region35: #{actor_forward.7} parent=27 // pred_region
        %s187 = smul.u32 224, %s11
        %p188 = scmp.lt.s32.totalorder %s187, 671
        %s189 = scalar_select %p188, %s187, 671
        %s190 = smul.addr %s189, 4
        %s191 = smul.addr %s190, 4
        %s192 = scalar_lea.vmem %s1, %s191
        %s193 = smul.u32 224, %s11
      $region36: #{actor_forward.7} parent=27 // pred_fallthru
        _
    $region28: #{actor_forward.7} parent=5 // pred_fallthru
      _
    %p194 = scmp.le.s32.totalorder 1, %s11
    %p195 = scmp.lt.s32.totalorder %s11, 4
    %p196 = pnand %p194, %p195
    %p197 = pneg %p196
    // Predicated region
    $region37: #{actor_forward.7} parent=5 // pred_check
      _
    $region38: #{actor_forward.7} parent=5 // pred_check_branch
      %199 = sbr.rel (%p196) target = $region40
    $region39: #{actor_forward.7} parent=5 // pred_region
      %s200 = ssub.s32 %s11, 1
      %s201 = smul.u32 14, %s16
      %p202 = scmp.lt.s32.totalorder %s201, 41
      %s203 = scalar_select %p202, %s201, 41
      %s204 = smul.addr %s203, 8
      %s205 = scalar_lea.vmem %s0, %s204
      %p206 = pneg %p37
      %p207 = pneg %p34
      %s208 = smul.u32 224, %s16
      %p209 = scmp.lt.s32.totalorder %s208, 671
      %s210 = scalar_select %p209, %s208, 671
      %s211 = smul.addr %s210, 4
      %s212 = smul.addr %s211, 4
      %s213 = scalar_lea.vmem %s1, %s212
      %p214 = pneg %p63
      %p215 = pneg %p60
      %p216 = pneg %p84
      %p217 = pneg %p81
      %p218 = pneg %p105
      %p219 = pneg %p102
      %p220 = pneg %p126
      %p221 = pneg %p123
      %p222 = pneg %p147
      %p223 = pneg %p144
      %s224 = smul.u32 14, %s16
      %p225 = scmp.lt.s32.totalorder %s224, 41
      %s226 = scalar_select %p225, %s224, 41
      %s227 = smul.addr %s226, 8
      %s228 = scalar_lea.vmem %s0, %s227
      %s229 = smul.u32 14, %s16
      %s230 = smul.u32 224, %s16
      %p231 = scmp.lt.s32.totalorder %s230, 671
      %s232 = scalar_select %p231, %s230, 671
      %s233 = smul.addr %s232, 4
      %s234 = smul.addr %s233, 4
      %s235 = scalar_lea.vmem %s1, %s234
      %s236 = smul.u32 224, %s16
      %p238 = scmp.eq.s32.totalorder %s16, 0
      // Predicated region
      $region41: #{actor_forward.7} parent=39 // pred_check
        %p239 = pneg %p238
      $region42: #{actor_forward.7} parent=39 // pred_check_branch
        %241 = sbr.rel (%p239) target = $region44
      $region43: #{actor_forward.7} parent=39 // pred_region
        %242 = vst [vmem:[#allocation2] sm:$0xff] 0.0
        %243 = vst [vmem:[#allocation2 + $0x8] sm:$0xff] 0.0
        %244 = vst [vmem:[#allocation2 + $0x10] sm:$0xff] 0.0
        %245 = vst [vmem:[#allocation2 + $0x18] sm:$0xff] 0.0
      $region44: #{actor_forward.7} parent=39 // pred_fallthru
        _
      %v246 = vld [vmem:[#allocation2] sm:$0xff]
      %v247 = vld [vmem:[#allocation2 + $0x8] sm:$0xff]
      %v248 = vld [vmem:[#allocation2 + $0x10] sm:$0xff]
      %v249 = vld [vmem:[#allocation2 + $0x18] sm:$0xff]
      %v250 = vld [vmem:[%s228] sm:$0xff]
      %v251 = vld [vmem:[%s228 + $0x8] sm:$0xff]
      %v252 = vld [vmem:[%s228 + $0x10] sm:$0xff]
      %v253 = vld [vmem:[%s228 + $0x18] sm:$0xff]
      %v254 = vld [vmem:[%s228 + $0x20] sm:$0xff]
      %v255 = vld [vmem:[%s228 + $0x28] sm:$0xff]
      %v256 = vld [vmem:[%s228 + $0x30] sm:$0xff]
      %v257 = vld [vmem:[%s228 + $0x38] sm:$0xff]
      %v258 = vld [vmem:[%s228 + $0x40] sm:$0xff]
      %v259 = vld [vmem:[%s228 + $0x48] sm:$0xff]
      %v260 = vld [vmem:[%s228 + $0x50] sm:$0xff]
      %v261 = vld [vmem:[%s228 + $0x58] sm:$0xff]
      %v262 = vld [vmem:[%s228 + $0x60] sm:$0xff]
      %v263 = vld [vmem:[%s228 + $0x68] sm:$0xff]
      %v264 = vpack.c.bf16 %v250, %v250
      %v265 = vpack.c.bf16 %v251, %v251
      %v266 = vpack.c.bf16 %v252, %v252
      %v267 = vpack.c.bf16 %v253, %v253
      %v268 = vpack.c.bf16 %v254, %v254
      %v269 = vpack.c.bf16 %v255, %v255
      %v270 = vpack.c.bf16 %v256, %v256
      %v271 = vpack.c.bf16 %v257, %v257
      %v272 = vpack.c.bf16 %v258, %v258
      %v273 = vpack.c.bf16 %v259, %v259
      %v274 = vpack.c.bf16 %v260, %v260
      %v275 = vpack.c.bf16 %v261, %v261
      %v276 = vpack.c.bf16 %v262, %v262
      %v277 = vpack.c.bf16 %v263, %v263
      %v278 = vld [vmem:[%s235] sm:$0xff]
      %v279 = vld [vmem:[%s235 + $0x8] sm:$0xff]
      %v280 = vld [vmem:[%s235 + $0x10] sm:$0xff]
      %v281 = vld [vmem:[%s235 + $0x18] sm:$0xff]
      %v282 = vld [vmem:[%s235 + $0x20] sm:$0xff]
      %v283 = vld [vmem:[%s235 + $0x28] sm:$0xff]
      %v284 = vld [vmem:[%s235 + $0x30] sm:$0xff]
      %v285 = vld [vmem:[%s235 + $0x38] sm:$0xff]
      %v286 = vld [vmem:[%s235 + $0x40] sm:$0xff]
      %v287 = vld [vmem:[%s235 + $0x48] sm:$0xff]
      %v288 = vld [vmem:[%s235 + $0x50] sm:$0xff]
      %v289 = vld [vmem:[%s235 + $0x58] sm:$0xff]
      %v290 = vld [vmem:[%s235 + $0x60] sm:$0xff]
      %v291 = vld [vmem:[%s235 + $0x68] sm:$0xff]
      %v292 = vld [vmem:[%s235 + $0x70] sm:$0xff]
      %v293 = vld [vmem:[%s235 + $0x78] sm:$0xff]
      %v294 = vld [vmem:[%s235 + $0x80] sm:$0xff]
      %v295 = vld [vmem:[%s235 + $0x88] sm:$0xff]
      %v296 = vld [vmem:[%s235 + $0x90] sm:$0xff]
      %v297 = vld [vmem:[%s235 + $0x98] sm:$0xff]
      %v298 = vld [vmem:[%s235 + $0xa0] sm:$0xff]
      %v299 = vld [vmem:[%s235 + $0xa8] sm:$0xff]
      %v300 = vld [vmem:[%s235 + $0xb0] sm:$0xff]
      %v301 = vld [vmem:[%s235 + $0xb8] sm:$0xff]
      %v302 = vld [vmem:[%s235 + $0xc0] sm:$0xff]
      %v303 = vld [vmem:[%s235 + $0xc8] sm:$0xff]
      %v304 = vld [vmem:[%s235 + $0xd0] sm:$0xff]
      %v305 = vld [vmem:[%s235 + $0xd8] sm:$0xff]
      %v306 = vld [vmem:[%s235 + $0xe0] sm:$0xff]
      %v307 = vld [vmem:[%s235 + $0xe8] sm:$0xff]
      %v308 = vld [vmem:[%s235 + $0xf0] sm:$0xff]
      %v309 = vld [vmem:[%s235 + $0xf8] sm:$0xff]
      %v310 = vld [vmem:[%s235 + $0x100] sm:$0xff]
      %v311 = vld [vmem:[%s235 + $0x108] sm:$0xff]
      %v312 = vld [vmem:[%s235 + $0x110] sm:$0xff]
      %v313 = vld [vmem:[%s235 + $0x118] sm:$0xff]
      %v314 = vld [vmem:[%s235 + $0x120] sm:$0xff]
      %v315 = vld [vmem:[%s235 + $0x128] sm:$0xff]
      %v316 = vld [vmem:[%s235 + $0x130] sm:$0xff]
      %v317 = vld [vmem:[%s235 + $0x138] sm:$0xff]
      %v318 = vld [vmem:[%s235 + $0x140] sm:$0xff]
      %v319 = vld [vmem:[%s235 + $0x148] sm:$0xff]
      %v320 = vld [vmem:[%s235 + $0x150] sm:$0xff]
      %v321 = vld [vmem:[%s235 + $0x158] sm:$0xff]
      %v322 = vld [vmem:[%s235 + $0x160] sm:$0xff]
      %v323 = vld [vmem:[%s235 + $0x168] sm:$0xff]
      %v324 = vld [vmem:[%s235 + $0x170] sm:$0xff]
      %v325 = vld [vmem:[%s235 + $0x178] sm:$0xff]
      %v326 = vld [vmem:[%s235 + $0x180] sm:$0xff]
      %v327 = vld [vmem:[%s235 + $0x188] sm:$0xff]
      %v328 = vld [vmem:[%s235 + $0x190] sm:$0xff]
      %v329 = vld [vmem:[%s235 + $0x198] sm:$0xff]
      %v330 = vld [vmem:[%s235 + $0x1a0] sm:$0xff]
      %v331 = vld [vmem:[%s235 + $0x1a8] sm:$0xff]
      %v332 = vld [vmem:[%s235 + $0x1b0] sm:$0xff]
      %v333 = vld [vmem:[%s235 + $0x1b8] sm:$0xff]
      %v334 = vld [vmem:[%s235 + $0x1c0] sm:$0xff]
      %v335 = vld [vmem:[%s235 + $0x1c8] sm:$0xff]
      %v336 = vld [vmem:[%s235 + $0x1d0] sm:$0xff]
      %v337 = vld [vmem:[%s235 + $0x1d8] sm:$0xff]
      %v338 = vld [vmem:[%s235 + $0x1e0] sm:$0xff]
      %v339 = vld [vmem:[%s235 + $0x1e8] sm:$0xff]
      %v340 = vld [vmem:[%s235 + $0x1f0] sm:$0xff]
      %v341 = vld [vmem:[%s235 + $0x1f8] sm:$0xff]
      %v342 = vld [vmem:[%s235 + $0x200] sm:$0xff]
      %v343 = vld [vmem:[%s235 + $0x208] sm:$0xff]
      %v344 = vld [vmem:[%s235 + $0x210] sm:$0xff]
      %v345 = vld [vmem:[%s235 + $0x218] sm:$0xff]
      %v346 = vld [vmem:[%s235 + $0x220] sm:$0xff]
      %v347 = vld [vmem:[%s235 + $0x228] sm:$0xff]
      %v348 = vld [vmem:[%s235 + $0x230] sm:$0xff]
      %v349 = vld [vmem:[%s235 + $0x238] sm:$0xff]
      %v350 = vld [vmem:[%s235 + $0x240] sm:$0xff]
      %v351 = vld [vmem:[%s235 + $0x248] sm:$0xff]
      %v352 = vld [vmem:[%s235 + $0x250] sm:$0xff]
      %v353 = vld [vmem:[%s235 + $0x258] sm:$0xff]
      %v354 = vld [vmem:[%s235 + $0x260] sm:$0xff]
      %v355 = vld [vmem:[%s235 + $0x268] sm:$0xff]
      %v356 = vld [vmem:[%s235 + $0x270] sm:$0xff]
      %v357 = vld [vmem:[%s235 + $0x278] sm:$0xff]
      %v358 = vld [vmem:[%s235 + $0x280] sm:$0xff]
      %v359 = vld [vmem:[%s235 + $0x288] sm:$0xff]
      %v360 = vld [vmem:[%s235 + $0x290] sm:$0xff]
      %v361 = vld [vmem:[%s235 + $0x298] sm:$0xff]
      %v362 = vld [vmem:[%s235 + $0x2a0] sm:$0xff]
      %v363 = vld [vmem:[%s235 + $0x2a8] sm:$0xff]
      %v364 = vld [vmem:[%s235 + $0x2b0] sm:$0xff]
      %v365 = vld [vmem:[%s235 + $0x2b8] sm:$0xff]
      %v366 = vld [vmem:[%s235 + $0x2c0] sm:$0xff]
      %v367 = vld [vmem:[%s235 + $0x2c8] sm:$0xff]
      %v368 = vld [vmem:[%s235 + $0x2d0] sm:$0xff]
      %v369 = vld [vmem:[%s235 + $0x2d8] sm:$0xff]
      %v370 = vld [vmem:[%s235 + $0x2e0] sm:$0xff]
      %v371 = vld [vmem:[%s235 + $0x2e8] sm:$0xff]
      %v372 = vld [vmem:[%s235 + $0x2f0] sm:$0xff]
      %v373 = vld [vmem:[%s235 + $0x2f8] sm:$0xff]
      %v374 = vld [vmem:[%s235 + $0x300] sm:$0xff]
      %v375 = vld [vmem:[%s235 + $0x308] sm:$0xff]
      %v376 = vld [vmem:[%s235 + $0x310] sm:$0xff]
      %v377 = vld [vmem:[%s235 + $0x318] sm:$0xff]
      %v378 = vld [vmem:[%s235 + $0x320] sm:$0xff]
      %v379 = vld [vmem:[%s235 + $0x328] sm:$0xff]
      %v380 = vld [vmem:[%s235 + $0x330] sm:$0xff]
      %v381 = vld [vmem:[%s235 + $0x338] sm:$0xff]
      %v382 = vld [vmem:[%s235 + $0x340] sm:$0xff]
      %v383 = vld [vmem:[%s235 + $0x348] sm:$0xff]
      %v384 = vld [vmem:[%s235 + $0x350] sm:$0xff]
      %v385 = vld [vmem:[%s235 + $0x358] sm:$0xff]
      %v386 = vld [vmem:[%s235 + $0x360] sm:$0xff]
      %v387 = vld [vmem:[%s235 + $0x368] sm:$0xff]
      %v388 = vld [vmem:[%s235 + $0x370] sm:$0xff]
      %v389 = vld [vmem:[%s235 + $0x378] sm:$0xff]
      %v390 = vld [vmem:[%s235 + $0x380] sm:$0xff]
      %v391 = vld [vmem:[%s235 + $0x388] sm:$0xff]
      %v392 = vld [vmem:[%s235 + $0x390] sm:$0xff]
      %v393 = vld [vmem:[%s235 + $0x398] sm:$0xff]
      %v394 = vld [vmem:[%s235 + $0x3a0] sm:$0xff]
      %v395 = vld [vmem:[%s235 + $0x3a8] sm:$0xff]
      %v396 = vld [vmem:[%s235 + $0x3b0] sm:$0xff]
      %v397 = vld [vmem:[%s235 + $0x3b8] sm:$0xff]
      %v398 = vld [vmem:[%s235 + $0x3c0] sm:$0xff]
      %v399 = vld [vmem:[%s235 + $0x3c8] sm:$0xff]
      %v400 = vld [vmem:[%s235 + $0x3d0] sm:$0xff]
      %v401 = vld [vmem:[%s235 + $0x3d8] sm:$0xff]
      %v402 = vld [vmem:[%s235 + $0x3e0] sm:$0xff]
      %v403 = vld [vmem:[%s235 + $0x3e8] sm:$0xff]
      %v404 = vld [vmem:[%s235 + $0x3f0] sm:$0xff]
      %v405 = vld [vmem:[%s235 + $0x3f8] sm:$0xff]
      %v406 = vld [vmem:[%s235 + $0x400] sm:$0xff]
      %v407 = vld [vmem:[%s235 + $0x408] sm:$0xff]
      %v408 = vld [vmem:[%s235 + $0x410] sm:$0xff]
      %v409 = vld [vmem:[%s235 + $0x418] sm:$0xff]
      %v410 = vld [vmem:[%s235 + $0x420] sm:$0xff]
      %v411 = vld [vmem:[%s235 + $0x428] sm:$0xff]
      %v412 = vld [vmem:[%s235 + $0x430] sm:$0xff]
      %v413 = vld [vmem:[%s235 + $0x438] sm:$0xff]
      %v414 = vld [vmem:[%s235 + $0x440] sm:$0xff]
      %v415 = vld [vmem:[%s235 + $0x448] sm:$0xff]
      %v416 = vld [vmem:[%s235 + $0x450] sm:$0xff]
      %v417 = vld [vmem:[%s235 + $0x458] sm:$0xff]
      %v418 = vld [vmem:[%s235 + $0x460] sm:$0xff]
      %v419 = vld [vmem:[%s235 + $0x468] sm:$0xff]
      %v420 = vld [vmem:[%s235 + $0x470] sm:$0xff]
      %v421 = vld [vmem:[%s235 + $0x478] sm:$0xff]
      %v422 = vld [vmem:[%s235 + $0x480] sm:$0xff]
      %v423 = vld [vmem:[%s235 + $0x488] sm:$0xff]
      %v424 = vld [vmem:[%s235 + $0x490] sm:$0xff]
      %v425 = vld [vmem:[%s235 + $0x498] sm:$0xff]
      %v426 = vld [vmem:[%s235 + $0x4a0] sm:$0xff]
      %v427 = vld [vmem:[%s235 + $0x4a8] sm:$0xff]
      %v428 = vld [vmem:[%s235 + $0x4b0] sm:$0xff]
      %v429 = vld [vmem:[%s235 + $0x4b8] sm:$0xff]
      %v430 = vld [vmem:[%s235 + $0x4c0] sm:$0xff]
      %v431 = vld [vmem:[%s235 + $0x4c8] sm:$0xff]
      %v432 = vld [vmem:[%s235 + $0x4d0] sm:$0xff]
      %v433 = vld [vmem:[%s235 + $0x4d8] sm:$0xff]
      %v434 = vld [vmem:[%s235 + $0x4e0] sm:$0xff]
      %v435 = vld [vmem:[%s235 + $0x4e8] sm:$0xff]
      %v436 = vld [vmem:[%s235 + $0x4f0] sm:$0xff]
      %v437 = vld [vmem:[%s235 + $0x4f8] sm:$0xff]
      %v438 = vld [vmem:[%s235 + $0x500] sm:$0xff]
      %v439 = vld [vmem:[%s235 + $0x508] sm:$0xff]
      %v440 = vld [vmem:[%s235 + $0x510] sm:$0xff]
      %v441 = vld [vmem:[%s235 + $0x518] sm:$0xff]
      %v442 = vld [vmem:[%s235 + $0x520] sm:$0xff]
      %v443 = vld [vmem:[%s235 + $0x528] sm:$0xff]
      %v444 = vld [vmem:[%s235 + $0x530] sm:$0xff]
      %v445 = vld [vmem:[%s235 + $0x538] sm:$0xff]
      %v446 = vld [vmem:[%s235 + $0x540] sm:$0xff]
      %v447 = vld [vmem:[%s235 + $0x548] sm:$0xff]
      %v448 = vld [vmem:[%s235 + $0x550] sm:$0xff]
      %v449 = vld [vmem:[%s235 + $0x558] sm:$0xff]
      %v450 = vld [vmem:[%s235 + $0x560] sm:$0xff]
      %v451 = vld [vmem:[%s235 + $0x568] sm:$0xff]
      %v452 = vld [vmem:[%s235 + $0x570] sm:$0xff]
      %v453 = vld [vmem:[%s235 + $0x578] sm:$0xff]
      %v454 = vld [vmem:[%s235 + $0x580] sm:$0xff]
      %v455 = vld [vmem:[%s235 + $0x588] sm:$0xff]
      %v456 = vld [vmem:[%s235 + $0x590] sm:$0xff]
      %v457 = vld [vmem:[%s235 + $0x598] sm:$0xff]
      %v458 = vld [vmem:[%s235 + $0x5a0] sm:$0xff]
      %v459 = vld [vmem:[%s235 + $0x5a8] sm:$0xff]
      %v460 = vld [vmem:[%s235 + $0x5b0] sm:$0xff]
      %v461 = vld [vmem:[%s235 + $0x5b8] sm:$0xff]
      %v462 = vld [vmem:[%s235 + $0x5c0] sm:$0xff]
      %v463 = vld [vmem:[%s235 + $0x5c8] sm:$0xff]
      %v464 = vld [vmem:[%s235 + $0x5d0] sm:$0xff]
      %v465 = vld [vmem:[%s235 + $0x5d8] sm:$0xff]
      %v466 = vld [vmem:[%s235 + $0x5e0] sm:$0xff]
      %v467 = vld [vmem:[%s235 + $0x5e8] sm:$0xff]
      %v468 = vld [vmem:[%s235 + $0x5f0] sm:$0xff]
      %v469 = vld [vmem:[%s235 + $0x5f8] sm:$0xff]
      %v470 = vld [vmem:[%s235 + $0x600] sm:$0xff]
      %v471 = vld [vmem:[%s235 + $0x608] sm:$0xff]
      %v472 = vld [vmem:[%s235 + $0x610] sm:$0xff]
      %v473 = vld [vmem:[%s235 + $0x618] sm:$0xff]
      %v474 = vld [vmem:[%s235 + $0x620] sm:$0xff]
      %v475 = vld [vmem:[%s235 + $0x628] sm:$0xff]
      %v476 = vld [vmem:[%s235 + $0x630] sm:$0xff]
      %v477 = vld [vmem:[%s235 + $0x638] sm:$0xff]
      %v478 = vld [vmem:[%s235 + $0x640] sm:$0xff]
      %v479 = vld [vmem:[%s235 + $0x648] sm:$0xff]
      %v480 = vld [vmem:[%s235 + $0x650] sm:$0xff]
      %v481 = vld [vmem:[%s235 + $0x658] sm:$0xff]
      %v482 = vld [vmem:[%s235 + $0x660] sm:$0xff]
      %v483 = vld [vmem:[%s235 + $0x668] sm:$0xff]
      %v484 = vld [vmem:[%s235 + $0x670] sm:$0xff]
      %v485 = vld [vmem:[%s235 + $0x678] sm:$0xff]
      %v486 = vld [vmem:[%s235 + $0x680] sm:$0xff]
      %v487 = vld [vmem:[%s235 + $0x688] sm:$0xff]
      %v488 = vld [vmem:[%s235 + $0x690] sm:$0xff]
      %v489 = vld [vmem:[%s235 + $0x698] sm:$0xff]
      %v490 = vld [vmem:[%s235 + $0x6a0] sm:$0xff]
      %v491 = vld [vmem:[%s235 + $0x6a8] sm:$0xff]
      %v492 = vld [vmem:[%s235 + $0x6b0] sm:$0xff]
      %v493 = vld [vmem:[%s235 + $0x6b8] sm:$0xff]
      %v494 = vld [vmem:[%s235 + $0x6c0] sm:$0xff]
      %v495 = vld [vmem:[%s235 + $0x6c8] sm:$0xff]
      %v496 = vld [vmem:[%s235 + $0x6d0] sm:$0xff]
      %v497 = vld [vmem:[%s235 + $0x6d8] sm:$0xff]
      %v498 = vld [vmem:[%s235 + $0x6e0] sm:$0xff]
      %v499 = vld [vmem:[%s235 + $0x6e8] sm:$0xff]
      %v500 = vld [vmem:[%s235 + $0x6f0] sm:$0xff]
      %v501 = vld [vmem:[%s235 + $0x6f8] sm:$0xff]
      %v502 = vld [vmem:[%s235 + $0x700] sm:$0xff]
      %v503 = vld [vmem:[%s235 + $0x708] sm:$0xff]
      %v504 = vld [vmem:[%s235 + $0x710] sm:$0xff]
      %v505 = vld [vmem:[%s235 + $0x718] sm:$0xff]
      %v506 = vld [vmem:[%s235 + $0x720] sm:$0xff]
      %v507 = vld [vmem:[%s235 + $0x728] sm:$0xff]
      %v508 = vld [vmem:[%s235 + $0x730] sm:$0xff]
      %v509 = vld [vmem:[%s235 + $0x738] sm:$0xff]
      %v510 = vld [vmem:[%s235 + $0x740] sm:$0xff]
      %v511 = vld [vmem:[%s235 + $0x748] sm:$0xff]
      %v512 = vld [vmem:[%s235 + $0x750] sm:$0xff]
      %v513 = vld [vmem:[%s235 + $0x758] sm:$0xff]
      %v514 = vld [vmem:[%s235 + $0x760] sm:$0xff]
      %v515 = vld [vmem:[%s235 + $0x768] sm:$0xff]
      %v516 = vld [vmem:[%s235 + $0x770] sm:$0xff]
      %v517 = vld [vmem:[%s235 + $0x778] sm:$0xff]
      %v518 = vld [vmem:[%s235 + $0x780] sm:$0xff]
      %v519 = vld [vmem:[%s235 + $0x788] sm:$0xff]
      %v520 = vld [vmem:[%s235 + $0x790] sm:$0xff]
      %v521 = vld [vmem:[%s235 + $0x798] sm:$0xff]
      %v522 = vld [vmem:[%s235 + $0x7a0] sm:$0xff]
      %v523 = vld [vmem:[%s235 + $0x7a8] sm:$0xff]
      %v524 = vld [vmem:[%s235 + $0x7b0] sm:$0xff]
      %v525 = vld [vmem:[%s235 + $0x7b8] sm:$0xff]
      %v526 = vld [vmem:[%s235 + $0x7c0] sm:$0xff]
      %v527 = vld [vmem:[%s235 + $0x7c8] sm:$0xff]
      %v528 = vld [vmem:[%s235 + $0x7d0] sm:$0xff]
      %v529 = vld [vmem:[%s235 + $0x7d8] sm:$0xff]
      %v530 = vld [vmem:[%s235 + $0x7e0] sm:$0xff]
      %v531 = vld [vmem:[%s235 + $0x7e8] sm:$0xff]
      %v532 = vld [vmem:[%s235 + $0x7f0] sm:$0xff]
      %v533 = vld [vmem:[%s235 + $0x7f8] sm:$0xff]
      %v534 = vld [vmem:[%s235 + $0x800] sm:$0xff]
      %v535 = vld [vmem:[%s235 + $0x808] sm:$0xff]
      %v536 = vld [vmem:[%s235 + $0x810] sm:$0xff]
      %v537 = vld [vmem:[%s235 + $0x818] sm:$0xff]
      %v538 = vld [vmem:[%s235 + $0x820] sm:$0xff]
      %v539 = vld [vmem:[%s235 + $0x828] sm:$0xff]
      %v540 = vld [vmem:[%s235 + $0x830] sm:$0xff]
      %v541 = vld [vmem:[%s235 + $0x838] sm:$0xff]
      %v542 = vld [vmem:[%s235 + $0x840] sm:$0xff]
      %v543 = vld [vmem:[%s235 + $0x848] sm:$0xff]
      %v544 = vld [vmem:[%s235 + $0x850] sm:$0xff]
      %v545 = vld [vmem:[%s235 + $0x858] sm:$0xff]
      %v546 = vld [vmem:[%s235 + $0x860] sm:$0xff]
      %v547 = vld [vmem:[%s235 + $0x868] sm:$0xff]
      %v548 = vld [vmem:[%s235 + $0x870] sm:$0xff]
      %v549 = vld [vmem:[%s235 + $0x878] sm:$0xff]
      %v550 = vld [vmem:[%s235 + $0x880] sm:$0xff]
      %v551 = vld [vmem:[%s235 + $0x888] sm:$0xff]
      %v552 = vld [vmem:[%s235 + $0x890] sm:$0xff]
      %v553 = vld [vmem:[%s235 + $0x898] sm:$0xff]
      %v554 = vld [vmem:[%s235 + $0x8a0] sm:$0xff]
      %v555 = vld [vmem:[%s235 + $0x8a8] sm:$0xff]
      %v556 = vld [vmem:[%s235 + $0x8b0] sm:$0xff]
      %v557 = vld [vmem:[%s235 + $0x8b8] sm:$0xff]
      %v558 = vld [vmem:[%s235 + $0x8c0] sm:$0xff]
      %v559 = vld [vmem:[%s235 + $0x8c8] sm:$0xff]
      %v560 = vld [vmem:[%s235 + $0x8d0] sm:$0xff]
      %v561 = vld [vmem:[%s235 + $0x8d8] sm:$0xff]
      %v562 = vld [vmem:[%s235 + $0x8e0] sm:$0xff]
      %v563 = vld [vmem:[%s235 + $0x8e8] sm:$0xff]
      %v564 = vld [vmem:[%s235 + $0x8f0] sm:$0xff]
      %v565 = vld [vmem:[%s235 + $0x8f8] sm:$0xff]
      %v566 = vld [vmem:[%s235 + $0x900] sm:$0xff]
      %v567 = vld [vmem:[%s235 + $0x908] sm:$0xff]
      %v568 = vld [vmem:[%s235 + $0x910] sm:$0xff]
      %v569 = vld [vmem:[%s235 + $0x918] sm:$0xff]
      %v570 = vld [vmem:[%s235 + $0x920] sm:$0xff]
      %v571 = vld [vmem:[%s235 + $0x928] sm:$0xff]
      %v572 = vld [vmem:[%s235 + $0x930] sm:$0xff]
      %v573 = vld [vmem:[%s235 + $0x938] sm:$0xff]
      %v574 = vld [vmem:[%s235 + $0x940] sm:$0xff]
      %v575 = vld [vmem:[%s235 + $0x948] sm:$0xff]
      %v576 = vld [vmem:[%s235 + $0x950] sm:$0xff]
      %v577 = vld [vmem:[%s235 + $0x958] sm:$0xff]
      %v578 = vld [vmem:[%s235 + $0x960] sm:$0xff]
      %v579 = vld [vmem:[%s235 + $0x968] sm:$0xff]
      %v580 = vld [vmem:[%s235 + $0x970] sm:$0xff]
      %v581 = vld [vmem:[%s235 + $0x978] sm:$0xff]
      %v582 = vld [vmem:[%s235 + $0x980] sm:$0xff]
      %v583 = vld [vmem:[%s235 + $0x988] sm:$0xff]
      %v584 = vld [vmem:[%s235 + $0x990] sm:$0xff]
      %v585 = vld [vmem:[%s235 + $0x998] sm:$0xff]
      %v586 = vld [vmem:[%s235 + $0x9a0] sm:$0xff]
      %v587 = vld [vmem:[%s235 + $0x9a8] sm:$0xff]
      %v588 = vld [vmem:[%s235 + $0x9b0] sm:$0xff]
      %v589 = vld [vmem:[%s235 + $0x9b8] sm:$0xff]
      %v590 = vld [vmem:[%s235 + $0x9c0] sm:$0xff]
      %v591 = vld [vmem:[%s235 + $0x9c8] sm:$0xff]
      %v592 = vld [vmem:[%s235 + $0x9d0] sm:$0xff]
      %v593 = vld [vmem:[%s235 + $0x9d8] sm:$0xff]
      %v594 = vld [vmem:[%s235 + $0x9e0] sm:$0xff]
      %v595 = vld [vmem:[%s235 + $0x9e8] sm:$0xff]
      %v596 = vld [vmem:[%s235 + $0x9f0] sm:$0xff]
      %v597 = vld [vmem:[%s235 + $0x9f8] sm:$0xff]
      %v598 = vld [vmem:[%s235 + $0xa00] sm:$0xff]
      %v599 = vld [vmem:[%s235 + $0xa08] sm:$0xff]
      %v600 = vld [vmem:[%s235 + $0xa10] sm:$0xff]
      %v601 = vld [vmem:[%s235 + $0xa18] sm:$0xff]
      %v602 = vld [vmem:[%s235 + $0xa20] sm:$0xff]
      %v603 = vld [vmem:[%s235 + $0xa28] sm:$0xff]
      %v604 = vld [vmem:[%s235 + $0xa30] sm:$0xff]
      %v605 = vld [vmem:[%s235 + $0xa38] sm:$0xff]
      %v606 = vld [vmem:[%s235 + $0xa40] sm:$0xff]
      %v607 = vld [vmem:[%s235 + $0xa48] sm:$0xff]
      %v608 = vld [vmem:[%s235 + $0xa50] sm:$0xff]
      %v609 = vld [vmem:[%s235 + $0xa58] sm:$0xff]
      %v610 = vld [vmem:[%s235 + $0xa60] sm:$0xff]
      %v611 = vld [vmem:[%s235 + $0xa68] sm:$0xff]
      %v612 = vld [vmem:[%s235 + $0xa70] sm:$0xff]
      %v613 = vld [vmem:[%s235 + $0xa78] sm:$0xff]
      %v614 = vld [vmem:[%s235 + $0xa80] sm:$0xff]
      %v615 = vld [vmem:[%s235 + $0xa88] sm:$0xff]
      %v616 = vld [vmem:[%s235 + $0xa90] sm:$0xff]
      %v617 = vld [vmem:[%s235 + $0xa98] sm:$0xff]
      %v618 = vld [vmem:[%s235 + $0xaa0] sm:$0xff]
      %v619 = vld [vmem:[%s235 + $0xaa8] sm:$0xff]
      %v620 = vld [vmem:[%s235 + $0xab0] sm:$0xff]
      %v621 = vld [vmem:[%s235 + $0xab8] sm:$0xff]
      %v622 = vld [vmem:[%s235 + $0xac0] sm:$0xff]
      %v623 = vld [vmem:[%s235 + $0xac8] sm:$0xff]
      %v624 = vld [vmem:[%s235 + $0xad0] sm:$0xff]
      %v625 = vld [vmem:[%s235 + $0xad8] sm:$0xff]
      %v626 = vld [vmem:[%s235 + $0xae0] sm:$0xff]
      %v627 = vld [vmem:[%s235 + $0xae8] sm:$0xff]
      %v628 = vld [vmem:[%s235 + $0xaf0] sm:$0xff]
      %v629 = vld [vmem:[%s235 + $0xaf8] sm:$0xff]
      %v630 = vld [vmem:[%s235 + $0xb00] sm:$0xff]
      %v631 = vld [vmem:[%s235 + $0xb08] sm:$0xff]
      %v632 = vld [vmem:[%s235 + $0xb10] sm:$0xff]
      %v633 = vld [vmem:[%s235 + $0xb18] sm:$0xff]
      %v634 = vld [vmem:[%s235 + $0xb20] sm:$0xff]
      %v635 = vld [vmem:[%s235 + $0xb28] sm:$0xff]
      %v636 = vld [vmem:[%s235 + $0xb30] sm:$0xff]
      %v637 = vld [vmem:[%s235 + $0xb38] sm:$0xff]
      %v638 = vld [vmem:[%s235 + $0xb40] sm:$0xff]
      %v639 = vld [vmem:[%s235 + $0xb48] sm:$0xff]
      %v640 = vld [vmem:[%s235 + $0xb50] sm:$0xff]
      %v641 = vld [vmem:[%s235 + $0xb58] sm:$0xff]
      %v642 = vld [vmem:[%s235 + $0xb60] sm:$0xff]
      %v643 = vld [vmem:[%s235 + $0xb68] sm:$0xff]
      %v644 = vld [vmem:[%s235 + $0xb70] sm:$0xff]
      %v645 = vld [vmem:[%s235 + $0xb78] sm:$0xff]
      %v646 = vld [vmem:[%s235 + $0xb80] sm:$0xff]
      %v647 = vld [vmem:[%s235 + $0xb88] sm:$0xff]
      %v648 = vld [vmem:[%s235 + $0xb90] sm:$0xff]
      %v649 = vld [vmem:[%s235 + $0xb98] sm:$0xff]
      %v650 = vld [vmem:[%s235 + $0xba0] sm:$0xff]
      %v651 = vld [vmem:[%s235 + $0xba8] sm:$0xff]
      %v652 = vld [vmem:[%s235 + $0xbb0] sm:$0xff]
      %v653 = vld [vmem:[%s235 + $0xbb8] sm:$0xff]
      %v654 = vld [vmem:[%s235 + $0xbc0] sm:$0xff]
      %v655 = vld [vmem:[%s235 + $0xbc8] sm:$0xff]
      %v656 = vld [vmem:[%s235 + $0xbd0] sm:$0xff]
      %v657 = vld [vmem:[%s235 + $0xbd8] sm:$0xff]
      %v658 = vld [vmem:[%s235 + $0xbe0] sm:$0xff]
      %v659 = vld [vmem:[%s235 + $0xbe8] sm:$0xff]
      %v660 = vld [vmem:[%s235 + $0xbf0] sm:$0xff]
      %v661 = vld [vmem:[%s235 + $0xbf8] sm:$0xff]
      %v662 = vld [vmem:[%s235 + $0xc00] sm:$0xff]
      %v663 = vld [vmem:[%s235 + $0xc08] sm:$0xff]
      %v664 = vld [vmem:[%s235 + $0xc10] sm:$0xff]
      %v665 = vld [vmem:[%s235 + $0xc18] sm:$0xff]
      %v666 = vld [vmem:[%s235 + $0xc20] sm:$0xff]
      %v667 = vld [vmem:[%s235 + $0xc28] sm:$0xff]
      %v668 = vld [vmem:[%s235 + $0xc30] sm:$0xff]
      %v669 = vld [vmem:[%s235 + $0xc38] sm:$0xff]
      %v670 = vld [vmem:[%s235 + $0xc40] sm:$0xff]
      %v671 = vld [vmem:[%s235 + $0xc48] sm:$0xff]
      %v672 = vld [vmem:[%s235 + $0xc50] sm:$0xff]
      %v673 = vld [vmem:[%s235 + $0xc58] sm:$0xff]
      %v674 = vld [vmem:[%s235 + $0xc60] sm:$0xff]
      %v675 = vld [vmem:[%s235 + $0xc68] sm:$0xff]
      %v676 = vld [vmem:[%s235 + $0xc70] sm:$0xff]
      %v677 = vld [vmem:[%s235 + $0xc78] sm:$0xff]
      %v678 = vld [vmem:[%s235 + $0xc80] sm:$0xff]
      %v679 = vld [vmem:[%s235 + $0xc88] sm:$0xff]
      %v680 = vld [vmem:[%s235 + $0xc90] sm:$0xff]
      %v681 = vld [vmem:[%s235 + $0xc98] sm:$0xff]
      %v682 = vld [vmem:[%s235 + $0xca0] sm:$0xff]
      %v683 = vld [vmem:[%s235 + $0xca8] sm:$0xff]
      %v684 = vld [vmem:[%s235 + $0xcb0] sm:$0xff]
      %v685 = vld [vmem:[%s235 + $0xcb8] sm:$0xff]
      %v686 = vld [vmem:[%s235 + $0xcc0] sm:$0xff]
      %v687 = vld [vmem:[%s235 + $0xcc8] sm:$0xff]
      %v688 = vld [vmem:[%s235 + $0xcd0] sm:$0xff]
      %v689 = vld [vmem:[%s235 + $0xcd8] sm:$0xff]
      %v690 = vld [vmem:[%s235 + $0xce0] sm:$0xff]
      %v691 = vld [vmem:[%s235 + $0xce8] sm:$0xff]
      %v692 = vld [vmem:[%s235 + $0xcf0] sm:$0xff]
      %v693 = vld [vmem:[%s235 + $0xcf8] sm:$0xff]
      %v694 = vld [vmem:[%s235 + $0xd00] sm:$0xff]
      %v695 = vld [vmem:[%s235 + $0xd08] sm:$0xff]
      %v696 = vld [vmem:[%s235 + $0xd10] sm:$0xff]
      %v697 = vld [vmem:[%s235 + $0xd18] sm:$0xff]
      %v698 = vld [vmem:[%s235 + $0xd20] sm:$0xff]
      %v699 = vld [vmem:[%s235 + $0xd28] sm:$0xff]
      %v700 = vld [vmem:[%s235 + $0xd30] sm:$0xff]
      %v701 = vld [vmem:[%s235 + $0xd38] sm:$0xff]
      %v702 = vld [vmem:[%s235 + $0xd40] sm:$0xff]
      %v703 = vld [vmem:[%s235 + $0xd48] sm:$0xff]
      %v704 = vld [vmem:[%s235 + $0xd50] sm:$0xff]
      %v705 = vld [vmem:[%s235 + $0xd58] sm:$0xff]
      %v706 = vld [vmem:[%s235 + $0xd60] sm:$0xff]
      %v707 = vld [vmem:[%s235 + $0xd68] sm:$0xff]
      %v708 = vld [vmem:[%s235 + $0xd70] sm:$0xff]
      %v709 = vld [vmem:[%s235 + $0xd78] sm:$0xff]
      %v710 = vld [vmem:[%s235 + $0xd80] sm:$0xff]
      %v711 = vld [vmem:[%s235 + $0xd88] sm:$0xff]
      %v712 = vld [vmem:[%s235 + $0xd90] sm:$0xff]
      %v713 = vld [vmem:[%s235 + $0xd98] sm:$0xff]
      %v714 = vld [vmem:[%s235 + $0xda0] sm:$0xff]
      %v715 = vld [vmem:[%s235 + $0xda8] sm:$0xff]
      %v716 = vld [vmem:[%s235 + $0xdb0] sm:$0xff]
      %v717 = vld [vmem:[%s235 + $0xdb8] sm:$0xff]
      %v718 = vld [vmem:[%s235 + $0xdc0] sm:$0xff]
      %v719 = vld [vmem:[%s235 + $0xdc8] sm:$0xff]
      %v720 = vld [vmem:[%s235 + $0xdd0] sm:$0xff]
      %v721 = vld [vmem:[%s235 + $0xdd8] sm:$0xff]
      %v722 = vld [vmem:[%s235 + $0xde0] sm:$0xff]
      %v723 = vld [vmem:[%s235 + $0xde8] sm:$0xff]
      %v724 = vld [vmem:[%s235 + $0xdf0] sm:$0xff]
      %v725 = vld [vmem:[%s235 + $0xdf8] sm:$0xff]
      %v1174 = vunpack.c.l.b16 %v278
      %v1175 = vunpack.c.h.b16 %v278
      %v1176 = vunpack.c.l.b16 %v279
      %v1177 = vunpack.c.h.b16 %v279
      %v1178 = vunpack.c.l.b16 %v280
      %v1179 = vunpack.c.h.b16 %v280
      %v1180 = vunpack.c.l.b16 %v281
      %v1181 = vunpack.c.h.b16 %v281
      %v1182 = vunpack.c.l.b16 %v282
      %v1183 = vunpack.c.h.b16 %v282
      %v1184 = vunpack.c.l.b16 %v283
      %v1185 = vunpack.c.h.b16 %v283
      %v1186 = vunpack.c.l.b16 %v284
      %v1187 = vunpack.c.h.b16 %v284
      %v1188 = vunpack.c.l.b16 %v285
      %v1189 = vunpack.c.h.b16 %v285
      %v1190 = vunpack.c.l.b16 %v286
      %v1191 = vunpack.c.h.b16 %v286
      %v1192 = vunpack.c.l.b16 %v287
      %v1193 = vunpack.c.h.b16 %v287
      %v1194 = vunpack.c.l.b16 %v288
      %v1195 = vunpack.c.h.b16 %v288
      %v1196 = vunpack.c.l.b16 %v289
      %v1197 = vunpack.c.h.b16 %v289
      %v1198 = vunpack.c.l.b16 %v290
      %v1199 = vunpack.c.h.b16 %v290
      %v1200 = vunpack.c.l.b16 %v291
      %v1201 = vunpack.c.h.b16 %v291
      %v1202 = vunpack.c.l.b16 %v292
      %v1203 = vunpack.c.h.b16 %v292
      %v1204 = vunpack.c.l.b16 %v293
      %v1205 = vunpack.c.h.b16 %v293
      %v1206 = vunpack.c.l.b16 %v294
      %v1207 = vunpack.c.h.b16 %v294
      %v1208 = vunpack.c.l.b16 %v295
      %v1209 = vunpack.c.h.b16 %v295
      %v1210 = vunpack.c.l.b16 %v296
      %v1211 = vunpack.c.h.b16 %v296
      %v1212 = vunpack.c.l.b16 %v297
      %v1213 = vunpack.c.h.b16 %v297
      %v1214 = vunpack.c.l.b16 %v298
      %v1215 = vunpack.c.h.b16 %v298
      %v1216 = vunpack.c.l.b16 %v299
      %v1217 = vunpack.c.h.b16 %v299
      %v1218 = vunpack.c.l.b16 %v300
      %v1219 = vunpack.c.h.b16 %v300
      %v1220 = vunpack.c.l.b16 %v301
      %v1221 = vunpack.c.h.b16 %v301
      %v1222 = vunpack.c.l.b16 %v302
      %v1223 = vunpack.c.h.b16 %v302
      %v1224 = vunpack.c.l.b16 %v303
      %v1225 = vunpack.c.h.b16 %v303
      %v1226 = vunpack.c.l.b16 %v304
      %v1227 = vunpack.c.h.b16 %v304
      %v1228 = vunpack.c.l.b16 %v305
      %v1229 = vunpack.c.h.b16 %v305
      %v1230 = vunpack.c.l.b16 %v306
      %v1231 = vunpack.c.h.b16 %v306
      %v1232 = vunpack.c.l.b16 %v307
      %v1233 = vunpack.c.h.b16 %v307
      %v1234 = vunpack.c.l.b16 %v308
      %v1235 = vunpack.c.h.b16 %v308
      %v1236 = vunpack.c.l.b16 %v309
      %v1237 = vunpack.c.h.b16 %v309
      %v1238 = vunpack.c.l.b16 %v310
      %v1239 = vunpack.c.h.b16 %v310
      %v1240 = vunpack.c.l.b16 %v311
      %v1241 = vunpack.c.h.b16 %v311
      %v1242 = vunpack.c.l.b16 %v312
      %v1243 = vunpack.c.h.b16 %v312
      %v1244 = vunpack.c.l.b16 %v313
      %v1245 = vunpack.c.h.b16 %v313
      %v1246 = vunpack.c.l.b16 %v314
      %v1247 = vunpack.c.h.b16 %v314
      %v1248 = vunpack.c.l.b16 %v315
      %v1249 = vunpack.c.h.b16 %v315
      %v1250 = vunpack.c.l.b16 %v316
      %v1251 = vunpack.c.h.b16 %v316
      %v1252 = vunpack.c.l.b16 %v317
      %v1253 = vunpack.c.h.b16 %v317
      %v1254 = vunpack.c.l.b16 %v318
      %v1255 = vunpack.c.h.b16 %v318
      %v1256 = vunpack.c.l.b16 %v319
      %v1257 = vunpack.c.h.b16 %v319
      %v1258 = vunpack.c.l.b16 %v320
      %v1259 = vunpack.c.h.b16 %v320
      %v1260 = vunpack.c.l.b16 %v321
      %v1261 = vunpack.c.h.b16 %v321
      %v1262 = vunpack.c.l.b16 %v322
      %v1263 = vunpack.c.h.b16 %v322
      %v1264 = vunpack.c.l.b16 %v323
      %v1265 = vunpack.c.h.b16 %v323
      %v1266 = vunpack.c.l.b16 %v324
      %v1267 = vunpack.c.h.b16 %v324
      %v1268 = vunpack.c.l.b16 %v325
      %v1269 = vunpack.c.h.b16 %v325
      %v1270 = vunpack.c.l.b16 %v326
      %v1271 = vunpack.c.h.b16 %v326
      %v1272 = vunpack.c.l.b16 %v327
      %v1273 = vunpack.c.h.b16 %v327
      %v1274 = vunpack.c.l.b16 %v328
      %v1275 = vunpack.c.h.b16 %v328
      %v1276 = vunpack.c.l.b16 %v329
      %v1277 = vunpack.c.h.b16 %v329
      %v1278 = vunpack.c.l.b16 %v330
      %v1279 = vunpack.c.h.b16 %v330
      %v1280 = vunpack.c.l.b16 %v331
      %v1281 = vunpack.c.h.b16 %v331
      %v1282 = vunpack.c.l.b16 %v332
      %v1283 = vunpack.c.h.b16 %v332
      %v1284 = vunpack.c.l.b16 %v333
      %v1285 = vunpack.c.h.b16 %v333
      %v1286 = vunpack.c.l.b16 %v334
      %v1287 = vunpack.c.h.b16 %v334
      %v1288 = vunpack.c.l.b16 %v335
      %v1289 = vunpack.c.h.b16 %v335
      %v1290 = vunpack.c.l.b16 %v336
      %v1291 = vunpack.c.h.b16 %v336
      %v1292 = vunpack.c.l.b16 %v337
      %v1293 = vunpack.c.h.b16 %v337
      %v1294 = vunpack.c.l.b16 %v338
      %v1295 = vunpack.c.h.b16 %v338
      %v1296 = vunpack.c.l.b16 %v339
      %v1297 = vunpack.c.h.b16 %v339
      %v1298 = vunpack.c.l.b16 %v340
      %v1299 = vunpack.c.h.b16 %v340
      %v1300 = vunpack.c.l.b16 %v341
      %v1301 = vunpack.c.h.b16 %v341
      %v1302 = vunpack.c.l.b16 %v342
      %v1303 = vunpack.c.h.b16 %v342
      %v1304 = vunpack.c.l.b16 %v343
      %v1305 = vunpack.c.h.b16 %v343
      %v1306 = vunpack.c.l.b16 %v344
      %v1307 = vunpack.c.h.b16 %v344
      %v1308 = vunpack.c.l.b16 %v345
      %v1309 = vunpack.c.h.b16 %v345
      %v1310 = vunpack.c.l.b16 %v346
      %v1311 = vunpack.c.h.b16 %v346
      %v1312 = vunpack.c.l.b16 %v347
      %v1313 = vunpack.c.h.b16 %v347
      %v1314 = vunpack.c.l.b16 %v348
      %v1315 = vunpack.c.h.b16 %v348
      %v1316 = vunpack.c.l.b16 %v349
      %v1317 = vunpack.c.h.b16 %v349
      %v1318 = vunpack.c.l.b16 %v350
      %v1319 = vunpack.c.h.b16 %v350
      %v1320 = vunpack.c.l.b16 %v351
      %v1321 = vunpack.c.h.b16 %v351
      %v1322 = vunpack.c.l.b16 %v352
      %v1323 = vunpack.c.h.b16 %v352
      %v1324 = vunpack.c.l.b16 %v353
      %v1325 = vunpack.c.h.b16 %v353
      %v1326 = vunpack.c.l.b16 %v354
      %v1327 = vunpack.c.h.b16 %v354
      %v1328 = vunpack.c.l.b16 %v355
      %v1329 = vunpack.c.h.b16 %v355
      %v1330 = vunpack.c.l.b16 %v356
      %v1331 = vunpack.c.h.b16 %v356
      %v1332 = vunpack.c.l.b16 %v357
      %v1333 = vunpack.c.h.b16 %v357
      %v1334 = vunpack.c.l.b16 %v358
      %v1335 = vunpack.c.h.b16 %v358
      %v1336 = vunpack.c.l.b16 %v359
      %v1337 = vunpack.c.h.b16 %v359
      %v1338 = vunpack.c.l.b16 %v360
      %v1339 = vunpack.c.h.b16 %v360
      %v1340 = vunpack.c.l.b16 %v361
      %v1341 = vunpack.c.h.b16 %v361
      %v1342 = vunpack.c.l.b16 %v362
      %v1343 = vunpack.c.h.b16 %v362
      %v1344 = vunpack.c.l.b16 %v363
      %v1345 = vunpack.c.h.b16 %v363
      %v1346 = vunpack.c.l.b16 %v364
      %v1347 = vunpack.c.h.b16 %v364
      %v1348 = vunpack.c.l.b16 %v365
      %v1349 = vunpack.c.h.b16 %v365
      %v1350 = vunpack.c.l.b16 %v366
      %v1351 = vunpack.c.h.b16 %v366
      %v1352 = vunpack.c.l.b16 %v367
      %v1353 = vunpack.c.h.b16 %v367
      %v1354 = vunpack.c.l.b16 %v368
      %v1355 = vunpack.c.h.b16 %v368
      %v1356 = vunpack.c.l.b16 %v369
      %v1357 = vunpack.c.h.b16 %v369
      %v1358 = vunpack.c.l.b16 %v370
      %v1359 = vunpack.c.h.b16 %v370
      %v1360 = vunpack.c.l.b16 %v371
      %v1361 = vunpack.c.h.b16 %v371
      %v1362 = vunpack.c.l.b16 %v372
      %v1363 = vunpack.c.h.b16 %v372
      %v1364 = vunpack.c.l.b16 %v373
      %v1365 = vunpack.c.h.b16 %v373
      %v1366 = vunpack.c.l.b16 %v374
      %v1367 = vunpack.c.h.b16 %v374
      %v1368 = vunpack.c.l.b16 %v375
      %v1369 = vunpack.c.h.b16 %v375
      %v1370 = vunpack.c.l.b16 %v376
      %v1371 = vunpack.c.h.b16 %v376
      %v1372 = vunpack.c.l.b16 %v377
      %v1373 = vunpack.c.h.b16 %v377
      %v1374 = vunpack.c.l.b16 %v378
      %v1375 = vunpack.c.h.b16 %v378
      %v1376 = vunpack.c.l.b16 %v379
      %v1377 = vunpack.c.h.b16 %v379
      %v1378 = vunpack.c.l.b16 %v380
      %v1379 = vunpack.c.h.b16 %v380
      %v1380 = vunpack.c.l.b16 %v381
      %v1381 = vunpack.c.h.b16 %v381
      %v1382 = vunpack.c.l.b16 %v382
      %v1383 = vunpack.c.h.b16 %v382
      %v1384 = vunpack.c.l.b16 %v383
      %v1385 = vunpack.c.h.b16 %v383
      %v1386 = vunpack.c.l.b16 %v384
      %v1387 = vunpack.c.h.b16 %v384
      %v1388 = vunpack.c.l.b16 %v385
      %v1389 = vunpack.c.h.b16 %v385
      %v1390 = vunpack.c.l.b16 %v386
      %v1391 = vunpack.c.h.b16 %v386
      %v1392 = vunpack.c.l.b16 %v387
      %v1393 = vunpack.c.h.b16 %v387
      %v1394 = vunpack.c.l.b16 %v388
      %v1395 = vunpack.c.h.b16 %v388
      %v1396 = vunpack.c.l.b16 %v389
      %v1397 = vunpack.c.h.b16 %v389
      %v1398 = vunpack.c.l.b16 %v390
      %v1399 = vunpack.c.h.b16 %v390
      %v1400 = vunpack.c.l.b16 %v391
      %v1401 = vunpack.c.h.b16 %v391
      %v1402 = vunpack.c.l.b16 %v392
      %v1403 = vunpack.c.h.b16 %v392
      %v1404 = vunpack.c.l.b16 %v393
      %v1405 = vunpack.c.h.b16 %v393
      %v1406 = vunpack.c.l.b16 %v394
      %v1407 = vunpack.c.h.b16 %v394
      %v1408 = vunpack.c.l.b16 %v395
      %v1409 = vunpack.c.h.b16 %v395
      %v1410 = vunpack.c.l.b16 %v396
      %v1411 = vunpack.c.h.b16 %v396
      %v1412 = vunpack.c.l.b16 %v397
      %v1413 = vunpack.c.h.b16 %v397
      %v1414 = vunpack.c.l.b16 %v398
      %v1415 = vunpack.c.h.b16 %v398
      %v1416 = vunpack.c.l.b16 %v399
      %v1417 = vunpack.c.h.b16 %v399
      %v1418 = vunpack.c.l.b16 %v400
      %v1419 = vunpack.c.h.b16 %v400
      %v1420 = vunpack.c.l.b16 %v401
      %v1421 = vunpack.c.h.b16 %v401
      %v1422 = vunpack.c.l.b16 %v402
      %v1423 = vunpack.c.h.b16 %v402
      %v1424 = vunpack.c.l.b16 %v403
      %v1425 = vunpack.c.h.b16 %v403
      %v1426 = vunpack.c.l.b16 %v404
      %v1427 = vunpack.c.h.b16 %v404
      %v1428 = vunpack.c.l.b16 %v405
      %v1429 = vunpack.c.h.b16 %v405
      %v1430 = vunpack.c.l.b16 %v406
      %v1431 = vunpack.c.h.b16 %v406
      %v1432 = vunpack.c.l.b16 %v407
      %v1433 = vunpack.c.h.b16 %v407
      %v1434 = vunpack.c.l.b16 %v408
      %v1435 = vunpack.c.h.b16 %v408
      %v1436 = vunpack.c.l.b16 %v409
      %v1437 = vunpack.c.h.b16 %v409
      %v1438 = vunpack.c.l.b16 %v410
      %v1439 = vunpack.c.h.b16 %v410
      %v1440 = vunpack.c.l.b16 %v411
      %v1441 = vunpack.c.h.b16 %v411
      %v1442 = vunpack.c.l.b16 %v412
      %v1443 = vunpack.c.h.b16 %v412
      %v1444 = vunpack.c.l.b16 %v413
      %v1445 = vunpack.c.h.b16 %v413
      %v1446 = vunpack.c.l.b16 %v414
      %v1447 = vunpack.c.h.b16 %v414
      %v1448 = vunpack.c.l.b16 %v415
      %v1449 = vunpack.c.h.b16 %v415
      %v1450 = vunpack.c.l.b16 %v416
      %v1451 = vunpack.c.h.b16 %v416
      %v1452 = vunpack.c.l.b16 %v417
      %v1453 = vunpack.c.h.b16 %v417
      %v1454 = vunpack.c.l.b16 %v418
      %v1455 = vunpack.c.h.b16 %v418
      %v1456 = vunpack.c.l.b16 %v419
      %v1457 = vunpack.c.h.b16 %v419
      %v1458 = vunpack.c.l.b16 %v420
      %v1459 = vunpack.c.h.b16 %v420
      %v1460 = vunpack.c.l.b16 %v421
      %v1461 = vunpack.c.h.b16 %v421
      %v1462 = vunpack.c.l.b16 %v422
      %v1463 = vunpack.c.h.b16 %v422
      %v1464 = vunpack.c.l.b16 %v423
      %v1465 = vunpack.c.h.b16 %v423
      %v1466 = vunpack.c.l.b16 %v424
      %v1467 = vunpack.c.h.b16 %v424
      %v1468 = vunpack.c.l.b16 %v425
      %v1469 = vunpack.c.h.b16 %v425
      %v1470 = vunpack.c.l.b16 %v426
      %v1471 = vunpack.c.h.b16 %v426
      %v1472 = vunpack.c.l.b16 %v427
      %v1473 = vunpack.c.h.b16 %v427
      %v1474 = vunpack.c.l.b16 %v428
      %v1475 = vunpack.c.h.b16 %v428
      %v1476 = vunpack.c.l.b16 %v429
      %v1477 = vunpack.c.h.b16 %v429
      %v1478 = vunpack.c.l.b16 %v430
      %v1479 = vunpack.c.h.b16 %v430
      %v1480 = vunpack.c.l.b16 %v431
      %v1481 = vunpack.c.h.b16 %v431
      %v1482 = vunpack.c.l.b16 %v432
      %v1483 = vunpack.c.h.b16 %v432
      %v1484 = vunpack.c.l.b16 %v433
      %v1485 = vunpack.c.h.b16 %v433
      %v1486 = vunpack.c.l.b16 %v434
      %v1487 = vunpack.c.h.b16 %v434
      %v1488 = vunpack.c.l.b16 %v435
      %v1489 = vunpack.c.h.b16 %v435
      %v1490 = vunpack.c.l.b16 %v436
      %v1491 = vunpack.c.h.b16 %v436
      %v1492 = vunpack.c.l.b16 %v437
      %v1493 = vunpack.c.h.b16 %v437
      %v1494 = vunpack.c.l.b16 %v438
      %v1495 = vunpack.c.h.b16 %v438
      %v1496 = vunpack.c.l.b16 %v439
      %v1497 = vunpack.c.h.b16 %v439
      %v1498 = vunpack.c.l.b16 %v440
      %v1499 = vunpack.c.h.b16 %v440
      %v1500 = vunpack.c.l.b16 %v441
      %v1501 = vunpack.c.h.b16 %v441
      %v1502 = vunpack.c.l.b16 %v442
      %v1503 = vunpack.c.h.b16 %v442
      %v1504 = vunpack.c.l.b16 %v443
      %v1505 = vunpack.c.h.b16 %v443
      %v1506 = vunpack.c.l.b16 %v444
      %v1507 = vunpack.c.h.b16 %v444
      %v1508 = vunpack.c.l.b16 %v445
      %v1509 = vunpack.c.h.b16 %v445
      %v1510 = vunpack.c.l.b16 %v446
      %v1511 = vunpack.c.h.b16 %v446
      %v1512 = vunpack.c.l.b16 %v447
      %v1513 = vunpack.c.h.b16 %v447
      %v1514 = vunpack.c.l.b16 %v448
      %v1515 = vunpack.c.h.b16 %v448
      %v1516 = vunpack.c.l.b16 %v449
      %v1517 = vunpack.c.h.b16 %v449
      %v1518 = vunpack.c.l.b16 %v450
      %v1519 = vunpack.c.h.b16 %v450
      %v1520 = vunpack.c.l.b16 %v451
      %v1521 = vunpack.c.h.b16 %v451
      %v1522 = vunpack.c.l.b16 %v452
      %v1523 = vunpack.c.h.b16 %v452
      %v1524 = vunpack.c.l.b16 %v453
      %v1525 = vunpack.c.h.b16 %v453
      %v1526 = vunpack.c.l.b16 %v454
      %v1527 = vunpack.c.h.b16 %v454
      %v1528 = vunpack.c.l.b16 %v455
      %v1529 = vunpack.c.h.b16 %v455
      %v1530 = vunpack.c.l.b16 %v456
      %v1531 = vunpack.c.h.b16 %v456
      %v1532 = vunpack.c.l.b16 %v457
      %v1533 = vunpack.c.h.b16 %v457
      %v1534 = vunpack.c.l.b16 %v458
      %v1535 = vunpack.c.h.b16 %v458
      %v1536 = vunpack.c.l.b16 %v459
      %v1537 = vunpack.c.h.b16 %v459
      %v1538 = vunpack.c.l.b16 %v460
      %v1539 = vunpack.c.h.b16 %v460
      %v1540 = vunpack.c.l.b16 %v461
      %v1541 = vunpack.c.h.b16 %v461
      %v1542 = vunpack.c.l.b16 %v462
      %v1543 = vunpack.c.h.b16 %v462
      %v1544 = vunpack.c.l.b16 %v463
      %v1545 = vunpack.c.h.b16 %v463
      %v1546 = vunpack.c.l.b16 %v464
      %v1547 = vunpack.c.h.b16 %v464
      %v1548 = vunpack.c.l.b16 %v465
      %v1549 = vunpack.c.h.b16 %v465
      %v1550 = vunpack.c.l.b16 %v466
      %v1551 = vunpack.c.h.b16 %v466
      %v1552 = vunpack.c.l.b16 %v467
      %v1553 = vunpack.c.h.b16 %v467
      %v1554 = vunpack.c.l.b16 %v468
      %v1555 = vunpack.c.h.b16 %v468
      %v1556 = vunpack.c.l.b16 %v469
      %v1557 = vunpack.c.h.b16 %v469
      %v1558 = vunpack.c.l.b16 %v470
      %v1559 = vunpack.c.h.b16 %v470
      %v1560 = vunpack.c.l.b16 %v471
      %v1561 = vunpack.c.h.b16 %v471
      %v1562 = vunpack.c.l.b16 %v472
      %v1563 = vunpack.c.h.b16 %v472
      %v1564 = vunpack.c.l.b16 %v473
      %v1565 = vunpack.c.h.b16 %v473
      %v1566 = vunpack.c.l.b16 %v474
      %v1567 = vunpack.c.h.b16 %v474
      %v1568 = vunpack.c.l.b16 %v475
      %v1569 = vunpack.c.h.b16 %v475
      %v1570 = vunpack.c.l.b16 %v476
      %v1571 = vunpack.c.h.b16 %v476
      %v1572 = vunpack.c.l.b16 %v477
      %v1573 = vunpack.c.h.b16 %v477
      %v1574 = vunpack.c.l.b16 %v478
      %v1575 = vunpack.c.h.b16 %v478
      %v1576 = vunpack.c.l.b16 %v479
      %v1577 = vunpack.c.h.b16 %v479
      %v1578 = vunpack.c.l.b16 %v480
      %v1579 = vunpack.c.h.b16 %v480
      %v1580 = vunpack.c.l.b16 %v481
      %v1581 = vunpack.c.h.b16 %v481
      %v1582 = vunpack.c.l.b16 %v482
      %v1583 = vunpack.c.h.b16 %v482
      %v1584 = vunpack.c.l.b16 %v483
      %v1585 = vunpack.c.h.b16 %v483
      %v1586 = vunpack.c.l.b16 %v484
      %v1587 = vunpack.c.h.b16 %v484
      %v1588 = vunpack.c.l.b16 %v485
      %v1589 = vunpack.c.h.b16 %v485
      %v1590 = vunpack.c.l.b16 %v486
      %v1591 = vunpack.c.h.b16 %v486
      %v1592 = vunpack.c.l.b16 %v487
      %v1593 = vunpack.c.h.b16 %v487
      %v1594 = vunpack.c.l.b16 %v488
      %v1595 = vunpack.c.h.b16 %v488
      %v1596 = vunpack.c.l.b16 %v489
      %v1597 = vunpack.c.h.b16 %v489
      %v1598 = vunpack.c.l.b16 %v490
      %v1599 = vunpack.c.h.b16 %v490
      %v1600 = vunpack.c.l.b16 %v491
      %v1601 = vunpack.c.h.b16 %v491
      %v1602 = vunpack.c.l.b16 %v492
      %v1603 = vunpack.c.h.b16 %v492
      %v1604 = vunpack.c.l.b16 %v493
      %v1605 = vunpack.c.h.b16 %v493
      %v1606 = vunpack.c.l.b16 %v494
      %v1607 = vunpack.c.h.b16 %v494
      %v1608 = vunpack.c.l.b16 %v495
      %v1609 = vunpack.c.h.b16 %v495
      %v1610 = vunpack.c.l.b16 %v496
      %v1611 = vunpack.c.h.b16 %v496
      %v1612 = vunpack.c.l.b16 %v497
      %v1613 = vunpack.c.h.b16 %v497
      %v1614 = vunpack.c.l.b16 %v498
      %v1615 = vunpack.c.h.b16 %v498
      %v1616 = vunpack.c.l.b16 %v499
      %v1617 = vunpack.c.h.b16 %v499
      %v1618 = vunpack.c.l.b16 %v500
      %v1619 = vunpack.c.h.b16 %v500
      %v1620 = vunpack.c.l.b16 %v501
      %v1621 = vunpack.c.h.b16 %v501
      %v1622 = vunpack.c.l.b16 %v502
      %v1623 = vunpack.c.h.b16 %v502
      %v1624 = vunpack.c.l.b16 %v503
      %v1625 = vunpack.c.h.b16 %v503
      %v1626 = vunpack.c.l.b16 %v504
      %v1627 = vunpack.c.h.b16 %v504
      %v1628 = vunpack.c.l.b16 %v505
      %v1629 = vunpack.c.h.b16 %v505
      %v1630 = vunpack.c.l.b16 %v506
      %v1631 = vunpack.c.h.b16 %v506
      %v1632 = vunpack.c.l.b16 %v507
      %v1633 = vunpack.c.h.b16 %v507
      %v1634 = vunpack.c.l.b16 %v508
      %v1635 = vunpack.c.h.b16 %v508
      %v1636 = vunpack.c.l.b16 %v509
      %v1637 = vunpack.c.h.b16 %v509
      %v1638 = vunpack.c.l.b16 %v510
      %v1639 = vunpack.c.h.b16 %v510
      %v1640 = vunpack.c.l.b16 %v511
      %v1641 = vunpack.c.h.b16 %v511
      %v1642 = vunpack.c.l.b16 %v512
      %v1643 = vunpack.c.h.b16 %v512
      %v1644 = vunpack.c.l.b16 %v513
      %v1645 = vunpack.c.h.b16 %v513
      %v1646 = vunpack.c.l.b16 %v514
      %v1647 = vunpack.c.h.b16 %v514
      %v1648 = vunpack.c.l.b16 %v515
      %v1649 = vunpack.c.h.b16 %v515
      %v1650 = vunpack.c.l.b16 %v516
      %v1651 = vunpack.c.h.b16 %v516
      %v1652 = vunpack.c.l.b16 %v517
      %v1653 = vunpack.c.h.b16 %v517
      %v1654 = vunpack.c.l.b16 %v518
      %v1655 = vunpack.c.h.b16 %v518
      %v1656 = vunpack.c.l.b16 %v519
      %v1657 = vunpack.c.h.b16 %v519
      %v1658 = vunpack.c.l.b16 %v520
      %v1659 = vunpack.c.h.b16 %v520
      %v1660 = vunpack.c.l.b16 %v521
      %v1661 = vunpack.c.h.b16 %v521
      %v1662 = vunpack.c.l.b16 %v522
      %v1663 = vunpack.c.h.b16 %v522
      %v1664 = vunpack.c.l.b16 %v523
      %v1665 = vunpack.c.h.b16 %v523
      %v1666 = vunpack.c.l.b16 %v524
      %v1667 = vunpack.c.h.b16 %v524
      %v1668 = vunpack.c.l.b16 %v525
      %v1669 = vunpack.c.h.b16 %v525
      %v1670 = vunpack.c.l.b16 %v526
      %v1671 = vunpack.c.h.b16 %v526
      %v1672 = vunpack.c.l.b16 %v527
      %v1673 = vunpack.c.h.b16 %v527
      %v1674 = vunpack.c.l.b16 %v528
      %v1675 = vunpack.c.h.b16 %v528
      %v1676 = vunpack.c.l.b16 %v529
      %v1677 = vunpack.c.h.b16 %v529
      %v1678 = vunpack.c.l.b16 %v530
      %v1679 = vunpack.c.h.b16 %v530
      %v1680 = vunpack.c.l.b16 %v531
      %v1681 = vunpack.c.h.b16 %v531
      %v1682 = vunpack.c.l.b16 %v532
      %v1683 = vunpack.c.h.b16 %v532
      %v1684 = vunpack.c.l.b16 %v533
      %v1685 = vunpack.c.h.b16 %v533
      %v1686 = vunpack.c.l.b16 %v534
      %v1687 = vunpack.c.h.b16 %v534
      %v1688 = vunpack.c.l.b16 %v535
      %v1689 = vunpack.c.h.b16 %v535
      %v1690 = vunpack.c.l.b16 %v536
      %v1691 = vunpack.c.h.b16 %v536
      %v1692 = vunpack.c.l.b16 %v537
      %v1693 = vunpack.c.h.b16 %v537
      %v1694 = vunpack.c.l.b16 %v538
      %v1695 = vunpack.c.h.b16 %v538
      %v1696 = vunpack.c.l.b16 %v539
      %v1697 = vunpack.c.h.b16 %v539
      %v1698 = vunpack.c.l.b16 %v540
      %v1699 = vunpack.c.h.b16 %v540
      %v1700 = vunpack.c.l.b16 %v541
      %v1701 = vunpack.c.h.b16 %v541
      %v1702 = vunpack.c.l.b16 %v542
      %v1703 = vunpack.c.h.b16 %v542
      %v1704 = vunpack.c.l.b16 %v543
      %v1705 = vunpack.c.h.b16 %v543
      %v1706 = vunpack.c.l.b16 %v544
      %v1707 = vunpack.c.h.b16 %v544
      %v1708 = vunpack.c.l.b16 %v545
      %v1709 = vunpack.c.h.b16 %v545
      %v1710 = vunpack.c.l.b16 %v546
      %v1711 = vunpack.c.h.b16 %v546
      %v1712 = vunpack.c.l.b16 %v547
      %v1713 = vunpack.c.h.b16 %v547
      %v1714 = vunpack.c.l.b16 %v548
      %v1715 = vunpack.c.h.b16 %v548
      %v1716 = vunpack.c.l.b16 %v549
      %v1717 = vunpack.c.h.b16 %v549
      %v1718 = vunpack.c.l.b16 %v550
      %v1719 = vunpack.c.h.b16 %v550
      %v1720 = vunpack.c.l.b16 %v551
      %v1721 = vunpack.c.h.b16 %v551
      %v1722 = vunpack.c.l.b16 %v552
      %v1723 = vunpack.c.h.b16 %v552
      %v1724 = vunpack.c.l.b16 %v553
      %v1725 = vunpack.c.h.b16 %v553
      %v1726 = vunpack.c.l.b16 %v554
      %v1727 = vunpack.c.h.b16 %v554
      %v1728 = vunpack.c.l.b16 %v555
      %v1729 = vunpack.c.h.b16 %v555
      %v1730 = vunpack.c.l.b16 %v556
      %v1731 = vunpack.c.h.b16 %v556
      %v1732 = vunpack.c.l.b16 %v557
      %v1733 = vunpack.c.h.b16 %v557
      %v1734 = vunpack.c.l.b16 %v558
      %v1735 = vunpack.c.h.b16 %v558
      %v1736 = vunpack.c.l.b16 %v559
      %v1737 = vunpack.c.h.b16 %v559
      %v1738 = vunpack.c.l.b16 %v560
      %v1739 = vunpack.c.h.b16 %v560
      %v1740 = vunpack.c.l.b16 %v561
      %v1741 = vunpack.c.h.b16 %v561
      %v1742 = vunpack.c.l.b16 %v562
      %v1743 = vunpack.c.h.b16 %v562
      %v1744 = vunpack.c.l.b16 %v563
      %v1745 = vunpack.c.h.b16 %v563
      %v1746 = vunpack.c.l.b16 %v564
      %v1747 = vunpack.c.h.b16 %v564
      %v1748 = vunpack.c.l.b16 %v565
      %v1749 = vunpack.c.h.b16 %v565
      %v1750 = vunpack.c.l.b16 %v566
      %v1751 = vunpack.c.h.b16 %v566
      %v1752 = vunpack.c.l.b16 %v567
      %v1753 = vunpack.c.h.b16 %v567
      %v1754 = vunpack.c.l.b16 %v568
      %v1755 = vunpack.c.h.b16 %v568
      %v1756 = vunpack.c.l.b16 %v569
      %v1757 = vunpack.c.h.b16 %v569
      %v1758 = vunpack.c.l.b16 %v570
      %v1759 = vunpack.c.h.b16 %v570
      %v1760 = vunpack.c.l.b16 %v571
      %v1761 = vunpack.c.h.b16 %v571
      %v1762 = vunpack.c.l.b16 %v572
      %v1763 = vunpack.c.h.b16 %v572
      %v1764 = vunpack.c.l.b16 %v573
      %v1765 = vunpack.c.h.b16 %v573
      %v1766 = vunpack.c.l.b16 %v574
      %v1767 = vunpack.c.h.b16 %v574
      %v1768 = vunpack.c.l.b16 %v575
      %v1769 = vunpack.c.h.b16 %v575
      %v1770 = vunpack.c.l.b16 %v576
      %v1771 = vunpack.c.h.b16 %v576
      %v1772 = vunpack.c.l.b16 %v577
      %v1773 = vunpack.c.h.b16 %v577
      %v1774 = vunpack.c.l.b16 %v578
      %v1775 = vunpack.c.h.b16 %v578
      %v1776 = vunpack.c.l.b16 %v579
      %v1777 = vunpack.c.h.b16 %v579
      %v1778 = vunpack.c.l.b16 %v580
      %v1779 = vunpack.c.h.b16 %v580
      %v1780 = vunpack.c.l.b16 %v581
      %v1781 = vunpack.c.h.b16 %v581
      %v1782 = vunpack.c.l.b16 %v582
      %v1783 = vunpack.c.h.b16 %v582
      %v1784 = vunpack.c.l.b16 %v583
      %v1785 = vunpack.c.h.b16 %v583
      %v1786 = vunpack.c.l.b16 %v584
      %v1787 = vunpack.c.h.b16 %v584
      %v1788 = vunpack.c.l.b16 %v585
      %v1789 = vunpack.c.h.b16 %v585
      %v1790 = vunpack.c.l.b16 %v586
      %v1791 = vunpack.c.h.b16 %v586
      %v1792 = vunpack.c.l.b16 %v587
      %v1793 = vunpack.c.h.b16 %v587
      %v1794 = vunpack.c.l.b16 %v588
      %v1795 = vunpack.c.h.b16 %v588
      %v1796 = vunpack.c.l.b16 %v589
      %v1797 = vunpack.c.h.b16 %v589
      %v1798 = vunpack.c.l.b16 %v590
      %v1799 = vunpack.c.h.b16 %v590
      %v1800 = vunpack.c.l.b16 %v591
      %v1801 = vunpack.c.h.b16 %v591
      %v1802 = vunpack.c.l.b16 %v592
      %v1803 = vunpack.c.h.b16 %v592
      %v1804 = vunpack.c.l.b16 %v593
      %v1805 = vunpack.c.h.b16 %v593
      %v1806 = vunpack.c.l.b16 %v594
      %v1807 = vunpack.c.h.b16 %v594
      %v1808 = vunpack.c.l.b16 %v595
      %v1809 = vunpack.c.h.b16 %v595
      %v1810 = vunpack.c.l.b16 %v596
      %v1811 = vunpack.c.h.b16 %v596
      %v1812 = vunpack.c.l.b16 %v597
      %v1813 = vunpack.c.h.b16 %v597
      %v1814 = vunpack.c.l.b16 %v598
      %v1815 = vunpack.c.h.b16 %v598
      %v1816 = vunpack.c.l.b16 %v599
      %v1817 = vunpack.c.h.b16 %v599
      %v1818 = vunpack.c.l.b16 %v600
      %v1819 = vunpack.c.h.b16 %v600
      %v1820 = vunpack.c.l.b16 %v601
      %v1821 = vunpack.c.h.b16 %v601
      %v1822 = vunpack.c.l.b16 %v602
      %v1823 = vunpack.c.h.b16 %v602
      %v1824 = vunpack.c.l.b16 %v603
      %v1825 = vunpack.c.h.b16 %v603
      %v1826 = vunpack.c.l.b16 %v604
      %v1827 = vunpack.c.h.b16 %v604
      %v1828 = vunpack.c.l.b16 %v605
      %v1829 = vunpack.c.h.b16 %v605
      %v1830 = vunpack.c.l.b16 %v606
      %v1831 = vunpack.c.h.b16 %v606
      %v1832 = vunpack.c.l.b16 %v607
      %v1833 = vunpack.c.h.b16 %v607
      %v1834 = vunpack.c.l.b16 %v608
      %v1835 = vunpack.c.h.b16 %v608
      %v1836 = vunpack.c.l.b16 %v609
      %v1837 = vunpack.c.h.b16 %v609
      %v1838 = vunpack.c.l.b16 %v610
      %v1839 = vunpack.c.h.b16 %v610
      %v1840 = vunpack.c.l.b16 %v611
      %v1841 = vunpack.c.h.b16 %v611
      %v1842 = vunpack.c.l.b16 %v612
      %v1843 = vunpack.c.h.b16 %v612
      %v1844 = vunpack.c.l.b16 %v613
      %v1845 = vunpack.c.h.b16 %v613
      %v1846 = vunpack.c.l.b16 %v614
      %v1847 = vunpack.c.h.b16 %v614
      %v1848 = vunpack.c.l.b16 %v615
      %v1849 = vunpack.c.h.b16 %v615
      %v1850 = vunpack.c.l.b16 %v616
      %v1851 = vunpack.c.h.b16 %v616
      %v1852 = vunpack.c.l.b16 %v617
      %v1853 = vunpack.c.h.b16 %v617
      %v1854 = vunpack.c.l.b16 %v618
      %v1855 = vunpack.c.h.b16 %v618
      %v1856 = vunpack.c.l.b16 %v619
      %v1857 = vunpack.c.h.b16 %v619
      %v1858 = vunpack.c.l.b16 %v620
      %v1859 = vunpack.c.h.b16 %v620
      %v1860 = vunpack.c.l.b16 %v621
      %v1861 = vunpack.c.h.b16 %v621
      %v1862 = vunpack.c.l.b16 %v622
      %v1863 = vunpack.c.h.b16 %v622
      %v1864 = vunpack.c.l.b16 %v623
      %v1865 = vunpack.c.h.b16 %v623
      %v1866 = vunpack.c.l.b16 %v624
      %v1867 = vunpack.c.h.b16 %v624
      %v1868 = vunpack.c.l.b16 %v625
      %v1869 = vunpack.c.h.b16 %v625
      %v1870 = vunpack.c.l.b16 %v626
      %v1871 = vunpack.c.h.b16 %v626
      %v1872 = vunpack.c.l.b16 %v627
      %v1873 = vunpack.c.h.b16 %v627
      %v1874 = vunpack.c.l.b16 %v628
      %v1875 = vunpack.c.h.b16 %v628
      %v1876 = vunpack.c.l.b16 %v629
      %v1877 = vunpack.c.h.b16 %v629
      %v1878 = vunpack.c.l.b16 %v630
      %v1879 = vunpack.c.h.b16 %v630
      %v1880 = vunpack.c.l.b16 %v631
      %v1881 = vunpack.c.h.b16 %v631
      %v1882 = vunpack.c.l.b16 %v632
      %v1883 = vunpack.c.h.b16 %v632
      %v1884 = vunpack.c.l.b16 %v633
      %v1885 = vunpack.c.h.b16 %v633
      %v1886 = vunpack.c.l.b16 %v634
      %v1887 = vunpack.c.h.b16 %v634
      %v1888 = vunpack.c.l.b16 %v635
      %v1889 = vunpack.c.h.b16 %v635
      %v1890 = vunpack.c.l.b16 %v636
      %v1891 = vunpack.c.h.b16 %v636
      %v1892 = vunpack.c.l.b16 %v637
      %v1893 = vunpack.c.h.b16 %v637
      %v1894 = vunpack.c.l.b16 %v638
      %v1895 = vunpack.c.h.b16 %v638
      %v1896 = vunpack.c.l.b16 %v639
      %v1897 = vunpack.c.h.b16 %v639
      %v1898 = vunpack.c.l.b16 %v640
      %v1899 = vunpack.c.h.b16 %v640
      %v1900 = vunpack.c.l.b16 %v641
      %v1901 = vunpack.c.h.b16 %v641
      %v1902 = vunpack.c.l.b16 %v642
      %v1903 = vunpack.c.h.b16 %v642
      %v1904 = vunpack.c.l.b16 %v643
      %v1905 = vunpack.c.h.b16 %v643
      %v1906 = vunpack.c.l.b16 %v644
      %v1907 = vunpack.c.h.b16 %v644
      %v1908 = vunpack.c.l.b16 %v645
      %v1909 = vunpack.c.h.b16 %v645
      %v1910 = vunpack.c.l.b16 %v646
      %v1911 = vunpack.c.h.b16 %v646
      %v1912 = vunpack.c.l.b16 %v647
      %v1913 = vunpack.c.h.b16 %v647
      %v1914 = vunpack.c.l.b16 %v648
      %v1915 = vunpack.c.h.b16 %v648
      %v1916 = vunpack.c.l.b16 %v649
      %v1917 = vunpack.c.h.b16 %v649
      %v1918 = vunpack.c.l.b16 %v650
      %v1919 = vunpack.c.h.b16 %v650
      %v1920 = vunpack.c.l.b16 %v651
      %v1921 = vunpack.c.h.b16 %v651
      %v1922 = vunpack.c.l.b16 %v652
      %v1923 = vunpack.c.h.b16 %v652
      %v1924 = vunpack.c.l.b16 %v653
      %v1925 = vunpack.c.h.b16 %v653
      %v1926 = vunpack.c.l.b16 %v654
      %v1927 = vunpack.c.h.b16 %v654
      %v1928 = vunpack.c.l.b16 %v655
      %v1929 = vunpack.c.h.b16 %v655
      %v1930 = vunpack.c.l.b16 %v656
      %v1931 = vunpack.c.h.b16 %v656
      %v1932 = vunpack.c.l.b16 %v657
      %v1933 = vunpack.c.h.b16 %v657
      %v1934 = vunpack.c.l.b16 %v658
      %v1935 = vunpack.c.h.b16 %v658
      %v1936 = vunpack.c.l.b16 %v659
      %v1937 = vunpack.c.h.b16 %v659
      %v1938 = vunpack.c.l.b16 %v660
      %v1939 = vunpack.c.h.b16 %v660
      %v1940 = vunpack.c.l.b16 %v661
      %v1941 = vunpack.c.h.b16 %v661
      %v1942 = vunpack.c.l.b16 %v662
      %v1943 = vunpack.c.h.b16 %v662
      %v1944 = vunpack.c.l.b16 %v663
      %v1945 = vunpack.c.h.b16 %v663
      %v1946 = vunpack.c.l.b16 %v664
      %v1947 = vunpack.c.h.b16 %v664
      %v1948 = vunpack.c.l.b16 %v665
      %v1949 = vunpack.c.h.b16 %v665
      %v1950 = vunpack.c.l.b16 %v666
      %v1951 = vunpack.c.h.b16 %v666
      %v1952 = vunpack.c.l.b16 %v667
      %v1953 = vunpack.c.h.b16 %v667
      %v1954 = vunpack.c.l.b16 %v668
      %v1955 = vunpack.c.h.b16 %v668
      %v1956 = vunpack.c.l.b16 %v669
      %v1957 = vunpack.c.h.b16 %v669
      %v1958 = vunpack.c.l.b16 %v670
      %v1959 = vunpack.c.h.b16 %v670
      %v1960 = vunpack.c.l.b16 %v671
      %v1961 = vunpack.c.h.b16 %v671
      %v1962 = vunpack.c.l.b16 %v672
      %v1963 = vunpack.c.h.b16 %v672
      %v1964 = vunpack.c.l.b16 %v673
      %v1965 = vunpack.c.h.b16 %v673
      %v1966 = vunpack.c.l.b16 %v674
      %v1967 = vunpack.c.h.b16 %v674
      %v1968 = vunpack.c.l.b16 %v675
      %v1969 = vunpack.c.h.b16 %v675
      %v1970 = vunpack.c.l.b16 %v676
      %v1971 = vunpack.c.h.b16 %v676
      %v1972 = vunpack.c.l.b16 %v677
      %v1973 = vunpack.c.h.b16 %v677
      %v1974 = vunpack.c.l.b16 %v678
      %v1975 = vunpack.c.h.b16 %v678
      %v1976 = vunpack.c.l.b16 %v679
      %v1977 = vunpack.c.h.b16 %v679
      %v1978 = vunpack.c.l.b16 %v680
      %v1979 = vunpack.c.h.b16 %v680
      %v1980 = vunpack.c.l.b16 %v681
      %v1981 = vunpack.c.h.b16 %v681
      %v1982 = vunpack.c.l.b16 %v682
      %v1983 = vunpack.c.h.b16 %v682
      %v1984 = vunpack.c.l.b16 %v683
      %v1985 = vunpack.c.h.b16 %v683
      %v1986 = vunpack.c.l.b16 %v684
      %v1987 = vunpack.c.h.b16 %v684
      %v1988 = vunpack.c.l.b16 %v685
      %v1989 = vunpack.c.h.b16 %v685
      %v1990 = vunpack.c.l.b16 %v686
      %v1991 = vunpack.c.h.b16 %v686
      %v1992 = vunpack.c.l.b16 %v687
      %v1993 = vunpack.c.h.b16 %v687
      %v1994 = vunpack.c.l.b16 %v688
      %v1995 = vunpack.c.h.b16 %v688
      %v1996 = vunpack.c.l.b16 %v689
      %v1997 = vunpack.c.h.b16 %v689
      %v1998 = vunpack.c.l.b16 %v690
      %v1999 = vunpack.c.h.b16 %v690
      %v2000 = vunpack.c.l.b16 %v691
      %v2001 = vunpack.c.h.b16 %v691
      %v2002 = vunpack.c.l.b16 %v692
      %v2003 = vunpack.c.h.b16 %v692
      %v2004 = vunpack.c.l.b16 %v693
      %v2005 = vunpack.c.h.b16 %v693
      %v2006 = vunpack.c.l.b16 %v694
      %v2007 = vunpack.c.h.b16 %v694
      %v2008 = vunpack.c.l.b16 %v695
      %v2009 = vunpack.c.h.b16 %v695
      %v2010 = vunpack.c.l.b16 %v696
      %v2011 = vunpack.c.h.b16 %v696
      %v2012 = vunpack.c.l.b16 %v697
      %v2013 = vunpack.c.h.b16 %v697
      %v2014 = vunpack.c.l.b16 %v698
      %v2015 = vunpack.c.h.b16 %v698
      %v2016 = vunpack.c.l.b16 %v699
      %v2017 = vunpack.c.h.b16 %v699
      %v2018 = vunpack.c.l.b16 %v700
      %v2019 = vunpack.c.h.b16 %v700
      %v2020 = vunpack.c.l.b16 %v701
      %v2021 = vunpack.c.h.b16 %v701
      %v2022 = vunpack.c.l.b16 %v702
      %v2023 = vunpack.c.h.b16 %v702
      %v2024 = vunpack.c.l.b16 %v703
      %v2025 = vunpack.c.h.b16 %v703
      %v2026 = vunpack.c.l.b16 %v704
      %v2027 = vunpack.c.h.b16 %v704
      %v2028 = vunpack.c.l.b16 %v705
      %v2029 = vunpack.c.h.b16 %v705
      %v2030 = vunpack.c.l.b16 %v706
      %v2031 = vunpack.c.h.b16 %v706
      %v2032 = vunpack.c.l.b16 %v707
      %v2033 = vunpack.c.h.b16 %v707
      %v2034 = vunpack.c.l.b16 %v708
      %v2035 = vunpack.c.h.b16 %v708
      %v2036 = vunpack.c.l.b16 %v709
      %v2037 = vunpack.c.h.b16 %v709
      %v2038 = vunpack.c.l.b16 %v710
      %v2039 = vunpack.c.h.b16 %v710
      %v2040 = vunpack.c.l.b16 %v711
      %v2041 = vunpack.c.h.b16 %v711
      %v2042 = vunpack.c.l.b16 %v712
      %v2043 = vunpack.c.h.b16 %v712
      %v2044 = vunpack.c.l.b16 %v713
      %v2045 = vunpack.c.h.b16 %v713
      %v2046 = vunpack.c.l.b16 %v714
      %v2047 = vunpack.c.h.b16 %v714
      %v2048 = vunpack.c.l.b16 %v715
      %v2049 = vunpack.c.h.b16 %v715
      %v2050 = vunpack.c.l.b16 %v716
      %v2051 = vunpack.c.h.b16 %v716
      %v2052 = vunpack.c.l.b16 %v717
      %v2053 = vunpack.c.h.b16 %v717
      %v2054 = vunpack.c.l.b16 %v718
      %v2055 = vunpack.c.h.b16 %v718
      %v2056 = vunpack.c.l.b16 %v719
      %v2057 = vunpack.c.h.b16 %v719
      %v2058 = vunpack.c.l.b16 %v720
      %v2059 = vunpack.c.h.b16 %v720
      %v2060 = vunpack.c.l.b16 %v721
      %v2061 = vunpack.c.h.b16 %v721
      %v2062 = vunpack.c.l.b16 %v722
      %v2063 = vunpack.c.h.b16 %v722
      %v2064 = vunpack.c.l.b16 %v723
      %v2065 = vunpack.c.h.b16 %v723
      %v2066 = vunpack.c.l.b16 %v724
      %v2067 = vunpack.c.h.b16 %v724
      %v2068 = vunpack.c.l.b16 %v725
      %v2069 = vunpack.c.h.b16 %v725
      %v2070 = vpack.c.b16 %v1178, %v1174
      %v2071 = vpack.c.b16 %v1179, %v1175
      %v2072 = vpack.c.b16 %v1180, %v1176
      %v2073 = vpack.c.b16 %v1181, %v1177
      %v2074 = vpack.c.b16 %v1186, %v1182
      %v2075 = vpack.c.b16 %v1187, %v1183
      %v2076 = vpack.c.b16 %v1188, %v1184
      %v2077 = vpack.c.b16 %v1189, %v1185
      %v2078 = vpack.c.b16 %v1194, %v1190
      %v2079 = vpack.c.b16 %v1195, %v1191
      %v2080 = vpack.c.b16 %v1196, %v1192
      %v2081 = vpack.c.b16 %v1197, %v1193
      %v2082 = vpack.c.b16 %v1202, %v1198
      %v2083 = vpack.c.b16 %v1203, %v1199
      %v2084 = vpack.c.b16 %v1204, %v1200
      %v2085 = vpack.c.b16 %v1205, %v1201
      %v2086 = vpack.c.b16 %v1210, %v1206
      %v2087 = vpack.c.b16 %v1211, %v1207
      %v2088 = vpack.c.b16 %v1212, %v1208
      %v2089 = vpack.c.b16 %v1213, %v1209
      %v2090 = vpack.c.b16 %v1218, %v1214
      %v2091 = vpack.c.b16 %v1219, %v1215
      %v2092 = vpack.c.b16 %v1220, %v1216
      %v2093 = vpack.c.b16 %v1221, %v1217
      %v2094 = vpack.c.b16 %v1226, %v1222
      %v2095 = vpack.c.b16 %v1227, %v1223
      %v2096 = vpack.c.b16 %v1228, %v1224
      %v2097 = vpack.c.b16 %v1229, %v1225
      %v2098 = vpack.c.b16 %v1234, %v1230
      %v2099 = vpack.c.b16 %v1235, %v1231
      %v2100 = vpack.c.b16 %v1236, %v1232
      %v2101 = vpack.c.b16 %v1237, %v1233
      %v2102 = vpack.c.b16 %v1242, %v1238
      %v2103 = vpack.c.b16 %v1243, %v1239
      %v2104 = vpack.c.b16 %v1244, %v1240
      %v2105 = vpack.c.b16 %v1245, %v1241
      %v2106 = vpack.c.b16 %v1250, %v1246
      %v2107 = vpack.c.b16 %v1251, %v1247
      %v2108 = vpack.c.b16 %v1252, %v1248
      %v2109 = vpack.c.b16 %v1253, %v1249
      %v2110 = vpack.c.b16 %v1258, %v1254
      %v2111 = vpack.c.b16 %v1259, %v1255
      %v2112 = vpack.c.b16 %v1260, %v1256
      %v2113 = vpack.c.b16 %v1261, %v1257
      %v2114 = vpack.c.b16 %v1266, %v1262
      %v2115 = vpack.c.b16 %v1267, %v1263
      %v2116 = vpack.c.b16 %v1268, %v1264
      %v2117 = vpack.c.b16 %v1269, %v1265
      %v2118 = vpack.c.b16 %v1274, %v1270
      %v2119 = vpack.c.b16 %v1275, %v1271
      %v2120 = vpack.c.b16 %v1276, %v1272
      %v2121 = vpack.c.b16 %v1277, %v1273
      %v2122 = vpack.c.b16 %v1282, %v1278
      %v2123 = vpack.c.b16 %v1283, %v1279
      %v2124 = vpack.c.b16 %v1284, %v1280
      %v2125 = vpack.c.b16 %v1285, %v1281
      %v2126 = vpack.c.b16 %v1290, %v1286
      %v2127 = vpack.c.b16 %v1291, %v1287
      %v2128 = vpack.c.b16 %v1292, %v1288
      %v2129 = vpack.c.b16 %v1293, %v1289
      %v2130 = vpack.c.b16 %v1298, %v1294
      %v2131 = vpack.c.b16 %v1299, %v1295
      %v2132 = vpack.c.b16 %v1300, %v1296
      %v2133 = vpack.c.b16 %v1301, %v1297
      %v2134 = vpack.c.b16 %v1306, %v1302
      %v2135 = vpack.c.b16 %v1307, %v1303
      %v2136 = vpack.c.b16 %v1308, %v1304
      %v2137 = vpack.c.b16 %v1309, %v1305
      %v2138 = vpack.c.b16 %v1314, %v1310
      %v2139 = vpack.c.b16 %v1315, %v1311
      %v2140 = vpack.c.b16 %v1316, %v1312
      %v2141 = vpack.c.b16 %v1317, %v1313
      %v2142 = vpack.c.b16 %v1322, %v1318
      %v2143 = vpack.c.b16 %v1323, %v1319
      %v2144 = vpack.c.b16 %v1324, %v1320
      %v2145 = vpack.c.b16 %v1325, %v1321
      %v2146 = vpack.c.b16 %v1330, %v1326
      %v2147 = vpack.c.b16 %v1331, %v1327
      %v2148 = vpack.c.b16 %v1332, %v1328
      %v2149 = vpack.c.b16 %v1333, %v1329
      %v2150 = vpack.c.b16 %v1338, %v1334
      %v2151 = vpack.c.b16 %v1339, %v1335
      %v2152 = vpack.c.b16 %v1340, %v1336
      %v2153 = vpack.c.b16 %v1341, %v1337
      %v2154 = vpack.c.b16 %v1346, %v1342
      %v2155 = vpack.c.b16 %v1347, %v1343
      %v2156 = vpack.c.b16 %v1348, %v1344
      %v2157 = vpack.c.b16 %v1349, %v1345
      %v2158 = vpack.c.b16 %v1354, %v1350
      %v2159 = vpack.c.b16 %v1355, %v1351
      %v2160 = vpack.c.b16 %v1356, %v1352
      %v2161 = vpack.c.b16 %v1357, %v1353
      %v2162 = vpack.c.b16 %v1362, %v1358
      %v2163 = vpack.c.b16 %v1363, %v1359
      %v2164 = vpack.c.b16 %v1364, %v1360
      %v2165 = vpack.c.b16 %v1365, %v1361
      %v2166 = vpack.c.b16 %v1370, %v1366
      %v2167 = vpack.c.b16 %v1371, %v1367
      %v2168 = vpack.c.b16 %v1372, %v1368
      %v2169 = vpack.c.b16 %v1373, %v1369
      %v2170 = vpack.c.b16 %v1378, %v1374
      %v2171 = vpack.c.b16 %v1379, %v1375
      %v2172 = vpack.c.b16 %v1380, %v1376
      %v2173 = vpack.c.b16 %v1381, %v1377
      %v2174 = vpack.c.b16 %v1386, %v1382
      %v2175 = vpack.c.b16 %v1387, %v1383
      %v2176 = vpack.c.b16 %v1388, %v1384
      %v2177 = vpack.c.b16 %v1389, %v1385
      %v2178 = vpack.c.b16 %v1394, %v1390
      %v2179 = vpack.c.b16 %v1395, %v1391
      %v2180 = vpack.c.b16 %v1396, %v1392
      %v2181 = vpack.c.b16 %v1397, %v1393
      %v2182 = vpack.c.b16 %v1402, %v1398
      %v2183 = vpack.c.b16 %v1403, %v1399
      %v2184 = vpack.c.b16 %v1404, %v1400
      %v2185 = vpack.c.b16 %v1405, %v1401
      %v2186 = vpack.c.b16 %v1410, %v1406
      %v2187 = vpack.c.b16 %v1411, %v1407
      %v2188 = vpack.c.b16 %v1412, %v1408
      %v2189 = vpack.c.b16 %v1413, %v1409
      %v2190 = vpack.c.b16 %v1418, %v1414
      %v2191 = vpack.c.b16 %v1419, %v1415
      %v2192 = vpack.c.b16 %v1420, %v1416
      %v2193 = vpack.c.b16 %v1421, %v1417
      %v2194 = vpack.c.b16 %v1426, %v1422
      %v2195 = vpack.c.b16 %v1427, %v1423
      %v2196 = vpack.c.b16 %v1428, %v1424
      %v2197 = vpack.c.b16 %v1429, %v1425
      %v2198 = vpack.c.b16 %v1434, %v1430
      %v2199 = vpack.c.b16 %v1435, %v1431
      %v2200 = vpack.c.b16 %v1436, %v1432
      %v2201 = vpack.c.b16 %v1437, %v1433
      %v2202 = vpack.c.b16 %v1442, %v1438
      %v2203 = vpack.c.b16 %v1443, %v1439
      %v2204 = vpack.c.b16 %v1444, %v1440
      %v2205 = vpack.c.b16 %v1445, %v1441
      %v2206 = vpack.c.b16 %v1450, %v1446
      %v2207 = vpack.c.b16 %v1451, %v1447
      %v2208 = vpack.c.b16 %v1452, %v1448
      %v2209 = vpack.c.b16 %v1453, %v1449
      %v2210 = vpack.c.b16 %v1458, %v1454
      %v2211 = vpack.c.b16 %v1459, %v1455
      %v2212 = vpack.c.b16 %v1460, %v1456
      %v2213 = vpack.c.b16 %v1461, %v1457
      %v2214 = vpack.c.b16 %v1466, %v1462
      %v2215 = vpack.c.b16 %v1467, %v1463
      %v2216 = vpack.c.b16 %v1468, %v1464
      %v2217 = vpack.c.b16 %v1469, %v1465
      %v2218 = vpack.c.b16 %v1474, %v1470
      %v2219 = vpack.c.b16 %v1475, %v1471
      %v2220 = vpack.c.b16 %v1476, %v1472
      %v2221 = vpack.c.b16 %v1477, %v1473
      %v2222 = vpack.c.b16 %v1482, %v1478
      %v2223 = vpack.c.b16 %v1483, %v1479
      %v2224 = vpack.c.b16 %v1484, %v1480
      %v2225 = vpack.c.b16 %v1485, %v1481
      %v2226 = vpack.c.b16 %v1490, %v1486
      %v2227 = vpack.c.b16 %v1491, %v1487
      %v2228 = vpack.c.b16 %v1492, %v1488
      %v2229 = vpack.c.b16 %v1493, %v1489
      %v2230 = vpack.c.b16 %v1498, %v1494
      %v2231 = vpack.c.b16 %v1499, %v1495
      %v2232 = vpack.c.b16 %v1500, %v1496
      %v2233 = vpack.c.b16 %v1501, %v1497
      %v2234 = vpack.c.b16 %v1506, %v1502
      %v2235 = vpack.c.b16 %v1507, %v1503
      %v2236 = vpack.c.b16 %v1508, %v1504
      %v2237 = vpack.c.b16 %v1509, %v1505
      %v2238 = vpack.c.b16 %v1514, %v1510
      %v2239 = vpack.c.b16 %v1515, %v1511
      %v2240 = vpack.c.b16 %v1516, %v1512
      %v2241 = vpack.c.b16 %v1517, %v1513
      %v2242 = vpack.c.b16 %v1522, %v1518
      %v2243 = vpack.c.b16 %v1523, %v1519
      %v2244 = vpack.c.b16 %v1524, %v1520
      %v2245 = vpack.c.b16 %v1525, %v1521
      %v2246 = vpack.c.b16 %v1530, %v1526
      %v2247 = vpack.c.b16 %v1531, %v1527
      %v2248 = vpack.c.b16 %v1532, %v1528
      %v2249 = vpack.c.b16 %v1533, %v1529
      %v2250 = vpack.c.b16 %v1538, %v1534
      %v2251 = vpack.c.b16 %v1539, %v1535
      %v2252 = vpack.c.b16 %v1540, %v1536
      %v2253 = vpack.c.b16 %v1541, %v1537
      %v2254 = vpack.c.b16 %v1546, %v1542
      %v2255 = vpack.c.b16 %v1547, %v1543
      %v2256 = vpack.c.b16 %v1548, %v1544
      %v2257 = vpack.c.b16 %v1549, %v1545
      %v2258 = vpack.c.b16 %v1554, %v1550
      %v2259 = vpack.c.b16 %v1555, %v1551
      %v2260 = vpack.c.b16 %v1556, %v1552
      %v2261 = vpack.c.b16 %v1557, %v1553
      %v2262 = vpack.c.b16 %v1562, %v1558
      %v2263 = vpack.c.b16 %v1563, %v1559
      %v2264 = vpack.c.b16 %v1564, %v1560
      %v2265 = vpack.c.b16 %v1565, %v1561
      %v2266 = vpack.c.b16 %v1570, %v1566
      %v2267 = vpack.c.b16 %v1571, %v1567
      %v2268 = vpack.c.b16 %v1572, %v1568
      %v2269 = vpack.c.b16 %v1573, %v1569
      %v2270 = vpack.c.b16 %v1578, %v1574
      %v2271 = vpack.c.b16 %v1579, %v1575
      %v2272 = vpack.c.b16 %v1580, %v1576
      %v2273 = vpack.c.b16 %v1581, %v1577
      %v2274 = vpack.c.b16 %v1586, %v1582
      %v2275 = vpack.c.b16 %v1587, %v1583
      %v2276 = vpack.c.b16 %v1588, %v1584
      %v2277 = vpack.c.b16 %v1589, %v1585
      %v2278 = vpack.c.b16 %v1594, %v1590
      %v2279 = vpack.c.b16 %v1595, %v1591
      %v2280 = vpack.c.b16 %v1596, %v1592
      %v2281 = vpack.c.b16 %v1597, %v1593
      %v2282 = vpack.c.b16 %v1602, %v1598
      %v2283 = vpack.c.b16 %v1603, %v1599
      %v2284 = vpack.c.b16 %v1604, %v1600
      %v2285 = vpack.c.b16 %v1605, %v1601
      %v2286 = vpack.c.b16 %v1610, %v1606
      %v2287 = vpack.c.b16 %v1611, %v1607
      %v2288 = vpack.c.b16 %v1612, %v1608
      %v2289 = vpack.c.b16 %v1613, %v1609
      %v2290 = vpack.c.b16 %v1618, %v1614
      %v2291 = vpack.c.b16 %v1619, %v1615
      %v2292 = vpack.c.b16 %v1620, %v1616
      %v2293 = vpack.c.b16 %v1621, %v1617
      %v2294 = vpack.c.b16 %v1626, %v1622
      %v2295 = vpack.c.b16 %v1627, %v1623
      %v2296 = vpack.c.b16 %v1628, %v1624
      %v2297 = vpack.c.b16 %v1629, %v1625
      %v2298 = vpack.c.b16 %v1634, %v1630
      %v2299 = vpack.c.b16 %v1635, %v1631
      %v2300 = vpack.c.b16 %v1636, %v1632
      %v2301 = vpack.c.b16 %v1637, %v1633
      %v2302 = vpack.c.b16 %v1642, %v1638
      %v2303 = vpack.c.b16 %v1643, %v1639
      %v2304 = vpack.c.b16 %v1644, %v1640
      %v2305 = vpack.c.b16 %v1645, %v1641
      %v2306 = vpack.c.b16 %v1650, %v1646
      %v2307 = vpack.c.b16 %v1651, %v1647
      %v2308 = vpack.c.b16 %v1652, %v1648
      %v2309 = vpack.c.b16 %v1653, %v1649
      %v2310 = vpack.c.b16 %v1658, %v1654
      %v2311 = vpack.c.b16 %v1659, %v1655
      %v2312 = vpack.c.b16 %v1660, %v1656
      %v2313 = vpack.c.b16 %v1661, %v1657
      %v2314 = vpack.c.b16 %v1666, %v1662
      %v2315 = vpack.c.b16 %v1667, %v1663
      %v2316 = vpack.c.b16 %v1668, %v1664
      %v2317 = vpack.c.b16 %v1669, %v1665
      %v2318 = vpack.c.b16 %v1674, %v1670
      %v2319 = vpack.c.b16 %v1675, %v1671
      %v2320 = vpack.c.b16 %v1676, %v1672
      %v2321 = vpack.c.b16 %v1677, %v1673
      %v2322 = vpack.c.b16 %v1682, %v1678
      %v2323 = vpack.c.b16 %v1683, %v1679
      %v2324 = vpack.c.b16 %v1684, %v1680
      %v2325 = vpack.c.b16 %v1685, %v1681
      %v2326 = vpack.c.b16 %v1690, %v1686
      %v2327 = vpack.c.b16 %v1691, %v1687
      %v2328 = vpack.c.b16 %v1692, %v1688
      %v2329 = vpack.c.b16 %v1693, %v1689
      %v2330 = vpack.c.b16 %v1698, %v1694
      %v2331 = vpack.c.b16 %v1699, %v1695
      %v2332 = vpack.c.b16 %v1700, %v1696
      %v2333 = vpack.c.b16 %v1701, %v1697
      %v2334 = vpack.c.b16 %v1706, %v1702
      %v2335 = vpack.c.b16 %v1707, %v1703
      %v2336 = vpack.c.b16 %v1708, %v1704
      %v2337 = vpack.c.b16 %v1709, %v1705
      %v2338 = vpack.c.b16 %v1714, %v1710
      %v2339 = vpack.c.b16 %v1715, %v1711
      %v2340 = vpack.c.b16 %v1716, %v1712
      %v2341 = vpack.c.b16 %v1717, %v1713
      %v2342 = vpack.c.b16 %v1722, %v1718
      %v2343 = vpack.c.b16 %v1723, %v1719
      %v2344 = vpack.c.b16 %v1724, %v1720
      %v2345 = vpack.c.b16 %v1725, %v1721
      %v2346 = vpack.c.b16 %v1730, %v1726
      %v2347 = vpack.c.b16 %v1731, %v1727
      %v2348 = vpack.c.b16 %v1732, %v1728
      %v2349 = vpack.c.b16 %v1733, %v1729
      %v2350 = vpack.c.b16 %v1738, %v1734
      %v2351 = vpack.c.b16 %v1739, %v1735
      %v2352 = vpack.c.b16 %v1740, %v1736
      %v2353 = vpack.c.b16 %v1741, %v1737
      %v2354 = vpack.c.b16 %v1746, %v1742
      %v2355 = vpack.c.b16 %v1747, %v1743
      %v2356 = vpack.c.b16 %v1748, %v1744
      %v2357 = vpack.c.b16 %v1749, %v1745
      %v2358 = vpack.c.b16 %v1754, %v1750
      %v2359 = vpack.c.b16 %v1755, %v1751
      %v2360 = vpack.c.b16 %v1756, %v1752
      %v2361 = vpack.c.b16 %v1757, %v1753
      %v2362 = vpack.c.b16 %v1762, %v1758
      %v2363 = vpack.c.b16 %v1763, %v1759
      %v2364 = vpack.c.b16 %v1764, %v1760
      %v2365 = vpack.c.b16 %v1765, %v1761
      %v2366 = vpack.c.b16 %v1770, %v1766
      %v2367 = vpack.c.b16 %v1771, %v1767
      %v2368 = vpack.c.b16 %v1772, %v1768
      %v2369 = vpack.c.b16 %v1773, %v1769
      %v2370 = vpack.c.b16 %v1778, %v1774
      %v2371 = vpack.c.b16 %v1779, %v1775
      %v2372 = vpack.c.b16 %v1780, %v1776
      %v2373 = vpack.c.b16 %v1781, %v1777
      %v2374 = vpack.c.b16 %v1786, %v1782
      %v2375 = vpack.c.b16 %v1787, %v1783
      %v2376 = vpack.c.b16 %v1788, %v1784
      %v2377 = vpack.c.b16 %v1789, %v1785
      %v2378 = vpack.c.b16 %v1794, %v1790
      %v2379 = vpack.c.b16 %v1795, %v1791
      %v2380 = vpack.c.b16 %v1796, %v1792
      %v2381 = vpack.c.b16 %v1797, %v1793
      %v2382 = vpack.c.b16 %v1802, %v1798
      %v2383 = vpack.c.b16 %v1803, %v1799
      %v2384 = vpack.c.b16 %v1804, %v1800
      %v2385 = vpack.c.b16 %v1805, %v1801
      %v2386 = vpack.c.b16 %v1810, %v1806
      %v2387 = vpack.c.b16 %v1811, %v1807
      %v2388 = vpack.c.b16 %v1812, %v1808
      %v2389 = vpack.c.b16 %v1813, %v1809
      %v2390 = vpack.c.b16 %v1818, %v1814
      %v2391 = vpack.c.b16 %v1819, %v1815
      %v2392 = vpack.c.b16 %v1820, %v1816
      %v2393 = vpack.c.b16 %v1821, %v1817
      %v2394 = vpack.c.b16 %v1826, %v1822
      %v2395 = vpack.c.b16 %v1827, %v1823
      %v2396 = vpack.c.b16 %v1828, %v1824
      %v2397 = vpack.c.b16 %v1829, %v1825
      %v2398 = vpack.c.b16 %v1834, %v1830
      %v2399 = vpack.c.b16 %v1835, %v1831
      %v2400 = vpack.c.b16 %v1836, %v1832
      %v2401 = vpack.c.b16 %v1837, %v1833
      %v2402 = vpack.c.b16 %v1842, %v1838
      %v2403 = vpack.c.b16 %v1843, %v1839
      %v2404 = vpack.c.b16 %v1844, %v1840
      %v2405 = vpack.c.b16 %v1845, %v1841
      %v2406 = vpack.c.b16 %v1850, %v1846
      %v2407 = vpack.c.b16 %v1851, %v1847
      %v2408 = vpack.c.b16 %v1852, %v1848
      %v2409 = vpack.c.b16 %v1853, %v1849
      %v2410 = vpack.c.b16 %v1858, %v1854
      %v2411 = vpack.c.b16 %v1859, %v1855
      %v2412 = vpack.c.b16 %v1860, %v1856
      %v2413 = vpack.c.b16 %v1861, %v1857
      %v2414 = vpack.c.b16 %v1866, %v1862
      %v2415 = vpack.c.b16 %v1867, %v1863
      %v2416 = vpack.c.b16 %v1868, %v1864
      %v2417 = vpack.c.b16 %v1869, %v1865
      %v2418 = vpack.c.b16 %v1874, %v1870
      %v2419 = vpack.c.b16 %v1875, %v1871
      %v2420 = vpack.c.b16 %v1876, %v1872
      %v2421 = vpack.c.b16 %v1877, %v1873
      %v2422 = vpack.c.b16 %v1882, %v1878
      %v2423 = vpack.c.b16 %v1883, %v1879
      %v2424 = vpack.c.b16 %v1884, %v1880
      %v2425 = vpack.c.b16 %v1885, %v1881
      %v2426 = vpack.c.b16 %v1890, %v1886
      %v2427 = vpack.c.b16 %v1891, %v1887
      %v2428 = vpack.c.b16 %v1892, %v1888
      %v2429 = vpack.c.b16 %v1893, %v1889
      %v2430 = vpack.c.b16 %v1898, %v1894
      %v2431 = vpack.c.b16 %v1899, %v1895
      %v2432 = vpack.c.b16 %v1900, %v1896
      %v2433 = vpack.c.b16 %v1901, %v1897
      %v2434 = vpack.c.b16 %v1906, %v1902
      %v2435 = vpack.c.b16 %v1907, %v1903
      %v2436 = vpack.c.b16 %v1908, %v1904
      %v2437 = vpack.c.b16 %v1909, %v1905
      %v2438 = vpack.c.b16 %v1914, %v1910
      %v2439 = vpack.c.b16 %v1915, %v1911
      %v2440 = vpack.c.b16 %v1916, %v1912
      %v2441 = vpack.c.b16 %v1917, %v1913
      %v2442 = vpack.c.b16 %v1922, %v1918
      %v2443 = vpack.c.b16 %v1923, %v1919
      %v2444 = vpack.c.b16 %v1924, %v1920
      %v2445 = vpack.c.b16 %v1925, %v1921
      %v2446 = vpack.c.b16 %v1930, %v1926
      %v2447 = vpack.c.b16 %v1931, %v1927
      %v2448 = vpack.c.b16 %v1932, %v1928
      %v2449 = vpack.c.b16 %v1933, %v1929
      %v2450 = vpack.c.b16 %v1938, %v1934
      %v2451 = vpack.c.b16 %v1939, %v1935
      %v2452 = vpack.c.b16 %v1940, %v1936
      %v2453 = vpack.c.b16 %v1941, %v1937
      %v2454 = vpack.c.b16 %v1946, %v1942
      %v2455 = vpack.c.b16 %v1947, %v1943
      %v2456 = vpack.c.b16 %v1948, %v1944
      %v2457 = vpack.c.b16 %v1949, %v1945
      %v2458 = vpack.c.b16 %v1954, %v1950
      %v2459 = vpack.c.b16 %v1955, %v1951
      %v2460 = vpack.c.b16 %v1956, %v1952
      %v2461 = vpack.c.b16 %v1957, %v1953
      %v2462 = vpack.c.b16 %v1962, %v1958
      %v2463 = vpack.c.b16 %v1963, %v1959
      %v2464 = vpack.c.b16 %v1964, %v1960
      %v2465 = vpack.c.b16 %v1965, %v1961
      %v2466 = vpack.c.b16 %v1970, %v1966
      %v2467 = vpack.c.b16 %v1971, %v1967
      %v2468 = vpack.c.b16 %v1972, %v1968
      %v2469 = vpack.c.b16 %v1973, %v1969
      %v2470 = vpack.c.b16 %v1978, %v1974
      %v2471 = vpack.c.b16 %v1979, %v1975
      %v2472 = vpack.c.b16 %v1980, %v1976
      %v2473 = vpack.c.b16 %v1981, %v1977
      %v2474 = vpack.c.b16 %v1986, %v1982
      %v2475 = vpack.c.b16 %v1987, %v1983
      %v2476 = vpack.c.b16 %v1988, %v1984
      %v2477 = vpack.c.b16 %v1989, %v1985
      %v2478 = vpack.c.b16 %v1994, %v1990
      %v2479 = vpack.c.b16 %v1995, %v1991
      %v2480 = vpack.c.b16 %v1996, %v1992
      %v2481 = vpack.c.b16 %v1997, %v1993
      %v2482 = vpack.c.b16 %v2002, %v1998
      %v2483 = vpack.c.b16 %v2003, %v1999
      %v2484 = vpack.c.b16 %v2004, %v2000
      %v2485 = vpack.c.b16 %v2005, %v2001
      %v2486 = vpack.c.b16 %v2010, %v2006
      %v2487 = vpack.c.b16 %v2011, %v2007
      %v2488 = vpack.c.b16 %v2012, %v2008
      %v2489 = vpack.c.b16 %v2013, %v2009
      %v2490 = vpack.c.b16 %v2018, %v2014
      %v2491 = vpack.c.b16 %v2019, %v2015
      %v2492 = vpack.c.b16 %v2020, %v2016
      %v2493 = vpack.c.b16 %v2021, %v2017
      %v2494 = vpack.c.b16 %v2026, %v2022
      %v2495 = vpack.c.b16 %v2027, %v2023
      %v2496 = vpack.c.b16 %v2028, %v2024
      %v2497 = vpack.c.b16 %v2029, %v2025
      %v2498 = vpack.c.b16 %v2034, %v2030
      %v2499 = vpack.c.b16 %v2035, %v2031
      %v2500 = vpack.c.b16 %v2036, %v2032
      %v2501 = vpack.c.b16 %v2037, %v2033
      %v2502 = vpack.c.b16 %v2042, %v2038
      %v2503 = vpack.c.b16 %v2043, %v2039
      %v2504 = vpack.c.b16 %v2044, %v2040
      %v2505 = vpack.c.b16 %v2045, %v2041
      %v2506 = vpack.c.b16 %v2050, %v2046
      %v2507 = vpack.c.b16 %v2051, %v2047
      %v2508 = vpack.c.b16 %v2052, %v2048
      %v2509 = vpack.c.b16 %v2053, %v2049
      %v2510 = vpack.c.b16 %v2058, %v2054
      %v2511 = vpack.c.b16 %v2059, %v2055
      %v2512 = vpack.c.b16 %v2060, %v2056
      %v2513 = vpack.c.b16 %v2061, %v2057
      %v2514 = vpack.c.b16 %v2066, %v2062
      %v2515 = vpack.c.b16 %v2067, %v2063
      %v2516 = vpack.c.b16 %v2068, %v2064
      %v2517 = vpack.c.b16 %v2069, %v2065
      %2966 = vmatprep.subr.bf16.mxu0 %v2071
      %2967 = vmatpush1.bf16.msra.mxu0 %v2070
      %2968 = vmatprep.subr.bf16.mxu0 %v2075
      %2969 = vmatpush1.bf16.msra.mxu0 %v2074
      %2970 = vmatprep.subr.bf16.mxu0 %v2079
      %2971 = vmatpush1.bf16.msra.mxu0 %v2078
      %2972 = vmatprep.subr.bf16.mxu0 %v2083
      %2973 = vmatpush1.bf16.msra.mxu0 %v2082
      %2974 = vmatprep.subr.bf16.mxu0 %v2087
      %2975 = vmatpush1.bf16.msra.mxu0 %v2086
      %2976 = vmatprep.subr.bf16.mxu0 %v2091
      %2977 = vmatpush1.bf16.msra.mxu0 %v2090
      %2978 = vmatprep.subr.bf16.mxu0 %v2095
      %2979 = vmatpush1.bf16.msra.mxu0 %v2094
      %2980 = vmatprep.subr.bf16.mxu0 %v2099
      %2981 = vmatpush1.bf16.msra.mxu0 %v2098
      %2982 = vmatprep.subr.bf16.mxu0 %v2103
      %2983 = vmatpush1.bf16.msra.mxu0 %v2102
      %2984 = vmatprep.subr.bf16.mxu0 %v2107
      %2985 = vmatpush1.bf16.msra.mxu0 %v2106
      %2986 = vmatprep.subr.bf16.mxu0 %v2111
      %2987 = vmatpush1.bf16.msra.mxu0 %v2110
      %2988 = vmatprep.subr.bf16.mxu0 %v2115
      %2989 = vmatpush1.bf16.msra.mxu0 %v2114
      %2990 = vmatprep.subr.bf16.mxu0 %v2119
      %2991 = vmatpush1.bf16.msra.mxu0 %v2118
      %2992 = vmatprep.subr.bf16.mxu0 %v2123
      %2993 = vmatpush1.bf16.msra.mxu0 %v2122
      %2994 = vmatprep.subr.bf16.mxu0 %v2127
      %2995 = vmatpush1.bf16.msra.mxu0 %v2126
      %2996 = vmatprep.subr.bf16.mxu0 %v2131
      %2997 = vmatpush1.bf16.msra.mxu0 %v2130
      %2998 = vmatprep.mubr.bf16.mxu0 %v265
      %2999 = vmatmul.mubr.bf16.gmra.mrb[0].mxu0 %v264
      %v3000 = vpop.f32.mrb[0].mxu0
      %v3001 = vadd.f32 0.0, %v3000
      %v3002 = vpop.f32.mrb[0].mxu0
      %v3003 = vadd.f32 0.0, %v3002
      %v3004 = vpop.f32.mrb[0].mxu0
      %v3005 = vpop.f32.mrb[0].mxu0
      %3006 = vdwg.mxu0
      %3007 = vmatprep.subr.bf16.mxu0 %v2135
      %3008 = vmatpush1.bf16.msra.mxu0 %v2134
      %3009 = vmatprep.subr.bf16.mxu0 %v2139
      %3010 = vmatpush1.bf16.msra.mxu0 %v2138
      %3011 = vmatprep.subr.bf16.mxu0 %v2143
      %3012 = vmatpush1.bf16.msra.mxu0 %v2142
      %3013 = vmatprep.subr.bf16.mxu0 %v2147
      %3014 = vmatpush1.bf16.msra.mxu0 %v2146
      %3015 = vmatprep.subr.bf16.mxu0 %v2151
      %3016 = vmatpush1.bf16.msra.mxu0 %v2150
      %3017 = vmatprep.subr.bf16.mxu0 %v2155
      %3018 = vmatpush1.bf16.msra.mxu0 %v2154
      %3019 = vmatprep.subr.bf16.mxu0 %v2159
      %3020 = vmatpush1.bf16.msra.mxu0 %v2158
      %3021 = vmatprep.subr.bf16.mxu0 %v2163
      %3022 = vmatpush1.bf16.msra.mxu0 %v2162
      %3023 = vmatprep.subr.bf16.mxu0 %v2167
      %3024 = vmatpush1.bf16.msra.mxu0 %v2166
      %3025 = vmatprep.subr.bf16.mxu0 %v2171
      %3026 = vmatpush1.bf16.msra.mxu0 %v2170
      %3027 = vmatprep.subr.bf16.mxu0 %v2175
      %3028 = vmatpush1.bf16.msra.mxu0 %v2174
      %3029 = vmatprep.subr.bf16.mxu0 %v2179
      %3030 = vmatpush1.bf16.msra.mxu0 %v2178
      %3031 = vmatprep.subr.bf16.mxu0 %v2183
      %3032 = vmatpush1.bf16.msra.mxu0 %v2182
      %3033 = vmatprep.subr.bf16.mxu0 %v2187
      %3034 = vmatpush1.bf16.msra.mxu0 %v2186
      %3035 = vmatprep.subr.bf16.mxu0 %v2191
      %3036 = vmatpush1.bf16.msra.mxu0 %v2190
      %3037 = vmatprep.subr.bf16.mxu0 %v2195
      %3038 = vmatpush1.bf16.msra.mxu0 %v2194
      %3039 = vmatprep.mubr.bf16.mxu0 %v267
      %3040 = vmatmul.mubr.bf16.gmra.mrb[0].mxu0 %v266
      %v3041 = vpop.f32.mrb[0].mxu0
      %v3042 = vadd.f32 %v3001, %v3041
      %v3043 = vpop.f32.mrb[0].mxu0
      %v3044 = vadd.f32 %v3003, %v3043
      %v3045 = vpop.f32.mrb[0].mxu0
      %v3046 = vpop.f32.mrb[0].mxu0
      %3047 = vdwg.mxu0
      %3048 = vmatprep.subr.bf16.mxu0 %v2199
      %3049 = vmatpush1.bf16.msra.mxu0 %v2198
      %3050 = vmatprep.subr.bf16.mxu0 %v2203
      %3051 = vmatpush1.bf16.msra.mxu0 %v2202
      %3052 = vmatprep.subr.bf16.mxu0 %v2207
      %3053 = vmatpush1.bf16.msra.mxu0 %v2206
      %3054 = vmatprep.subr.bf16.mxu0 %v2211
      %3055 = vmatpush1.bf16.msra.mxu0 %v2210
      %3056 = vmatprep.subr.bf16.mxu0 %v2215
      %3057 = vmatpush1.bf16.msra.mxu0 %v2214
      %3058 = vmatprep.subr.bf16.mxu0 %v2219
      %3059 = vmatpush1.bf16.msra.mxu0 %v2218
      %3060 = vmatprep.subr.bf16.mxu0 %v2223
      %3061 = vmatpush1.bf16.msra.mxu0 %v2222
      %3062 = vmatprep.subr.bf16.mxu0 %v2227
      %3063 = vmatpush1.bf16.msra.mxu0 %v2226
      %3064 = vmatprep.subr.bf16.mxu0 %v2231
      %3065 = vmatpush1.bf16.msra.mxu0 %v2230
      %3066 = vmatprep.subr.bf16.mxu0 %v2235
      %3067 = vmatpush1.bf16.msra.mxu0 %v2234
      %3068 = vmatprep.subr.bf16.mxu0 %v2239
      %3069 = vmatpush1.bf16.msra.mxu0 %v2238
      %3070 = vmatprep.subr.bf16.mxu0 %v2243
      %3071 = vmatpush1.bf16.msra.mxu0 %v2242
      %3072 = vmatprep.subr.bf16.mxu0 %v2247
      %3073 = vmatpush1.bf16.msra.mxu0 %v2246
      %3074 = vmatprep.subr.bf16.mxu0 %v2251
      %3075 = vmatpush1.bf16.msra.mxu0 %v2250
      %3076 = vmatprep.subr.bf16.mxu0 %v2255
      %3077 = vmatpush1.bf16.msra.mxu0 %v2254
      %3078 = vmatprep.subr.bf16.mxu0 %v2259
      %3079 = vmatpush1.bf16.msra.mxu0 %v2258
      %3080 = vmatprep.mubr.bf16.mxu0 %v269
      %3081 = vmatmul.mubr.bf16.gmra.mrb[0].mxu0 %v268
      %v3082 = vpop.f32.mrb[0].mxu0
      %v3083 = vadd.f32 %v3042, %v3082
      %v3084 = vpop.f32.mrb[0].mxu0
      %v3085 = vadd.f32 %v3044, %v3084
      %v3086 = vpop.f32.mrb[0].mxu0
      %v3087 = vpop.f32.mrb[0].mxu0
      %3088 = vdwg.mxu0
      %3089 = vmatprep.subr.bf16.mxu0 %v2263
      %3090 = vmatpush1.bf16.msra.mxu0 %v2262
      %3091 = vmatprep.subr.bf16.mxu0 %v2267
      %3092 = vmatpush1.bf16.msra.mxu0 %v2266
      %3093 = vmatprep.subr.bf16.mxu0 %v2271
      %3094 = vmatpush1.bf16.msra.mxu0 %v2270
      %3095 = vmatprep.subr.bf16.mxu0 %v2275
      %3096 = vmatpush1.bf16.msra.mxu0 %v2274
      %3097 = vmatprep.subr.bf16.mxu0 %v2279
      %3098 = vmatpush1.bf16.msra.mxu0 %v2278
      %3099 = vmatprep.subr.bf16.mxu0 %v2283
      %3100 = vmatpush1.bf16.msra.mxu0 %v2282
      %3101 = vmatprep.subr.bf16.mxu0 %v2287
      %3102 = vmatpush1.bf16.msra.mxu0 %v2286
      %3103 = vmatprep.subr.bf16.mxu0 %v2291
      %3104 = vmatpush1.bf16.msra.mxu0 %v2290
      %3105 = vmatprep.subr.bf16.mxu0 %v2295
      %3106 = vmatpush1.bf16.msra.mxu0 %v2294
      %3107 = vmatprep.subr.bf16.mxu0 %v2299
      %3108 = vmatpush1.bf16.msra.mxu0 %v2298
      %3109 = vmatprep.subr.bf16.mxu0 %v2303
      %3110 = vmatpush1.bf16.msra.mxu0 %v2302
      %3111 = vmatprep.subr.bf16.mxu0 %v2307
      %3112 = vmatpush1.bf16.msra.mxu0 %v2306
      %3113 = vmatprep.subr.bf16.mxu0 %v2311
      %3114 = vmatpush1.bf16.msra.mxu0 %v2310
      %3115 = vmatprep.subr.bf16.mxu0 %v2315
      %3116 = vmatpush1.bf16.msra.mxu0 %v2314
      %3117 = vmatprep.subr.bf16.mxu0 %v2319
      %3118 = vmatpush1.bf16.msra.mxu0 %v2318
      %3119 = vmatprep.subr.bf16.mxu0 %v2323
      %3120 = vmatpush1.bf16.msra.mxu0 %v2322
      %3121 = vmatprep.mubr.bf16.mxu0 %v271
      %3122 = vmatmul.mubr.bf16.gmra.mrb[0].mxu0 %v270
      %v3123 = vpop.f32.mrb[0].mxu0
      %v3124 = vadd.f32 %v3083, %v3123
      %v3125 = vpop.f32.mrb[0].mxu0
      %v3126 = vadd.f32 %v3085, %v3125
      %v3127 = vpop.f32.mrb[0].mxu0
      %v3128 = vpop.f32.mrb[0].mxu0
      %3129 = vdwg.mxu0
      %3130 = vmatprep.subr.bf16.mxu0 %v2327
      %3131 = vmatpush1.bf16.msra.mxu0 %v2326
      %3132 = vmatprep.subr.bf16.mxu0 %v2331
      %3133 = vmatpush1.bf16.msra.mxu0 %v2330
      %3134 = vmatprep.subr.bf16.mxu0 %v2335
      %3135 = vmatpush1.bf16.msra.mxu0 %v2334
      %3136 = vmatprep.subr.bf16.mxu0 %v2339
      %3137 = vmatpush1.bf16.msra.mxu0 %v2338
      %3138 = vmatprep.subr.bf16.mxu0 %v2343
      %3139 = vmatpush1.bf16.msra.mxu0 %v2342
      %3140 = vmatprep.subr.bf16.mxu0 %v2347
      %3141 = vmatpush1.bf16.msra.mxu0 %v2346
      %3142 = vmatprep.subr.bf16.mxu0 %v2351
      %3143 = vmatpush1.bf16.msra.mxu0 %v2350
      %3144 = vmatprep.subr.bf16.mxu0 %v2355
      %3145 = vmatpush1.bf16.msra.mxu0 %v2354
      %3146 = vmatprep.subr.bf16.mxu0 %v2359
      %3147 = vmatpush1.bf16.msra.mxu0 %v2358
      %3148 = vmatprep.subr.bf16.mxu0 %v2363
      %3149 = vmatpush1.bf16.msra.mxu0 %v2362
      %3150 = vmatprep.subr.bf16.mxu0 %v2367
      %3151 = vmatpush1.bf16.msra.mxu0 %v2366
      %3152 = vmatprep.subr.bf16.mxu0 %v2371
      %3153 = vmatpush1.bf16.msra.mxu0 %v2370
      %3154 = vmatprep.subr.bf16.mxu0 %v2375
      %3155 = vmatpush1.bf16.msra.mxu0 %v2374
      %3156 = vmatprep.subr.bf16.mxu0 %v2379
      %3157 = vmatpush1.bf16.msra.mxu0 %v2378
      %3158 = vmatprep.subr.bf16.mxu0 %v2383
      %3159 = vmatpush1.bf16.msra.mxu0 %v2382
      %3160 = vmatprep.subr.bf16.mxu0 %v2387
      %3161 = vmatpush1.bf16.msra.mxu0 %v2386
      %3162 = vmatprep.mubr.bf16.mxu0 %v273
      %3163 = vmatmul.mubr.bf16.gmra.mrb[0].mxu0 %v272
      %v3164 = vpop.f32.mrb[0].mxu0
      %v3165 = vadd.f32 %v3124, %v3164
      %v3166 = vpop.f32.mrb[0].mxu0
      %v3167 = vadd.f32 %v3126, %v3166
      %v3168 = vpop.f32.mrb[0].mxu0
      %v3169 = vpop.f32.mrb[0].mxu0
      %3170 = vdwg.mxu0
      %3171 = vmatprep.subr.bf16.mxu0 %v2391
      %3172 = vmatpush1.bf16.msra.mxu0 %v2390
      %3173 = vmatprep.subr.bf16.mxu0 %v2395
      %3174 = vmatpush1.bf16.msra.mxu0 %v2394
      %3175 = vmatprep.subr.bf16.mxu0 %v2399
      %3176 = vmatpush1.bf16.msra.mxu0 %v2398
      %3177 = vmatprep.subr.bf16.mxu0 %v2403
      %3178 = vmatpush1.bf16.msra.mxu0 %v2402
      %3179 = vmatprep.subr.bf16.mxu0 %v2407
      %3180 = vmatpush1.bf16.msra.mxu0 %v2406
      %3181 = vmatprep.subr.bf16.mxu0 %v2411
      %3182 = vmatpush1.bf16.msra.mxu0 %v2410
      %3183 = vmatprep.subr.bf16.mxu0 %v2415
      %3184 = vmatpush1.bf16.msra.mxu0 %v2414
      %3185 = vmatprep.subr.bf16.mxu0 %v2419
      %3186 = vmatpush1.bf16.msra.mxu0 %v2418
      %3187 = vmatprep.subr.bf16.mxu0 %v2423
      %3188 = vmatpush1.bf16.msra.mxu0 %v2422
      %3189 = vmatprep.subr.bf16.mxu0 %v2427
      %3190 = vmatpush1.bf16.msra.mxu0 %v2426
      %3191 = vmatprep.subr.bf16.mxu0 %v2431
      %3192 = vmatpush1.bf16.msra.mxu0 %v2430
      %3193 = vmatprep.subr.bf16.mxu0 %v2435
      %3194 = vmatpush1.bf16.msra.mxu0 %v2434
      %3195 = vmatprep.subr.bf16.mxu0 %v2439
      %3196 = vmatpush1.bf16.msra.mxu0 %v2438
      %3197 = vmatprep.subr.bf16.mxu0 %v2443
      %3198 = vmatpush1.bf16.msra.mxu0 %v2442
      %3199 = vmatprep.subr.bf16.mxu0 %v2447
      %3200 = vmatpush1.bf16.msra.mxu0 %v2446
      %3201 = vmatprep.subr.bf16.mxu0 %v2451
      %3202 = vmatpush1.bf16.msra.mxu0 %v2450
      %3203 = vmatprep.mubr.bf16.mxu0 %v275
      %3204 = vmatmul.mubr.bf16.gmra.mrb[0].mxu0 %v274
      %v3205 = vpop.f32.mrb[0].mxu0
      %v3206 = vadd.f32 %v3165, %v3205
      %v3207 = vpop.f32.mrb[0].mxu0
      %v3208 = vadd.f32 %v3167, %v3207
      %v3209 = vpop.f32.mrb[0].mxu0
      %v3210 = vpop.f32.mrb[0].mxu0
      %3211 = vdwg.mxu0
      %3212 = vmatprep.subr.bf16.mxu0 %v2455
      %3213 = vmatpush1.bf16.msra.mxu0 %v2454
      %3214 = vmatprep.subr.bf16.mxu0 %v2459
      %3215 = vmatpush1.bf16.msra.mxu0 %v2458
      %3216 = vmatprep.subr.bf16.mxu0 %v2463
      %3217 = vmatpush1.bf16.msra.mxu0 %v2462
      %3218 = vmatprep.subr.bf16.mxu0 %v2467
      %3219 = vmatpush1.bf16.msra.mxu0 %v2466
      %3220 = vmatprep.subr.bf16.mxu0 %v2471
      %3221 = vmatpush1.bf16.msra.mxu0 %v2470
      %3222 = vmatprep.subr.bf16.mxu0 %v2475
      %3223 = vmatpush1.bf16.msra.mxu0 %v2474
      %3224 = vmatprep.subr.bf16.mxu0 %v2479
      %3225 = vmatpush1.bf16.msra.mxu0 %v2478
      %3226 = vmatprep.subr.bf16.mxu0 %v2483
      %3227 = vmatpush1.bf16.msra.mxu0 %v2482
      %3228 = vmatprep.subr.bf16.mxu0 %v2487
      %3229 = vmatpush1.bf16.msra.mxu0 %v2486
      %3230 = vmatprep.subr.bf16.mxu0 %v2491
      %3231 = vmatpush1.bf16.msra.mxu0 %v2490
      %3232 = vmatprep.subr.bf16.mxu0 %v2495
      %3233 = vmatpush1.bf16.msra.mxu0 %v2494
      %3234 = vmatprep.subr.bf16.mxu0 %v2499
      %3235 = vmatpush1.bf16.msra.mxu0 %v2498
      %3236 = vmatprep.subr.bf16.mxu0 %v2503
      %3237 = vmatpush1.bf16.msra.mxu0 %v2502
      %3238 = vmatprep.subr.bf16.mxu0 %v2507
      %3239 = vmatpush1.bf16.msra.mxu0 %v2506
      %3240 = vmatprep.subr.bf16.mxu0 %v2511
      %3241 = vmatpush1.bf16.msra.mxu0 %v2510
      %3242 = vmatprep.subr.bf16.mxu0 %v2515
      %3243 = vmatpush1.bf16.msra.mxu0 %v2514
      %3244 = vmatprep.mubr.bf16.mxu0 %v277
      %3245 = vmatmul.mubr.bf16.gmra.mrb[0].mxu0 %v276
      %v3246 = vpop.f32.mrb[0].mxu0
      %v3247 = vadd.f32 %v3206, %v3246
      %v3248 = vpop.f32.mrb[0].mxu0
      %v3249 = vadd.f32 %v3208, %v3248
      %v3250 = vpop.f32.mrb[0].mxu0
      %v3251 = vpop.f32.mrb[0].mxu0
      %3252 = vdwg.mxu0
      %3253 = vmatprep.subr.bf16.mxu0 %v2073
      %3254 = vmatpush1.bf16.msra.mxu0 %v2072
      %3255 = vmatprep.subr.bf16.mxu0 %v2077
      %3256 = vmatpush1.bf16.msra.mxu0 %v2076
      %3257 = vmatprep.subr.bf16.mxu0 %v2081
      %3258 = vmatpush1.bf16.msra.mxu0 %v2080
      %3259 = vmatprep.subr.bf16.mxu0 %v2085
      %3260 = vmatpush1.bf16.msra.mxu0 %v2084
      %3261 = vmatprep.subr.bf16.mxu0 %v2089
      %3262 = vmatpush1.bf16.msra.mxu0 %v2088
      %3263 = vmatprep.subr.bf16.mxu0 %v2093
      %3264 = vmatpush1.bf16.msra.mxu0 %v2092
      %3265 = vmatprep.subr.bf16.mxu0 %v2097
      %3266 = vmatpush1.bf16.msra.mxu0 %v2096
      %3267 = vmatprep.subr.bf16.mxu0 %v2101
      %3268 = vmatpush1.bf16.msra.mxu0 %v2100
      %3269 = vmatprep.subr.bf16.mxu0 %v2105
      %3270 = vmatpush1.bf16.msra.mxu0 %v2104
      %3271 = vmatprep.subr.bf16.mxu0 %v2109
      %3272 = vmatpush1.bf16.msra.mxu0 %v2108
      %3273 = vmatprep.subr.bf16.mxu0 %v2113
      %3274 = vmatpush1.bf16.msra.mxu0 %v2112
      %3275 = vmatprep.subr.bf16.mxu0 %v2117
      %3276 = vmatpush1.bf16.msra.mxu0 %v2116
      %3277 = vmatprep.subr.bf16.mxu0 %v2121
      %3278 = vmatpush1.bf16.msra.mxu0 %v2120
      %3279 = vmatprep.subr.bf16.mxu0 %v2125
      %3280 = vmatpush1.bf16.msra.mxu0 %v2124
      %3281 = vmatprep.subr.bf16.mxu0 %v2129
      %3282 = vmatpush1.bf16.msra.mxu0 %v2128
      %3283 = vmatprep.subr.bf16.mxu0 %v2133
      %3284 = vmatpush1.bf16.msra.mxu0 %v2132
      %3285 = vmatprep.mubr.bf16.mxu0 %v265
      %3286 = vmatmul.mubr.bf16.gmra.mrb[0].mxu0 %v264
      %v3287 = vpop.f32.mrb[0].mxu0
      %v3288 = vadd.f32 0.0, %v3287
      %v3289 = vpop.f32.mrb[0].mxu0
      %v3290 = vadd.f32 0.0, %v3289
      %v3291 = vpop.f32.mrb[0].mxu0
      %v3292 = vpop.f32.mrb[0].mxu0
      %3293 = vdwg.mxu0
      %3294 = vmatprep.subr.bf16.mxu0 %v2137
      %3295 = vmatpush1.bf16.msra.mxu0 %v2136
      %3296 = vmatprep.subr.bf16.mxu0 %v2141
      %3297 = vmatpush1.bf16.msra.mxu0 %v2140
      %3298 = vmatprep.subr.bf16.mxu0 %v2145
      %3299 = vmatpush1.bf16.msra.mxu0 %v2144
      %3300 = vmatprep.subr.bf16.mxu0 %v2149
      %3301 = vmatpush1.bf16.msra.mxu0 %v2148
      %3302 = vmatprep.subr.bf16.mxu0 %v2153
      %3303 = vmatpush1.bf16.msra.mxu0 %v2152
      %3304 = vmatprep.subr.bf16.mxu0 %v2157
      %3305 = vmatpush1.bf16.msra.mxu0 %v2156
      %3306 = vmatprep.subr.bf16.mxu0 %v2161
      %3307 = vmatpush1.bf16.msra.mxu0 %v2160
      %3308 = vmatprep.subr.bf16.mxu0 %v2165
      %3309 = vmatpush1.bf16.msra.mxu0 %v2164
      %3310 = vmatprep.subr.bf16.mxu0 %v2169
      %3311 = vmatpush1.bf16.msra.mxu0 %v2168
      %3312 = vmatprep.subr.bf16.mxu0 %v2173
      %3313 = vmatpush1.bf16.msra.mxu0 %v2172
      %3314 = vmatprep.subr.bf16.mxu0 %v2177
      %3315 = vmatpush1.bf16.msra.mxu0 %v2176
      %3316 = vmatprep.subr.bf16.mxu0 %v2181
      %3317 = vmatpush1.bf16.msra.mxu0 %v2180
      %3318 = vmatprep.subr.bf16.mxu0 %v2185
      %3319 = vmatpush1.bf16.msra.mxu0 %v2184
      %3320 = vmatprep.subr.bf16.mxu0 %v2189
      %3321 = vmatpush1.bf16.msra.mxu0 %v2188
      %3322 = vmatprep.subr.bf16.mxu0 %v2193
      %3323 = vmatpush1.bf16.msra.mxu0 %v2192
      %3324 = vmatprep.subr.bf16.mxu0 %v2197
      %3325 = vmatpush1.bf16.msra.mxu0 %v2196
      %3326 = vmatprep.mubr.bf16.mxu0 %v267
      %3327 = vmatmul.mubr.bf16.gmra.mrb[0].mxu0 %v266
      %v3328 = vpop.f32.mrb[0].mxu0
      %v3329 = vadd.f32 %v3288, %v3328
      %v3330 = vpop.f32.mrb[0].mxu0
      %v3331 = vadd.f32 %v3290, %v3330
      %v3332 = vpop.f32.mrb[0].mxu0
      %v3333 = vpop.f32.mrb[0].mxu0
      %3334 = vdwg.mxu0
      %3335 = vmatprep.subr.bf16.mxu0 %v2201
      %3336 = vmatpush1.bf16.msra.mxu0 %v2200
      %3337 = vmatprep.subr.bf16.mxu0 %v2205
      %3338 = vmatpush1.bf16.msra.mxu0 %v2204
      %3339 = vmatprep.subr.bf16.mxu0 %v2209
      %3340 = vmatpush1.bf16.msra.mxu0 %v2208
      %3341 = vmatprep.subr.bf16.mxu0 %v2213
      %3342 = vmatpush1.bf16.msra.mxu0 %v2212
      %3343 = vmatprep.subr.bf16.mxu0 %v2217
      %3344 = vmatpush1.bf16.msra.mxu0 %v2216
      %3345 = vmatprep.subr.bf16.mxu0 %v2221
      %3346 = vmatpush1.bf16.msra.mxu0 %v2220
      %3347 = vmatprep.subr.bf16.mxu0 %v2225
      %3348 = vmatpush1.bf16.msra.mxu0 %v2224
      %3349 = vmatprep.subr.bf16.mxu0 %v2229
      %3350 = vmatpush1.bf16.msra.mxu0 %v2228
      %3351 = vmatprep.subr.bf16.mxu0 %v2233
      %3352 = vmatpush1.bf16.msra.mxu0 %v2232
      %3353 = vmatprep.subr.bf16.mxu0 %v2237
      %3354 = vmatpush1.bf16.msra.mxu0 %v2236
      %3355 = vmatprep.subr.bf16.mxu0 %v2241
      %3356 = vmatpush1.bf16.msra.mxu0 %v2240
      %3357 = vmatprep.subr.bf16.mxu0 %v2245
      %3358 = vmatpush1.bf16.msra.mxu0 %v2244
      %3359 = vmatprep.subr.bf16.mxu0 %v2249
      %3360 = vmatpush1.bf16.msra.mxu0 %v2248
      %3361 = vmatprep.subr.bf16.mxu0 %v2253
      %3362 = vmatpush1.bf16.msra.mxu0 %v2252
      %3363 = vmatprep.subr.bf16.mxu0 %v2257
      %3364 = vmatpush1.bf16.msra.mxu0 %v2256
      %3365 = vmatprep.subr.bf16.mxu0 %v2261
      %3366 = vmatpush1.bf16.msra.mxu0 %v2260
      %3367 = vmatprep.mubr.bf16.mxu0 %v269
      %3368 = vmatmul.mubr.bf16.gmra.mrb[0].mxu0 %v268
      %v3369 = vpop.f32.mrb[0].mxu0
      %v3370 = vadd.f32 %v3329, %v3369
      %v3371 = vpop.f32.mrb[0].mxu0
      %v3372 = vadd.f32 %v3331, %v3371
      %v3373 = vpop.f32.mrb[0].mxu0
      %v3374 = vpop.f32.mrb[0].mxu0
      %3375 = vdwg.mxu0
      %3376 = vmatprep.subr.bf16.mxu0 %v2265
      %3377 = vmatpush1.bf16.msra.mxu0 %v2264
      %3378 = vmatprep.subr.bf16.mxu0 %v2269
      %3379 = vmatpush1.bf16.msra.mxu0 %v2268
      %3380 = vmatprep.subr.bf16.mxu0 %v2273
      %3381 = vmatpush1.bf16.msra.mxu0 %v2272
      %3382 = vmatprep.subr.bf16.mxu0 %v2277
      %3383 = vmatpush1.bf16.msra.mxu0 %v2276
      %3384 = vmatprep.subr.bf16.mxu0 %v2281
      %3385 = vmatpush1.bf16.msra.mxu0 %v2280
      %3386 = vmatprep.subr.bf16.mxu0 %v2285
      %3387 = vmatpush1.bf16.msra.mxu0 %v2284
      %3388 = vmatprep.subr.bf16.mxu0 %v2289
      %3389 = vmatpush1.bf16.msra.mxu0 %v2288
      %3390 = vmatprep.subr.bf16.mxu0 %v2293
      %3391 = vmatpush1.bf16.msra.mxu0 %v2292
      %3392 = vmatprep.subr.bf16.mxu0 %v2297
      %3393 = vmatpush1.bf16.msra.mxu0 %v2296
      %3394 = vmatprep.subr.bf16.mxu0 %v2301
      %3395 = vmatpush1.bf16.msra.mxu0 %v2300
      %3396 = vmatprep.subr.bf16.mxu0 %v2305
      %3397 = vmatpush1.bf16.msra.mxu0 %v2304
      %3398 = vmatprep.subr.bf16.mxu0 %v2309
      %3399 = vmatpush1.bf16.msra.mxu0 %v2308
      %3400 = vmatprep.subr.bf16.mxu0 %v2313
      %3401 = vmatpush1.bf16.msra.mxu0 %v2312
      %3402 = vmatprep.subr.bf16.mxu0 %v2317
      %3403 = vmatpush1.bf16.msra.mxu0 %v2316
      %3404 = vmatprep.subr.bf16.mxu0 %v2321
      %3405 = vmatpush1.bf16.msra.mxu0 %v2320
      %3406 = vmatprep.subr.bf16.mxu0 %v2325
      %3407 = vmatpush1.bf16.msra.mxu0 %v2324
      %3408 = vmatprep.mubr.bf16.mxu0 %v271
      %3409 = vmatmul.mubr.bf16.gmra.mrb[0].mxu0 %v270
      %v3410 = vpop.f32.mrb[0].mxu0
      %v3411 = vadd.f32 %v3370, %v3410
      %v3412 = vpop.f32.mrb[0].mxu0
      %v3413 = vadd.f32 %v3372, %v3412
      %v3414 = vpop.f32.mrb[0].mxu0
      %v3415 = vpop.f32.mrb[0].mxu0
      %3416 = vdwg.mxu0
      %3417 = vmatprep.subr.bf16.mxu0 %v2329
      %3418 = vmatpush1.bf16.msra.mxu0 %v2328
      %3419 = vmatprep.subr.bf16.mxu0 %v2333
      %3420 = vmatpush1.bf16.msra.mxu0 %v2332
      %3421 = vmatprep.subr.bf16.mxu0 %v2337
      %3422 = vmatpush1.bf16.msra.mxu0 %v2336
      %3423 = vmatprep.subr.bf16.mxu0 %v2341
      %3424 = vmatpush1.bf16.msra.mxu0 %v2340
      %3425 = vmatprep.subr.bf16.mxu0 %v2345
      %3426 = vmatpush1.bf16.msra.mxu0 %v2344
      %3427 = vmatprep.subr.bf16.mxu0 %v2349
      %3428 = vmatpush1.bf16.msra.mxu0 %v2348
      %3429 = vmatprep.subr.bf16.mxu0 %v2353
      %3430 = vmatpush1.bf16.msra.mxu0 %v2352
      %3431 = vmatprep.subr.bf16.mxu0 %v2357
      %3432 = vmatpush1.bf16.msra.mxu0 %v2356
      %3433 = vmatprep.subr.bf16.mxu0 %v2361
      %3434 = vmatpush1.bf16.msra.mxu0 %v2360
      %3435 = vmatprep.subr.bf16.mxu0 %v2365
      %3436 = vmatpush1.bf16.msra.mxu0 %v2364
      %3437 = vmatprep.subr.bf16.mxu0 %v2369
      %3438 = vmatpush1.bf16.msra.mxu0 %v2368
      %3439 = vmatprep.subr.bf16.mxu0 %v2373
      %3440 = vmatpush1.bf16.msra.mxu0 %v2372
      %3441 = vmatprep.subr.bf16.mxu0 %v2377
      %3442 = vmatpush1.bf16.msra.mxu0 %v2376
      %3443 = vmatprep.subr.bf16.mxu0 %v2381
      %3444 = vmatpush1.bf16.msra.mxu0 %v2380
      %3445 = vmatprep.subr.bf16.mxu0 %v2385
      %3446 = vmatpush1.bf16.msra.mxu0 %v2384
      %3447 = vmatprep.subr.bf16.mxu0 %v2389
      %3448 = vmatpush1.bf16.msra.mxu0 %v2388
      %3449 = vmatprep.mubr.bf16.mxu0 %v273
      %3450 = vmatmul.mubr.bf16.gmra.mrb[0].mxu0 %v272
      %v3451 = vpop.f32.mrb[0].mxu0
      %v3452 = vadd.f32 %v3411, %v3451
      %v3453 = vpop.f32.mrb[0].mxu0
      %v3454 = vadd.f32 %v3413, %v3453
      %v3455 = vpop.f32.mrb[0].mxu0
      %v3456 = vpop.f32.mrb[0].mxu0
      %3457 = vdwg.mxu0
      %3458 = vmatprep.subr.bf16.mxu0 %v2393
      %3459 = vmatpush1.bf16.msra.mxu0 %v2392
      %3460 = vmatprep.subr.bf16.mxu0 %v2397
      %3461 = vmatpush1.bf16.msra.mxu0 %v2396
      %3462 = vmatprep.subr.bf16.mxu0 %v2401
      %3463 = vmatpush1.bf16.msra.mxu0 %v2400
      %3464 = vmatprep.subr.bf16.mxu0 %v2405
      %3465 = vmatpush1.bf16.msra.mxu0 %v2404
      %3466 = vmatprep.subr.bf16.mxu0 %v2409
      %3467 = vmatpush1.bf16.msra.mxu0 %v2408
      %3468 = vmatprep.subr.bf16.mxu0 %v2413
      %3469 = vmatpush1.bf16.msra.mxu0 %v2412
      %3470 = vmatprep.subr.bf16.mxu0 %v2417
      %3471 = vmatpush1.bf16.msra.mxu0 %v2416
      %3472 = vmatprep.subr.bf16.mxu0 %v2421
      %3473 = vmatpush1.bf16.msra.mxu0 %v2420
      %3474 = vmatprep.subr.bf16.mxu0 %v2425
      %3475 = vmatpush1.bf16.msra.mxu0 %v2424
      %3476 = vmatprep.subr.bf16.mxu0 %v2429
      %3477 = vmatpush1.bf16.msra.mxu0 %v2428
      %3478 = vmatprep.subr.bf16.mxu0 %v2433
      %3479 = vmatpush1.bf16.msra.mxu0 %v2432
      %3480 = vmatprep.subr.bf16.mxu0 %v2437
      %3481 = vmatpush1.bf16.msra.mxu0 %v2436
      %3482 = vmatprep.subr.bf16.mxu0 %v2441
      %3483 = vmatpush1.bf16.msra.mxu0 %v2440
      %3484 = vmatprep.subr.bf16.mxu0 %v2445
      %3485 = vmatpush1.bf16.msra.mxu0 %v2444
      %3486 = vmatprep.subr.bf16.mxu0 %v2449
      %3487 = vmatpush1.bf16.msra.mxu0 %v2448
      %3488 = vmatprep.subr.bf16.mxu0 %v2453
      %3489 = vmatpush1.bf16.msra.mxu0 %v2452
      %3490 = vmatprep.mubr.bf16.mxu0 %v275
      %3491 = vmatmul.mubr.bf16.gmra.mrb[0].mxu0 %v274
      %v3492 = vpop.f32.mrb[0].mxu0
      %v3493 = vadd.f32 %v3452, %v3492
      %v3494 = vpop.f32.mrb[0].mxu0
      %v3495 = vadd.f32 %v3454, %v3494
      %v3496 = vpop.f32.mrb[0].mxu0
      %v3497 = vpop.f32.mrb[0].mxu0
      %3498 = vdwg.mxu0
      %3499 = vmatprep.subr.bf16.mxu0 %v2457
      %3500 = vmatpush1.bf16.msra.mxu0 %v2456
      %3501 = vmatprep.subr.bf16.mxu0 %v2461
      %3502 = vmatpush1.bf16.msra.mxu0 %v2460
      %3503 = vmatprep.subr.bf16.mxu0 %v2465
      %3504 = vmatpush1.bf16.msra.mxu0 %v2464
      %3505 = vmatprep.subr.bf16.mxu0 %v2469
      %3506 = vmatpush1.bf16.msra.mxu0 %v2468
      %3507 = vmatprep.subr.bf16.mxu0 %v2473
      %3508 = vmatpush1.bf16.msra.mxu0 %v2472
      %3509 = vmatprep.subr.bf16.mxu0 %v2477
      %3510 = vmatpush1.bf16.msra.mxu0 %v2476
      %3511 = vmatprep.subr.bf16.mxu0 %v2481
      %3512 = vmatpush1.bf16.msra.mxu0 %v2480
      %3513 = vmatprep.subr.bf16.mxu0 %v2485
      %3514 = vmatpush1.bf16.msra.mxu0 %v2484
      %3515 = vmatprep.subr.bf16.mxu0 %v2489
      %3516 = vmatpush1.bf16.msra.mxu0 %v2488
      %3517 = vmatprep.subr.bf16.mxu0 %v2493
      %3518 = vmatpush1.bf16.msra.mxu0 %v2492
      %3519 = vmatprep.subr.bf16.mxu0 %v2497
      %3520 = vmatpush1.bf16.msra.mxu0 %v2496
      %3521 = vmatprep.subr.bf16.mxu0 %v2501
      %3522 = vmatpush1.bf16.msra.mxu0 %v2500
      %3523 = vmatprep.subr.bf16.mxu0 %v2505
      %3524 = vmatpush1.bf16.msra.mxu0 %v2504
      %3525 = vmatprep.subr.bf16.mxu0 %v2509
      %3526 = vmatpush1.bf16.msra.mxu0 %v2508
      %3527 = vmatprep.subr.bf16.mxu0 %v2513
      %3528 = vmatpush1.bf16.msra.mxu0 %v2512
      %3529 = vmatprep.subr.bf16.mxu0 %v2517
      %3530 = vmatpush1.bf16.msra.mxu0 %v2516
      %3531 = vmatprep.mubr.bf16.mxu0 %v277
      %3532 = vmatmul.mubr.bf16.gmra.mrb[0].mxu0 %v276
      %v3533 = vpop.f32.mrb[0].mxu0
      %v3534 = vadd.f32 %v3493, %v3533
      %v3535 = vpop.f32.mrb[0].mxu0
      %v3536 = vadd.f32 %v3495, %v3535
      %v3537 = vpop.f32.mrb[0].mxu0
      %v3538 = vpop.f32.mrb[0].mxu0
      %3539 = vdwg.mxu0
      %v3540 = vadd.f32 %v246, %v3247
      %v3541 = vadd.f32 %v247, %v3249
      %v3542 = vadd.f32 %v248, %v3534
      %v3543 = vadd.f32 %v249, %v3536
      %3544 = vst [vmem:[#allocation2] sm:$0xff] %v3540
      %3545 = vst [vmem:[#allocation2 + $0x8] sm:$0xff] %v3541
      %3546 = vst [vmem:[#allocation2 + $0x10] sm:$0xff] %v3542
      %3547 = vst [vmem:[#allocation2 + $0x18] sm:$0xff] %v3543
      %p3548 = scmp.eq.s32.totalorder %s16, 2
      // Predicated region
      $region45: #{actor_forward.7} parent=39 // pred_check
        %p3549 = pneg %p3548
      $region46: #{actor_forward.7} parent=39 // pred_check_branch
        %3551 = sbr.rel (%p3549) target = $region48
      $region47: #{actor_forward.7} parent=39 // pred_region
        %v3552 = vld [vmem:[#allocation2] sm:$0xff]
        %v3553 = vld [vmem:[#allocation2 + $0x8] sm:$0xff]
        %v3554 = vld [vmem:[#allocation2 + $0x10] sm:$0xff]
        %v3555 = vld [vmem:[#allocation2 + $0x18] sm:$0xff]
        %v3556 = vld [vmem:[%s2] sm:$0xf]
        %v3558 = vlaneseq
        %v3559 = vshrl.u32 %v3558, 7
        %v3560 = vsub.s32 0, %v3559
        %v3561 = vrot.slane %v3556, %v3560
        %v3562 = vlaneseq
        %v3563 = vshrl.u32 %v3562, 7
        %v3564 = vsub.s32 1, %v3563
        %v3565 = vrot.slane %v3556, %v3564
        %v3566 = vlaneseq
        %v3567 = vshrl.u32 %v3566, 7
        %v3568 = vsub.s32 2, %v3567
        %v3569 = vrot.slane %v3556, %v3568
        %v3570 = vlaneseq
        %v3571 = vshrl.u32 %v3570, 7
        %v3572 = vsub.s32 3, %v3571
        %v3573 = vrot.slane %v3556, %v3572
        %v3578 = vadd.f32 %v3552, %v3561
        %v3579 = vadd.f32 %v3553, %v3565
        %v3580 = vadd.f32 %v3554, %v3569
        %v3581 = vadd.f32 %v3555, %v3573
        %v3582 = vmax.f32 %v3578, 0.0
        %v3583 = vmax.f32 %v3579, 0.0
        %v3584 = vmax.f32 %v3580, 0.0
        %v3585 = vmax.f32 %v3581, 0.0
        %v3586 = vpack.c.bf16 %v3582, %v3582
        %v3587 = vpack.c.bf16 %v3583, %v3583
        %v3588 = vpack.c.bf16 %v3584, %v3584
        %v3589 = vpack.c.bf16 %v3585, %v3585
        %v3590 = vld [vmem:[%s3] sm:$0xf]
        %v3591 = vld [vmem:[%s3 + $0x4] sm:$0xf]
        %v3592 = vld [vmem:[%s3 + $0x8] sm:$0xf]
        %v3593 = vld [vmem:[%s3 + $0xc] sm:$0xf]
        %v3594 = vld [vmem:[%s3 + $0x10] sm:$0xf]
        %v3595 = vld [vmem:[%s3 + $0x14] sm:$0xf]
        %v3596 = vld [vmem:[%s3 + $0x18] sm:$0xf]
        %v3597 = vld [vmem:[%s3 + $0x1c] sm:$0xf]
        %v3598 = vld [vmem:[%s3 + $0x20] sm:$0xf]
        %v3599 = vld [vmem:[%s3 + $0x24] sm:$0xf]
        %v3600 = vld [vmem:[%s3 + $0x28] sm:$0xf]
        %v3601 = vld [vmem:[%s3 + $0x2c] sm:$0xf]
        %v3602 = vld [vmem:[%s3 + $0x30] sm:$0xf]
        %v3603 = vld [vmem:[%s3 + $0x34] sm:$0xf]
        %v3604 = vld [vmem:[%s3 + $0x38] sm:$0xf]
        %v3605 = vld [vmem:[%s3 + $0x3c] sm:$0xf]
        %v3606 = vld [vmem:[%s3 + $0x40] sm:$0xf]
        %v3607 = vld [vmem:[%s3 + $0x44] sm:$0xf]
        %v3608 = vld [vmem:[%s3 + $0x48] sm:$0xf]
        %v3609 = vld [vmem:[%s3 + $0x4c] sm:$0xf]
        %v3610 = vld [vmem:[%s3 + $0x50] sm:$0xf]
        %v3611 = vld [vmem:[%s3 + $0x54] sm:$0xf]
        %v3612 = vld [vmem:[%s3 + $0x58] sm:$0xf]
        %v3613 = vld [vmem:[%s3 + $0x5c] sm:$0xf]
        %v3614 = vld [vmem:[%s3 + $0x60] sm:$0xf]
        %v3615 = vld [vmem:[%s3 + $0x64] sm:$0xf]
        %v3616 = vld [vmem:[%s3 + $0x68] sm:$0xf]
        %v3617 = vld [vmem:[%s3 + $0x6c] sm:$0xf]
        %v3618 = vld [vmem:[%s3 + $0x70] sm:$0xf]
        %v3619 = vld [vmem:[%s3 + $0x74] sm:$0xf]
        %v3620 = vld [vmem:[%s3 + $0x78] sm:$0xf]
        %v3621 = vld [vmem:[%s3 + $0x7c] sm:$0xf]
        %v3622 = vld [vmem:[%s3 + $0x80] sm:$0xf]
        %v3623 = vld [vmem:[%s3 + $0x84] sm:$0xf]
        %v3624 = vld [vmem:[%s3 + $0x88] sm:$0xf]
        %v3625 = vld [vmem:[%s3 + $0x8c] sm:$0xf]
        %v3626 = vld [vmem:[%s3 + $0x90] sm:$0xf]
        %v3627 = vld [vmem:[%s3 + $0x94] sm:$0xf]
        %v3628 = vld [vmem:[%s3 + $0x98] sm:$0xf]
        %v3629 = vld [vmem:[%s3 + $0x9c] sm:$0xf]
        %v3630 = vld [vmem:[%s3 + $0xa0] sm:$0xf]
        %v3631 = vld [vmem:[%s3 + $0xa4] sm:$0xf]
        %v3632 = vld [vmem:[%s3 + $0xa8] sm:$0xf]
        %v3633 = vld [vmem:[%s3 + $0xac] sm:$0xf]
        %v3634 = vld [vmem:[%s3 + $0xb0] sm:$0xf]
        %v3635 = vld [vmem:[%s3 + $0xb4] sm:$0xf]
        %v3636 = vld [vmem:[%s3 + $0xb8] sm:$0xf]
        %v3637 = vld [vmem:[%s3 + $0xbc] sm:$0xf]
        %v3638 = vld [vmem:[%s3 + $0xc0] sm:$0xf]
        %v3639 = vld [vmem:[%s3 + $0xc4] sm:$0xf]
        %v3640 = vld [vmem:[%s3 + $0xc8] sm:$0xf]
        %v3641 = vld [vmem:[%s3 + $0xcc] sm:$0xf]
        %v3642 = vld [vmem:[%s3 + $0xd0] sm:$0xf]
        %v3643 = vld [vmem:[%s3 + $0xd4] sm:$0xf]
        %v3644 = vld [vmem:[%s3 + $0xd8] sm:$0xf]
        %v3645 = vld [vmem:[%s3 + $0xdc] sm:$0xf]
        %v3646 = vld [vmem:[%s3 + $0xe0] sm:$0xf]
        %v3647 = vld [vmem:[%s3 + $0xe4] sm:$0xf]
        %v3648 = vld [vmem:[%s3 + $0xe8] sm:$0xf]
        %v3649 = vld [vmem:[%s3 + $0xec] sm:$0xf]
        %v3650 = vld [vmem:[%s3 + $0xf0] sm:$0xf]
        %v3651 = vld [vmem:[%s3 + $0xf4] sm:$0xf]
        %v3652 = vld [vmem:[%s3 + $0xf8] sm:$0xf]
        %v3653 = vld [vmem:[%s3 + $0xfc] sm:$0xf]
        %v3654 = vld [vmem:[%s4] sm:$0x1]
        %v3656 = vlaneseq
        %v3657 = vshrl.u32 %v3656, 7
        %v3658 = vsub.s32 0, %v3657
        %v3659 = vrot.slane %v3654, %v3658
        %v3725 = vunpack.c.l.b16 %v3590
        %v3726 = vunpack.c.l.b16 %v3591
        %v3727 = vunpack.c.l.b16 %v3592
        %v3728 = vunpack.c.l.b16 %v3593
        %v3729 = vunpack.c.l.b16 %v3594
        %v3730 = vunpack.c.l.b16 %v3595
        %v3731 = vunpack.c.l.b16 %v3596
        %v3732 = vunpack.c.l.b16 %v3597
        %v3733 = vunpack.c.l.b16 %v3598
        %v3734 = vunpack.c.l.b16 %v3599
        %v3735 = vunpack.c.l.b16 %v3600
        %v3736 = vunpack.c.l.b16 %v3601
        %v3737 = vunpack.c.l.b16 %v3602
        %v3738 = vunpack.c.l.b16 %v3603
        %v3739 = vunpack.c.l.b16 %v3604
        %v3740 = vunpack.c.l.b16 %v3605
        %v3741 = vunpack.c.l.b16 %v3606
        %v3742 = vunpack.c.l.b16 %v3607
        %v3743 = vunpack.c.l.b16 %v3608
        %v3744 = vunpack.c.l.b16 %v3609
        %v3745 = vunpack.c.l.b16 %v3610
        %v3746 = vunpack.c.l.b16 %v3611
        %v3747 = vunpack.c.l.b16 %v3612
        %v3748 = vunpack.c.l.b16 %v3613
        %v3749 = vunpack.c.l.b16 %v3614
        %v3750 = vunpack.c.l.b16 %v3615
        %v3751 = vunpack.c.l.b16 %v3616
        %v3752 = vunpack.c.l.b16 %v3617
        %v3753 = vunpack.c.l.b16 %v3618
        %v3754 = vunpack.c.l.b16 %v3619
        %v3755 = vunpack.c.l.b16 %v3620
        %v3756 = vunpack.c.l.b16 %v3621
        %v3757 = vunpack.c.l.b16 %v3622
        %v3758 = vunpack.c.l.b16 %v3623
        %v3759 = vunpack.c.l.b16 %v3624
        %v3760 = vunpack.c.l.b16 %v3625
        %v3761 = vunpack.c.l.b16 %v3626
        %v3762 = vunpack.c.l.b16 %v3627
        %v3763 = vunpack.c.l.b16 %v3628
        %v3764 = vunpack.c.l.b16 %v3629
        %v3765 = vunpack.c.l.b16 %v3630
        %v3766 = vunpack.c.l.b16 %v3631
        %v3767 = vunpack.c.l.b16 %v3632
        %v3768 = vunpack.c.l.b16 %v3633
        %v3769 = vunpack.c.l.b16 %v3634
        %v3770 = vunpack.c.l.b16 %v3635
        %v3771 = vunpack.c.l.b16 %v3636
        %v3772 = vunpack.c.l.b16 %v3637
        %v3773 = vunpack.c.l.b16 %v3638
        %v3774 = vunpack.c.l.b16 %v3639
        %v3775 = vunpack.c.l.b16 %v3640
        %v3776 = vunpack.c.l.b16 %v3641
        %v3777 = vunpack.c.l.b16 %v3642
        %v3778 = vunpack.c.l.b16 %v3643
        %v3779 = vunpack.c.l.b16 %v3644
        %v3780 = vunpack.c.l.b16 %v3645
        %v3781 = vunpack.c.l.b16 %v3646
        %v3782 = vunpack.c.l.b16 %v3647
        %v3783 = vunpack.c.l.b16 %v3648
        %v3784 = vunpack.c.l.b16 %v3649
        %v3785 = vunpack.c.l.b16 %v3650
        %v3786 = vunpack.c.l.b16 %v3651
        %v3787 = vunpack.c.l.b16 %v3652
        %v3788 = vunpack.c.l.b16 %v3653
        %v3789 = vpack.c.b16 %v3726, %v3725
        %v3790 = vpack.c.b16 %v3728, %v3727
        %v3791 = vpack.c.b16 %v3730, %v3729
        %v3792 = vpack.c.b16 %v3732, %v3731
        %v3793 = vpack.c.b16 %v3734, %v3733
        %v3794 = vpack.c.b16 %v3736, %v3735
        %v3795 = vpack.c.b16 %v3738, %v3737
        %v3796 = vpack.c.b16 %v3740, %v3739
        %v3797 = vpack.c.b16 %v3742, %v3741
        %v3798 = vpack.c.b16 %v3744, %v3743
        %v3799 = vpack.c.b16 %v3746, %v3745
        %v3800 = vpack.c.b16 %v3748, %v3747
        %v3801 = vpack.c.b16 %v3750, %v3749
        %v3802 = vpack.c.b16 %v3752, %v3751
        %v3803 = vpack.c.b16 %v3754, %v3753
        %v3804 = vpack.c.b16 %v3756, %v3755
        %v3805 = vpack.c.b16 %v3758, %v3757
        %v3806 = vpack.c.b16 %v3760, %v3759
        %v3807 = vpack.c.b16 %v3762, %v3761
        %v3808 = vpack.c.b16 %v3764, %v3763
        %v3809 = vpack.c.b16 %v3766, %v3765
        %v3810 = vpack.c.b16 %v3768, %v3767
        %v3811 = vpack.c.b16 %v3770, %v3769
        %v3812 = vpack.c.b16 %v3772, %v3771
        %v3813 = vpack.c.b16 %v3774, %v3773
        %v3814 = vpack.c.b16 %v3776, %v3775
        %v3815 = vpack.c.b16 %v3778, %v3777
        %v3816 = vpack.c.b16 %v3780, %v3779
        %v3817 = vpack.c.b16 %v3782, %v3781
        %v3818 = vpack.c.b16 %v3784, %v3783
        %v3819 = vpack.c.b16 %v3786, %v3785
        %v3820 = vpack.c.b16 %v3788, %v3787
        %3853 = vmatprep.subr.bf16.mxu0 0
        %3854 = vmatpush1.bf16.msra.mxu0 %v3789
        %3855 = vmatprep.subr.bf16.mxu0 0
        %3856 = vmatpush1.bf16.msra.mxu0 %v3790
        %3857 = vmatprep.subr.bf16.mxu0 0
        %3858 = vmatpush1.bf16.msra.mxu0 %v3791
        %3859 = vmatprep.subr.bf16.mxu0 0
        %3860 = vmatpush1.bf16.msra.mxu0 %v3792
        %3861 = vmatprep.subr.bf16.mxu0 0
        %3862 = vmatpush1.bf16.msra.mxu0 %v3793
        %3863 = vmatprep.subr.bf16.mxu0 0
        %3864 = vmatpush1.bf16.msra.mxu0 %v3794
        %3865 = vmatprep.subr.bf16.mxu0 0
        %3866 = vmatpush1.bf16.msra.mxu0 %v3795
        %3867 = vmatprep.subr.bf16.mxu0 0
        %3868 = vmatpush1.bf16.msra.mxu0 %v3796
        %3869 = vmatprep.subr.bf16.mxu0 0
        %3870 = vmatpush1.bf16.msra.mxu0 %v3797
        %3871 = vmatprep.subr.bf16.mxu0 0
        %3872 = vmatpush1.bf16.msra.mxu0 %v3798
        %3873 = vmatprep.subr.bf16.mxu0 0
        %3874 = vmatpush1.bf16.msra.mxu0 %v3799
        %3875 = vmatprep.subr.bf16.mxu0 0
        %3876 = vmatpush1.bf16.msra.mxu0 %v3800
        %3877 = vmatprep.subr.bf16.mxu0 0
        %3878 = vmatpush1.bf16.msra.mxu0 %v3801
        %3879 = vmatprep.subr.bf16.mxu0 0
        %3880 = vmatpush1.bf16.msra.mxu0 %v3802
        %3881 = vmatprep.subr.bf16.mxu0 0
        %3882 = vmatpush1.bf16.msra.mxu0 %v3803
        %3883 = vmatprep.subr.bf16.mxu0 0
        %3884 = vmatpush1.bf16.msra.mxu0 %v3804
        %3885 = vmatprep.mubr.bf16.mxu0 %v3587
        %3886 = vmatmul.mubr.bf16.gmra.mrb[0].mxu0 %v3586
        %v3887 = vpop.f32.mrb[0].mxu0
        %v3888 = vadd.f32 %v3659, %v3887
        %v3889 = vpop.f32.mrb[0].mxu0
        %v3890 = vpop.f32.mrb[0].mxu0
        %v3891 = vpop.f32.mrb[0].mxu0
        %3892 = vdwg.mxu0
        %3893 = vmatprep.subr.bf16.mxu0 0
        %3894 = vmatpush1.bf16.msra.mxu0 %v3805
        %3895 = vmatprep.subr.bf16.mxu0 0
        %3896 = vmatpush1.bf16.msra.mxu0 %v3806
        %3897 = vmatprep.subr.bf16.mxu0 0
        %3898 = vmatpush1.bf16.msra.mxu0 %v3807
        %3899 = vmatprep.subr.bf16.mxu0 0
        %3900 = vmatpush1.bf16.msra.mxu0 %v3808
        %3901 = vmatprep.subr.bf16.mxu0 0
        %3902 = vmatpush1.bf16.msra.mxu0 %v3809
        %3903 = vmatprep.subr.bf16.mxu0 0
        %3904 = vmatpush1.bf16.msra.mxu0 %v3810
        %3905 = vmatprep.subr.bf16.mxu0 0
        %3906 = vmatpush1.bf16.msra.mxu0 %v3811
        %3907 = vmatprep.subr.bf16.mxu0 0
        %3908 = vmatpush1.bf16.msra.mxu0 %v3812
        %3909 = vmatprep.subr.bf16.mxu0 0
        %3910 = vmatpush1.bf16.msra.mxu0 %v3813
        %3911 = vmatprep.subr.bf16.mxu0 0
        %3912 = vmatpush1.bf16.msra.mxu0 %v3814
        %3913 = vmatprep.subr.bf16.mxu0 0
        %3914 = vmatpush1.bf16.msra.mxu0 %v3815
        %3915 = vmatprep.subr.bf16.mxu0 0
        %3916 = vmatpush1.bf16.msra.mxu0 %v3816
        %3917 = vmatprep.subr.bf16.mxu0 0
        %3918 = vmatpush1.bf16.msra.mxu0 %v3817
        %3919 = vmatprep.subr.bf16.mxu0 0
        %3920 = vmatpush1.bf16.msra.mxu0 %v3818
        %3921 = vmatprep.subr.bf16.mxu0 0
        %3922 = vmatpush1.bf16.msra.mxu0 %v3819
        %3923 = vmatprep.subr.bf16.mxu0 0
        %3924 = vmatpush1.bf16.msra.mxu0 %v3820
        %3925 = vmatprep.mubr.bf16.mxu0 %v3589
        %3926 = vmatmul.mubr.bf16.gmra.mrb[0].mxu0 %v3588
        %v3927 = vpop.f32.mrb[0].mxu0
        %v3928 = vadd.f32 %v3888, %v3927
        %v3929 = vpop.f32.mrb[0].mxu0
        %v3930 = vpop.f32.mrb[0].mxu0
        %v3931 = vpop.f32.mrb[0].mxu0
        %3932 = vdwg.mxu0
        %v3933 = vtanh.pop %v3928
        %3934 = vst [vmem:[%s5] sm:$0xff] %v3933
      $region48: #{actor_forward.7} parent=39 // pred_fallthru
        _
      // Predicated region
      $region49: #{actor_forward.7} parent=39 // pred_check
        %p3935 = pneg %p144
      $region50: #{actor_forward.7} parent=39 // pred_check_branch
        %3937 = sbr.rel (%p3935) target = $region52
      $region51: #{actor_forward.7} parent=39 // pred_region
        _
      $region52: #{actor_forward.7} parent=39 // pred_fallthru
        _
      // Predicated region
      $region53: #{actor_forward.7} parent=39 // pred_check
        %p3938 = pneg %p144
      $region54: #{actor_forward.7} parent=39 // pred_check_branch
        %3940 = sbr.rel (%p3938) target = $region56
      $region55: #{actor_forward.7} parent=39 // pred_region
        _
      $region56: #{actor_forward.7} parent=39 // pred_fallthru
        _
    $region40: #{actor_forward.7} parent=5 // pred_fallthru
      _
    %p3941 = scmp.le.s32.totalorder 2, %s11
    // Predicated region
    $region57: #{actor_forward.7} parent=5 // pred_check
      %p3942 = pneg %p3941
    $region58: #{actor_forward.7} parent=5 // pred_check_branch
      %3944 = sbr.rel (%p3942) target = $region60
    $region59: #{actor_forward.7} parent=5 // pred_region
      %s3945 = ssub.s32 %s11, 2
    $region60: #{actor_forward.7} parent=5 // pred_fallthru
      _
  $region6: #{actor_forward.7} parent=0 // loop_footer
    %s15 = sadd.s32 1, %s11
  $region7: #{actor_forward.7} parent=0 // loop_footer_branch
    %10 = sbr.rel target = $region3
  $region8: #{actor_forward.7} parent=0 // loop_exit
    _

</llo_original>
